<compile_context>
chip_gen: v6e
topology: v6e:2x2x1
jax: 0.10.0
libtpu: 0.0.40
codegen_flags: <defaults>
</compile_context>

<pallas_src>
import functools

import numpy as np
import jax
import jax.numpy as jnp
from jax import lax
from jax.experimental import pallas as pl
from jax.experimental.pallas import tpu as pltpu


# ----------------------------------------------------------------------------
# Fused whole-network Pallas kernel
# ----------------------------------------------------------------------------
def _yannet_kernel(x0_ref, w1_ref, b1_ref, w2_ref, b2_ref, w3_ref, b3_ref,
                   w4_ref, b4_ref, m30_ref, m16_ref, s1_ref, s2_ref,
                   wf1_ref, bf1_ref, wf2_ref, bf2_ref, wf3_ref, bf3_ref,
                   out_ref, *, n_batch):
    f32 = jnp.float32

    def conv3x3(x, w_ref, b_ref, mask, wpad):
        # x: (cin, L) with L = n_batch * hpad * wpad (per-image padded, flat).
        cin, length = x.shape
        guard = wpad + 1
        z = jnp.zeros((cin, guard), f32)
        xw = jnp.concatenate([z, x, z], axis=1)            # zero guards, no wrap
        taps = []
        for dy in range(3):
            for dx in range(3):
                start = guard + (dy - 1) * wpad + (dx - 1)  # static lane shift
                taps.append(xw[:, start:start + length])
        patches = jnp.concatenate(taps, axis=0)             # (9*cin, L) in VMEM
        acc = jnp.dot(w_ref[...], patches, preferred_element_type=f32)
        # scale already folded into w; bias + ReLU + zero the padded border.
        return jnp.maximum(acc + b_ref[...], 0.0) * mask

    def maxpool2(y, s_ref, wpad):
        # y: (c, L);  m[p] = max over the 2x2 window starting at p.
        c, length = y.shape
        z = jnp.zeros((c, wpad + 1), f32)
        yw = jnp.concatenate([y, z], axis=1)
        m = y
        for d in (1, wpad, wpad + 1):
            m = jnp.maximum(m, yw[:, d:d + length])
        # 0/1 selection matmul: picks window tops AND re-embeds into the next
        # padded layout (border columns are all-zero -> zero padding for free).
        return jnp.dot(m, s_ref[...], preferred_element_type=f32)

    m30 = m30_ref[...]
    m16 = m16_ref[...]

    y = conv3x3(x0_ref[...], w1_ref, b1_ref, m30, 30)   # (8,  N*900)  28x28
    y = conv3x3(y, w2_ref, b2_ref, m30, 30)             # (16, N*900)
    y = maxpool2(y, s1_ref, 30)                         # (16, N*256)  14x14
    y = conv3x3(y, w3_ref, b3_ref, m16, 16)             # (16, N*256)
    y = conv3x3(y, w4_ref, b4_ref, m16, 16)             # (8,  N*256)
    y = maxpool2(y, s2_ref, 16)                         # (8,  N*81)   7x7

    # conv -> fc transition: per-sample feature row in PyTorch (c, h, w) order.
    a3 = 81
    rows = []
    for n in range(n_batch):
        feats = [y[c:c + 1, n * a3:(n + 1) * a3] for c in range(8)]
        rows.append(jnp.concatenate(feats, axis=1))      # (1, 648)
    xf = jnp.concatenate(rows, axis=0)                   # (N, 648)

    h = jnp.dot(xf, wf1_ref[...], preferred_element_type=f32) + bf1_ref[...]
    h = jnp.maximum(h, 0.0)
    h = jnp.dot(h, wf2_ref[...], preferred_element_type=f32) + bf2_ref[...]
    h = jnp.maximum(h, 0.0)
    logits = jnp.dot(h, wf3_ref[...], preferred_element_type=f32) + bf3_ref[...]
    out_ref[...] = logits.astype(out_ref.dtype)


def yannet_forward(img_nchw, packed):
    """img_nchw: (N, 1, 28, 28) -> logits (N, 10). `packed` from pack_operands."""
    n = img_nchw.shape[0]
    assert img_nchw.shape[1:] == (1, 28, 28)
    x = img_nchw[:, 0].astype(jnp.float32)               # (N, 28, 28)
    xp = jnp.pad(x, ((0, 0), (1, 1), (1, 1)))            # (N, 30, 30) zero pad
    x0 = xp.reshape(1, n * 30 * 30)                      # (1, N*900)

    n_in = 1 + len(packed)
    return pl.pallas_call(
        functools.partial(_yannet_kernel, n_batch=n),
        out_shape=jax.ShapeDtypeStruct((n, 10), jnp.float32),
        in_specs=[pl.BlockSpec(memory_space=pltpu.MemorySpace.VMEM)] * n_in,
        out_specs=pl.BlockSpec(memory_space=pltpu.MemorySpace.VMEM),
        compiler_params=pltpu.CompilerParams(vmem_limit_bytes=32 * 1024 * 1024),
    )(x0, *packed)


# ----------------------------------------------------------------------------
# Parameters (deterministic synthetic init, BatchNorm folded in eval mode)
# ----------------------------------------------------------------------------
def init_params(key):
    eps = 1e-5
    conv_dims = [(1, 8), (8, 16), (16, 16), (16, 8)]
    fc_dims = [(8 * 7 * 7, 256), (256, 256), (256, 10)]
    keys = jax.random.split(key, 40)
    ki = 0

    def nxt():
        nonlocal ki
        k = keys[ki]
        ki += 1
        return k

    params = {"conv": [], "fc": []}
    for cin, cout in conv_dims:
        fan_in = 9 * cin
        w = jax.random.normal(nxt(), (3, 3, cin, cout), jnp.float32) / np.sqrt(fan_in)
        b = 0.1 * jax.random.normal(nxt(), (cout,), jnp.float32)
        gamma = jax.random.uniform(nxt(), (cout,), jnp.float32, 0.5, 1.5)
        beta = 0.1 * jax.random.normal(nxt(), (cout,), jnp.float32)
        mean = 0.1 * jax.random.normal(nxt(), (cout,), jnp.float32)
        var = jax.random.uniform(nxt(), (cout,), jnp.float32, 0.5, 1.5)
        scale = gamma / jnp.sqrt(var + eps)
        bias = (b - mean) * scale + beta
        params["conv"].append((w, scale.reshape(1, cout), bias.reshape(1, cout)))

    for li, (din, dout) in enumerate(fc_dims):
        w = jax.random.normal(nxt(), (din, dout), jnp.float32) / np.sqrt(din)
        b = 0.1 * jax.random.normal(nxt(), (dout,), jnp.float32)
        if li < 2:  # Linear -> BatchNorm1d -> ReLU (-> Dropout)
            gamma = jax.random.uniform(nxt(), (dout,), jnp.float32, 0.5, 1.5)
            beta = 0.1 * jax.random.normal(nxt(), (dout,), jnp.float32)
            mean = 0.1 * jax.random.normal(nxt(), (dout,), jnp.float32)
            var = jax.random.uniform(nxt(), (dout,), jnp.float32, 0.5, 1.5)
            scale = gamma / jnp.sqrt(var + eps)
            bias = (b - mean) * scale + beta
            relu = True
        else:       # final Linear(256, 10)
            scale = jnp.ones((dout,), jnp.float32)
            bias = b
            relu = False
        params["fc"].append((w, scale.reshape(1, dout), bias.reshape(1, dout), relu))
    return params


def pack_operands(params, n_batch):
    """Fold BN scales into weights, build masks / pool-selection / expanded-FC1
    constants for the fused kernel (host-side numpy, done once)."""
    ops = []

    # Conv weights: (cout, 9*cin) with scale folded; bias as (cout, 1).
    for (w, s, b) in params["conv"]:
        w = np.asarray(w, np.float32)
        s = np.asarray(s, np.float32).reshape(-1)
        b = np.asarray(b, np.float32).reshape(-1)
        cin, cout = w.shape[2], w.shape[3]
        wm = (w * s.reshape(1, 1, 1, cout)).reshape(9 * cin, cout).T
        ops.append(jnp.asarray(np.ascontiguousarray(wm)))
        ops.append(jnp.asarray(b.reshape(cout, 1)))

    # Interior (non-padding) masks in the flat padded layout.
    def border_mask(hp, wp):
        m = np.zeros((hp, wp), np.float32)
        m[1:-1, 1:-1] = 1.0
        return jnp.asarray(np.tile(m.reshape(-1), n_batch).reshape(1, -1))

    # 0/1 selection matrices: 2x2-window top -> next padded layout interior.
    def pool_select(hp_i, wp_i, hp_o, wp_o, h_o, w_o):
        a_i, a_o = hp_i * wp_i, hp_o * wp_o
        sel = np.zeros((n_batch * a_i, n_batch * a_o), np.float32)
        for n in range(n_batch):
            for ho in range(h_o):
                for wo in range(w_o):
                    src = n * a_i + (2 * ho + 1) * wp_i + (2 * wo + 1)
                    dst = n * a_o + (ho + 1) * wp_o + (wo + 1)
                    sel[src, dst] = 1.0
        return jnp.asarray(sel)

    ops.append(border_mask(30, 30))                     # mask for 28x28 stage
    ops.append(border_mask(16, 16))                     # mask for 14x14 stage
    ops.append(pool_select(30, 30, 16, 16, 14, 14))     # pool1: 28x28 -> 14x14
    ops.append(pool_select(16, 16, 9, 9, 7, 7))         # pool2: 14x14 -> 7x7

    (w1, s1, b1, _), (w2, s2, b2, _), (w3, s3, b3, _) = params["fc"]
    # FC1 expanded to (8*81, 256): rows at padded-border positions are zero,
    # so the conv output can be consumed in its padded layout directly.
    w1f = np.asarray(w1, np.float32) * np.asarray(s1, np.float32).reshape(1, -1)
    w1e = np.zeros((8 * 81, 256), np.float32)
    for c in range(8):
        for hh in range(7):
            for ww in range(7):
                w1e[c * 81 + (hh + 1) * 9 + (ww + 1), :] = w1f[c * 49 + hh * 7 + ww, :]
    ops.append(jnp.asarray(w1e))
    ops.append(jnp.asarray(np.asarray(b1, np.float32).reshape(1, -1)))

    w2f = np.asarray(w2, np.float32) * np.asarray(s2, np.float32).reshape(1, -1)
    ops.append(jnp.asarray(w2f))
    ops.append(jnp.asarray(np.asarray(b2, np.float32).reshape(1, -1)))

    w3f = np.asarray(w3, np.float32) * np.asarray(s3, np.float32).reshape(1, -1)
    ops.append(jnp.asarray(w3f))
    ops.append(jnp.asarray(np.asarray(b3, np.float32).reshape(1, -1)))
    return tuple(ops)


# ----------------------------------------------------------------------------
# Pure-JAX reference (XLA conv/dot) for correctness checking
# ----------------------------------------------------------------------------
def _maxpool2_nhwc(x_nhwc):
    n, h, w, c = x_nhwc.shape
    return x_nhwc.reshape(n, h // 2, 2, w // 2, 2, c).max(axis=(2, 4))


def reference_forward(img_nchw, params):
    x = jnp.transpose(img_nchw, (0, 2, 3, 1)).astype(jnp.float32)
    for i, (w, s, b) in enumerate(params["conv"]):
        x = lax.conv_general_dilated(
            x, w, window_strides=(1, 1), padding="SAME",
            dimension_numbers=("NHWC", "HWIO", "NHWC"),
            precision=lax.Precision.HIGHEST)
        x = jnp.maximum(x * s + b, 0.0)
        if i in (1, 3):
            x = _maxpool2_nhwc(x)
    n = x.shape[0]
    h = jnp.transpose(x, (0, 3, 1, 2)).reshape(n, -1)   # PyTorch view(N, -1) order
    for (w, s, b, relu) in params["fc"]:
        h = jnp.dot(h, w, precision=lax.Precision.HIGHEST) * s + b
        if relu:
            h = jnp.maximum(h, 0.0)
    return h


if __name__ == "__main__":
    key = jax.random.PRNGKey(0)
    pkey, xkey = jax.random.split(key)
    params = init_params(pkey)

    # MNIST-style input: batch=2, 1 channel, 28x28 (fc expects 8*7*7 features)
    img = jax.random.normal(xkey, (2, 1, 28, 28), jnp.float32)

    packed = pack_operands(params, n_batch=img.shape[0])
    fwd = jax.jit(yannet_forward)
    out = jax.block_until_ready(fwd(img, packed))
    assert out.shape == (2, 10)

    ref = reference_forward(img, params)
    np.testing.assert_allclose(np.asarray(out), np.asarray(ref), rtol=1e-2, atol=1e-2)

    print("KERNEL_OK")
</pallas_src>

<mosaic_0001>
module attributes {stable_mosaic.version = 11 : i64} {
  func.func @_yannet_kernel(%arg0: memref<1x1800xf32, #tpu.memory_space<vmem>>, %arg1: memref<8x9xf32, #tpu.memory_space<vmem>>, %arg2: memref<8x1xf32, #tpu.memory_space<vmem>>, %arg3: memref<16x72xf32, #tpu.memory_space<vmem>>, %arg4: memref<16x1xf32, #tpu.memory_space<vmem>>, %arg5: memref<16x144xf32, #tpu.memory_space<vmem>>, %arg6: memref<16x1xf32, #tpu.memory_space<vmem>>, %arg7: memref<8x144xf32, #tpu.memory_space<vmem>>, %arg8: memref<8x1xf32, #tpu.memory_space<vmem>>, %arg9: memref<1x1800xf32, #tpu.memory_space<vmem>>, %arg10: memref<1x512xf32, #tpu.memory_space<vmem>>, %arg11: memref<1800x512xf32, #tpu.memory_space<vmem>>, %arg12: memref<512x162xf32, #tpu.memory_space<vmem>>, %arg13: memref<648x256xf32, #tpu.memory_space<vmem>>, %arg14: memref<1x256xf32, #tpu.memory_space<vmem>>, %arg15: memref<256x256xf32, #tpu.memory_space<vmem>>, %arg16: memref<1x256xf32, #tpu.memory_space<vmem>>, %arg17: memref<256x10xf32, #tpu.memory_space<vmem>>, %arg18: memref<1x10xf32, #tpu.memory_space<vmem>>, %arg19: memref<2x10xf32, #tpu.memory_space<vmem>>) attributes {dimension_semantics = [], scalar_prefetch = 0 : i64, scratch_operands = 0 : i64, tpu.core_type = #tpu.core_type<tc>} {
    %c0 = arith.constant 0 : index
    %c0_0 = arith.constant 0 : index
    %0 = vector.load %arg9[%c0, %c0_0] : memref<1x1800xf32, #tpu.memory_space<vmem>>, vector<1x1800xf32>
    %c0_1 = arith.constant 0 : index
    %c0_2 = arith.constant 0 : index
    %1 = vector.load %arg10[%c0_1, %c0_2] : memref<1x512xf32, #tpu.memory_space<vmem>>, vector<1x512xf32>
    %c0_3 = arith.constant 0 : index
    %c0_4 = arith.constant 0 : index
    %2 = vector.load %arg0[%c0_3, %c0_4] : memref<1x1800xf32, #tpu.memory_space<vmem>>, vector<1x1800xf32>
    %cst = arith.constant 0.000000e+00 : f32
    %3 = vector.broadcast %cst : f32 to vector<1x31xf32>
    %4 = tpu.concatenate %3, %2, %3 in 1 : vector<1x31xf32>, vector<1x1800xf32>, vector<1x31xf32> -> vector<1x1862xf32>
    %5 = vector.extract_strided_slice %4 {offsets = [0, 0], sizes = [1, 1800], strides = [1, 1]} : vector<1x1862xf32> to vector<1x1800xf32>
    %6 = vector.extract_strided_slice %4 {offsets = [0, 1], sizes = [1, 1800], strides = [1, 1]} : vector<1x1862xf32> to vector<1x1800xf32>
    %7 = vector.extract_strided_slice %4 {offsets = [0, 2], sizes = [1, 1800], strides = [1, 1]} : vector<1x1862xf32> to vector<1x1800xf32>
    %8 = vector.extract_strided_slice %4 {offsets = [0, 30], sizes = [1, 1800], strides = [1, 1]} : vector<1x1862xf32> to vector<1x1800xf32>
    %9 = vector.extract_strided_slice %4 {offsets = [0, 31], sizes = [1, 1800], strides = [1, 1]} : vector<1x1862xf32> to vector<1x1800xf32>
    %10 = vector.extract_strided_slice %4 {offsets = [0, 32], sizes = [1, 1800], strides = [1, 1]} : vector<1x1862xf32> to vector<1x1800xf32>
    %11 = vector.extract_strided_slice %4 {offsets = [0, 60], sizes = [1, 1800], strides = [1, 1]} : vector<1x1862xf32> to vector<1x1800xf32>
    %12 = vector.extract_strided_slice %4 {offsets = [0, 61], sizes = [1, 1800], strides = [1, 1]} : vector<1x1862xf32> to vector<1x1800xf32>
    %13 = vector.extract_strided_slice %4 {offsets = [0, 62], sizes = [1, 1800], strides = [1, 1]} : vector<1x1862xf32> to vector<1x1800xf32>
    %14 = tpu.concatenate %5, %6, %7, %8, %9, %10, %11, %12, %13 in 0 : vector<1x1800xf32>, vector<1x1800xf32>, vector<1x1800xf32>, vector<1x1800xf32>, vector<1x1800xf32>, vector<1x1800xf32>, vector<1x1800xf32>, vector<1x1800xf32>, vector<1x1800xf32> -> vector<9x1800xf32>
    %c0_5 = arith.constant 0 : index
    %c0_6 = arith.constant 0 : index
    %15 = vector.load %arg1[%c0_5, %c0_6] : memref<8x9xf32, #tpu.memory_space<vmem>>, vector<8x9xf32>
    %cst_7 = arith.constant dense<0.000000e+00> : vector<8x1800xf32>
    %16 = tpu.matmul %15, %14, %cst_7 {dimension_numbers = #tpu.dot_dimension_numbers<[1], [0], [0], [1], [0, 0, 1, 1], [], []>} : vector<8x9xf32>, vector<9x1800xf32>, vector<8x1800xf32> -> vector<8x1800xf32>
    %c0_8 = arith.constant 0 : index
    %c0_9 = arith.constant 0 : index
    %17 = vector.load %arg2[%c0_8, %c0_9] : memref<8x1xf32, #tpu.memory_space<vmem>>, vector<8x1xf32>
    %18 = vector.broadcast %17 : vector<8x1xf32> to vector<8x1800xf32>
    %19 = arith.addf %16, %18 : vector<8x1800xf32>
    %cst_10 = arith.constant 0.000000e+00 : f32
    %20 = vector.broadcast %cst_10 : f32 to vector<8x1800xf32>
    %21 = arith.maximumf %19, %20 : vector<8x1800xf32>
    %22 = vector.broadcast %0 : vector<1x1800xf32> to vector<8x1800xf32>
    %23 = arith.mulf %21, %22 : vector<8x1800xf32>
    %cst_11 = arith.constant 0.000000e+00 : f32
    %24 = vector.broadcast %cst_11 : f32 to vector<8x31xf32>
    %25 = tpu.concatenate %24, %23, %24 in 1 : vector<8x31xf32>, vector<8x1800xf32>, vector<8x31xf32> -> vector<8x1862xf32>
    %26 = vector.extract_strided_slice %25 {offsets = [0, 0], sizes = [8, 1800], strides = [1, 1]} : vector<8x1862xf32> to vector<8x1800xf32>
    %27 = vector.extract_strided_slice %25 {offsets = [0, 1], sizes = [8, 1800], strides = [1, 1]} : vector<8x1862xf32> to vector<8x1800xf32>
    %28 = vector.extract_strided_slice %25 {offsets = [0, 2], sizes = [8, 1800], strides = [1, 1]} : vector<8x1862xf32> to vector<8x1800xf32>
    %29 = vector.extract_strided_slice %25 {offsets = [0, 30], sizes = [8, 1800], strides = [1, 1]} : vector<8x1862xf32> to vector<8x1800xf32>
    %30 = vector.extract_strided_slice %25 {offsets = [0, 31], sizes = [8, 1800], strides = [1, 1]} : vector<8x1862xf32> to vector<8x1800xf32>
    %31 = vector.extract_strided_slice %25 {offsets = [0, 32], sizes = [8, 1800], strides = [1, 1]} : vector<8x1862xf32> to vector<8x1800xf32>
    %32 = vector.extract_strided_slice %25 {offsets = [0, 60], sizes = [8, 1800], strides = [1, 1]} : vector<8x1862xf32> to vector<8x1800xf32>
    %33 = vector.extract_strided_slice %25 {offsets = [0, 61], sizes = [8, 1800], strides = [1, 1]} : vector<8x1862xf32> to vector<8x1800xf32>
    %34 = vector.extract_strided_slice %25 {offsets = [0, 62], sizes = [8, 1800], strides = [1, 1]} : vector<8x1862xf32> to vector<8x1800xf32>
    %35 = tpu.concatenate %26, %27, %28, %29, %30, %31, %32, %33, %34 in 0 : vector<8x1800xf32>, vector<8x1800xf32>, vector<8x1800xf32>, vector<8x1800xf32>, vector<8x1800xf32>, vector<8x1800xf32>, vector<8x1800xf32>, vector<8x1800xf32>, vector<8x1800xf32> -> vector<72x1800xf32>
    %c0_12 = arith.constant 0 : index
    %c0_13 = arith.constant 0 : index
    %36 = vector.load %arg3[%c0_12, %c0_13] : memref<16x72xf32, #tpu.memory_space<vmem>>, vector<16x72xf32>
    %cst_14 = arith.constant dense<0.000000e+00> : vector<16x1800xf32>
    %37 = tpu.matmul %36, %35, %cst_14 {dimension_numbers = #tpu.dot_dimension_numbers<[1], [0], [0], [1], [0, 0, 1, 1], [], []>} : vector<16x72xf32>, vector<72x1800xf32>, vector<16x1800xf32> -> vector<16x1800xf32>
    %c0_15 = arith.constant 0 : index
    %c0_16 = arith.constant 0 : index
    %38 = vector.load %arg4[%c0_15, %c0_16] : memref<16x1xf32, #tpu.memory_space<vmem>>, vector<16x1xf32>
    %39 = vector.broadcast %38 : vector<16x1xf32> to vector<16x1800xf32>
    %40 = arith.addf %37, %39 : vector<16x1800xf32>
    %cst_17 = arith.constant 0.000000e+00 : f32
    %41 = vector.broadcast %cst_17 : f32 to vector<16x1800xf32>
    %42 = arith.maximumf %40, %41 : vector<16x1800xf32>
    %43 = vector.broadcast %0 : vector<1x1800xf32> to vector<16x1800xf32>
    %44 = arith.mulf %42, %43 : vector<16x1800xf32>
    %cst_18 = arith.constant 0.000000e+00 : f32
    %45 = vector.broadcast %cst_18 : f32 to vector<16x31xf32>
    %46 = tpu.concatenate %44, %45 in 1 : vector<16x1800xf32>, vector<16x31xf32> -> vector<16x1831xf32>
    %47 = vector.extract_strided_slice %46 {offsets = [0, 1], sizes = [16, 1800], strides = [1, 1]} : vector<16x1831xf32> to vector<16x1800xf32>
    %48 = arith.maximumf %44, %47 : vector<16x1800xf32>
    %49 = vector.extract_strided_slice %46 {offsets = [0, 30], sizes = [16, 1800], strides = [1, 1]} : vector<16x1831xf32> to vector<16x1800xf32>
    %50 = arith.maximumf %48, %49 : vector<16x1800xf32>
    %51 = vector.extract_strided_slice %46 {offsets = [0, 31], sizes = [16, 1800], strides = [1, 1]} : vector<16x1831xf32> to vector<16x1800xf32>
    %52 = arith.maximumf %50, %51 : vector<16x1800xf32>
    %c0_19 = arith.constant 0 : index
    %c0_20 = arith.constant 0 : index
    %53 = vector.load %arg11[%c0_19, %c0_20] : memref<1800x512xf32, #tpu.memory_space<vmem>>, vector<1800x512xf32>
    %cst_21 = arith.constant dense<0.000000e+00> : vector<16x512xf32>
    %54 = tpu.matmul %52, %53, %cst_21 {dimension_numbers = #tpu.dot_dimension_numbers<[1], [0], [0], [1], [0, 0, 1, 1], [], []>} : vector<16x1800xf32>, vector<1800x512xf32>, vector<16x512xf32> -> vector<16x512xf32>
    %cst_22 = arith.constant 0.000000e+00 : f32
    %55 = vector.broadcast %cst_22 : f32 to vector<16x17xf32>
    %56 = tpu.concatenate %55, %54, %55 in 1 : vector<16x17xf32>, vector<16x512xf32>, vector<16x17xf32> -> vector<16x546xf32>
    %57 = vector.extract_strided_slice %56 {offsets = [0, 0], sizes = [16, 512], strides = [1, 1]} : vector<16x546xf32> to vector<16x512xf32>
    %58 = vector.extract_strided_slice %56 {offsets = [0, 1], sizes = [16, 512], strides = [1, 1]} : vector<16x546xf32> to vector<16x512xf32>
    %59 = vector.extract_strided_slice %56 {offsets = [0, 2], sizes = [16, 512], strides = [1, 1]} : vector<16x546xf32> to vector<16x512xf32>
    %60 = vector.extract_strided_slice %56 {offsets = [0, 16], sizes = [16, 512], strides = [1, 1]} : vector<16x546xf32> to vector<16x512xf32>
    %61 = vector.extract_strided_slice %56 {offsets = [0, 17], sizes = [16, 512], strides = [1, 1]} : vector<16x546xf32> to vector<16x512xf32>
    %62 = vector.extract_strided_slice %56 {offsets = [0, 18], sizes = [16, 512], strides = [1, 1]} : vector<16x546xf32> to vector<16x512xf32>
    %63 = vector.extract_strided_slice %56 {offsets = [0, 32], sizes = [16, 512], strides = [1, 1]} : vector<16x546xf32> to vector<16x512xf32>
    %64 = vector.extract_strided_slice %56 {offsets = [0, 33], sizes = [16, 512], strides = [1, 1]} : vector<16x546xf32> to vector<16x512xf32>
    %65 = vector.extract_strided_slice %56 {offsets = [0, 34], sizes = [16, 512], strides = [1, 1]} : vector<16x546xf32> to vector<16x512xf32>
    %66 = tpu.concatenate %57, %58, %59, %60, %61, %62, %63, %64, %65 in 0 : vector<16x512xf32>, vector<16x512xf32>, vector<16x512xf32>, vector<16x512xf32>, vector<16x512xf32>, vector<16x512xf32>, vector<16x512xf32>, vector<16x512xf32>, vector<16x512xf32> -> vector<144x512xf32>
    %c0_23 = arith.constant 0 : index
    %c0_24 = arith.constant 0 : index
    %67 = vector.load %arg5[%c0_23, %c0_24] : memref<16x144xf32, #tpu.memory_space<vmem>>, vector<16x144xf32>
    %cst_25 = arith.constant dense<0.000000e+00> : vector<16x512xf32>
    %68 = tpu.matmul %67, %66, %cst_25 {dimension_numbers = #tpu.dot_dimension_numbers<[1], [0], [0], [1], [0, 0, 1, 1], [], []>} : vector<16x144xf32>, vector<144x512xf32>, vector<16x512xf32> -> vector<16x512xf32>
    %c0_26 = arith.constant 0 : index
    %c0_27 = arith.constant 0 : index
    %69 = vector.load %arg6[%c0_26, %c0_27] : memref<16x1xf32, #tpu.memory_space<vmem>>, vector<16x1xf32>
    %70 = vector.broadcast %69 : vector<16x1xf32> to vector<16x512xf32>
    %71 = arith.addf %68, %70 : vector<16x512xf32>
    %cst_28 = arith.constant 0.000000e+00 : f32
    %72 = vector.broadcast %cst_28 : f32 to vector<16x512xf32>
    %73 = arith.maximumf %71, %72 : vector<16x512xf32>
    %74 = vector.broadcast %1 : vector<1x512xf32> to vector<16x512xf32>
    %75 = arith.mulf %73, %74 : vector<16x512xf32>
    %cst_29 = arith.constant 0.000000e+00 : f32
    %76 = vector.broadcast %cst_29 : f32 to vector<16x17xf32>
    %77 = tpu.concatenate %76, %75, %76 in 1 : vector<16x17xf32>, vector<16x512xf32>, vector<16x17xf32> -> vector<16x546xf32>
    %78 = vector.extract_strided_slice %77 {offsets = [0, 0], sizes = [16, 512], strides = [1, 1]} : vector<16x546xf32> to vector<16x512xf32>
    %79 = vector.extract_strided_slice %77 {offsets = [0, 1], sizes = [16, 512], strides = [1, 1]} : vector<16x546xf32> to vector<16x512xf32>
    %80 = vector.extract_strided_slice %77 {offsets = [0, 2], sizes = [16, 512], strides = [1, 1]} : vector<16x546xf32> to vector<16x512xf32>
    %81 = vector.extract_strided_slice %77 {offsets = [0, 16], sizes = [16, 512], strides = [1, 1]} : vector<16x546xf32> to vector<16x512xf32>
    %82 = vector.extract_strided_slice %77 {offsets = [0, 17], sizes = [16, 512], strides = [1, 1]} : vector<16x546xf32> to vector<16x512xf32>
    %83 = vector.extract_strided_slice %77 {offsets = [0, 18], sizes = [16, 512], strides = [1, 1]} : vector<16x546xf32> to vector<16x512xf32>
    %84 = vector.extract_strided_slice %77 {offsets = [0, 32], sizes = [16, 512], strides = [1, 1]} : vector<16x546xf32> to vector<16x512xf32>
    %85 = vector.extract_strided_slice %77 {offsets = [0, 33], sizes = [16, 512], strides = [1, 1]} : vector<16x546xf32> to vector<16x512xf32>
    %86 = vector.extract_strided_slice %77 {offsets = [0, 34], sizes = [16, 512], strides = [1, 1]} : vector<16x546xf32> to vector<16x512xf32>
    %87 = tpu.concatenate %78, %79, %80, %81, %82, %83, %84, %85, %86 in 0 : vector<16x512xf32>, vector<16x512xf32>, vector<16x512xf32>, vector<16x512xf32>, vector<16x512xf32>, vector<16x512xf32>, vector<16x512xf32>, vector<16x512xf32>, vector<16x512xf32> -> vector<144x512xf32>
    %c0_30 = arith.constant 0 : index
    %c0_31 = arith.constant 0 : index
    %88 = vector.load %arg7[%c0_30, %c0_31] : memref<8x144xf32, #tpu.memory_space<vmem>>, vector<8x144xf32>
    %cst_32 = arith.constant dense<0.000000e+00> : vector<8x512xf32>
    %89 = tpu.matmul %88, %87, %cst_32 {dimension_numbers = #tpu.dot_dimension_numbers<[1], [0], [0], [1], [0, 0, 1, 1], [], []>} : vector<8x144xf32>, vector<144x512xf32>, vector<8x512xf32> -> vector<8x512xf32>
    %c0_33 = arith.constant 0 : index
    %c0_34 = arith.constant 0 : index
    %90 = vector.load %arg8[%c0_33, %c0_34] : memref<8x1xf32, #tpu.memory_space<vmem>>, vector<8x1xf32>
    %91 = vector.broadcast %90 : vector<8x1xf32> to vector<8x512xf32>
    %92 = arith.addf %89, %91 : vector<8x512xf32>
    %cst_35 = arith.constant 0.000000e+00 : f32
    %93 = vector.broadcast %cst_35 : f32 to vector<8x512xf32>
    %94 = arith.maximumf %92, %93 : vector<8x512xf32>
    %95 = vector.broadcast %1 : vector<1x512xf32> to vector<8x512xf32>
    %96 = arith.mulf %94, %95 : vector<8x512xf32>
    %cst_36 = arith.constant 0.000000e+00 : f32
    %97 = vector.broadcast %cst_36 : f32 to vector<8x17xf32>
    %98 = tpu.concatenate %96, %97 in 1 : vector<8x512xf32>, vector<8x17xf32> -> vector<8x529xf32>
    %99 = vector.extract_strided_slice %98 {offsets = [0, 1], sizes = [8, 512], strides = [1, 1]} : vector<8x529xf32> to vector<8x512xf32>
    %100 = arith.maximumf %96, %99 : vector<8x512xf32>
    %101 = vector.extract_strided_slice %98 {offsets = [0, 16], sizes = [8, 512], strides = [1, 1]} : vector<8x529xf32> to vector<8x512xf32>
    %102 = arith.maximumf %100, %101 : vector<8x512xf32>
    %103 = vector.extract_strided_slice %98 {offsets = [0, 17], sizes = [8, 512], strides = [1, 1]} : vector<8x529xf32> to vector<8x512xf32>
    %104 = arith.maximumf %102, %103 : vector<8x512xf32>
    %c0_37 = arith.constant 0 : index
    %c0_38 = arith.constant 0 : index
    %105 = vector.load %arg12[%c0_37, %c0_38] : memref<512x162xf32, #tpu.memory_space<vmem>>, vector<512x162xf32>
    %cst_39 = arith.constant dense<0.000000e+00> : vector<8x162xf32>
    %106 = tpu.matmul %104, %105, %cst_39 {dimension_numbers = #tpu.dot_dimension_numbers<[1], [0], [0], [1], [0, 0, 1, 1], [], []>} : vector<8x512xf32>, vector<512x162xf32>, vector<8x162xf32> -> vector<8x162xf32>
    %107 = vector.extract_strided_slice %106 {offsets = [0, 0], sizes = [1, 81], strides = [1, 1]} : vector<8x162xf32> to vector<1x81xf32>
    %108 = vector.extract_strided_slice %106 {offsets = [1, 0], sizes = [1, 81], strides = [1, 1]} : vector<8x162xf32> to vector<1x81xf32>
    %109 = vector.extract_strided_slice %106 {offsets = [2, 0], sizes = [1, 81], strides = [1, 1]} : vector<8x162xf32> to vector<1x81xf32>
    %110 = vector.extract_strided_slice %106 {offsets = [3, 0], sizes = [1, 81], strides = [1, 1]} : vector<8x162xf32> to vector<1x81xf32>
    %111 = vector.extract_strided_slice %106 {offsets = [4, 0], sizes = [1, 81], strides = [1, 1]} : vector<8x162xf32> to vector<1x81xf32>
    %112 = vector.extract_strided_slice %106 {offsets = [5, 0], sizes = [1, 81], strides = [1, 1]} : vector<8x162xf32> to vector<1x81xf32>
    %113 = vector.extract_strided_slice %106 {offsets = [6, 0], sizes = [1, 81], strides = [1, 1]} : vector<8x162xf32> to vector<1x81xf32>
    %114 = vector.extract_strided_slice %106 {offsets = [7, 0], sizes = [1, 81], strides = [1, 1]} : vector<8x162xf32> to vector<1x81xf32>
    %115 = tpu.concatenate %107, %108, %109, %110, %111, %112, %113, %114 in 1 : vector<1x81xf32>, vector<1x81xf32>, vector<1x81xf32>, vector<1x81xf32>, vector<1x81xf32>, vector<1x81xf32>, vector<1x81xf32>, vector<1x81xf32> -> vector<1x648xf32>
    %116 = vector.extract_strided_slice %106 {offsets = [0, 81], sizes = [1, 81], strides = [1, 1]} : vector<8x162xf32> to vector<1x81xf32>
    %117 = vector.extract_strided_slice %106 {offsets = [1, 81], sizes = [1, 81], strides = [1, 1]} : vector<8x162xf32> to vector<1x81xf32>
    %118 = vector.extract_strided_slice %106 {offsets = [2, 81], sizes = [1, 81], strides = [1, 1]} : vector<8x162xf32> to vector<1x81xf32>
    %119 = vector.extract_strided_slice %106 {offsets = [3, 81], sizes = [1, 81], strides = [1, 1]} : vector<8x162xf32> to vector<1x81xf32>
    %120 = vector.extract_strided_slice %106 {offsets = [4, 81], sizes = [1, 81], strides = [1, 1]} : vector<8x162xf32> to vector<1x81xf32>
    %121 = vector.extract_strided_slice %106 {offsets = [5, 81], sizes = [1, 81], strides = [1, 1]} : vector<8x162xf32> to vector<1x81xf32>
    %122 = vector.extract_strided_slice %106 {offsets = [6, 81], sizes = [1, 81], strides = [1, 1]} : vector<8x162xf32> to vector<1x81xf32>
    %123 = vector.extract_strided_slice %106 {offsets = [7, 81], sizes = [1, 81], strides = [1, 1]} : vector<8x162xf32> to vector<1x81xf32>
    %124 = tpu.concatenate %116, %117, %118, %119, %120, %121, %122, %123 in 1 : vector<1x81xf32>, vector<1x81xf32>, vector<1x81xf32>, vector<1x81xf32>, vector<1x81xf32>, vector<1x81xf32>, vector<1x81xf32>, vector<1x81xf32> -> vector<1x648xf32>
    %125 = tpu.concatenate %115, %124 in 0 : vector<1x648xf32>, vector<1x648xf32> -> vector<2x648xf32>
    %c0_40 = arith.constant 0 : index
    %c0_41 = arith.constant 0 : index
    %126 = vector.load %arg13[%c0_40, %c0_41] : memref<648x256xf32, #tpu.memory_space<vmem>>, vector<648x256xf32>
    %cst_42 = arith.constant dense<0.000000e+00> : vector<2x256xf32>
    %127 = tpu.matmul %125, %126, %cst_42 {dimension_numbers = #tpu.dot_dimension_numbers<[1], [0], [0], [1], [0, 0, 1, 1], [], []>} : vector<2x648xf32>, vector<648x256xf32>, vector<2x256xf32> -> vector<2x256xf32>
    %c0_43 = arith.constant 0 : index
    %c0_44 = arith.constant 0 : index
    %128 = vector.load %arg14[%c0_43, %c0_44] : memref<1x256xf32, #tpu.memory_space<vmem>>, vector<1x256xf32>
    %129 = vector.broadcast %128 : vector<1x256xf32> to vector<2x256xf32>
    %130 = arith.addf %127, %129 : vector<2x256xf32>
    %cst_45 = arith.constant 0.000000e+00 : f32
    %131 = vector.broadcast %cst_45 : f32 to vector<2x256xf32>
    %132 = arith.maximumf %130, %131 : vector<2x256xf32>
    %c0_46 = arith.constant 0 : index
    %c0_47 = arith.constant 0 : index
    %133 = vector.load %arg15[%c0_46, %c0_47] : memref<256x256xf32, #tpu.memory_space<vmem>>, vector<256x256xf32>
    %cst_48 = arith.constant dense<0.000000e+00> : vector<2x256xf32>
    %134 = tpu.matmul %132, %133, %cst_48 {dimension_numbers = #tpu.dot_dimension_numbers<[1], [0], [0], [1], [0, 0, 1, 1], [], []>} : vector<2x256xf32>, vector<256x256xf32>, vector<2x256xf32> -> vector<2x256xf32>
    %c0_49 = arith.constant 0 : index
    %c0_50 = arith.constant 0 : index
    %135 = vector.load %arg16[%c0_49, %c0_50] : memref<1x256xf32, #tpu.memory_space<vmem>>, vector<1x256xf32>
    %136 = vector.broadcast %135 : vector<1x256xf32> to vector<2x256xf32>
    %137 = arith.addf %134, %136 : vector<2x256xf32>
    %cst_51 = arith.constant 0.000000e+00 : f32
    %138 = vector.broadcast %cst_51 : f32 to vector<2x256xf32>
    %139 = arith.maximumf %137, %138 : vector<2x256xf32>
    %c0_52 = arith.constant 0 : index
    %c0_53 = arith.constant 0 : index
    %140 = vector.load %arg17[%c0_52, %c0_53] : memref<256x10xf32, #tpu.memory_space<vmem>>, vector<256x10xf32>
    %cst_54 = arith.constant dense<0.000000e+00> : vector<2x10xf32>
    %141 = tpu.matmul %139, %140, %cst_54 {dimension_numbers = #tpu.dot_dimension_numbers<[1], [0], [0], [1], [0, 0, 1, 1], [], []>} : vector<2x256xf32>, vector<256x10xf32>, vector<2x10xf32> -> vector<2x10xf32>
    %c0_55 = arith.constant 0 : index
    %c0_56 = arith.constant 0 : index
    %142 = vector.load %arg18[%c0_55, %c0_56] : memref<1x10xf32, #tpu.memory_space<vmem>>, vector<1x10xf32>
    %143 = vector.broadcast %142 : vector<1x10xf32> to vector<2x10xf32>
    %144 = arith.addf %141, %143 : vector<2x10xf32>
    %c0_57 = arith.constant 0 : index
    %c0_58 = arith.constant 0 : index
    %145 = vector.load %arg19[%c0_57, %c0_58] : memref<2x10xf32, #tpu.memory_space<vmem>>, vector<2x10xf32>
    tpu.vector_store %arg19[%c0_57, %c0_58], %144 {strides = array<i32>} : memref<2x10xf32, #tpu.memory_space<vmem>>, vector<2x10xf32>,
    return
  }
}

</mosaic_0001>

<llo_original>
// kernel: yannet_forward.1
$region0: #{yannet_forward.1}
  #allocation0 [shape = 'u32[]', space=smem, size = 0x4, offset = 0x4, fixed_abs, tag = 'smem constant byte address 0x4 - core index']
  #allocation1 [shape = 'u32[144,128]{1,0:T(1,128)}', space=vmem, size = 0x12000, scoped, tag = 'internal scratch']
  %s0 = inlined_call_operand.vmem [shape: f32[1,1800], index: 0, kind: input, shape index: {}]
  %s1 = inlined_call_operand.hbm [shape: f32[8,9], index: 1, kind: input, shape index: {}]
  %s2 = inlined_call_operand.vmem [shape: f32[8,1], index: 2, kind: input, shape index: {}]
  %s3 = inlined_call_operand.hbm [shape: f32[16,72], index: 3, kind: input, shape index: {}]
  %s4 = inlined_call_operand.vmem [shape: f32[16,1], index: 4, kind: input, shape index: {}]
  %s5 = inlined_call_operand.hbm [shape: f32[16,144], index: 5, kind: input, shape index: {}]
  %s6 = inlined_call_operand.vmem [shape: f32[16,1], index: 6, kind: input, shape index: {}]
  %s7 = inlined_call_operand.hbm [shape: f32[8,144], index: 7, kind: input, shape index: {}]
  %s8 = inlined_call_operand.vmem [shape: f32[8,1], index: 8, kind: input, shape index: {}]
  %s9 = inlined_call_operand.hbm [shape: f32[1,1800], index: 9, kind: input, shape index: {}]
  %s10 = inlined_call_operand.hbm [shape: f32[1,512], index: 10, kind: input, shape index: {}]
  %s11 = inlined_call_operand.hbm [shape: f32[1800,512], index: 11, kind: input, shape index: {}]
  %s12 = inlined_call_operand.vmem [shape: f32[512,162], index: 12, kind: input, shape index: {}]
  %s13 = inlined_call_operand.hbm [shape: f32[648,256], index: 13, kind: input, shape index: {}]
  %s14 = inlined_call_operand.hbm [shape: f32[1,256], index: 14, kind: input, shape index: {}]
  %s15 = inlined_call_operand.hbm [shape: f32[256,256], index: 15, kind: input, shape index: {}]
  %s16 = inlined_call_operand.hbm [shape: f32[1,256], index: 16, kind: input, shape index: {}]
  %s17 = inlined_call_operand.vmem [shape: f32[256,10], index: 17, kind: input, shape index: {}]
  %s18 = inlined_call_operand.hbm [shape: f32[1,10], index: 18, kind: input, shape index: {}]
  %s19 = inlined_call_operand.hbm [shape: f32[2,10], index: 19, kind: output, shape index: {}]
  %s20 = sld [smem:[#allocation0]]
  $region134: #{yannet_forward.1} parent=0
    _
  %s22 = ssub.s32 1, %s20
  %s23 = scalar_select 0, %s22, %s20
  $region1: #{yannet_forward.1} parent=0
    #allocation2 [shape = 'u8[4096]{0}', space=vmem, size = 0x1000, scoped, tag = 'input window, operand 1, single buffered']
    #allocation3 [shape = 's32[1]{0}', space=sflag, size = 0x4, scoped, tag = 'scoped memory for yannet_forward.1']
    #allocation4 [shape = 's32[1]{0}', space=sflag, size = 0x4, scoped, tag = 'scoped memory for yannet_forward.1']
    #allocation5 [shape = 'u8[8192]{0}', space=vmem, size = 0x2000, scoped, tag = 'input window, operand 3, single buffered']
    #allocation6 [shape = 's32[1]{0}', space=sflag, size = 0x4, scoped, tag = 'scoped memory for yannet_forward.1']
    #allocation7 [shape = 'u8[16384]{0}', space=vmem, size = 0x4000, scoped, tag = 'input window, operand 5, single buffered']
    #allocation8 [shape = 'u8[8192]{0}', space=vmem, size = 0x2000, scoped, tag = 'input window, operand 7, single buffered']
    #allocation9 [shape = 's32[1]{0}', space=sflag, size = 0x4, scoped, tag = 'scoped memory for yannet_forward.1']
    #allocation10 [shape = 'u8[7680]{0}', space=vmem, size = 0x2000, scoped, tag = 'input window, operand 9, single buffered']
    #allocation11 [shape = 'u8[2048]{0}', space=vmem, size = 0x800, scoped, tag = 'input window, operand 10, single buffered']
    #allocation12 [shape = 's32[1]{0}', space=sflag, size = 0x4, scoped, tag = 'scoped memory for yannet_forward.1']
    #allocation13 [shape = 'u8[3686400]{0}', space=vmem, size = 0x384000, scoped, tag = 'input window, operand 11, single buffered']
    #allocation14 [shape = 'u8[663552]{0}', space=vmem, size = 0xa2000, scoped, tag = 'input window, operand 13, single buffered']
    #allocation15 [shape = 's32[1]{0}', space=sflag, size = 0x4, scoped, tag = 'scoped memory for yannet_forward.1']
    #allocation16 [shape = 'u8[1024]{0}', space=vmem, size = 0x400, scoped, tag = 'input window, operand 14, single buffered']
    #allocation17 [shape = 'u8[262144]{0}', space=vmem, size = 0x40000, scoped, tag = 'input window, operand 15, single buffered']
    #allocation18 [shape = 's32[1]{0}', space=sflag, size = 0x4, scoped, tag = 'scoped memory for yannet_forward.1']
    #allocation19 [shape = 'u8[1024]{0}', space=vmem, size = 0x400, scoped, tag = 'input window, operand 16, single buffered']
    #allocation20 [shape = 'u8[512]{0}', space=vmem, size = 0x400, scoped, tag = 'input window, operand 18, single buffered']
    #allocation21 [shape = 's32[1]{0}', space=sflag, size = 0x4, scoped, tag = 'scoped memory for yannet_forward.1']
    #allocation22 [shape = 'u8[1024]{0}', space=vmem, size = 0x400, scoped, tag = 'output window, operand 0, single buffered']
    %24 = vsyncpa [#allocation3], 0
    %25 = vsyncpa [#allocation6], 0
    %26 = vsyncpa [#allocation9], 0
    %27 = vsyncpa [#allocation12], 0
    %28 = vsyncpa [#allocation15], 0
    %29 = vsyncpa [#allocation18], 0
    %30 = vsyncpa [#allocation21], 0
    %31 = vsyncpa [#allocation4], 0
    // Predicated region
    $region2: #{yannet_forward.1} parent=1 // pred_check
      _
    $region3: #{yannet_forward.1} parent=1 // pred_check_branch
      %33 = sbr.rel (0) target = $region5
    $region4: #{yannet_forward.1} parent=1 // pred_region
      _
    $region5: #{yannet_forward.1} parent=1 // pred_fallthru
      _
    // Predicated region
    $region6: #{yannet_forward.1} parent=1 // pred_check
      _
    $region7: #{yannet_forward.1} parent=1 // pred_check_branch
      %35 = sbr.rel (0) target = $region9
    $region8: #{yannet_forward.1} parent=1 // pred_region
      %s37 = ssub.s32 128, 128
      %38 = vsyncadd [#allocation3], %s37
      %s40 = sshll.u32 [#allocation2], 4
      %s41 = int_to_ptr.vmem [resolvable:$true] %s40
      %43 = dma.hbm_to_vmem [thread:$0]  %s1, 128, %s41, [#allocation3]
    $region9: #{yannet_forward.1} parent=1 // pred_fallthru
      _
    // Predicated region
    $region10: #{yannet_forward.1} parent=1 // pred_check
      _
    $region11: #{yannet_forward.1} parent=1 // pred_check_branch
      %45 = sbr.rel (0) target = $region13
    $region12: #{yannet_forward.1} parent=1 // pred_region
      _
    $region13: #{yannet_forward.1} parent=1 // pred_fallthru
      _
    // Predicated region
    $region14: #{yannet_forward.1} parent=1 // pred_check
      _
    $region15: #{yannet_forward.1} parent=1 // pred_check_branch
      %47 = sbr.rel (0) target = $region17
    $region16: #{yannet_forward.1} parent=1 // pred_region
      %s49 = ssub.s32 256, 256
      %50 = vsyncadd [#allocation6], %s49
      %s51 = sshll.u32 [#allocation5], 4
      %s52 = int_to_ptr.vmem [resolvable:$true] %s51
      %57 = dma.hbm_to_vmem [thread:$0]  %s3, 256, %s52, [#allocation6], 128, 128, 8
    $region17: #{yannet_forward.1} parent=1 // pred_fallthru
      _
    // Predicated region
    $region18: #{yannet_forward.1} parent=1 // pred_check
      _
    $region19: #{yannet_forward.1} parent=1 // pred_check_branch
      %59 = sbr.rel (0) target = $region21
    $region20: #{yannet_forward.1} parent=1 // pred_region
      _
    $region21: #{yannet_forward.1} parent=1 // pred_fallthru
      _
    // Predicated region
    $region22: #{yannet_forward.1} parent=1 // pred_check
      _
    $region23: #{yannet_forward.1} parent=1 // pred_check_branch
      %61 = sbr.rel (0) target = $region25
    $region24: #{yannet_forward.1} parent=1 // pred_region
      %s63 = ssub.s32 512, 512
      %64 = vsyncadd [#allocation6], %s63
      %s65 = sshll.u32 [#allocation7], 4
      %s66 = int_to_ptr.vmem [resolvable:$true] %s65
      %71 = dma.hbm_to_vmem [thread:$0]  %s5, 512, %s66, [#allocation6], 256, 256, 16
    $region25: #{yannet_forward.1} parent=1 // pred_fallthru
      _
    // Predicated region
    $region26: #{yannet_forward.1} parent=1 // pred_check
      _
    $region27: #{yannet_forward.1} parent=1 // pred_check_branch
      %73 = sbr.rel (0) target = $region29
    $region28: #{yannet_forward.1} parent=1 // pred_region
      _
    $region29: #{yannet_forward.1} parent=1 // pred_fallthru
      _
    // Predicated region
    $region30: #{yannet_forward.1} parent=1 // pred_check
      _
    $region31: #{yannet_forward.1} parent=1 // pred_check_branch
      %75 = sbr.rel (0) target = $region33
    $region32: #{yannet_forward.1} parent=1 // pred_region
      %s77 = ssub.s32 256, 256
      %78 = vsyncadd [#allocation9], %s77
      %s80 = sshll.u32 [#allocation8], 4
      %s81 = int_to_ptr.vmem [resolvable:$true] %s80
      %83 = dma.hbm_to_vmem [thread:$0]  %s7, 256, %s81, [#allocation9]
    $region33: #{yannet_forward.1} parent=1 // pred_fallthru
      _
    // Predicated region
    $region34: #{yannet_forward.1} parent=1 // pred_check
      _
    $region35: #{yannet_forward.1} parent=1 // pred_check_branch
      %85 = sbr.rel (0) target = $region37
    $region36: #{yannet_forward.1} parent=1 // pred_region
      _
    $region37: #{yannet_forward.1} parent=1 // pred_fallthru
      _
    // Predicated region
    $region38: #{yannet_forward.1} parent=1 // pred_check
      _
    $region39: #{yannet_forward.1} parent=1 // pred_check_branch
      %87 = sbr.rel (0) target = $region41
    $region40: #{yannet_forward.1} parent=1 // pred_region
      %s89 = ssub.s32 240, 240
      %90 = vsyncadd [#allocation9], %s89
      %s92 = sshll.u32 [#allocation10], 4
      %s93 = int_to_ptr.vmem [resolvable:$true] %s92
      %95 = dma.hbm_to_vmem [thread:$0]  %s9, 240, %s93, [#allocation9]
    $region41: #{yannet_forward.1} parent=1 // pred_fallthru
      _
    // Predicated region
    $region42: #{yannet_forward.1} parent=1 // pred_check
      _
    $region43: #{yannet_forward.1} parent=1 // pred_check_branch
      %97 = sbr.rel (0) target = $region45
    $region44: #{yannet_forward.1} parent=1 // pred_region
      %s99 = ssub.s32 64, 64
      %100 = vsyncadd [#allocation12], %s99
      %s102 = sshll.u32 [#allocation11], 4
      %s103 = int_to_ptr.vmem [resolvable:$true] %s102
      %105 = dma.hbm_to_vmem [thread:$0]  %s10, 64, %s103, [#allocation12]
    $region45: #{yannet_forward.1} parent=1 // pred_fallthru
      _
    // Predicated region
    $region46: #{yannet_forward.1} parent=1 // pred_check
      _
    $region47: #{yannet_forward.1} parent=1 // pred_check_branch
      %107 = sbr.rel (0) target = $region49
    $region48: #{yannet_forward.1} parent=1 // pred_region
      %s109 = ssub.s32 115200, 115200
      %110 = vsyncadd [#allocation12], %s109
      %s111 = sshll.u32 [#allocation13], 4
      %s112 = int_to_ptr.vmem [resolvable:$true] %s111
      %117 = dma.hbm_to_vmem [thread:$0]  %s11, 115200, %s112, [#allocation12], 512, 512, 32
    $region49: #{yannet_forward.1} parent=1 // pred_fallthru
      _
    // Predicated region
    $region50: #{yannet_forward.1} parent=1 // pred_check
      _
    $region51: #{yannet_forward.1} parent=1 // pred_check_branch
      %119 = sbr.rel (0) target = $region53
    $region52: #{yannet_forward.1} parent=1 // pred_region
      _
    $region53: #{yannet_forward.1} parent=1 // pred_fallthru
      _
    // Predicated region
    $region54: #{yannet_forward.1} parent=1 // pred_check
      _
    $region55: #{yannet_forward.1} parent=1 // pred_check_branch
      %121 = sbr.rel (0) target = $region57
    $region56: #{yannet_forward.1} parent=1 // pred_region
      %s123 = ssub.s32 20736, 20736
      %124 = vsyncadd [#allocation15], %s123
      %s125 = sshll.u32 [#allocation14], 4
      %s126 = int_to_ptr.vmem [resolvable:$true] %s125
      %131 = dma.hbm_to_vmem [thread:$0]  %s13, 20736, %s126, [#allocation15], 256, 256, 16
    $region57: #{yannet_forward.1} parent=1 // pred_fallthru
      _
    // Predicated region
    $region58: #{yannet_forward.1} parent=1 // pred_check
      _
    $region59: #{yannet_forward.1} parent=1 // pred_check_branch
      %133 = sbr.rel (0) target = $region61
    $region60: #{yannet_forward.1} parent=1 // pred_region
      %s135 = ssub.s32 32, 32
      %136 = vsyncadd [#allocation15], %s135
      %s138 = sshll.u32 [#allocation16], 4
      %s139 = int_to_ptr.vmem [resolvable:$true] %s138
      %141 = dma.hbm_to_vmem [thread:$0]  %s14, 32, %s139, [#allocation15]
    $region61: #{yannet_forward.1} parent=1 // pred_fallthru
      _
    // Predicated region
    $region62: #{yannet_forward.1} parent=1 // pred_check
      _
    $region63: #{yannet_forward.1} parent=1 // pred_check_branch
      %143 = sbr.rel (0) target = $region65
    $region64: #{yannet_forward.1} parent=1 // pred_region
      %s145 = ssub.s32 8192, 8192
      %146 = vsyncadd [#allocation18], %s145
      %s147 = sshll.u32 [#allocation17], 4
      %s148 = int_to_ptr.vmem [resolvable:$true] %s147
      %153 = dma.hbm_to_vmem [thread:$0]  %s15, 8192, %s148, [#allocation18], 256, 256, 16
    $region65: #{yannet_forward.1} parent=1 // pred_fallthru
      _
    // Predicated region
    $region66: #{yannet_forward.1} parent=1 // pred_check
      _
    $region67: #{yannet_forward.1} parent=1 // pred_check_branch
      %155 = sbr.rel (0) target = $region69
    $region68: #{yannet_forward.1} parent=1 // pred_region
      %s157 = ssub.s32 32, 32
      %158 = vsyncadd [#allocation18], %s157
      %s160 = sshll.u32 [#allocation19], 4
      %s161 = int_to_ptr.vmem [resolvable:$true] %s160
      %163 = dma.hbm_to_vmem [thread:$0]  %s16, 32, %s161, [#allocation18]
    $region69: #{yannet_forward.1} parent=1 // pred_fallthru
      _
    // Predicated region
    $region70: #{yannet_forward.1} parent=1 // pred_check
      _
    $region71: #{yannet_forward.1} parent=1 // pred_check_branch
      %165 = sbr.rel (0) target = $region73
    $region72: #{yannet_forward.1} parent=1 // pred_region
      _
    $region73: #{yannet_forward.1} parent=1 // pred_fallthru
      _
    // Predicated region
    $region74: #{yannet_forward.1} parent=1 // pred_check
      _
    $region75: #{yannet_forward.1} parent=1 // pred_check_branch
      %167 = sbr.rel (0) target = $region77
    $region76: #{yannet_forward.1} parent=1 // pred_region
      %s169 = ssub.s32 16, 16
      %170 = vsyncadd [#allocation21], %s169
      %s172 = sshll.u32 [#allocation20], 4
      %s173 = int_to_ptr.vmem [resolvable:$true] %s172
      %175 = dma.hbm_to_vmem [thread:$0]  %s18, 16, %s173, [#allocation21]
    $region77: #{yannet_forward.1} parent=1 // pred_fallthru
      _
    // Predicated region
    $region78: #{yannet_forward.1} parent=1 // pred_check
      _
    $region79: #{yannet_forward.1} parent=1 // pred_check_branch
      %177 = sbr.rel (0) target = $region81
    $region80: #{yannet_forward.1} parent=1 // pred_region
      %178 = dma.done [#allocation3], 128
    $region81: #{yannet_forward.1} parent=1 // pred_fallthru
      _
    // Predicated region
    $region82: #{yannet_forward.1} parent=1 // pred_check
      _
    $region83: #{yannet_forward.1} parent=1 // pred_check_branch
      %180 = sbr.rel (0) target = $region85
    $region84: #{yannet_forward.1} parent=1 // pred_region
      %181 = dma.done [#allocation6], 256
    $region85: #{yannet_forward.1} parent=1 // pred_fallthru
      _
    // Predicated region
    $region86: #{yannet_forward.1} parent=1 // pred_check
      _
    $region87: #{yannet_forward.1} parent=1 // pred_check_branch
      %183 = sbr.rel (0) target = $region89
    $region88: #{yannet_forward.1} parent=1 // pred_region
      %184 = dma.done [#allocation6], 512
    $region89: #{yannet_forward.1} parent=1 // pred_fallthru
      _
    // Predicated region
    $region90: #{yannet_forward.1} parent=1 // pred_check
      _
    $region91: #{yannet_forward.1} parent=1 // pred_check_branch
      %186 = sbr.rel (0) target = $region93
    $region92: #{yannet_forward.1} parent=1 // pred_region
      %187 = dma.done [#allocation9], 256
    $region93: #{yannet_forward.1} parent=1 // pred_fallthru
      _
    // Predicated region
    $region94: #{yannet_forward.1} parent=1 // pred_check
      _
    $region95: #{yannet_forward.1} parent=1 // pred_check_branch
      %189 = sbr.rel (0) target = $region97
    $region96: #{yannet_forward.1} parent=1 // pred_region
      %190 = dma.done [#allocation9], 240
    $region97: #{yannet_forward.1} parent=1 // pred_fallthru
      _
    // Predicated region
    $region98: #{yannet_forward.1} parent=1 // pred_check
      _
    $region99: #{yannet_forward.1} parent=1 // pred_check_branch
      %192 = sbr.rel (0) target = $region101
    $region100: #{yannet_forward.1} parent=1 // pred_region
      %193 = dma.done [#allocation12], 64
    $region101: #{yannet_forward.1} parent=1 // pred_fallthru
      _
    // Predicated region
    $region102: #{yannet_forward.1} parent=1 // pred_check
      _
    $region103: #{yannet_forward.1} parent=1 // pred_check_branch
      %195 = sbr.rel (0) target = $region105
    $region104: #{yannet_forward.1} parent=1 // pred_region
      %196 = dma.done [#allocation12], 115200
    $region105: #{yannet_forward.1} parent=1 // pred_fallthru
      _
    // Predicated region
    $region106: #{yannet_forward.1} parent=1 // pred_check
      _
    $region107: #{yannet_forward.1} parent=1 // pred_check_branch
      %198 = sbr.rel (0) target = $region109
    $region108: #{yannet_forward.1} parent=1 // pred_region
      %199 = dma.done [#allocation15], 20736
    $region109: #{yannet_forward.1} parent=1 // pred_fallthru
      _
    // Predicated region
    $region110: #{yannet_forward.1} parent=1 // pred_check
      _
    $region111: #{yannet_forward.1} parent=1 // pred_check_branch
      %201 = sbr.rel (0) target = $region113
    $region112: #{yannet_forward.1} parent=1 // pred_region
      %202 = dma.done [#allocation15], 32
    $region113: #{yannet_forward.1} parent=1 // pred_fallthru
      _
    // Predicated region
    $region114: #{yannet_forward.1} parent=1 // pred_check
      _
    $region115: #{yannet_forward.1} parent=1 // pred_check_branch
      %204 = sbr.rel (0) target = $region117
    $region116: #{yannet_forward.1} parent=1 // pred_region
      %205 = dma.done [#allocation18], 8192
    $region117: #{yannet_forward.1} parent=1 // pred_fallthru
      _
    // Predicated region
    $region118: #{yannet_forward.1} parent=1 // pred_check
      _
    $region119: #{yannet_forward.1} parent=1 // pred_check_branch
      %207 = sbr.rel (0) target = $region121
    $region120: #{yannet_forward.1} parent=1 // pred_region
      %208 = dma.done [#allocation18], 32
    $region121: #{yannet_forward.1} parent=1 // pred_fallthru
      _
    // Predicated region
    $region122: #{yannet_forward.1} parent=1 // pred_check
      _
    $region123: #{yannet_forward.1} parent=1 // pred_check_branch
      %210 = sbr.rel (0) target = $region125
    $region124: #{yannet_forward.1} parent=1 // pred_region
      %211 = dma.done [#allocation21], 16
    $region125: #{yannet_forward.1} parent=1 // pred_fallthru
      _
    %v212 = vld [vmem:[#allocation10] sm:$0xff]
    %v213 = vld [vmem:[#allocation10 + $0x8] sm:$0x7f]
    %v214 = vld [vmem:[#allocation11] sm:$0xf]
    %v215 = vld [vmem:[%s0] sm:$0xff]
    %v216 = vld [vmem:[%s0 + $0x8] sm:$0x7f]
    %v219 = vlaneseq
    %v220 = vshrl.u32 %v219, 7
    %v221 = vsub.s32 0, %v220
    %v222 = vrot.slane %v215, %v221
    %v223 = vlaneseq
    %v224 = vshrl.u32 %v223, 7
    %v225 = vsub.s32 1, %v224
    %v226 = vrot.slane %v215, %v225
    %v227 = vlaneseq
    %v228 = vshrl.u32 %v227, 7
    %v229 = vsub.s32 2, %v228
    %v230 = vrot.slane %v215, %v229
    %v231 = vlaneseq
    %v232 = vshrl.u32 %v231, 7
    %v233 = vsub.s32 3, %v232
    %v234 = vrot.slane %v215, %v233
    %v235 = vlaneseq
    %v236 = vshrl.u32 %v235, 7
    %v237 = vsub.s32 4, %v236
    %v238 = vrot.slane %v215, %v237
    %v239 = vlaneseq
    %v240 = vshrl.u32 %v239, 7
    %v241 = vsub.s32 5, %v240
    %v242 = vrot.slane %v215, %v241
    %v243 = vlaneseq
    %v244 = vshrl.u32 %v243, 7
    %v245 = vsub.s32 6, %v244
    %v246 = vrot.slane %v215, %v245
    %v247 = vlaneseq
    %v248 = vshrl.u32 %v247, 7
    %v249 = vsub.s32 7, %v248
    %v250 = vrot.slane %v215, %v249
    %v251 = vlaneseq
    %v252 = vshrl.u32 %v251, 7
    %v253 = vsub.s32 0, %v252
    %v254 = vrot.slane %v216, %v253
    %v255 = vlaneseq
    %v256 = vshrl.u32 %v255, 7
    %v257 = vsub.s32 1, %v256
    %v258 = vrot.slane %v216, %v257
    %v259 = vlaneseq
    %v260 = vshrl.u32 %v259, 7
    %v261 = vsub.s32 2, %v260
    %v262 = vrot.slane %v216, %v261
    %v263 = vlaneseq
    %v264 = vshrl.u32 %v263, 7
    %v265 = vsub.s32 3, %v264
    %v266 = vrot.slane %v216, %v265
    %v267 = vlaneseq
    %v268 = vshrl.u32 %v267, 7
    %v269 = vsub.s32 4, %v268
    %v270 = vrot.slane %v216, %v269
    %v271 = vlaneseq
    %v272 = vshrl.u32 %v271, 7
    %v273 = vsub.s32 5, %v272
    %v274 = vrot.slane %v216, %v273
    %v275 = vlaneseq
    %v276 = vshrl.u32 %v275, 7
    %v277 = vsub.s32 6, %v276
    %v278 = vrot.slane %v216, %v277
    %279 = vrot.lane.b32.xlu0 %v222, 31
    %v280 = vpop.permute.xlu0 %279
    %281 = vrot.lane.b32.xlu0 %v226, 31
    %v282 = vpop.permute.xlu0 %281
    %283 = vrot.lane.b32.xlu0 %v230, 31
    %v284 = vpop.permute.xlu0 %283
    %285 = vrot.lane.b32.xlu0 %v234, 31
    %v286 = vpop.permute.xlu0 %285
    %287 = vrot.lane.b32.xlu0 %v238, 31
    %v288 = vpop.permute.xlu0 %287
    %289 = vrot.lane.b32.xlu0 %v242, 31
    %v290 = vpop.permute.xlu0 %289
    %291 = vrot.lane.b32.xlu0 %v246, 31
    %v292 = vpop.permute.xlu0 %291
    %293 = vrot.lane.b32.xlu0 %v250, 31
    %v294 = vpop.permute.xlu0 %293
    %295 = vrot.lane.b32.xlu0 %v254, 31
    %v296 = vpop.permute.xlu0 %295
    %297 = vrot.lane.b32.xlu0 %v258, 31
    %v298 = vpop.permute.xlu0 %297
    %299 = vrot.lane.b32.xlu0 %v262, 31
    %v300 = vpop.permute.xlu0 %299
    %301 = vrot.lane.b32.xlu0 %v266, 31
    %v302 = vpop.permute.xlu0 %301
    %303 = vrot.lane.b32.xlu0 %v270, 31
    %v304 = vpop.permute.xlu0 %303
    %305 = vrot.lane.b32.xlu0 %v274, 31
    %v306 = vpop.permute.xlu0 %305
    %307 = vrot.lane.b32.xlu0 %v278, 31
    %v308 = vpop.permute.xlu0 %307
    %vm309 = vcmask 252928
    %v310 = vsel %vm309, %v280, %v282
    %v311 = vsel %vm309, %v282, %v284
    %v312 = vsel %vm309, %v284, %v286
    %v313 = vsel %vm309, %v286, %v288
    %v314 = vsel %vm309, %v288, %v290
    %v315 = vsel %vm309, %v290, %v292
    %v316 = vsel %vm309, %v292, %v294
    %v317 = vsel %vm309, %v294, %v296
    %v318 = vsel %vm309, %v296, %v298
    %v319 = vsel %vm309, %v298, %v300
    %v320 = vsel %vm309, %v300, %v302
    %v321 = vsel %vm309, %v302, %v304
    %v322 = vsel %vm309, %v304, %v306
    %v323 = vsel %vm309, %v306, %v308
    %v339 = vsel %vm309, 0.0, %v280
    %vm340 = vcmask 318464
    %v341 = vsel %vm340, %v323, 0.0
    %v344 = vrot.slane %v339, 7
    %v345 = vrot.slane %v310, 7
    %v346 = vrot.slane %v311, 7
    %v347 = vrot.slane %v312, 7
    %v348 = vrot.slane %v313, 7
    %v349 = vrot.slane %v314, 7
    %v350 = vrot.slane %v315, 7
    %v351 = vrot.slane %v316, 7
    %v352 = vrot.slane %v317, 7
    %v353 = vrot.slane %v318, 7
    %v354 = vrot.slane %v319, 7
    %v355 = vrot.slane %v320, 7
    %v356 = vrot.slane %v321, 7
    %v357 = vrot.slane %v322, 7
    %v358 = vrot.slane %v341, 7
    %359 = vrot.lane.b32.xlu0 %v344, 127
    %v360 = vpop.permute.xlu0 %359
    %361 = vrot.lane.b32.xlu0 %v345, 127
    %v362 = vpop.permute.xlu0 %361
    %363 = vrot.lane.b32.xlu0 %v346, 127
    %v364 = vpop.permute.xlu0 %363
    %365 = vrot.lane.b32.xlu0 %v347, 127
    %v366 = vpop.permute.xlu0 %365
    %367 = vrot.lane.b32.xlu0 %v348, 127
    %v368 = vpop.permute.xlu0 %367
    %369 = vrot.lane.b32.xlu0 %v349, 127
    %v370 = vpop.permute.xlu0 %369
    %371 = vrot.lane.b32.xlu0 %v350, 127
    %v372 = vpop.permute.xlu0 %371
    %373 = vrot.lane.b32.xlu0 %v351, 127
    %v374 = vpop.permute.xlu0 %373
    %375 = vrot.lane.b32.xlu0 %v352, 127
    %v376 = vpop.permute.xlu0 %375
    %377 = vrot.lane.b32.xlu0 %v353, 127
    %v378 = vpop.permute.xlu0 %377
    %379 = vrot.lane.b32.xlu0 %v354, 127
    %v380 = vpop.permute.xlu0 %379
    %381 = vrot.lane.b32.xlu0 %v355, 127
    %v382 = vpop.permute.xlu0 %381
    %383 = vrot.lane.b32.xlu0 %v356, 127
    %v384 = vpop.permute.xlu0 %383
    %385 = vrot.lane.b32.xlu0 %v357, 127
    %v386 = vpop.permute.xlu0 %385
    %387 = vrot.lane.b32.xlu0 %v358, 127
    %v388 = vpop.permute.xlu0 %387
    %vm389 = vcmask 1039360
    %v390 = vsel %vm389, %v360, %v362
    %v391 = vsel %vm389, %v362, %v364
    %v392 = vsel %vm389, %v364, %v366
    %v393 = vsel %vm389, %v366, %v368
    %v394 = vsel %vm389, %v368, %v370
    %v395 = vsel %vm389, %v370, %v372
    %v396 = vsel %vm389, %v372, %v374
    %v397 = vsel %vm389, %v374, %v376
    %v398 = vsel %vm389, %v376, %v378
    %v399 = vsel %vm389, %v378, %v380
    %v400 = vsel %vm389, %v380, %v382
    %v401 = vsel %vm389, %v382, %v384
    %v402 = vsel %vm389, %v384, %v386
    %v403 = vsel %vm389, %v386, %v388
    %v419 = vrot.slane %v339, 6
    %v420 = vrot.slane %v310, 6
    %v421 = vrot.slane %v311, 6
    %v422 = vrot.slane %v312, 6
    %v423 = vrot.slane %v313, 6
    %v424 = vrot.slane %v314, 6
    %v425 = vrot.slane %v315, 6
    %v426 = vrot.slane %v316, 6
    %v427 = vrot.slane %v317, 6
    %v428 = vrot.slane %v318, 6
    %v429 = vrot.slane %v319, 6
    %v430 = vrot.slane %v320, 6
    %v431 = vrot.slane %v321, 6
    %v432 = vrot.slane %v322, 6
    %v433 = vrot.slane %v341, 6
    %434 = vrot.lane.b32.xlu0 %v419, 126
    %v435 = vpop.permute.xlu0 %434
    %436 = vrot.lane.b32.xlu0 %v420, 126
    %v437 = vpop.permute.xlu0 %436
    %438 = vrot.lane.b32.xlu0 %v421, 126
    %v439 = vpop.permute.xlu0 %438
    %440 = vrot.lane.b32.xlu0 %v422, 126
    %v441 = vpop.permute.xlu0 %440
    %442 = vrot.lane.b32.xlu0 %v423, 126
    %v443 = vpop.permute.xlu0 %442
    %444 = vrot.lane.b32.xlu0 %v424, 126
    %v445 = vpop.permute.xlu0 %444
    %446 = vrot.lane.b32.xlu0 %v425, 126
    %v447 = vpop.permute.xlu0 %446
    %448 = vrot.lane.b32.xlu0 %v426, 126
    %v449 = vpop.permute.xlu0 %448
    %450 = vrot.lane.b32.xlu0 %v427, 126
    %v451 = vpop.permute.xlu0 %450
    %452 = vrot.lane.b32.xlu0 %v428, 126
    %v453 = vpop.permute.xlu0 %452
    %454 = vrot.lane.b32.xlu0 %v429, 126
    %v455 = vpop.permute.xlu0 %454
    %456 = vrot.lane.b32.xlu0 %v430, 126
    %v457 = vpop.permute.xlu0 %456
    %458 = vrot.lane.b32.xlu0 %v431, 126
    %v459 = vpop.permute.xlu0 %458
    %460 = vrot.lane.b32.xlu0 %v432, 126
    %v461 = vpop.permute.xlu0 %460
    %462 = vrot.lane.b32.xlu0 %v433, 126
    %v463 = vpop.permute.xlu0 %462
    %vm464 = vcmask 1031168
    %v465 = vsel %vm464, %v435, %v437
    %v466 = vsel %vm464, %v437, %v439
    %v467 = vsel %vm464, %v439, %v441
    %v468 = vsel %vm464, %v441, %v443
    %v469 = vsel %vm464, %v443, %v445
    %v470 = vsel %vm464, %v445, %v447
    %v471 = vsel %vm464, %v447, %v449
    %v472 = vsel %vm464, %v449, %v451
    %v473 = vsel %vm464, %v451, %v453
    %v474 = vsel %vm464, %v453, %v455
    %v475 = vsel %vm464, %v455, %v457
    %v476 = vsel %vm464, %v457, %v459
    %v477 = vsel %vm464, %v459, %v461
    %v478 = vsel %vm464, %v461, %v463
    %v494 = vrot.slane %v339, 5
    %v495 = vrot.slane %v310, 5
    %v496 = vrot.slane %v311, 5
    %v497 = vrot.slane %v312, 5
    %v498 = vrot.slane %v313, 5
    %v499 = vrot.slane %v314, 5
    %v500 = vrot.slane %v315, 5
    %v501 = vrot.slane %v316, 5
    %v502 = vrot.slane %v317, 5
    %v503 = vrot.slane %v318, 5
    %v504 = vrot.slane %v319, 5
    %v505 = vrot.slane %v320, 5
    %v506 = vrot.slane %v321, 5
    %v507 = vrot.slane %v322, 5
    %v508 = vrot.slane %v341, 5
    %509 = vrot.lane.b32.xlu0 %v494, 98
    %v510 = vpop.permute.xlu0 %509
    %511 = vrot.lane.b32.xlu0 %v495, 98
    %v512 = vpop.permute.xlu0 %511
    %513 = vrot.lane.b32.xlu0 %v496, 98
    %v514 = vpop.permute.xlu0 %513
    %515 = vrot.lane.b32.xlu0 %v497, 98
    %v516 = vpop.permute.xlu0 %515
    %517 = vrot.lane.b32.xlu0 %v498, 98
    %v518 = vpop.permute.xlu0 %517
    %519 = vrot.lane.b32.xlu0 %v499, 98
    %v520 = vpop.permute.xlu0 %519
    %521 = vrot.lane.b32.xlu0 %v500, 98
    %v522 = vpop.permute.xlu0 %521
    %523 = vrot.lane.b32.xlu0 %v501, 98
    %v524 = vpop.permute.xlu0 %523
    %525 = vrot.lane.b32.xlu0 %v502, 98
    %v526 = vpop.permute.xlu0 %525
    %527 = vrot.lane.b32.xlu0 %v503, 98
    %v528 = vpop.permute.xlu0 %527
    %529 = vrot.lane.b32.xlu0 %v504, 98
    %v530 = vpop.permute.xlu0 %529
    %531 = vrot.lane.b32.xlu0 %v505, 98
    %v532 = vpop.permute.xlu0 %531
    %533 = vrot.lane.b32.xlu0 %v506, 98
    %v534 = vpop.permute.xlu0 %533
    %535 = vrot.lane.b32.xlu0 %v507, 98
    %v536 = vpop.permute.xlu0 %535
    %537 = vrot.lane.b32.xlu0 %v508, 98
    %v538 = vpop.permute.xlu0 %537
    %vm539 = vcmask 801792
    %v540 = vsel %vm539, %v510, %v512
    %v541 = vsel %vm539, %v512, %v514
    %v542 = vsel %vm539, %v514, %v516
    %v543 = vsel %vm539, %v516, %v518
    %v544 = vsel %vm539, %v518, %v520
    %v545 = vsel %vm539, %v520, %v522
    %v546 = vsel %vm539, %v522, %v524
    %v547 = vsel %vm539, %v524, %v526
    %v548 = vsel %vm539, %v526, %v528
    %v549 = vsel %vm539, %v528, %v530
    %v550 = vsel %vm539, %v530, %v532
    %v551 = vsel %vm539, %v532, %v534
    %v552 = vsel %vm539, %v534, %v536
    %v553 = vsel %vm539, %v536, %v538
    %v569 = vrot.slane %v339, 4
    %v570 = vrot.slane %v310, 4
    %v571 = vrot.slane %v311, 4
    %v572 = vrot.slane %v312, 4
    %v573 = vrot.slane %v313, 4
    %v574 = vrot.slane %v314, 4
    %v575 = vrot.slane %v315, 4
    %v576 = vrot.slane %v316, 4
    %v577 = vrot.slane %v317, 4
    %v578 = vrot.slane %v318, 4
    %v579 = vrot.slane %v319, 4
    %v580 = vrot.slane %v320, 4
    %v581 = vrot.slane %v321, 4
    %v582 = vrot.slane %v322, 4
    %v583 = vrot.slane %v341, 4
    %584 = vrot.lane.b32.xlu0 %v569, 97
    %v585 = vpop.permute.xlu0 %584
    %586 = vrot.lane.b32.xlu0 %v570, 97
    %v587 = vpop.permute.xlu0 %586
    %588 = vrot.lane.b32.xlu0 %v571, 97
    %v589 = vpop.permute.xlu0 %588
    %590 = vrot.lane.b32.xlu0 %v572, 97
    %v591 = vpop.permute.xlu0 %590
    %592 = vrot.lane.b32.xlu0 %v573, 97
    %v593 = vpop.permute.xlu0 %592
    %594 = vrot.lane.b32.xlu0 %v574, 97
    %v595 = vpop.permute.xlu0 %594
    %596 = vrot.lane.b32.xlu0 %v575, 97
    %v597 = vpop.permute.xlu0 %596
    %598 = vrot.lane.b32.xlu0 %v576, 97
    %v599 = vpop.permute.xlu0 %598
    %600 = vrot.lane.b32.xlu0 %v577, 97
    %v601 = vpop.permute.xlu0 %600
    %602 = vrot.lane.b32.xlu0 %v578, 97
    %v603 = vpop.permute.xlu0 %602
    %604 = vrot.lane.b32.xlu0 %v579, 97
    %v605 = vpop.permute.xlu0 %604
    %606 = vrot.lane.b32.xlu0 %v580, 97
    %v607 = vpop.permute.xlu0 %606
    %608 = vrot.lane.b32.xlu0 %v581, 97
    %v609 = vpop.permute.xlu0 %608
    %610 = vrot.lane.b32.xlu0 %v582, 97
    %v611 = vpop.permute.xlu0 %610
    %612 = vrot.lane.b32.xlu0 %v583, 97
    %v613 = vpop.permute.xlu0 %612
    %vm614 = vcmask 793600
    %v615 = vsel %vm614, %v585, %v587
    %v616 = vsel %vm614, %v587, %v589
    %v617 = vsel %vm614, %v589, %v591
    %v618 = vsel %vm614, %v591, %v593
    %v619 = vsel %vm614, %v593, %v595
    %v620 = vsel %vm614, %v595, %v597
    %v621 = vsel %vm614, %v597, %v599
    %v622 = vsel %vm614, %v599, %v601
    %v623 = vsel %vm614, %v601, %v603
    %v624 = vsel %vm614, %v603, %v605
    %v625 = vsel %vm614, %v605, %v607
    %v626 = vsel %vm614, %v607, %v609
    %v627 = vsel %vm614, %v609, %v611
    %v628 = vsel %vm614, %v611, %v613
    %v644 = vrot.slane %v339, 3
    %v645 = vrot.slane %v310, 3
    %v646 = vrot.slane %v311, 3
    %v647 = vrot.slane %v312, 3
    %v648 = vrot.slane %v313, 3
    %v649 = vrot.slane %v314, 3
    %v650 = vrot.slane %v315, 3
    %v651 = vrot.slane %v316, 3
    %v652 = vrot.slane %v317, 3
    %v653 = vrot.slane %v318, 3
    %v654 = vrot.slane %v319, 3
    %v655 = vrot.slane %v320, 3
    %v656 = vrot.slane %v321, 3
    %v657 = vrot.slane %v322, 3
    %v658 = vrot.slane %v341, 3
    %659 = vrot.lane.b32.xlu0 %v644, 96
    %v660 = vpop.permute.xlu0 %659
    %661 = vrot.lane.b32.xlu0 %v645, 96
    %v662 = vpop.permute.xlu0 %661
    %663 = vrot.lane.b32.xlu0 %v646, 96
    %v664 = vpop.permute.xlu0 %663
    %665 = vrot.lane.b32.xlu0 %v647, 96
    %v666 = vpop.permute.xlu0 %665
    %667 = vrot.lane.b32.xlu0 %v648, 96
    %v668 = vpop.permute.xlu0 %667
    %669 = vrot.lane.b32.xlu0 %v649, 96
    %v670 = vpop.permute.xlu0 %669
    %671 = vrot.lane.b32.xlu0 %v650, 96
    %v672 = vpop.permute.xlu0 %671
    %673 = vrot.lane.b32.xlu0 %v651, 96
    %v674 = vpop.permute.xlu0 %673
    %675 = vrot.lane.b32.xlu0 %v652, 96
    %v676 = vpop.permute.xlu0 %675
    %677 = vrot.lane.b32.xlu0 %v653, 96
    %v678 = vpop.permute.xlu0 %677
    %679 = vrot.lane.b32.xlu0 %v654, 96
    %v680 = vpop.permute.xlu0 %679
    %681 = vrot.lane.b32.xlu0 %v655, 96
    %v682 = vpop.permute.xlu0 %681
    %683 = vrot.lane.b32.xlu0 %v656, 96
    %v684 = vpop.permute.xlu0 %683
    %685 = vrot.lane.b32.xlu0 %v657, 96
    %v686 = vpop.permute.xlu0 %685
    %687 = vrot.lane.b32.xlu0 %v658, 96
    %v688 = vpop.permute.xlu0 %687
    %vm689 = vcmask 785408
    %v690 = vsel %vm689, %v660, %v662
    %v691 = vsel %vm689, %v662, %v664
    %v692 = vsel %vm689, %v664, %v666
    %v693 = vsel %vm689, %v666, %v668
    %v694 = vsel %vm689, %v668, %v670
    %v695 = vsel %vm689, %v670, %v672
    %v696 = vsel %vm689, %v672, %v674
    %v697 = vsel %vm689, %v674, %v676
    %v698 = vsel %vm689, %v676, %v678
    %v699 = vsel %vm689, %v678, %v680
    %v700 = vsel %vm689, %v680, %v682
    %v701 = vsel %vm689, %v682, %v684
    %v702 = vsel %vm689, %v684, %v686
    %v703 = vsel %vm689, %v686, %v688
    %v719 = vrot.slane %v339, 2
    %v720 = vrot.slane %v310, 2
    %v721 = vrot.slane %v311, 2
    %v722 = vrot.slane %v312, 2
    %v723 = vrot.slane %v313, 2
    %v724 = vrot.slane %v314, 2
    %v725 = vrot.slane %v315, 2
    %v726 = vrot.slane %v316, 2
    %v727 = vrot.slane %v317, 2
    %v728 = vrot.slane %v318, 2
    %v729 = vrot.slane %v319, 2
    %v730 = vrot.slane %v320, 2
    %v731 = vrot.slane %v321, 2
    %v732 = vrot.slane %v322, 2
    %v733 = vrot.slane %v341, 2
    %734 = vrot.lane.b32.xlu0 %v719, 68
    %v735 = vpop.permute.xlu0 %734
    %736 = vrot.lane.b32.xlu0 %v720, 68
    %v737 = vpop.permute.xlu0 %736
    %738 = vrot.lane.b32.xlu0 %v721, 68
    %v739 = vpop.permute.xlu0 %738
    %740 = vrot.lane.b32.xlu0 %v722, 68
    %v741 = vpop.permute.xlu0 %740
    %742 = vrot.lane.b32.xlu0 %v723, 68
    %v743 = vpop.permute.xlu0 %742
    %744 = vrot.lane.b32.xlu0 %v724, 68
    %v745 = vpop.permute.xlu0 %744
    %746 = vrot.lane.b32.xlu0 %v725, 68
    %v747 = vpop.permute.xlu0 %746
    %748 = vrot.lane.b32.xlu0 %v726, 68
    %v749 = vpop.permute.xlu0 %748
    %750 = vrot.lane.b32.xlu0 %v727, 68
    %v751 = vpop.permute.xlu0 %750
    %752 = vrot.lane.b32.xlu0 %v728, 68
    %v753 = vpop.permute.xlu0 %752
    %754 = vrot.lane.b32.xlu0 %v729, 68
    %v755 = vpop.permute.xlu0 %754
    %756 = vrot.lane.b32.xlu0 %v730, 68
    %v757 = vpop.permute.xlu0 %756
    %758 = vrot.lane.b32.xlu0 %v731, 68
    %v759 = vpop.permute.xlu0 %758
    %760 = vrot.lane.b32.xlu0 %v732, 68
    %v761 = vpop.permute.xlu0 %760
    %762 = vrot.lane.b32.xlu0 %v733, 68
    %v763 = vpop.permute.xlu0 %762
    %vm764 = vcmask 556032
    %v765 = vsel %vm764, %v735, %v737
    %v766 = vsel %vm764, %v737, %v739
    %v767 = vsel %vm764, %v739, %v741
    %v768 = vsel %vm764, %v741, %v743
    %v769 = vsel %vm764, %v743, %v745
    %v770 = vsel %vm764, %v745, %v747
    %v771 = vsel %vm764, %v747, %v749
    %v772 = vsel %vm764, %v749, %v751
    %v773 = vsel %vm764, %v751, %v753
    %v774 = vsel %vm764, %v753, %v755
    %v775 = vsel %vm764, %v755, %v757
    %v776 = vsel %vm764, %v757, %v759
    %v777 = vsel %vm764, %v759, %v761
    %v778 = vsel %vm764, %v761, %v763
    %v794 = vrot.slane %v339, 1
    %v795 = vrot.slane %v310, 1
    %v796 = vrot.slane %v311, 1
    %v797 = vrot.slane %v312, 1
    %v798 = vrot.slane %v313, 1
    %v799 = vrot.slane %v314, 1
    %v800 = vrot.slane %v315, 1
    %v801 = vrot.slane %v316, 1
    %v802 = vrot.slane %v317, 1
    %v803 = vrot.slane %v318, 1
    %v804 = vrot.slane %v319, 1
    %v805 = vrot.slane %v320, 1
    %v806 = vrot.slane %v321, 1
    %v807 = vrot.slane %v322, 1
    %v808 = vrot.slane %v341, 1
    %809 = vrot.lane.b32.xlu0 %v794, 67
    %v810 = vpop.permute.xlu0 %809
    %811 = vrot.lane.b32.xlu0 %v795, 67
    %v812 = vpop.permute.xlu0 %811
    %813 = vrot.lane.b32.xlu0 %v796, 67
    %v814 = vpop.permute.xlu0 %813
    %815 = vrot.lane.b32.xlu0 %v797, 67
    %v816 = vpop.permute.xlu0 %815
    %817 = vrot.lane.b32.xlu0 %v798, 67
    %v818 = vpop.permute.xlu0 %817
    %819 = vrot.lane.b32.xlu0 %v799, 67
    %v820 = vpop.permute.xlu0 %819
    %821 = vrot.lane.b32.xlu0 %v800, 67
    %v822 = vpop.permute.xlu0 %821
    %823 = vrot.lane.b32.xlu0 %v801, 67
    %v824 = vpop.permute.xlu0 %823
    %825 = vrot.lane.b32.xlu0 %v802, 67
    %v826 = vpop.permute.xlu0 %825
    %827 = vrot.lane.b32.xlu0 %v803, 67
    %v828 = vpop.permute.xlu0 %827
    %829 = vrot.lane.b32.xlu0 %v804, 67
    %v830 = vpop.permute.xlu0 %829
    %831 = vrot.lane.b32.xlu0 %v805, 67
    %v832 = vpop.permute.xlu0 %831
    %833 = vrot.lane.b32.xlu0 %v806, 67
    %v834 = vpop.permute.xlu0 %833
    %835 = vrot.lane.b32.xlu0 %v807, 67
    %v836 = vpop.permute.xlu0 %835
    %837 = vrot.lane.b32.xlu0 %v808, 67
    %v838 = vpop.permute.xlu0 %837
    %vm839 = vcmask 547840
    %v840 = vsel %vm839, %v810, %v812
    %v841 = vsel %vm839, %v812, %v814
    %v842 = vsel %vm839, %v814, %v816
    %v843 = vsel %vm839, %v816, %v818
    %v844 = vsel %vm839, %v818, %v820
    %v845 = vsel %vm839, %v820, %v822
    %v846 = vsel %vm839, %v822, %v824
    %v847 = vsel %vm839, %v824, %v826
    %v848 = vsel %vm839, %v826, %v828
    %v849 = vsel %vm839, %v828, %v830
    %v850 = vsel %vm839, %v830, %v832
    %v851 = vsel %vm839, %v832, %v834
    %v852 = vsel %vm839, %v834, %v836
    %v853 = vsel %vm839, %v836, %v838
    %869 = vrot.lane.b32.xlu0 %v339, 66
    %v870 = vpop.permute.xlu0 %869
    %871 = vrot.lane.b32.xlu0 %v310, 66
    %v872 = vpop.permute.xlu0 %871
    %873 = vrot.lane.b32.xlu0 %v311, 66
    %v874 = vpop.permute.xlu0 %873
    %875 = vrot.lane.b32.xlu0 %v312, 66
    %v876 = vpop.permute.xlu0 %875
    %877 = vrot.lane.b32.xlu0 %v313, 66
    %v878 = vpop.permute.xlu0 %877
    %879 = vrot.lane.b32.xlu0 %v314, 66
    %v880 = vpop.permute.xlu0 %879
    %881 = vrot.lane.b32.xlu0 %v315, 66
    %v882 = vpop.permute.xlu0 %881
    %883 = vrot.lane.b32.xlu0 %v316, 66
    %v884 = vpop.permute.xlu0 %883
    %885 = vrot.lane.b32.xlu0 %v317, 66
    %v886 = vpop.permute.xlu0 %885
    %887 = vrot.lane.b32.xlu0 %v318, 66
    %v888 = vpop.permute.xlu0 %887
    %889 = vrot.lane.b32.xlu0 %v319, 66
    %v890 = vpop.permute.xlu0 %889
    %891 = vrot.lane.b32.xlu0 %v320, 66
    %v892 = vpop.permute.xlu0 %891
    %893 = vrot.lane.b32.xlu0 %v321, 66
    %v894 = vpop.permute.xlu0 %893
    %895 = vrot.lane.b32.xlu0 %v322, 66
    %v896 = vpop.permute.xlu0 %895
    %897 = vrot.lane.b32.xlu0 %v341, 66
    %v898 = vpop.permute.xlu0 %897
    %vm899 = vcmask 539648
    %v900 = vsel %vm899, %v870, %v872
    %v901 = vsel %vm899, %v872, %v874
    %v902 = vsel %vm899, %v874, %v876
    %v903 = vsel %vm899, %v876, %v878
    %v904 = vsel %vm899, %v878, %v880
    %v905 = vsel %vm899, %v880, %v882
    %v906 = vsel %vm899, %v882, %v884
    %v907 = vsel %vm899, %v884, %v886
    %v908 = vsel %vm899, %v886, %v888
    %v909 = vsel %vm899, %v888, %v890
    %v910 = vsel %vm899, %v890, %v892
    %v911 = vsel %vm899, %v892, %v894
    %v912 = vsel %vm899, %v894, %v896
    %v913 = vsel %vm899, %v896, %v898
    %vm914 = vcmask 1040384
    %v915 = vsel %vm914, %v339, %v390
    %v916 = vsel %vm914, %v310, %v391
    %v917 = vsel %vm914, %v311, %v392
    %v918 = vsel %vm914, %v312, %v393
    %v919 = vsel %vm914, %v313, %v394
    %v920 = vsel %vm914, %v314, %v395
    %v921 = vsel %vm914, %v315, %v396
    %v922 = vsel %vm914, %v316, %v397
    %v923 = vsel %vm914, %v317, %v398
    %v924 = vsel %vm914, %v318, %v399
    %v925 = vsel %vm914, %v319, %v400
    %v926 = vsel %vm914, %v320, %v401
    %v927 = vsel %vm914, %v321, %v402
    %v928 = vsel %vm914, %v322, %v403
    %v929 = vsel %vm914, %v341, %v388
    %vm930 = vcmask 1041408
    %v931 = vsel %vm930, %v915, %v465
    %v932 = vsel %vm930, %v916, %v466
    %v933 = vsel %vm930, %v917, %v467
    %v934 = vsel %vm930, %v918, %v468
    %v935 = vsel %vm930, %v919, %v469
    %v936 = vsel %vm930, %v920, %v470
    %v937 = vsel %vm930, %v921, %v471
    %v938 = vsel %vm930, %v922, %v472
    %v939 = vsel %vm930, %v923, %v473
    %v940 = vsel %vm930, %v924, %v474
    %v941 = vsel %vm930, %v925, %v475
    %v942 = vsel %vm930, %v926, %v476
    %v943 = vsel %vm930, %v927, %v477
    %v944 = vsel %vm930, %v928, %v478
    %v945 = vsel %vm930, %v929, %v463
    %vm946 = vcmask 1042432
    %v947 = vsel %vm946, %v931, %v540
    %v948 = vsel %vm946, %v932, %v541
    %v949 = vsel %vm946, %v933, %v542
    %v950 = vsel %vm946, %v934, %v543
    %v951 = vsel %vm946, %v935, %v544
    %v952 = vsel %vm946, %v936, %v545
    %v953 = vsel %vm946, %v937, %v546
    %v954 = vsel %vm946, %v938, %v547
    %v955 = vsel %vm946, %v939, %v548
    %v956 = vsel %vm946, %v940, %v549
    %v957 = vsel %vm946, %v941, %v550
    %v958 = vsel %vm946, %v942, %v551
    %v959 = vsel %vm946, %v943, %v552
    %v960 = vsel %vm946, %v944, %v553
    %v961 = vsel %vm946, %v945, %v538
    %vm962 = vcmask 1043456
    %v963 = vsel %vm962, %v947, %v615
    %v964 = vsel %vm962, %v948, %v616
    %v965 = vsel %vm962, %v949, %v617
    %v966 = vsel %vm962, %v950, %v618
    %v967 = vsel %vm962, %v951, %v619
    %v968 = vsel %vm962, %v952, %v620
    %v969 = vsel %vm962, %v953, %v621
    %v970 = vsel %vm962, %v954, %v622
    %v971 = vsel %vm962, %v955, %v623
    %v972 = vsel %vm962, %v956, %v624
    %v973 = vsel %vm962, %v957, %v625
    %v974 = vsel %vm962, %v958, %v626
    %v975 = vsel %vm962, %v959, %v627
    %v976 = vsel %vm962, %v960, %v628
    %v977 = vsel %vm962, %v961, %v613
    %vm978 = vcmask 1044480
    %v979 = vsel %vm978, %v963, %v690
    %v980 = vsel %vm978, %v964, %v691
    %v981 = vsel %vm978, %v965, %v692
    %v982 = vsel %vm978, %v966, %v693
    %v983 = vsel %vm978, %v967, %v694
    %v984 = vsel %vm978, %v968, %v695
    %v985 = vsel %vm978, %v969, %v696
    %v986 = vsel %vm978, %v970, %v697
    %v987 = vsel %vm978, %v971, %v698
    %v988 = vsel %vm978, %v972, %v699
    %v989 = vsel %vm978, %v973, %v700
    %v990 = vsel %vm978, %v974, %v701
    %v991 = vsel %vm978, %v975, %v702
    %v992 = vsel %vm978, %v976, %v703
    %v993 = vsel %vm978, %v977, %v688
    %vm994 = vcmask 1045504
    %v995 = vsel %vm994, %v979, %v765
    %v996 = vsel %vm994, %v980, %v766
    %v997 = vsel %vm994, %v981, %v767
    %v998 = vsel %vm994, %v982, %v768
    %v999 = vsel %vm994, %v983, %v769
    %v1000 = vsel %vm994, %v984, %v770
    %v1001 = vsel %vm994, %v985, %v771
    %v1002 = vsel %vm994, %v986, %v772
    %v1003 = vsel %vm994, %v987, %v773
    %v1004 = vsel %vm994, %v988, %v774
    %v1005 = vsel %vm994, %v989, %v775
    %v1006 = vsel %vm994, %v990, %v776
    %v1007 = vsel %vm994, %v991, %v777
    %v1008 = vsel %vm994, %v992, %v778
    %v1009 = vsel %vm994, %v993, %v763
    %vm1010 = vcmask 1046528
    %v1011 = vsel %vm1010, %v995, %v840
    %v1012 = vsel %vm1010, %v996, %v841
    %v1013 = vsel %vm1010, %v997, %v842
    %v1014 = vsel %vm1010, %v998, %v843
    %v1015 = vsel %vm1010, %v999, %v844
    %v1016 = vsel %vm1010, %v1000, %v845
    %v1017 = vsel %vm1010, %v1001, %v846
    %v1018 = vsel %vm1010, %v1002, %v847
    %v1019 = vsel %vm1010, %v1003, %v848
    %v1020 = vsel %vm1010, %v1004, %v849
    %v1021 = vsel %vm1010, %v1005, %v850
    %v1022 = vsel %vm1010, %v1006, %v851
    %v1023 = vsel %vm1010, %v1007, %v852
    %v1024 = vsel %vm1010, %v1008, %v853
    %v1025 = vsel %vm1010, %v1009, %v838
    %v1026 = vld [vmem:[#allocation2] sm:$0xff]
    %v1027 = vld [vmem:[%s2] sm:$0xff]
    %1029 = vset.pattern.permute.xlu0 0
    %1030 = vperm.xlu0 %1029, %v1027
    %v1031 = vpop.permute.xlu0 %1030
    %vm1033 = vcmask 72704
    %v1035 = vsel %vm1033, %v1026, 0
    %v1037 = vsel %vm914, %v900, 0
    %v1039 = vsel %vm914, %v901, 0
    %v1041 = vsel %vm914, %v902, 0
    %v1043 = vsel %vm914, %v903, 0
    %v1045 = vsel %vm914, %v904, 0
    %v1047 = vsel %vm914, %v905, 0
    %v1049 = vsel %vm914, %v906, 0
    %v1051 = vsel %vm914, %v907, 0
    %v1053 = vsel %vm914, %v908, 0
    %v1055 = vsel %vm914, %v909, 0
    %v1057 = vsel %vm914, %v910, 0
    %v1059 = vsel %vm914, %v911, 0
    %v1061 = vsel %vm914, %v912, 0
    %v1063 = vsel %vm914, %v913, 0
    %v1065 = vsel %vm914, %v898, 0
    %1067 = vmatprep.subr.mxu0 0.0
    %1068 = vmatpush1.msra.mxu0 0.0
    %1069 = vmatprep.subr.mxu0 0.0
    %1070 = vmatpush1.msra.mxu0 0.0
    %1071 = vmatprep.subr.mxu0 0.0
    %1072 = vmatpush1.msra.mxu0 0.0
    %1073 = vmatprep.subr.mxu0 0.0
    %1074 = vmatpush1.msra.mxu0 0.0
    %1075 = vmatprep.subr.mxu0 0.0
    %1076 = vmatpush1.msra.mxu0 0.0
    %1077 = vmatprep.subr.mxu0 0.0
    %1078 = vmatpush1.msra.mxu0 0.0
    %1079 = vmatprep.subr.mxu0 0.0
    %1080 = vmatpush1.msra.mxu0 0.0
    %1081 = vmatprep.subr.mxu0 0.0
    %1082 = vmatpush1.msra.mxu0 0.0
    %1083 = vmatprep.subr.mxu0 0.0
    %1084 = vmatpush1.msra.mxu0 0.0
    %1085 = vmatprep.subr.mxu0 0.0
    %1086 = vmatpush1.msra.mxu0 0.0
    %1087 = vmatprep.subr.mxu0 0.0
    %1088 = vmatpush1.msra.mxu0 0.0
    %1089 = vmatprep.subr.mxu0 0.0
    %1090 = vmatpush1.msra.mxu0 0.0
    %1091 = vmatprep.subr.mxu0 0.0
    %1092 = vmatpush1.msra.mxu0 0.0
    %1093 = vmatprep.subr.mxu0 0.0
    %1094 = vmatpush1.msra.mxu0 0.0
    %1095 = vmatprep.subr.mxu0 %v1039
    %1096 = vmatpush1.msra.mxu0 %v1037
    %1097 = vmatprep.subr.mxu0 %v1012
    %1098 = vmatpush1.msra.mxu0 %v1011
    %1099 = vmatprep.subr.mxu0 0.0
    %1100 = vmatpush2.msra.mxu0 0.0
    %1101 = vmatprep.subr.mxu0 0.0
    %1102 = vmatpush2.msra.mxu0 0.0
    %1103 = vmatprep.subr.mxu0 0.0
    %1104 = vmatpush2.msra.mxu0 0.0
    %1105 = vmatprep.subr.mxu0 0.0
    %1106 = vmatpush2.msra.mxu0 0.0
    %1107 = vmatprep.subr.mxu0 0.0
    %1108 = vmatpush2.msra.mxu0 0.0
    %1109 = vmatprep.subr.mxu0 0.0
    %1110 = vmatpush2.msra.mxu0 0.0
    %1111 = vmatprep.subr.mxu0 0.0
    %1112 = vmatpush2.msra.mxu0 0.0
    %1113 = vmatprep.subr.mxu0 0.0
    %1114 = vmatpush2.msra.mxu0 0.0
    %1115 = vmatprep.subr.mxu0 0.0
    %1116 = vmatpush2.msra.mxu0 0.0
    %1117 = vmatprep.subr.mxu0 0.0
    %1118 = vmatpush2.msra.mxu0 0.0
    %1119 = vmatprep.subr.mxu0 0.0
    %1120 = vmatpush2.msra.mxu0 0.0
    %1121 = vmatprep.subr.mxu0 0.0
    %1122 = vmatpush2.msra.mxu0 0.0
    %1123 = vmatprep.subr.mxu0 0.0
    %1124 = vmatpush2.msra.mxu0 0.0
    %1125 = vmatprep.subr.mxu0 0.0
    %1126 = vmatpush2.msra.mxu0 0.0
    %1127 = vmatprep.subr.mxu0 0.0
    %1128 = vmatpush2.msra.mxu0 0.0
    %1129 = vmatprep.subr.mxu0 0.0
    %1130 = vmatpush2.msra.mxu0 0.0
    %1131 = vmatprep.mubr.f32.mxu0 0.0
    %1132 = vmatmul.mubr.f32.gmra.mxu0 %v1035
    %v1133 = vpop.f32.mrf.mxu0
    %v1134 = vadd.f32 %v1031, %v1133
    %v1135 = vpop.f32.mrf.mxu0
    %v1136 = vadd.f32 %v1031, %v1135
    %1137 = vdwg.mxu0
    %1138 = vmatprep.subr.mxu0 0.0
    %1139 = vmatpush1.msra.mxu0 0.0
    %1140 = vmatprep.subr.mxu0 0.0
    %1141 = vmatpush1.msra.mxu0 0.0
    %1142 = vmatprep.subr.mxu0 0.0
    %1143 = vmatpush1.msra.mxu0 0.0
    %1144 = vmatprep.subr.mxu0 0.0
    %1145 = vmatpush1.msra.mxu0 0.0
    %1146 = vmatprep.subr.mxu0 0.0
    %1147 = vmatpush1.msra.mxu0 0.0
    %1148 = vmatprep.subr.mxu0 0.0
    %1149 = vmatpush1.msra.mxu0 0.0
    %1150 = vmatprep.subr.mxu0 0.0
    %1151 = vmatpush1.msra.mxu0 0.0
    %1152 = vmatprep.subr.mxu0 0.0
    %1153 = vmatpush1.msra.mxu0 0.0
    %1154 = vmatprep.subr.mxu0 0.0
    %1155 = vmatpush1.msra.mxu0 0.0
    %1156 = vmatprep.subr.mxu0 0.0
    %1157 = vmatpush1.msra.mxu0 0.0
    %1158 = vmatprep.subr.mxu0 0.0
    %1159 = vmatpush1.msra.mxu0 0.0
    %1160 = vmatprep.subr.mxu0 0.0
    %1161 = vmatpush1.msra.mxu0 0.0
    %1162 = vmatprep.subr.mxu0 0.0
    %1163 = vmatpush1.msra.mxu0 0.0
    %1164 = vmatprep.subr.mxu0 0.0
    %1165 = vmatpush1.msra.mxu0 0.0
    %1166 = vmatprep.subr.mxu0 %v1043
    %1167 = vmatpush1.msra.mxu0 %v1041
    %1168 = vmatprep.subr.mxu0 %v1014
    %1169 = vmatpush1.msra.mxu0 %v1013
    %1170 = vmatprep.subr.mxu0 0.0
    %1171 = vmatpush2.msra.mxu0 0.0
    %1172 = vmatprep.subr.mxu0 0.0
    %1173 = vmatpush2.msra.mxu0 0.0
    %1174 = vmatprep.subr.mxu0 0.0
    %1175 = vmatpush2.msra.mxu0 0.0
    %1176 = vmatprep.subr.mxu0 0.0
    %1177 = vmatpush2.msra.mxu0 0.0
    %1178 = vmatprep.subr.mxu0 0.0
    %1179 = vmatpush2.msra.mxu0 0.0
    %1180 = vmatprep.subr.mxu0 0.0
    %1181 = vmatpush2.msra.mxu0 0.0
    %1182 = vmatprep.subr.mxu0 0.0
    %1183 = vmatpush2.msra.mxu0 0.0
    %1184 = vmatprep.subr.mxu0 0.0
    %1185 = vmatpush2.msra.mxu0 0.0
    %1186 = vmatprep.subr.mxu0 0.0
    %1187 = vmatpush2.msra.mxu0 0.0
    %1188 = vmatprep.subr.mxu0 0.0
    %1189 = vmatpush2.msra.mxu0 0.0
    %1190 = vmatprep.subr.mxu0 0.0
    %1191 = vmatpush2.msra.mxu0 0.0
    %1192 = vmatprep.subr.mxu0 0.0
    %1193 = vmatpush2.msra.mxu0 0.0
    %1194 = vmatprep.subr.mxu0 0.0
    %1195 = vmatpush2.msra.mxu0 0.0
    %1196 = vmatprep.subr.mxu0 0.0
    %1197 = vmatpush2.msra.mxu0 0.0
    %1198 = vmatprep.subr.mxu0 0.0
    %1199 = vmatpush2.msra.mxu0 0.0
    %1200 = vmatprep.subr.mxu0 0.0
    %1201 = vmatpush2.msra.mxu0 0.0
    %1202 = vmatprep.mubr.f32.mxu0 0.0
    %1203 = vmatmul.mubr.f32.gmra.mxu0 %v1035
    %v1204 = vpop.f32.mrf.mxu0
    %v1205 = vadd.f32 %v1031, %v1204
    %v1206 = vpop.f32.mrf.mxu0
    %v1207 = vadd.f32 %v1031, %v1206
    %1208 = vdwg.mxu0
    %1209 = vmatprep.subr.mxu0 0.0
    %1210 = vmatpush1.msra.mxu0 0.0
    %1211 = vmatprep.subr.mxu0 0.0
    %1212 = vmatpush1.msra.mxu0 0.0
    %1213 = vmatprep.subr.mxu0 0.0
    %1214 = vmatpush1.msra.mxu0 0.0
    %1215 = vmatprep.subr.mxu0 0.0
    %1216 = vmatpush1.msra.mxu0 0.0
    %1217 = vmatprep.subr.mxu0 0.0
    %1218 = vmatpush1.msra.mxu0 0.0
    %1219 = vmatprep.subr.mxu0 0.0
    %1220 = vmatpush1.msra.mxu0 0.0
    %1221 = vmatprep.subr.mxu0 0.0
    %1222 = vmatpush1.msra.mxu0 0.0
    %1223 = vmatprep.subr.mxu0 0.0
    %1224 = vmatpush1.msra.mxu0 0.0
    %1225 = vmatprep.subr.mxu0 0.0
    %1226 = vmatpush1.msra.mxu0 0.0
    %1227 = vmatprep.subr.mxu0 0.0
    %1228 = vmatpush1.msra.mxu0 0.0
    %1229 = vmatprep.subr.mxu0 0.0
    %1230 = vmatpush1.msra.mxu0 0.0
    %1231 = vmatprep.subr.mxu0 0.0
    %1232 = vmatpush1.msra.mxu0 0.0
    %1233 = vmatprep.subr.mxu0 0.0
    %1234 = vmatpush1.msra.mxu0 0.0
    %1235 = vmatprep.subr.mxu0 0.0
    %1236 = vmatpush1.msra.mxu0 0.0
    %1237 = vmatprep.subr.mxu0 %v1047
    %1238 = vmatpush1.msra.mxu0 %v1045
    %1239 = vmatprep.subr.mxu0 %v1016
    %1240 = vmatpush1.msra.mxu0 %v1015
    %1241 = vmatprep.subr.mxu0 0.0
    %1242 = vmatpush2.msra.mxu0 0.0
    %1243 = vmatprep.subr.mxu0 0.0
    %1244 = vmatpush2.msra.mxu0 0.0
    %1245 = vmatprep.subr.mxu0 0.0
    %1246 = vmatpush2.msra.mxu0 0.0
    %1247 = vmatprep.subr.mxu0 0.0
    %1248 = vmatpush2.msra.mxu0 0.0
    %1249 = vmatprep.subr.mxu0 0.0
    %1250 = vmatpush2.msra.mxu0 0.0
    %1251 = vmatprep.subr.mxu0 0.0
    %1252 = vmatpush2.msra.mxu0 0.0
    %1253 = vmatprep.subr.mxu0 0.0
    %1254 = vmatpush2.msra.mxu0 0.0
    %1255 = vmatprep.subr.mxu0 0.0
    %1256 = vmatpush2.msra.mxu0 0.0
    %1257 = vmatprep.subr.mxu0 0.0
    %1258 = vmatpush2.msra.mxu0 0.0
    %1259 = vmatprep.subr.mxu0 0.0
    %1260 = vmatpush2.msra.mxu0 0.0
    %1261 = vmatprep.subr.mxu0 0.0
    %1262 = vmatpush2.msra.mxu0 0.0
    %1263 = vmatprep.subr.mxu0 0.0
    %1264 = vmatpush2.msra.mxu0 0.0
    %1265 = vmatprep.subr.mxu0 0.0
    %1266 = vmatpush2.msra.mxu0 0.0
    %1267 = vmatprep.subr.mxu0 0.0
    %1268 = vmatpush2.msra.mxu0 0.0
    %1269 = vmatprep.subr.mxu0 0.0
    %1270 = vmatpush2.msra.mxu0 0.0
    %1271 = vmatprep.subr.mxu0 0.0
    %1272 = vmatpush2.msra.mxu0 0.0
    %1273 = vmatprep.mubr.f32.mxu0 0.0
    %1274 = vmatmul.mubr.f32.gmra.mxu0 %v1035
    %v1275 = vpop.f32.mrf.mxu0
    %v1276 = vadd.f32 %v1031, %v1275
    %v1277 = vpop.f32.mrf.mxu0
    %v1278 = vadd.f32 %v1031, %v1277
    %1279 = vdwg.mxu0
    %1280 = vmatprep.subr.mxu0 0.0
    %1281 = vmatpush1.msra.mxu0 0.0
    %1282 = vmatprep.subr.mxu0 0.0
    %1283 = vmatpush1.msra.mxu0 0.0
    %1284 = vmatprep.subr.mxu0 0.0
    %1285 = vmatpush1.msra.mxu0 0.0
    %1286 = vmatprep.subr.mxu0 0.0
    %1287 = vmatpush1.msra.mxu0 0.0
    %1288 = vmatprep.subr.mxu0 0.0
    %1289 = vmatpush1.msra.mxu0 0.0
    %1290 = vmatprep.subr.mxu0 0.0
    %1291 = vmatpush1.msra.mxu0 0.0
    %1292 = vmatprep.subr.mxu0 0.0
    %1293 = vmatpush1.msra.mxu0 0.0
    %1294 = vmatprep.subr.mxu0 0.0
    %1295 = vmatpush1.msra.mxu0 0.0
    %1296 = vmatprep.subr.mxu0 0.0
    %1297 = vmatpush1.msra.mxu0 0.0
    %1298 = vmatprep.subr.mxu0 0.0
    %1299 = vmatpush1.msra.mxu0 0.0
    %1300 = vmatprep.subr.mxu0 0.0
    %1301 = vmatpush1.msra.mxu0 0.0
    %1302 = vmatprep.subr.mxu0 0.0
    %1303 = vmatpush1.msra.mxu0 0.0
    %1304 = vmatprep.subr.mxu0 0.0
    %1305 = vmatpush1.msra.mxu0 0.0
    %1306 = vmatprep.subr.mxu0 0.0
    %1307 = vmatpush1.msra.mxu0 0.0
    %1308 = vmatprep.subr.mxu0 %v1051
    %1309 = vmatpush1.msra.mxu0 %v1049
    %1310 = vmatprep.subr.mxu0 %v1018
    %1311 = vmatpush1.msra.mxu0 %v1017
    %1312 = vmatprep.subr.mxu0 0.0
    %1313 = vmatpush2.msra.mxu0 0.0
    %1314 = vmatprep.subr.mxu0 0.0
    %1315 = vmatpush2.msra.mxu0 0.0
    %1316 = vmatprep.subr.mxu0 0.0
    %1317 = vmatpush2.msra.mxu0 0.0
    %1318 = vmatprep.subr.mxu0 0.0
    %1319 = vmatpush2.msra.mxu0 0.0
    %1320 = vmatprep.subr.mxu0 0.0
    %1321 = vmatpush2.msra.mxu0 0.0
    %1322 = vmatprep.subr.mxu0 0.0
    %1323 = vmatpush2.msra.mxu0 0.0
    %1324 = vmatprep.subr.mxu0 0.0
    %1325 = vmatpush2.msra.mxu0 0.0
    %1326 = vmatprep.subr.mxu0 0.0
    %1327 = vmatpush2.msra.mxu0 0.0
    %1328 = vmatprep.subr.mxu0 0.0
    %1329 = vmatpush2.msra.mxu0 0.0
    %1330 = vmatprep.subr.mxu0 0.0
    %1331 = vmatpush2.msra.mxu0 0.0
    %1332 = vmatprep.subr.mxu0 0.0
    %1333 = vmatpush2.msra.mxu0 0.0
    %1334 = vmatprep.subr.mxu0 0.0
    %1335 = vmatpush2.msra.mxu0 0.0
    %1336 = vmatprep.subr.mxu0 0.0
    %1337 = vmatpush2.msra.mxu0 0.0
    %1338 = vmatprep.subr.mxu0 0.0
    %1339 = vmatpush2.msra.mxu0 0.0
    %1340 = vmatprep.subr.mxu0 0.0
    %1341 = vmatpush2.msra.mxu0 0.0
    %1342 = vmatprep.subr.mxu0 0.0
    %1343 = vmatpush2.msra.mxu0 0.0
    %1344 = vmatprep.mubr.f32.mxu0 0.0
    %1345 = vmatmul.mubr.f32.gmra.mxu0 %v1035
    %v1346 = vpop.f32.mrf.mxu0
    %v1347 = vadd.f32 %v1031, %v1346
    %v1348 = vpop.f32.mrf.mxu0
    %v1349 = vadd.f32 %v1031, %v1348
    %1350 = vdwg.mxu0
    %1351 = vmatprep.subr.mxu0 0.0
    %1352 = vmatpush1.msra.mxu0 0.0
    %1353 = vmatprep.subr.mxu0 0.0
    %1354 = vmatpush1.msra.mxu0 0.0
    %1355 = vmatprep.subr.mxu0 0.0
    %1356 = vmatpush1.msra.mxu0 0.0
    %1357 = vmatprep.subr.mxu0 0.0
    %1358 = vmatpush1.msra.mxu0 0.0
    %1359 = vmatprep.subr.mxu0 0.0
    %1360 = vmatpush1.msra.mxu0 0.0
    %1361 = vmatprep.subr.mxu0 0.0
    %1362 = vmatpush1.msra.mxu0 0.0
    %1363 = vmatprep.subr.mxu0 0.0
    %1364 = vmatpush1.msra.mxu0 0.0
    %1365 = vmatprep.subr.mxu0 0.0
    %1366 = vmatpush1.msra.mxu0 0.0
    %1367 = vmatprep.subr.mxu0 0.0
    %1368 = vmatpush1.msra.mxu0 0.0
    %1369 = vmatprep.subr.mxu0 0.0
    %1370 = vmatpush1.msra.mxu0 0.0
    %1371 = vmatprep.subr.mxu0 0.0
    %1372 = vmatpush1.msra.mxu0 0.0
    %1373 = vmatprep.subr.mxu0 0.0
    %1374 = vmatpush1.msra.mxu0 0.0
    %1375 = vmatprep.subr.mxu0 0.0
    %1376 = vmatpush1.msra.mxu0 0.0
    %1377 = vmatprep.subr.mxu0 0.0
    %1378 = vmatpush1.msra.mxu0 0.0
    %1379 = vmatprep.subr.mxu0 %v1055
    %1380 = vmatpush1.msra.mxu0 %v1053
    %1381 = vmatprep.subr.mxu0 %v1020
    %1382 = vmatpush1.msra.mxu0 %v1019
    %1383 = vmatprep.subr.mxu0 0.0
    %1384 = vmatpush2.msra.mxu0 0.0
    %1385 = vmatprep.subr.mxu0 0.0
    %1386 = vmatpush2.msra.mxu0 0.0
    %1387 = vmatprep.subr.mxu0 0.0
    %1388 = vmatpush2.msra.mxu0 0.0
    %1389 = vmatprep.subr.mxu0 0.0
    %1390 = vmatpush2.msra.mxu0 0.0
    %1391 = vmatprep.subr.mxu0 0.0
    %1392 = vmatpush2.msra.mxu0 0.0
    %1393 = vmatprep.subr.mxu0 0.0
    %1394 = vmatpush2.msra.mxu0 0.0
    %1395 = vmatprep.subr.mxu0 0.0
    %1396 = vmatpush2.msra.mxu0 0.0
    %1397 = vmatprep.subr.mxu0 0.0
    %1398 = vmatpush2.msra.mxu0 0.0
    %1399 = vmatprep.subr.mxu0 0.0
    %1400 = vmatpush2.msra.mxu0 0.0
    %1401 = vmatprep.subr.mxu0 0.0
    %1402 = vmatpush2.msra.mxu0 0.0
    %1403 = vmatprep.subr.mxu0 0.0
    %1404 = vmatpush2.msra.mxu0 0.0
    %1405 = vmatprep.subr.mxu0 0.0
    %1406 = vmatpush2.msra.mxu0 0.0
    %1407 = vmatprep.subr.mxu0 0.0
    %1408 = vmatpush2.msra.mxu0 0.0
    %1409 = vmatprep.subr.mxu0 0.0
    %1410 = vmatpush2.msra.mxu0 0.0
    %1411 = vmatprep.subr.mxu0 0.0
    %1412 = vmatpush2.msra.mxu0 0.0
    %1413 = vmatprep.subr.mxu0 0.0
    %1414 = vmatpush2.msra.mxu0 0.0
    %1415 = vmatprep.mubr.f32.mxu0 0.0
    %1416 = vmatmul.mubr.f32.gmra.mxu0 %v1035
    %v1417 = vpop.f32.mrf.mxu0
    %v1418 = vadd.f32 %v1031, %v1417
    %v1419 = vpop.f32.mrf.mxu0
    %v1420 = vadd.f32 %v1031, %v1419
    %1421 = vdwg.mxu0
    %1422 = vmatprep.subr.mxu0 0.0
    %1423 = vmatpush1.msra.mxu0 0.0
    %1424 = vmatprep.subr.mxu0 0.0
    %1425 = vmatpush1.msra.mxu0 0.0
    %1426 = vmatprep.subr.mxu0 0.0
    %1427 = vmatpush1.msra.mxu0 0.0
    %1428 = vmatprep.subr.mxu0 0.0
    %1429 = vmatpush1.msra.mxu0 0.0
    %1430 = vmatprep.subr.mxu0 0.0
    %1431 = vmatpush1.msra.mxu0 0.0
    %1432 = vmatprep.subr.mxu0 0.0
    %1433 = vmatpush1.msra.mxu0 0.0
    %1434 = vmatprep.subr.mxu0 0.0
    %1435 = vmatpush1.msra.mxu0 0.0
    %1436 = vmatprep.subr.mxu0 0.0
    %1437 = vmatpush1.msra.mxu0 0.0
    %1438 = vmatprep.subr.mxu0 0.0
    %1439 = vmatpush1.msra.mxu0 0.0
    %1440 = vmatprep.subr.mxu0 0.0
    %1441 = vmatpush1.msra.mxu0 0.0
    %1442 = vmatprep.subr.mxu0 0.0
    %1443 = vmatpush1.msra.mxu0 0.0
    %1444 = vmatprep.subr.mxu0 0.0
    %1445 = vmatpush1.msra.mxu0 0.0
    %1446 = vmatprep.subr.mxu0 0.0
    %1447 = vmatpush1.msra.mxu0 0.0
    %1448 = vmatprep.subr.mxu0 0.0
    %1449 = vmatpush1.msra.mxu0 0.0
    %1450 = vmatprep.subr.mxu0 %v1059
    %1451 = vmatpush1.msra.mxu0 %v1057
    %1452 = vmatprep.subr.mxu0 %v1022
    %1453 = vmatpush1.msra.mxu0 %v1021
    %1454 = vmatprep.subr.mxu0 0.0
    %1455 = vmatpush2.msra.mxu0 0.0
    %1456 = vmatprep.subr.mxu0 0.0
    %1457 = vmatpush2.msra.mxu0 0.0
    %1458 = vmatprep.subr.mxu0 0.0
    %1459 = vmatpush2.msra.mxu0 0.0
    %1460 = vmatprep.subr.mxu0 0.0
    %1461 = vmatpush2.msra.mxu0 0.0
    %1462 = vmatprep.subr.mxu0 0.0
    %1463 = vmatpush2.msra.mxu0 0.0
    %1464 = vmatprep.subr.mxu0 0.0
    %1465 = vmatpush2.msra.mxu0 0.0
    %1466 = vmatprep.subr.mxu0 0.0
    %1467 = vmatpush2.msra.mxu0 0.0
    %1468 = vmatprep.subr.mxu0 0.0
    %1469 = vmatpush2.msra.mxu0 0.0
    %1470 = vmatprep.subr.mxu0 0.0
    %1471 = vmatpush2.msra.mxu0 0.0
    %1472 = vmatprep.subr.mxu0 0.0
    %1473 = vmatpush2.msra.mxu0 0.0
    %1474 = vmatprep.subr.mxu0 0.0
    %1475 = vmatpush2.msra.mxu0 0.0
    %1476 = vmatprep.subr.mxu0 0.0
    %1477 = vmatpush2.msra.mxu0 0.0
    %1478 = vmatprep.subr.mxu0 0.0
    %1479 = vmatpush2.msra.mxu0 0.0
    %1480 = vmatprep.subr.mxu0 0.0
    %1481 = vmatpush2.msra.mxu0 0.0
    %1482 = vmatprep.subr.mxu0 0.0
    %1483 = vmatpush2.msra.mxu0 0.0
    %1484 = vmatprep.subr.mxu0 0.0
    %1485 = vmatpush2.msra.mxu0 0.0
    %1486 = vmatprep.mubr.f32.mxu0 0.0
    %1487 = vmatmul.mubr.f32.gmra.mxu0 %v1035
    %v1488 = vpop.f32.mrf.mxu0
    %v1489 = vadd.f32 %v1031, %v1488
    %v1490 = vpop.f32.mrf.mxu0
    %v1491 = vadd.f32 %v1031, %v1490
    %1492 = vdwg.mxu0
    %1493 = vmatprep.subr.mxu0 0.0
    %1494 = vmatpush1.msra.mxu0 0.0
    %1495 = vmatprep.subr.mxu0 0.0
    %1496 = vmatpush1.msra.mxu0 0.0
    %1497 = vmatprep.subr.mxu0 0.0
    %1498 = vmatpush1.msra.mxu0 0.0
    %1499 = vmatprep.subr.mxu0 0.0
    %1500 = vmatpush1.msra.mxu0 0.0
    %1501 = vmatprep.subr.mxu0 0.0
    %1502 = vmatpush1.msra.mxu0 0.0
    %1503 = vmatprep.subr.mxu0 0.0
    %1504 = vmatpush1.msra.mxu0 0.0
    %1505 = vmatprep.subr.mxu0 0.0
    %1506 = vmatpush1.msra.mxu0 0.0
    %1507 = vmatprep.subr.mxu0 0.0
    %1508 = vmatpush1.msra.mxu0 0.0
    %1509 = vmatprep.subr.mxu0 0.0
    %1510 = vmatpush1.msra.mxu0 0.0
    %1511 = vmatprep.subr.mxu0 0.0
    %1512 = vmatpush1.msra.mxu0 0.0
    %1513 = vmatprep.subr.mxu0 0.0
    %1514 = vmatpush1.msra.mxu0 0.0
    %1515 = vmatprep.subr.mxu0 0.0
    %1516 = vmatpush1.msra.mxu0 0.0
    %1517 = vmatprep.subr.mxu0 0.0
    %1518 = vmatpush1.msra.mxu0 0.0
    %1519 = vmatprep.subr.mxu0 0.0
    %1520 = vmatpush1.msra.mxu0 0.0
    %1521 = vmatprep.subr.mxu0 %v1063
    %1522 = vmatpush1.msra.mxu0 %v1061
    %1523 = vmatprep.subr.mxu0 %v1024
    %1524 = vmatpush1.msra.mxu0 %v1023
    %1525 = vmatprep.subr.mxu0 0.0
    %1526 = vmatpush2.msra.mxu0 0.0
    %1527 = vmatprep.subr.mxu0 0.0
    %1528 = vmatpush2.msra.mxu0 0.0
    %1529 = vmatprep.subr.mxu0 0.0
    %1530 = vmatpush2.msra.mxu0 0.0
    %1531 = vmatprep.subr.mxu0 0.0
    %1532 = vmatpush2.msra.mxu0 0.0
    %1533 = vmatprep.subr.mxu0 0.0
    %1534 = vmatpush2.msra.mxu0 0.0
    %1535 = vmatprep.subr.mxu0 0.0
    %1536 = vmatpush2.msra.mxu0 0.0
    %1537 = vmatprep.subr.mxu0 0.0
    %1538 = vmatpush2.msra.mxu0 0.0
    %1539 = vmatprep.subr.mxu0 0.0
    %1540 = vmatpush2.msra.mxu0 0.0
    %1541 = vmatprep.subr.mxu0 0.0
    %1542 = vmatpush2.msra.mxu0 0.0
    %1543 = vmatprep.subr.mxu0 0.0
    %1544 = vmatpush2.msra.mxu0 0.0
    %1545 = vmatprep.subr.mxu0 0.0
    %1546 = vmatpush2.msra.mxu0 0.0
    %1547 = vmatprep.subr.mxu0 0.0
    %1548 = vmatpush2.msra.mxu0 0.0
    %1549 = vmatprep.subr.mxu0 0.0
    %1550 = vmatpush2.msra.mxu0 0.0
    %1551 = vmatprep.subr.mxu0 0.0
    %1552 = vmatpush2.msra.mxu0 0.0
    %1553 = vmatprep.subr.mxu0 0.0
    %1554 = vmatpush2.msra.mxu0 0.0
    %1555 = vmatprep.subr.mxu0 0.0
    %1556 = vmatpush2.msra.mxu0 0.0
    %1557 = vmatprep.mubr.f32.mxu0 0.0
    %1558 = vmatmul.mubr.f32.gmra.mxu0 %v1035
    %v1559 = vpop.f32.mrf.mxu0
    %v1560 = vadd.f32 %v1031, %v1559
    %v1561 = vpop.f32.mrf.mxu0
    %v1562 = vadd.f32 %v1031, %v1561
    %1563 = vdwg.mxu0
    %1564 = vmatprep.subr.mxu0 0.0
    %1565 = vmatpush1.msra.mxu0 0.0
    %1566 = vmatprep.subr.mxu0 0.0
    %1567 = vmatpush1.msra.mxu0 0.0
    %1568 = vmatprep.subr.mxu0 0.0
    %1569 = vmatpush1.msra.mxu0 0.0
    %1570 = vmatprep.subr.mxu0 0.0
    %1571 = vmatpush1.msra.mxu0 0.0
    %1572 = vmatprep.subr.mxu0 0.0
    %1573 = vmatpush1.msra.mxu0 0.0
    %1574 = vmatprep.subr.mxu0 0.0
    %1575 = vmatpush1.msra.mxu0 0.0
    %1576 = vmatprep.subr.mxu0 0.0
    %1577 = vmatpush1.msra.mxu0 0.0
    %1578 = vmatprep.subr.mxu0 0.0
    %1579 = vmatpush1.msra.mxu0 0.0
    %1580 = vmatprep.subr.mxu0 0.0
    %1581 = vmatpush1.msra.mxu0 0.0
    %1582 = vmatprep.subr.mxu0 0.0
    %1583 = vmatpush1.msra.mxu0 0.0
    %1584 = vmatprep.subr.mxu0 0.0
    %1585 = vmatpush1.msra.mxu0 0.0
    %1586 = vmatprep.subr.mxu0 0.0
    %1587 = vmatpush1.msra.mxu0 0.0
    %1588 = vmatprep.subr.mxu0 0.0
    %1589 = vmatpush1.msra.mxu0 0.0
    %1590 = vmatprep.subr.mxu0 0.0
    %1591 = vmatpush1.msra.mxu0 0.0
    %1592 = vmatprep.subr.mxu0 0.0
    %1593 = vmatpush1.msra.mxu0 %v1065
    %1594 = vmatprep.subr.mxu0 0.0
    %1595 = vmatpush1.msra.mxu0 %v1025
    %1596 = vmatprep.subr.mxu0 0.0
    %1597 = vmatpush2.msra.mxu0 0.0
    %1598 = vmatprep.subr.mxu0 0.0
    %1599 = vmatpush2.msra.mxu0 0.0
    %1600 = vmatprep.subr.mxu0 0.0
    %1601 = vmatpush2.msra.mxu0 0.0
    %1602 = vmatprep.subr.mxu0 0.0
    %1603 = vmatpush2.msra.mxu0 0.0
    %1604 = vmatprep.subr.mxu0 0.0
    %1605 = vmatpush2.msra.mxu0 0.0
    %1606 = vmatprep.subr.mxu0 0.0
    %1607 = vmatpush2.msra.mxu0 0.0
    %1608 = vmatprep.subr.mxu0 0.0
    %1609 = vmatpush2.msra.mxu0 0.0
    %1610 = vmatprep.subr.mxu0 0.0
    %1611 = vmatpush2.msra.mxu0 0.0
    %1612 = vmatprep.subr.mxu0 0.0
    %1613 = vmatpush2.msra.mxu0 0.0
    %1614 = vmatprep.subr.mxu0 0.0
    %1615 = vmatpush2.msra.mxu0 0.0
    %1616 = vmatprep.subr.mxu0 0.0
    %1617 = vmatpush2.msra.mxu0 0.0
    %1618 = vmatprep.subr.mxu0 0.0
    %1619 = vmatpush2.msra.mxu0 0.0
    %1620 = vmatprep.subr.mxu0 0.0
    %1621 = vmatpush2.msra.mxu0 0.0
    %1622 = vmatprep.subr.mxu0 0.0
    %1623 = vmatpush2.msra.mxu0 0.0
    %1624 = vmatprep.subr.mxu0 0.0
    %1625 = vmatpush2.msra.mxu0 0.0
    %1626 = vmatprep.subr.mxu0 0.0
    %1627 = vmatpush2.msra.mxu0 0.0
    %1628 = vmatprep.mubr.f32.mxu0 0.0
    %1629 = vmatmul.mubr.f32.gmra.mxu0 %v1035
    %v1630 = vpop.f32.mrf.mxu0
    %v1631 = vadd.f32 %v1031, %v1630
    %v1632 = vpop.f32.mrf.mxu0
    %1633 = vdwg.mxu0
    %v1634 = vmax.f32 %v1134, 0.0
    %v1635 = vmax.f32 %v1136, 0.0
    %v1636 = vmax.f32 %v1205, 0.0
    %v1637 = vmax.f32 %v1207, 0.0
    %v1638 = vmax.f32 %v1276, 0.0
    %v1639 = vmax.f32 %v1278, 0.0
    %v1640 = vmax.f32 %v1347, 0.0
    %v1641 = vmax.f32 %v1349, 0.0
    %v1642 = vmax.f32 %v1418, 0.0
    %v1643 = vmax.f32 %v1420, 0.0
    %v1644 = vmax.f32 %v1489, 0.0
    %v1645 = vmax.f32 %v1491, 0.0
    %v1646 = vmax.f32 %v1560, 0.0
    %v1647 = vmax.f32 %v1562, 0.0
    %v1648 = vmax.f32 %v1631, 0.0
    %v1651 = vlaneseq
    %v1652 = vshrl.u32 %v1651, 7
    %v1653 = vsub.s32 0, %v1652
    %v1654 = vrot.slane %v212, %v1653
    %v1655 = vlaneseq
    %v1656 = vshrl.u32 %v1655, 7
    %v1657 = vsub.s32 1, %v1656
    %v1658 = vrot.slane %v212, %v1657
    %v1659 = vlaneseq
    %v1660 = vshrl.u32 %v1659, 7
    %v1661 = vsub.s32 2, %v1660
    %v1662 = vrot.slane %v212, %v1661
    %v1663 = vlaneseq
    %v1664 = vshrl.u32 %v1663, 7
    %v1665 = vsub.s32 3, %v1664
    %v1666 = vrot.slane %v212, %v1665
    %v1667 = vlaneseq
    %v1668 = vshrl.u32 %v1667, 7
    %v1669 = vsub.s32 4, %v1668
    %v1670 = vrot.slane %v212, %v1669
    %v1671 = vlaneseq
    %v1672 = vshrl.u32 %v1671, 7
    %v1673 = vsub.s32 5, %v1672
    %v1674 = vrot.slane %v212, %v1673
    %v1675 = vlaneseq
    %v1676 = vshrl.u32 %v1675, 7
    %v1677 = vsub.s32 6, %v1676
    %v1678 = vrot.slane %v212, %v1677
    %v1679 = vlaneseq
    %v1680 = vshrl.u32 %v1679, 7
    %v1681 = vsub.s32 7, %v1680
    %v1682 = vrot.slane %v212, %v1681
    %v1683 = vlaneseq
    %v1684 = vshrl.u32 %v1683, 7
    %v1685 = vsub.s32 0, %v1684
    %v1686 = vrot.slane %v213, %v1685
    %v1687 = vlaneseq
    %v1688 = vshrl.u32 %v1687, 7
    %v1689 = vsub.s32 1, %v1688
    %v1690 = vrot.slane %v213, %v1689
    %v1691 = vlaneseq
    %v1692 = vshrl.u32 %v1691, 7
    %v1693 = vsub.s32 2, %v1692
    %v1694 = vrot.slane %v213, %v1693
    %v1695 = vlaneseq
    %v1696 = vshrl.u32 %v1695, 7
    %v1697 = vsub.s32 3, %v1696
    %v1698 = vrot.slane %v213, %v1697
    %v1699 = vlaneseq
    %v1700 = vshrl.u32 %v1699, 7
    %v1701 = vsub.s32 4, %v1700
    %v1702 = vrot.slane %v213, %v1701
    %v1703 = vlaneseq
    %v1704 = vshrl.u32 %v1703, 7
    %v1705 = vsub.s32 5, %v1704
    %v1706 = vrot.slane %v213, %v1705
    %v1707 = vlaneseq
    %v1708 = vshrl.u32 %v1707, 7
    %v1709 = vsub.s32 6, %v1708
    %v1710 = vrot.slane %v213, %v1709
    %v1726 = vmul.f32 %v1634, %v1654
    %v1727 = vmul.f32 %v1635, %v1658
    %v1728 = vmul.f32 %v1636, %v1662
    %v1729 = vmul.f32 %v1637, %v1666
    %v1730 = vmul.f32 %v1638, %v1670
    %v1731 = vmul.f32 %v1639, %v1674
    %v1732 = vmul.f32 %v1640, %v1678
    %v1733 = vmul.f32 %v1641, %v1682
    %v1734 = vmul.f32 %v1642, %v1686
    %v1735 = vmul.f32 %v1643, %v1690
    %v1736 = vmul.f32 %v1644, %v1694
    %v1737 = vmul.f32 %v1645, %v1698
    %v1738 = vmul.f32 %v1646, %v1702
    %v1739 = vmul.f32 %v1647, %v1706
    %v1740 = vmul.f32 %v1648, %v1710
    %1756 = vrot.lane.b32.xlu0 %v1726, 31
    %v1757 = vpop.permute.xlu0 %1756
    %1758 = vrot.lane.b32.xlu0 %v1727, 31
    %v1759 = vpop.permute.xlu0 %1758
    %1760 = vrot.lane.b32.xlu0 %v1728, 31
    %v1761 = vpop.permute.xlu0 %1760
    %1762 = vrot.lane.b32.xlu0 %v1729, 31
    %v1763 = vpop.permute.xlu0 %1762
    %1764 = vrot.lane.b32.xlu0 %v1730, 31
    %v1765 = vpop.permute.xlu0 %1764
    %1766 = vrot.lane.b32.xlu0 %v1731, 31
    %v1767 = vpop.permute.xlu0 %1766
    %1768 = vrot.lane.b32.xlu0 %v1732, 31
    %v1769 = vpop.permute.xlu0 %1768
    %1770 = vrot.lane.b32.xlu0 %v1733, 31
    %v1771 = vpop.permute.xlu0 %1770
    %1772 = vrot.lane.b32.xlu0 %v1734, 31
    %v1773 = vpop.permute.xlu0 %1772
    %1774 = vrot.lane.b32.xlu0 %v1735, 31
    %v1775 = vpop.permute.xlu0 %1774
    %1776 = vrot.lane.b32.xlu0 %v1736, 31
    %v1777 = vpop.permute.xlu0 %1776
    %1778 = vrot.lane.b32.xlu0 %v1737, 31
    %v1779 = vpop.permute.xlu0 %1778
    %1780 = vrot.lane.b32.xlu0 %v1738, 31
    %v1781 = vpop.permute.xlu0 %1780
    %1782 = vrot.lane.b32.xlu0 %v1739, 31
    %v1783 = vpop.permute.xlu0 %1782
    %1784 = vrot.lane.b32.xlu0 %v1740, 31
    %v1785 = vpop.permute.xlu0 %1784
    %v1786 = vsel %vm309, %v1757, %v1759
    %v1787 = vsel %vm309, %v1759, %v1761
    %v1788 = vsel %vm309, %v1761, %v1763
    %v1789 = vsel %vm309, %v1763, %v1765
    %v1790 = vsel %vm309, %v1765, %v1767
    %v1791 = vsel %vm309, %v1767, %v1769
    %v1792 = vsel %vm309, %v1769, %v1771
    %v1793 = vsel %vm309, %v1771, %v1773
    %v1794 = vsel %vm309, %v1773, %v1775
    %v1795 = vsel %vm309, %v1775, %v1777
    %v1796 = vsel %vm309, %v1777, %v1779
    %v1797 = vsel %vm309, %v1779, %v1781
    %v1798 = vsel %vm309, %v1781, %v1783
    %v1799 = vsel %vm309, %v1783, %v1785
    %v1815 = vsel %vm309, 0.0, %v1757
    %v1816 = vsel %vm340, %v1799, 0.0
    %1819 = vrot.lane.b32.xlu0 %v1815, 127
    %v1820 = vpop.permute.xlu0 %1819
    %1821 = vrot.lane.b32.xlu0 %v1786, 127
    %v1822 = vpop.permute.xlu0 %1821
    %1823 = vrot.lane.b32.xlu0 %v1787, 127
    %v1824 = vpop.permute.xlu0 %1823
    %1825 = vrot.lane.b32.xlu0 %v1788, 127
    %v1826 = vpop.permute.xlu0 %1825
    %1827 = vrot.lane.b32.xlu0 %v1789, 127
    %v1828 = vpop.permute.xlu0 %1827
    %1829 = vrot.lane.b32.xlu0 %v1790, 127
    %v1830 = vpop.permute.xlu0 %1829
    %1831 = vrot.lane.b32.xlu0 %v1791, 127
    %v1832 = vpop.permute.xlu0 %1831
    %1833 = vrot.lane.b32.xlu0 %v1792, 127
    %v1834 = vpop.permute.xlu0 %1833
    %1835 = vrot.lane.b32.xlu0 %v1793, 127
    %v1836 = vpop.permute.xlu0 %1835
    %1837 = vrot.lane.b32.xlu0 %v1794, 127
    %v1838 = vpop.permute.xlu0 %1837
    %1839 = vrot.lane.b32.xlu0 %v1795, 127
    %v1840 = vpop.permute.xlu0 %1839
    %1841 = vrot.lane.b32.xlu0 %v1796, 127
    %v1842 = vpop.permute.xlu0 %1841
    %1843 = vrot.lane.b32.xlu0 %v1797, 127
    %v1844 = vpop.permute.xlu0 %1843
    %1845 = vrot.lane.b32.xlu0 %v1798, 127
    %v1846 = vpop.permute.xlu0 %1845
    %1847 = vrot.lane.b32.xlu0 %v1816, 127
    %v1848 = vpop.permute.xlu0 %1847
    %v1849 = vsel %vm389, %v1820, %v1822
    %v1850 = vsel %vm389, %v1822, %v1824
    %v1851 = vsel %vm389, %v1824, %v1826
    %v1852 = vsel %vm389, %v1826, %v1828
    %v1853 = vsel %vm389, %v1828, %v1830
    %v1854 = vsel %vm389, %v1830, %v1832
    %v1855 = vsel %vm389, %v1832, %v1834
    %v1856 = vsel %vm389, %v1834, %v1836
    %v1857 = vsel %vm389, %v1836, %v1838
    %v1858 = vsel %vm389, %v1838, %v1840
    %v1859 = vsel %vm389, %v1840, %v1842
    %v1860 = vsel %vm389, %v1842, %v1844
    %v1861 = vsel %vm389, %v1844, %v1846
    %v1862 = vsel %vm389, %v1846, %v1848
    %1878 = vrot.lane.b32.xlu0 %v1815, 126
    %v1879 = vpop.permute.xlu0 %1878
    %1880 = vrot.lane.b32.xlu0 %v1786, 126
    %v1881 = vpop.permute.xlu0 %1880
    %1882 = vrot.lane.b32.xlu0 %v1787, 126
    %v1883 = vpop.permute.xlu0 %1882
    %1884 = vrot.lane.b32.xlu0 %v1788, 126
    %v1885 = vpop.permute.xlu0 %1884
    %1886 = vrot.lane.b32.xlu0 %v1789, 126
    %v1887 = vpop.permute.xlu0 %1886
    %1888 = vrot.lane.b32.xlu0 %v1790, 126
    %v1889 = vpop.permute.xlu0 %1888
    %1890 = vrot.lane.b32.xlu0 %v1791, 126
    %v1891 = vpop.permute.xlu0 %1890
    %1892 = vrot.lane.b32.xlu0 %v1792, 126
    %v1893 = vpop.permute.xlu0 %1892
    %1894 = vrot.lane.b32.xlu0 %v1793, 126
    %v1895 = vpop.permute.xlu0 %1894
    %1896 = vrot.lane.b32.xlu0 %v1794, 126
    %v1897 = vpop.permute.xlu0 %1896
    %1898 = vrot.lane.b32.xlu0 %v1795, 126
    %v1899 = vpop.permute.xlu0 %1898
    %1900 = vrot.lane.b32.xlu0 %v1796, 126
    %v1901 = vpop.permute.xlu0 %1900
    %1902 = vrot.lane.b32.xlu0 %v1797, 126
    %v1903 = vpop.permute.xlu0 %1902
    %1904 = vrot.lane.b32.xlu0 %v1798, 126
    %v1905 = vpop.permute.xlu0 %1904
    %1906 = vrot.lane.b32.xlu0 %v1816, 126
    %v1907 = vpop.permute.xlu0 %1906
    %v1908 = vsel %vm464, %v1879, %v1881
    %v1909 = vsel %vm464, %v1881, %v1883
    %v1910 = vsel %vm464, %v1883, %v1885
    %v1911 = vsel %vm464, %v1885, %v1887
    %v1912 = vsel %vm464, %v1887, %v1889
    %v1913 = vsel %vm464, %v1889, %v1891
    %v1914 = vsel %vm464, %v1891, %v1893
    %v1915 = vsel %vm464, %v1893, %v1895
    %v1916 = vsel %vm464, %v1895, %v1897
    %v1917 = vsel %vm464, %v1897, %v1899
    %v1918 = vsel %vm464, %v1899, %v1901
    %v1919 = vsel %vm464, %v1901, %v1903
    %v1920 = vsel %vm464, %v1903, %v1905
    %v1921 = vsel %vm464, %v1905, %v1907
    %1937 = vrot.lane.b32.xlu0 %v1815, 98
    %v1938 = vpop.permute.xlu0 %1937
    %1939 = vrot.lane.b32.xlu0 %v1786, 98
    %v1940 = vpop.permute.xlu0 %1939
    %1941 = vrot.lane.b32.xlu0 %v1787, 98
    %v1942 = vpop.permute.xlu0 %1941
    %1943 = vrot.lane.b32.xlu0 %v1788, 98
    %v1944 = vpop.permute.xlu0 %1943
    %1945 = vrot.lane.b32.xlu0 %v1789, 98
    %v1946 = vpop.permute.xlu0 %1945
    %1947 = vrot.lane.b32.xlu0 %v1790, 98
    %v1948 = vpop.permute.xlu0 %1947
    %1949 = vrot.lane.b32.xlu0 %v1791, 98
    %v1950 = vpop.permute.xlu0 %1949
    %1951 = vrot.lane.b32.xlu0 %v1792, 98
    %v1952 = vpop.permute.xlu0 %1951
    %1953 = vrot.lane.b32.xlu0 %v1793, 98
    %v1954 = vpop.permute.xlu0 %1953
    %1955 = vrot.lane.b32.xlu0 %v1794, 98
    %v1956 = vpop.permute.xlu0 %1955
    %1957 = vrot.lane.b32.xlu0 %v1795, 98
    %v1958 = vpop.permute.xlu0 %1957
    %1959 = vrot.lane.b32.xlu0 %v1796, 98
    %v1960 = vpop.permute.xlu0 %1959
    %1961 = vrot.lane.b32.xlu0 %v1797, 98
    %v1962 = vpop.permute.xlu0 %1961
    %1963 = vrot.lane.b32.xlu0 %v1798, 98
    %v1964 = vpop.permute.xlu0 %1963
    %1965 = vrot.lane.b32.xlu0 %v1816, 98
    %v1966 = vpop.permute.xlu0 %1965
    %v1967 = vsel %vm539, %v1938, %v1940
    %v1968 = vsel %vm539, %v1940, %v1942
    %v1969 = vsel %vm539, %v1942, %v1944
    %v1970 = vsel %vm539, %v1944, %v1946
    %v1971 = vsel %vm539, %v1946, %v1948
    %v1972 = vsel %vm539, %v1948, %v1950
    %v1973 = vsel %vm539, %v1950, %v1952
    %v1974 = vsel %vm539, %v1952, %v1954
    %v1975 = vsel %vm539, %v1954, %v1956
    %v1976 = vsel %vm539, %v1956, %v1958
    %v1977 = vsel %vm539, %v1958, %v1960
    %v1978 = vsel %vm539, %v1960, %v1962
    %v1979 = vsel %vm539, %v1962, %v1964
    %v1980 = vsel %vm539, %v1964, %v1966
    %1996 = vrot.lane.b32.xlu0 %v1815, 97
    %v1997 = vpop.permute.xlu0 %1996
    %1998 = vrot.lane.b32.xlu0 %v1786, 97
    %v1999 = vpop.permute.xlu0 %1998
    %2000 = vrot.lane.b32.xlu0 %v1787, 97
    %v2001 = vpop.permute.xlu0 %2000
    %2002 = vrot.lane.b32.xlu0 %v1788, 97
    %v2003 = vpop.permute.xlu0 %2002
    %2004 = vrot.lane.b32.xlu0 %v1789, 97
    %v2005 = vpop.permute.xlu0 %2004
    %2006 = vrot.lane.b32.xlu0 %v1790, 97
    %v2007 = vpop.permute.xlu0 %2006
    %2008 = vrot.lane.b32.xlu0 %v1791, 97
    %v2009 = vpop.permute.xlu0 %2008
    %2010 = vrot.lane.b32.xlu0 %v1792, 97
    %v2011 = vpop.permute.xlu0 %2010
    %2012 = vrot.lane.b32.xlu0 %v1793, 97
    %v2013 = vpop.permute.xlu0 %2012
    %2014 = vrot.lane.b32.xlu0 %v1794, 97
    %v2015 = vpop.permute.xlu0 %2014
    %2016 = vrot.lane.b32.xlu0 %v1795, 97
    %v2017 = vpop.permute.xlu0 %2016
    %2018 = vrot.lane.b32.xlu0 %v1796, 97
    %v2019 = vpop.permute.xlu0 %2018
    %2020 = vrot.lane.b32.xlu0 %v1797, 97
    %v2021 = vpop.permute.xlu0 %2020
    %2022 = vrot.lane.b32.xlu0 %v1798, 97
    %v2023 = vpop.permute.xlu0 %2022
    %2024 = vrot.lane.b32.xlu0 %v1816, 97
    %v2025 = vpop.permute.xlu0 %2024
    %v2026 = vsel %vm614, %v1997, %v1999
    %v2027 = vsel %vm614, %v1999, %v2001
    %v2028 = vsel %vm614, %v2001, %v2003
    %v2029 = vsel %vm614, %v2003, %v2005
    %v2030 = vsel %vm614, %v2005, %v2007
    %v2031 = vsel %vm614, %v2007, %v2009
    %v2032 = vsel %vm614, %v2009, %v2011
    %v2033 = vsel %vm614, %v2011, %v2013
    %v2034 = vsel %vm614, %v2013, %v2015
    %v2035 = vsel %vm614, %v2015, %v2017
    %v2036 = vsel %vm614, %v2017, %v2019
    %v2037 = vsel %vm614, %v2019, %v2021
    %v2038 = vsel %vm614, %v2021, %v2023
    %v2039 = vsel %vm614, %v2023, %v2025
    %2055 = vrot.lane.b32.xlu0 %v1815, 96
    %v2056 = vpop.permute.xlu0 %2055
    %2057 = vrot.lane.b32.xlu0 %v1786, 96
    %v2058 = vpop.permute.xlu0 %2057
    %2059 = vrot.lane.b32.xlu0 %v1787, 96
    %v2060 = vpop.permute.xlu0 %2059
    %2061 = vrot.lane.b32.xlu0 %v1788, 96
    %v2062 = vpop.permute.xlu0 %2061
    %2063 = vrot.lane.b32.xlu0 %v1789, 96
    %v2064 = vpop.permute.xlu0 %2063
    %2065 = vrot.lane.b32.xlu0 %v1790, 96
    %v2066 = vpop.permute.xlu0 %2065
    %2067 = vrot.lane.b32.xlu0 %v1791, 96
    %v2068 = vpop.permute.xlu0 %2067
    %2069 = vrot.lane.b32.xlu0 %v1792, 96
    %v2070 = vpop.permute.xlu0 %2069
    %2071 = vrot.lane.b32.xlu0 %v1793, 96
    %v2072 = vpop.permute.xlu0 %2071
    %2073 = vrot.lane.b32.xlu0 %v1794, 96
    %v2074 = vpop.permute.xlu0 %2073
    %2075 = vrot.lane.b32.xlu0 %v1795, 96
    %v2076 = vpop.permute.xlu0 %2075
    %2077 = vrot.lane.b32.xlu0 %v1796, 96
    %v2078 = vpop.permute.xlu0 %2077
    %2079 = vrot.lane.b32.xlu0 %v1797, 96
    %v2080 = vpop.permute.xlu0 %2079
    %2081 = vrot.lane.b32.xlu0 %v1798, 96
    %v2082 = vpop.permute.xlu0 %2081
    %2083 = vrot.lane.b32.xlu0 %v1816, 96
    %v2084 = vpop.permute.xlu0 %2083
    %v2085 = vsel %vm689, %v2056, %v2058
    %v2086 = vsel %vm689, %v2058, %v2060
    %v2087 = vsel %vm689, %v2060, %v2062
    %v2088 = vsel %vm689, %v2062, %v2064
    %v2089 = vsel %vm689, %v2064, %v2066
    %v2090 = vsel %vm689, %v2066, %v2068
    %v2091 = vsel %vm689, %v2068, %v2070
    %v2092 = vsel %vm689, %v2070, %v2072
    %v2093 = vsel %vm689, %v2072, %v2074
    %v2094 = vsel %vm689, %v2074, %v2076
    %v2095 = vsel %vm689, %v2076, %v2078
    %v2096 = vsel %vm689, %v2078, %v2080
    %v2097 = vsel %vm689, %v2080, %v2082
    %v2098 = vsel %vm689, %v2082, %v2084
    %2114 = vrot.lane.b32.xlu0 %v1815, 68
    %v2115 = vpop.permute.xlu0 %2114
    %2116 = vrot.lane.b32.xlu0 %v1786, 68
    %v2117 = vpop.permute.xlu0 %2116
    %2118 = vrot.lane.b32.xlu0 %v1787, 68
    %v2119 = vpop.permute.xlu0 %2118
    %2120 = vrot.lane.b32.xlu0 %v1788, 68
    %v2121 = vpop.permute.xlu0 %2120
    %2122 = vrot.lane.b32.xlu0 %v1789, 68
    %v2123 = vpop.permute.xlu0 %2122
    %2124 = vrot.lane.b32.xlu0 %v1790, 68
    %v2125 = vpop.permute.xlu0 %2124
    %2126 = vrot.lane.b32.xlu0 %v1791, 68
    %v2127 = vpop.permute.xlu0 %2126
    %2128 = vrot.lane.b32.xlu0 %v1792, 68
    %v2129 = vpop.permute.xlu0 %2128
    %2130 = vrot.lane.b32.xlu0 %v1793, 68
    %v2131 = vpop.permute.xlu0 %2130
    %2132 = vrot.lane.b32.xlu0 %v1794, 68
    %v2133 = vpop.permute.xlu0 %2132
    %2134 = vrot.lane.b32.xlu0 %v1795, 68
    %v2135 = vpop.permute.xlu0 %2134
    %2136 = vrot.lane.b32.xlu0 %v1796, 68
    %v2137 = vpop.permute.xlu0 %2136
    %2138 = vrot.lane.b32.xlu0 %v1797, 68
    %v2139 = vpop.permute.xlu0 %2138
    %2140 = vrot.lane.b32.xlu0 %v1798, 68
    %v2141 = vpop.permute.xlu0 %2140
    %2142 = vrot.lane.b32.xlu0 %v1816, 68
    %v2143 = vpop.permute.xlu0 %2142
    %v2144 = vsel %vm764, %v2115, %v2117
    %v2145 = vsel %vm764, %v2117, %v2119
    %v2146 = vsel %vm764, %v2119, %v2121
    %v2147 = vsel %vm764, %v2121, %v2123
    %v2148 = vsel %vm764, %v2123, %v2125
    %v2149 = vsel %vm764, %v2125, %v2127
    %v2150 = vsel %vm764, %v2127, %v2129
    %v2151 = vsel %vm764, %v2129, %v2131
    %v2152 = vsel %vm764, %v2131, %v2133
    %v2153 = vsel %vm764, %v2133, %v2135
    %v2154 = vsel %vm764, %v2135, %v2137
    %v2155 = vsel %vm764, %v2137, %v2139
    %v2156 = vsel %vm764, %v2139, %v2141
    %v2157 = vsel %vm764, %v2141, %v2143
    %2173 = vrot.lane.b32.xlu0 %v1815, 67
    %v2174 = vpop.permute.xlu0 %2173
    %2175 = vrot.lane.b32.xlu0 %v1786, 67
    %v2176 = vpop.permute.xlu0 %2175
    %2177 = vrot.lane.b32.xlu0 %v1787, 67
    %v2178 = vpop.permute.xlu0 %2177
    %2179 = vrot.lane.b32.xlu0 %v1788, 67
    %v2180 = vpop.permute.xlu0 %2179
    %2181 = vrot.lane.b32.xlu0 %v1789, 67
    %v2182 = vpop.permute.xlu0 %2181
    %2183 = vrot.lane.b32.xlu0 %v1790, 67
    %v2184 = vpop.permute.xlu0 %2183
    %2185 = vrot.lane.b32.xlu0 %v1791, 67
    %v2186 = vpop.permute.xlu0 %2185
    %2187 = vrot.lane.b32.xlu0 %v1792, 67
    %v2188 = vpop.permute.xlu0 %2187
    %2189 = vrot.lane.b32.xlu0 %v1793, 67
    %v2190 = vpop.permute.xlu0 %2189
    %2191 = vrot.lane.b32.xlu0 %v1794, 67
    %v2192 = vpop.permute.xlu0 %2191
    %2193 = vrot.lane.b32.xlu0 %v1795, 67
    %v2194 = vpop.permute.xlu0 %2193
    %2195 = vrot.lane.b32.xlu0 %v1796, 67
    %v2196 = vpop.permute.xlu0 %2195
    %2197 = vrot.lane.b32.xlu0 %v1797, 67
    %v2198 = vpop.permute.xlu0 %2197
    %2199 = vrot.lane.b32.xlu0 %v1798, 67
    %v2200 = vpop.permute.xlu0 %2199
    %2201 = vrot.lane.b32.xlu0 %v1816, 67
    %v2202 = vpop.permute.xlu0 %2201
    %v2203 = vsel %vm839, %v2174, %v2176
    %v2204 = vsel %vm839, %v2176, %v2178
    %v2205 = vsel %vm839, %v2178, %v2180
    %v2206 = vsel %vm839, %v2180, %v2182
    %v2207 = vsel %vm839, %v2182, %v2184
    %v2208 = vsel %vm839, %v2184, %v2186
    %v2209 = vsel %vm839, %v2186, %v2188
    %v2210 = vsel %vm839, %v2188, %v2190
    %v2211 = vsel %vm839, %v2190, %v2192
    %v2212 = vsel %vm839, %v2192, %v2194
    %v2213 = vsel %vm839, %v2194, %v2196
    %v2214 = vsel %vm839, %v2196, %v2198
    %v2215 = vsel %vm839, %v2198, %v2200
    %v2216 = vsel %vm839, %v2200, %v2202
    %2232 = vrot.lane.b32.xlu0 %v1815, 66
    %v2233 = vpop.permute.xlu0 %2232
    %2234 = vrot.lane.b32.xlu0 %v1786, 66
    %v2235 = vpop.permute.xlu0 %2234
    %2236 = vrot.lane.b32.xlu0 %v1787, 66
    %v2237 = vpop.permute.xlu0 %2236
    %2238 = vrot.lane.b32.xlu0 %v1788, 66
    %v2239 = vpop.permute.xlu0 %2238
    %2240 = vrot.lane.b32.xlu0 %v1789, 66
    %v2241 = vpop.permute.xlu0 %2240
    %2242 = vrot.lane.b32.xlu0 %v1790, 66
    %v2243 = vpop.permute.xlu0 %2242
    %2244 = vrot.lane.b32.xlu0 %v1791, 66
    %v2245 = vpop.permute.xlu0 %2244
    %2246 = vrot.lane.b32.xlu0 %v1792, 66
    %v2247 = vpop.permute.xlu0 %2246
    %2248 = vrot.lane.b32.xlu0 %v1793, 66
    %v2249 = vpop.permute.xlu0 %2248
    %2250 = vrot.lane.b32.xlu0 %v1794, 66
    %v2251 = vpop.permute.xlu0 %2250
    %2252 = vrot.lane.b32.xlu0 %v1795, 66
    %v2253 = vpop.permute.xlu0 %2252
    %2254 = vrot.lane.b32.xlu0 %v1796, 66
    %v2255 = vpop.permute.xlu0 %2254
    %2256 = vrot.lane.b32.xlu0 %v1797, 66
    %v2257 = vpop.permute.xlu0 %2256
    %2258 = vrot.lane.b32.xlu0 %v1798, 66
    %v2259 = vpop.permute.xlu0 %2258
    %2260 = vrot.lane.b32.xlu0 %v1816, 66
    %v2261 = vpop.permute.xlu0 %2260
    %v2262 = vsel %vm899, %v2233, %v2235
    %v2263 = vsel %vm899, %v2235, %v2237
    %v2264 = vsel %vm899, %v2237, %v2239
    %v2265 = vsel %vm899, %v2239, %v2241
    %v2266 = vsel %vm899, %v2241, %v2243
    %v2267 = vsel %vm899, %v2243, %v2245
    %v2268 = vsel %vm899, %v2245, %v2247
    %v2269 = vsel %vm899, %v2247, %v2249
    %v2270 = vsel %vm899, %v2249, %v2251
    %v2271 = vsel %vm899, %v2251, %v2253
    %v2272 = vsel %vm899, %v2253, %v2255
    %v2273 = vsel %vm899, %v2255, %v2257
    %v2274 = vsel %vm899, %v2257, %v2259
    %v2275 = vsel %vm899, %v2259, %v2261
    %v2291 = vld [vmem:[#allocation5] sm:$0xff]
    %v2292 = vld [vmem:[#allocation5 + $0x8] sm:$0xff]
    %v2293 = vld [vmem:[%s4] sm:$0xff]
    %v2294 = vld [vmem:[%s4 + $0x8] sm:$0xff]
    %2296 = vset.pattern.permute.xlu0 0
    %2297 = vperm.xlu0 %2296, %v2293
    %v2298 = vpop.permute.xlu0 %2297
    %2301 = vset.pattern.permute.xlu0 0
    %2302 = vperm.xlu0 %2301, %v2294
    %v2303 = vpop.permute.xlu0 %2302
    %vm2305 = vcmask 588800
    %v2307 = vsel %vm2305, %v2291, 0
    %v2310 = vsel %vm2305, %v2292, 0
    %2312 = vmatprep.subr.mxu0 0.0
    %2313 = vmatpush1.msra.mxu0 0.0
    %2314 = vmatprep.subr.mxu0 0.0
    %2315 = vmatpush1.msra.mxu0 0.0
    %2316 = vmatprep.subr.mxu0 0.0
    %2317 = vmatpush1.msra.mxu0 0.0
    %2318 = vmatprep.subr.mxu0 0.0
    %2319 = vmatpush1.msra.mxu0 0.0
    %2320 = vmatprep.subr.mxu0 0.0
    %2321 = vmatpush1.msra.mxu0 0.0
    %2322 = vmatprep.subr.mxu0 0.0
    %2323 = vmatpush1.msra.mxu0 0.0
    %2324 = vmatprep.subr.mxu0 0.0
    %2325 = vmatpush1.msra.mxu0 0.0
    %2326 = vmatprep.subr.mxu0 %v2263
    %2327 = vmatpush1.msra.mxu0 %v2262
    %2328 = vmatprep.subr.mxu0 %v2204
    %2329 = vmatpush1.msra.mxu0 %v2203
    %2330 = vmatprep.subr.mxu0 %v2145
    %2331 = vmatpush1.msra.mxu0 %v2144
    %2332 = vmatprep.subr.mxu0 %v2086
    %2333 = vmatpush1.msra.mxu0 %v2085
    %2334 = vmatprep.subr.mxu0 %v2027
    %2335 = vmatpush1.msra.mxu0 %v2026
    %2336 = vmatprep.subr.mxu0 %v1968
    %2337 = vmatpush1.msra.mxu0 %v1967
    %2338 = vmatprep.subr.mxu0 %v1909
    %2339 = vmatpush1.msra.mxu0 %v1908
    %2340 = vmatprep.subr.mxu0 %v1850
    %2341 = vmatpush1.msra.mxu0 %v1849
    %2342 = vmatprep.subr.mxu0 %v1786
    %2343 = vmatpush1.msra.mxu0 %v1815
    %2344 = vmatprep.subr.mxu0 0.0
    %2345 = vmatpush2.msra.mxu0 0.0
    %2346 = vmatprep.subr.mxu0 0.0
    %2347 = vmatpush2.msra.mxu0 0.0
    %2348 = vmatprep.subr.mxu0 0.0
    %2349 = vmatpush2.msra.mxu0 0.0
    %2350 = vmatprep.subr.mxu0 0.0
    %2351 = vmatpush2.msra.mxu0 0.0
    %2352 = vmatprep.subr.mxu0 0.0
    %2353 = vmatpush2.msra.mxu0 0.0
    %2354 = vmatprep.subr.mxu0 0.0
    %2355 = vmatpush2.msra.mxu0 0.0
    %2356 = vmatprep.subr.mxu0 0.0
    %2357 = vmatpush2.msra.mxu0 0.0
    %2358 = vmatprep.subr.mxu0 0.0
    %2359 = vmatpush2.msra.mxu0 0.0
    %2360 = vmatprep.subr.mxu0 0.0
    %2361 = vmatpush2.msra.mxu0 0.0
    %2362 = vmatprep.subr.mxu0 0.0
    %2363 = vmatpush2.msra.mxu0 0.0
    %2364 = vmatprep.subr.mxu0 0.0
    %2365 = vmatpush2.msra.mxu0 0.0
    %2366 = vmatprep.subr.mxu0 0.0
    %2367 = vmatpush2.msra.mxu0 0.0
    %2368 = vmatprep.subr.mxu0 0.0
    %2369 = vmatpush2.msra.mxu0 0.0
    %2370 = vmatprep.subr.mxu0 0.0
    %2371 = vmatpush2.msra.mxu0 0.0
    %2372 = vmatprep.subr.mxu0 0.0
    %2373 = vmatpush2.msra.mxu0 0.0
    %2374 = vmatprep.subr.mxu0 0.0
    %2375 = vmatpush2.msra.mxu0 0.0
    %2376 = vmatprep.mubr.f32.mxu0 0.0
    %2377 = vmatmul.mubr.f32.gmra.mxu0 %v2307
    %v2378 = vpop.f32.mrf.mxu0
    %v2379 = vadd.f32 %v2298, %v2378
    %v2380 = vpop.f32.mrf.mxu0
    %v2381 = vadd.f32 %v2298, %v2380
    %2382 = vmatprep.mubr.f32.mxu0 0.0
    %2383 = vmatmul.mubr.f32.gmra.mxu0 %v2310
    %v2384 = vpop.f32.mrf.mxu0
    %v2385 = vadd.f32 %v2303, %v2384
    %v2386 = vpop.f32.mrf.mxu0
    %v2387 = vadd.f32 %v2303, %v2386
    %2388 = vdwg.mxu0
    %2389 = vmatprep.subr.mxu0 0.0
    %2390 = vmatpush1.msra.mxu0 0.0
    %2391 = vmatprep.subr.mxu0 0.0
    %2392 = vmatpush1.msra.mxu0 0.0
    %2393 = vmatprep.subr.mxu0 0.0
    %2394 = vmatpush1.msra.mxu0 0.0
    %2395 = vmatprep.subr.mxu0 0.0
    %2396 = vmatpush1.msra.mxu0 0.0
    %2397 = vmatprep.subr.mxu0 0.0
    %2398 = vmatpush1.msra.mxu0 0.0
    %2399 = vmatprep.subr.mxu0 0.0
    %2400 = vmatpush1.msra.mxu0 0.0
    %2401 = vmatprep.subr.mxu0 0.0
    %2402 = vmatpush1.msra.mxu0 0.0
    %2403 = vmatprep.subr.mxu0 %v2265
    %2404 = vmatpush1.msra.mxu0 %v2264
    %2405 = vmatprep.subr.mxu0 %v2206
    %2406 = vmatpush1.msra.mxu0 %v2205
    %2407 = vmatprep.subr.mxu0 %v2147
    %2408 = vmatpush1.msra.mxu0 %v2146
    %2409 = vmatprep.subr.mxu0 %v2088
    %2410 = vmatpush1.msra.mxu0 %v2087
    %2411 = vmatprep.subr.mxu0 %v2029
    %2412 = vmatpush1.msra.mxu0 %v2028
    %2413 = vmatprep.subr.mxu0 %v1970
    %2414 = vmatpush1.msra.mxu0 %v1969
    %2415 = vmatprep.subr.mxu0 %v1911
    %2416 = vmatpush1.msra.mxu0 %v1910
    %2417 = vmatprep.subr.mxu0 %v1852
    %2418 = vmatpush1.msra.mxu0 %v1851
    %2419 = vmatprep.subr.mxu0 %v1788
    %2420 = vmatpush1.msra.mxu0 %v1787
    %2421 = vmatprep.subr.mxu0 0.0
    %2422 = vmatpush2.msra.mxu0 0.0
    %2423 = vmatprep.subr.mxu0 0.0
    %2424 = vmatpush2.msra.mxu0 0.0
    %2425 = vmatprep.subr.mxu0 0.0
    %2426 = vmatpush2.msra.mxu0 0.0
    %2427 = vmatprep.subr.mxu0 0.0
    %2428 = vmatpush2.msra.mxu0 0.0
    %2429 = vmatprep.subr.mxu0 0.0
    %2430 = vmatpush2.msra.mxu0 0.0
    %2431 = vmatprep.subr.mxu0 0.0
    %2432 = vmatpush2.msra.mxu0 0.0
    %2433 = vmatprep.subr.mxu0 0.0
    %2434 = vmatpush2.msra.mxu0 0.0
    %2435 = vmatprep.subr.mxu0 0.0
    %2436 = vmatpush2.msra.mxu0 0.0
    %2437 = vmatprep.subr.mxu0 0.0
    %2438 = vmatpush2.msra.mxu0 0.0
    %2439 = vmatprep.subr.mxu0 0.0
    %2440 = vmatpush2.msra.mxu0 0.0
    %2441 = vmatprep.subr.mxu0 0.0
    %2442 = vmatpush2.msra.mxu0 0.0
    %2443 = vmatprep.subr.mxu0 0.0
    %2444 = vmatpush2.msra.mxu0 0.0
    %2445 = vmatprep.subr.mxu0 0.0
    %2446 = vmatpush2.msra.mxu0 0.0
    %2447 = vmatprep.subr.mxu0 0.0
    %2448 = vmatpush2.msra.mxu0 0.0
    %2449 = vmatprep.subr.mxu0 0.0
    %2450 = vmatpush2.msra.mxu0 0.0
    %2451 = vmatprep.subr.mxu0 0.0
    %2452 = vmatpush2.msra.mxu0 0.0
    %2453 = vmatprep.mubr.f32.mxu0 0.0
    %2454 = vmatmul.mubr.f32.gmra.mxu0 %v2307
    %v2455 = vpop.f32.mrf.mxu0
    %v2456 = vadd.f32 %v2298, %v2455
    %v2457 = vpop.f32.mrf.mxu0
    %v2458 = vadd.f32 %v2298, %v2457
    %2459 = vmatprep.mubr.f32.mxu0 0.0
    %2460 = vmatmul.mubr.f32.gmra.mxu0 %v2310
    %v2461 = vpop.f32.mrf.mxu0
    %v2462 = vadd.f32 %v2303, %v2461
    %v2463 = vpop.f32.mrf.mxu0
    %v2464 = vadd.f32 %v2303, %v2463
    %2465 = vdwg.mxu0
    %2466 = vmatprep.subr.mxu0 0.0
    %2467 = vmatpush1.msra.mxu0 0.0
    %2468 = vmatprep.subr.mxu0 0.0
    %2469 = vmatpush1.msra.mxu0 0.0
    %2470 = vmatprep.subr.mxu0 0.0
    %2471 = vmatpush1.msra.mxu0 0.0
    %2472 = vmatprep.subr.mxu0 0.0
    %2473 = vmatpush1.msra.mxu0 0.0
    %2474 = vmatprep.subr.mxu0 0.0
    %2475 = vmatpush1.msra.mxu0 0.0
    %2476 = vmatprep.subr.mxu0 0.0
    %2477 = vmatpush1.msra.mxu0 0.0
    %2478 = vmatprep.subr.mxu0 0.0
    %2479 = vmatpush1.msra.mxu0 0.0
    %2480 = vmatprep.subr.mxu0 %v2267
    %2481 = vmatpush1.msra.mxu0 %v2266
    %2482 = vmatprep.subr.mxu0 %v2208
    %2483 = vmatpush1.msra.mxu0 %v2207
    %2484 = vmatprep.subr.mxu0 %v2149
    %2485 = vmatpush1.msra.mxu0 %v2148
    %2486 = vmatprep.subr.mxu0 %v2090
    %2487 = vmatpush1.msra.mxu0 %v2089
    %2488 = vmatprep.subr.mxu0 %v2031
    %2489 = vmatpush1.msra.mxu0 %v2030
    %2490 = vmatprep.subr.mxu0 %v1972
    %2491 = vmatpush1.msra.mxu0 %v1971
    %2492 = vmatprep.subr.mxu0 %v1913
    %2493 = vmatpush1.msra.mxu0 %v1912
    %2494 = vmatprep.subr.mxu0 %v1854
    %2495 = vmatpush1.msra.mxu0 %v1853
    %2496 = vmatprep.subr.mxu0 %v1790
    %2497 = vmatpush1.msra.mxu0 %v1789
    %2498 = vmatprep.subr.mxu0 0.0
    %2499 = vmatpush2.msra.mxu0 0.0
    %2500 = vmatprep.subr.mxu0 0.0
    %2501 = vmatpush2.msra.mxu0 0.0
    %2502 = vmatprep.subr.mxu0 0.0
    %2503 = vmatpush2.msra.mxu0 0.0
    %2504 = vmatprep.subr.mxu0 0.0
    %2505 = vmatpush2.msra.mxu0 0.0
    %2506 = vmatprep.subr.mxu0 0.0
    %2507 = vmatpush2.msra.mxu0 0.0
    %2508 = vmatprep.subr.mxu0 0.0
    %2509 = vmatpush2.msra.mxu0 0.0
    %2510 = vmatprep.subr.mxu0 0.0
    %2511 = vmatpush2.msra.mxu0 0.0
    %2512 = vmatprep.subr.mxu0 0.0
    %2513 = vmatpush2.msra.mxu0 0.0
    %2514 = vmatprep.subr.mxu0 0.0
    %2515 = vmatpush2.msra.mxu0 0.0
    %2516 = vmatprep.subr.mxu0 0.0
    %2517 = vmatpush2.msra.mxu0 0.0
    %2518 = vmatprep.subr.mxu0 0.0
    %2519 = vmatpush2.msra.mxu0 0.0
    %2520 = vmatprep.subr.mxu0 0.0
    %2521 = vmatpush2.msra.mxu0 0.0
    %2522 = vmatprep.subr.mxu0 0.0
    %2523 = vmatpush2.msra.mxu0 0.0
    %2524 = vmatprep.subr.mxu0 0.0
    %2525 = vmatpush2.msra.mxu0 0.0
    %2526 = vmatprep.subr.mxu0 0.0
    %2527 = vmatpush2.msra.mxu0 0.0
    %2528 = vmatprep.subr.mxu0 0.0
    %2529 = vmatpush2.msra.mxu0 0.0
    %2530 = vmatprep.mubr.f32.mxu0 0.0
    %2531 = vmatmul.mubr.f32.gmra.mxu0 %v2307
    %v2532 = vpop.f32.mrf.mxu0
    %v2533 = vadd.f32 %v2298, %v2532
    %v2534 = vpop.f32.mrf.mxu0
    %v2535 = vadd.f32 %v2298, %v2534
    %2536 = vmatprep.mubr.f32.mxu0 0.0
    %2537 = vmatmul.mubr.f32.gmra.mxu0 %v2310
    %v2538 = vpop.f32.mrf.mxu0
    %v2539 = vadd.f32 %v2303, %v2538
    %v2540 = vpop.f32.mrf.mxu0
    %v2541 = vadd.f32 %v2303, %v2540
    %2542 = vdwg.mxu0
    %2543 = vmatprep.subr.mxu0 0.0
    %2544 = vmatpush1.msra.mxu0 0.0
    %2545 = vmatprep.subr.mxu0 0.0
    %2546 = vmatpush1.msra.mxu0 0.0
    %2547 = vmatprep.subr.mxu0 0.0
    %2548 = vmatpush1.msra.mxu0 0.0
    %2549 = vmatprep.subr.mxu0 0.0
    %2550 = vmatpush1.msra.mxu0 0.0
    %2551 = vmatprep.subr.mxu0 0.0
    %2552 = vmatpush1.msra.mxu0 0.0
    %2553 = vmatprep.subr.mxu0 0.0
    %2554 = vmatpush1.msra.mxu0 0.0
    %2555 = vmatprep.subr.mxu0 0.0
    %2556 = vmatpush1.msra.mxu0 0.0
    %2557 = vmatprep.subr.mxu0 %v2269
    %2558 = vmatpush1.msra.mxu0 %v2268
    %2559 = vmatprep.subr.mxu0 %v2210
    %2560 = vmatpush1.msra.mxu0 %v2209
    %2561 = vmatprep.subr.mxu0 %v2151
    %2562 = vmatpush1.msra.mxu0 %v2150
    %2563 = vmatprep.subr.mxu0 %v2092
    %2564 = vmatpush1.msra.mxu0 %v2091
    %2565 = vmatprep.subr.mxu0 %v2033
    %2566 = vmatpush1.msra.mxu0 %v2032
    %2567 = vmatprep.subr.mxu0 %v1974
    %2568 = vmatpush1.msra.mxu0 %v1973
    %2569 = vmatprep.subr.mxu0 %v1915
    %2570 = vmatpush1.msra.mxu0 %v1914
    %2571 = vmatprep.subr.mxu0 %v1856
    %2572 = vmatpush1.msra.mxu0 %v1855
    %2573 = vmatprep.subr.mxu0 %v1792
    %2574 = vmatpush1.msra.mxu0 %v1791
    %2575 = vmatprep.subr.mxu0 0.0
    %2576 = vmatpush2.msra.mxu0 0.0
    %2577 = vmatprep.subr.mxu0 0.0
    %2578 = vmatpush2.msra.mxu0 0.0
    %2579 = vmatprep.subr.mxu0 0.0
    %2580 = vmatpush2.msra.mxu0 0.0
    %2581 = vmatprep.subr.mxu0 0.0
    %2582 = vmatpush2.msra.mxu0 0.0
    %2583 = vmatprep.subr.mxu0 0.0
    %2584 = vmatpush2.msra.mxu0 0.0
    %2585 = vmatprep.subr.mxu0 0.0
    %2586 = vmatpush2.msra.mxu0 0.0
    %2587 = vmatprep.subr.mxu0 0.0
    %2588 = vmatpush2.msra.mxu0 0.0
    %2589 = vmatprep.subr.mxu0 0.0
    %2590 = vmatpush2.msra.mxu0 0.0
    %2591 = vmatprep.subr.mxu0 0.0
    %2592 = vmatpush2.msra.mxu0 0.0
    %2593 = vmatprep.subr.mxu0 0.0
    %2594 = vmatpush2.msra.mxu0 0.0
    %2595 = vmatprep.subr.mxu0 0.0
    %2596 = vmatpush2.msra.mxu0 0.0
    %2597 = vmatprep.subr.mxu0 0.0
    %2598 = vmatpush2.msra.mxu0 0.0
    %2599 = vmatprep.subr.mxu0 0.0
    %2600 = vmatpush2.msra.mxu0 0.0
    %2601 = vmatprep.subr.mxu0 0.0
    %2602 = vmatpush2.msra.mxu0 0.0
    %2603 = vmatprep.subr.mxu0 0.0
    %2604 = vmatpush2.msra.mxu0 0.0
    %2605 = vmatprep.subr.mxu0 0.0
    %2606 = vmatpush2.msra.mxu0 0.0
    %2607 = vmatprep.mubr.f32.mxu0 0.0
    %2608 = vmatmul.mubr.f32.gmra.mxu0 %v2307
    %v2609 = vpop.f32.mrf.mxu0
    %v2610 = vadd.f32 %v2298, %v2609
    %v2611 = vpop.f32.mrf.mxu0
    %v2612 = vadd.f32 %v2298, %v2611
    %2613 = vmatprep.mubr.f32.mxu0 0.0
    %2614 = vmatmul.mubr.f32.gmra.mxu0 %v2310
    %v2615 = vpop.f32.mrf.mxu0
    %v2616 = vadd.f32 %v2303, %v2615
    %v2617 = vpop.f32.mrf.mxu0
    %v2618 = vadd.f32 %v2303, %v2617
    %2619 = vdwg.mxu0
    %2620 = vmatprep.subr.mxu0 0.0
    %2621 = vmatpush1.msra.mxu0 0.0
    %2622 = vmatprep.subr.mxu0 0.0
    %2623 = vmatpush1.msra.mxu0 0.0
    %2624 = vmatprep.subr.mxu0 0.0
    %2625 = vmatpush1.msra.mxu0 0.0
    %2626 = vmatprep.subr.mxu0 0.0
    %2627 = vmatpush1.msra.mxu0 0.0
    %2628 = vmatprep.subr.mxu0 0.0
    %2629 = vmatpush1.msra.mxu0 0.0
    %2630 = vmatprep.subr.mxu0 0.0
    %2631 = vmatpush1.msra.mxu0 0.0
    %2632 = vmatprep.subr.mxu0 0.0
    %2633 = vmatpush1.msra.mxu0 0.0
    %2634 = vmatprep.subr.mxu0 %v2271
    %2635 = vmatpush1.msra.mxu0 %v2270
    %2636 = vmatprep.subr.mxu0 %v2212
    %2637 = vmatpush1.msra.mxu0 %v2211
    %2638 = vmatprep.subr.mxu0 %v2153
    %2639 = vmatpush1.msra.mxu0 %v2152
    %2640 = vmatprep.subr.mxu0 %v2094
    %2641 = vmatpush1.msra.mxu0 %v2093
    %2642 = vmatprep.subr.mxu0 %v2035
    %2643 = vmatpush1.msra.mxu0 %v2034
    %2644 = vmatprep.subr.mxu0 %v1976
    %2645 = vmatpush1.msra.mxu0 %v1975
    %2646 = vmatprep.subr.mxu0 %v1917
    %2647 = vmatpush1.msra.mxu0 %v1916
    %2648 = vmatprep.subr.mxu0 %v1858
    %2649 = vmatpush1.msra.mxu0 %v1857
    %2650 = vmatprep.subr.mxu0 %v1794
    %2651 = vmatpush1.msra.mxu0 %v1793
    %2652 = vmatprep.subr.mxu0 0.0
    %2653 = vmatpush2.msra.mxu0 0.0
    %2654 = vmatprep.subr.mxu0 0.0
    %2655 = vmatpush2.msra.mxu0 0.0
    %2656 = vmatprep.subr.mxu0 0.0
    %2657 = vmatpush2.msra.mxu0 0.0
    %2658 = vmatprep.subr.mxu0 0.0
    %2659 = vmatpush2.msra.mxu0 0.0
    %2660 = vmatprep.subr.mxu0 0.0
    %2661 = vmatpush2.msra.mxu0 0.0
    %2662 = vmatprep.subr.mxu0 0.0
    %2663 = vmatpush2.msra.mxu0 0.0
    %2664 = vmatprep.subr.mxu0 0.0
    %2665 = vmatpush2.msra.mxu0 0.0
    %2666 = vmatprep.subr.mxu0 0.0
    %2667 = vmatpush2.msra.mxu0 0.0
    %2668 = vmatprep.subr.mxu0 0.0
    %2669 = vmatpush2.msra.mxu0 0.0
    %2670 = vmatprep.subr.mxu0 0.0
    %2671 = vmatpush2.msra.mxu0 0.0
    %2672 = vmatprep.subr.mxu0 0.0
    %2673 = vmatpush2.msra.mxu0 0.0
    %2674 = vmatprep.subr.mxu0 0.0
    %2675 = vmatpush2.msra.mxu0 0.0
    %2676 = vmatprep.subr.mxu0 0.0
    %2677 = vmatpush2.msra.mxu0 0.0
    %2678 = vmatprep.subr.mxu0 0.0
    %2679 = vmatpush2.msra.mxu0 0.0
    %2680 = vmatprep.subr.mxu0 0.0
    %2681 = vmatpush2.msra.mxu0 0.0
    %2682 = vmatprep.subr.mxu0 0.0
    %2683 = vmatpush2.msra.mxu0 0.0
    %2684 = vmatprep.mubr.f32.mxu0 0.0
    %2685 = vmatmul.mubr.f32.gmra.mxu0 %v2307
    %v2686 = vpop.f32.mrf.mxu0
    %v2687 = vadd.f32 %v2298, %v2686
    %v2688 = vpop.f32.mrf.mxu0
    %v2689 = vadd.f32 %v2298, %v2688
    %2690 = vmatprep.mubr.f32.mxu0 0.0
    %2691 = vmatmul.mubr.f32.gmra.mxu0 %v2310
    %v2692 = vpop.f32.mrf.mxu0
    %v2693 = vadd.f32 %v2303, %v2692
    %v2694 = vpop.f32.mrf.mxu0
    %v2695 = vadd.f32 %v2303, %v2694
    %2696 = vdwg.mxu0
    %2697 = vmatprep.subr.mxu0 0.0
    %2698 = vmatpush1.msra.mxu0 0.0
    %2699 = vmatprep.subr.mxu0 0.0
    %2700 = vmatpush1.msra.mxu0 0.0
    %2701 = vmatprep.subr.mxu0 0.0
    %2702 = vmatpush1.msra.mxu0 0.0
    %2703 = vmatprep.subr.mxu0 0.0
    %2704 = vmatpush1.msra.mxu0 0.0
    %2705 = vmatprep.subr.mxu0 0.0
    %2706 = vmatpush1.msra.mxu0 0.0
    %2707 = vmatprep.subr.mxu0 0.0
    %2708 = vmatpush1.msra.mxu0 0.0
    %2709 = vmatprep.subr.mxu0 0.0
    %2710 = vmatpush1.msra.mxu0 0.0
    %2711 = vmatprep.subr.mxu0 %v2273
    %2712 = vmatpush1.msra.mxu0 %v2272
    %2713 = vmatprep.subr.mxu0 %v2214
    %2714 = vmatpush1.msra.mxu0 %v2213
    %2715 = vmatprep.subr.mxu0 %v2155
    %2716 = vmatpush1.msra.mxu0 %v2154
    %2717 = vmatprep.subr.mxu0 %v2096
    %2718 = vmatpush1.msra.mxu0 %v2095
    %2719 = vmatprep.subr.mxu0 %v2037
    %2720 = vmatpush1.msra.mxu0 %v2036
    %2721 = vmatprep.subr.mxu0 %v1978
    %2722 = vmatpush1.msra.mxu0 %v1977
    %2723 = vmatprep.subr.mxu0 %v1919
    %2724 = vmatpush1.msra.mxu0 %v1918
    %2725 = vmatprep.subr.mxu0 %v1860
    %2726 = vmatpush1.msra.mxu0 %v1859
    %2727 = vmatprep.subr.mxu0 %v1796
    %2728 = vmatpush1.msra.mxu0 %v1795
    %2729 = vmatprep.subr.mxu0 0.0
    %2730 = vmatpush2.msra.mxu0 0.0
    %2731 = vmatprep.subr.mxu0 0.0
    %2732 = vmatpush2.msra.mxu0 0.0
    %2733 = vmatprep.subr.mxu0 0.0
    %2734 = vmatpush2.msra.mxu0 0.0
    %2735 = vmatprep.subr.mxu0 0.0
    %2736 = vmatpush2.msra.mxu0 0.0
    %2737 = vmatprep.subr.mxu0 0.0
    %2738 = vmatpush2.msra.mxu0 0.0
    %2739 = vmatprep.subr.mxu0 0.0
    %2740 = vmatpush2.msra.mxu0 0.0
    %2741 = vmatprep.subr.mxu0 0.0
    %2742 = vmatpush2.msra.mxu0 0.0
    %2743 = vmatprep.subr.mxu0 0.0
    %2744 = vmatpush2.msra.mxu0 0.0
    %2745 = vmatprep.subr.mxu0 0.0
    %2746 = vmatpush2.msra.mxu0 0.0
    %2747 = vmatprep.subr.mxu0 0.0
    %2748 = vmatpush2.msra.mxu0 0.0
    %2749 = vmatprep.subr.mxu0 0.0
    %2750 = vmatpush2.msra.mxu0 0.0
    %2751 = vmatprep.subr.mxu0 0.0
    %2752 = vmatpush2.msra.mxu0 0.0
    %2753 = vmatprep.subr.mxu0 0.0
    %2754 = vmatpush2.msra.mxu0 0.0
    %2755 = vmatprep.subr.mxu0 0.0
    %2756 = vmatpush2.msra.mxu0 0.0
    %2757 = vmatprep.subr.mxu0 0.0
    %2758 = vmatpush2.msra.mxu0 0.0
    %2759 = vmatprep.subr.mxu0 0.0
    %2760 = vmatpush2.msra.mxu0 0.0
    %2761 = vmatprep.mubr.f32.mxu0 0.0
    %2762 = vmatmul.mubr.f32.gmra.mxu0 %v2307
    %v2763 = vpop.f32.mrf.mxu0
    %v2764 = vadd.f32 %v2298, %v2763
    %v2765 = vpop.f32.mrf.mxu0
    %v2766 = vadd.f32 %v2298, %v2765
    %2767 = vmatprep.mubr.f32.mxu0 0.0
    %2768 = vmatmul.mubr.f32.gmra.mxu0 %v2310
    %v2769 = vpop.f32.mrf.mxu0
    %v2770 = vadd.f32 %v2303, %v2769
    %v2771 = vpop.f32.mrf.mxu0
    %v2772 = vadd.f32 %v2303, %v2771
    %2773 = vdwg.mxu0
    %2774 = vmatprep.subr.mxu0 0.0
    %2775 = vmatpush1.msra.mxu0 0.0
    %2776 = vmatprep.subr.mxu0 0.0
    %2777 = vmatpush1.msra.mxu0 0.0
    %2778 = vmatprep.subr.mxu0 0.0
    %2779 = vmatpush1.msra.mxu0 0.0
    %2780 = vmatprep.subr.mxu0 0.0
    %2781 = vmatpush1.msra.mxu0 0.0
    %2782 = vmatprep.subr.mxu0 0.0
    %2783 = vmatpush1.msra.mxu0 0.0
    %2784 = vmatprep.subr.mxu0 0.0
    %2785 = vmatpush1.msra.mxu0 0.0
    %2786 = vmatprep.subr.mxu0 0.0
    %2787 = vmatpush1.msra.mxu0 0.0
    %2788 = vmatprep.subr.mxu0 %v2275
    %2789 = vmatpush1.msra.mxu0 %v2274
    %2790 = vmatprep.subr.mxu0 %v2216
    %2791 = vmatpush1.msra.mxu0 %v2215
    %2792 = vmatprep.subr.mxu0 %v2157
    %2793 = vmatpush1.msra.mxu0 %v2156
    %2794 = vmatprep.subr.mxu0 %v2098
    %2795 = vmatpush1.msra.mxu0 %v2097
    %2796 = vmatprep.subr.mxu0 %v2039
    %2797 = vmatpush1.msra.mxu0 %v2038
    %2798 = vmatprep.subr.mxu0 %v1980
    %2799 = vmatpush1.msra.mxu0 %v1979
    %2800 = vmatprep.subr.mxu0 %v1921
    %2801 = vmatpush1.msra.mxu0 %v1920
    %2802 = vmatprep.subr.mxu0 %v1862
    %2803 = vmatpush1.msra.mxu0 %v1861
    %2804 = vmatprep.subr.mxu0 %v1798
    %2805 = vmatpush1.msra.mxu0 %v1797
    %2806 = vmatprep.subr.mxu0 0.0
    %2807 = vmatpush2.msra.mxu0 0.0
    %2808 = vmatprep.subr.mxu0 0.0
    %2809 = vmatpush2.msra.mxu0 0.0
    %2810 = vmatprep.subr.mxu0 0.0
    %2811 = vmatpush2.msra.mxu0 0.0
    %2812 = vmatprep.subr.mxu0 0.0
    %2813 = vmatpush2.msra.mxu0 0.0
    %2814 = vmatprep.subr.mxu0 0.0
    %2815 = vmatpush2.msra.mxu0 0.0
    %2816 = vmatprep.subr.mxu0 0.0
    %2817 = vmatpush2.msra.mxu0 0.0
    %2818 = vmatprep.subr.mxu0 0.0
    %2819 = vmatpush2.msra.mxu0 0.0
    %2820 = vmatprep.subr.mxu0 0.0
    %2821 = vmatpush2.msra.mxu0 0.0
    %2822 = vmatprep.subr.mxu0 0.0
    %2823 = vmatpush2.msra.mxu0 0.0
    %2824 = vmatprep.subr.mxu0 0.0
    %2825 = vmatpush2.msra.mxu0 0.0
    %2826 = vmatprep.subr.mxu0 0.0
    %2827 = vmatpush2.msra.mxu0 0.0
    %2828 = vmatprep.subr.mxu0 0.0
    %2829 = vmatpush2.msra.mxu0 0.0
    %2830 = vmatprep.subr.mxu0 0.0
    %2831 = vmatpush2.msra.mxu0 0.0
    %2832 = vmatprep.subr.mxu0 0.0
    %2833 = vmatpush2.msra.mxu0 0.0
    %2834 = vmatprep.subr.mxu0 0.0
    %2835 = vmatpush2.msra.mxu0 0.0
    %2836 = vmatprep.subr.mxu0 0.0
    %2837 = vmatpush2.msra.mxu0 0.0
    %2838 = vmatprep.mubr.f32.mxu0 0.0
    %2839 = vmatmul.mubr.f32.gmra.mxu0 %v2307
    %v2840 = vpop.f32.mrf.mxu0
    %v2841 = vadd.f32 %v2298, %v2840
    %v2842 = vpop.f32.mrf.mxu0
    %v2843 = vadd.f32 %v2298, %v2842
    %2844 = vmatprep.mubr.f32.mxu0 0.0
    %2845 = vmatmul.mubr.f32.gmra.mxu0 %v2310
    %v2846 = vpop.f32.mrf.mxu0
    %v2847 = vadd.f32 %v2303, %v2846
    %v2848 = vpop.f32.mrf.mxu0
    %v2849 = vadd.f32 %v2303, %v2848
    %2850 = vdwg.mxu0
    %2851 = vmatprep.subr.mxu0 0.0
    %2852 = vmatpush1.msra.mxu0 0.0
    %2853 = vmatprep.subr.mxu0 0.0
    %2854 = vmatpush1.msra.mxu0 0.0
    %2855 = vmatprep.subr.mxu0 0.0
    %2856 = vmatpush1.msra.mxu0 0.0
    %2857 = vmatprep.subr.mxu0 0.0
    %2858 = vmatpush1.msra.mxu0 0.0
    %2859 = vmatprep.subr.mxu0 0.0
    %2860 = vmatpush1.msra.mxu0 0.0
    %2861 = vmatprep.subr.mxu0 0.0
    %2862 = vmatpush1.msra.mxu0 0.0
    %2863 = vmatprep.subr.mxu0 0.0
    %2864 = vmatpush1.msra.mxu0 0.0
    %2865 = vmatprep.subr.mxu0 0.0
    %2866 = vmatpush1.msra.mxu0 %v2261
    %2867 = vmatprep.subr.mxu0 0.0
    %2868 = vmatpush1.msra.mxu0 %v2202
    %2869 = vmatprep.subr.mxu0 0.0
    %2870 = vmatpush1.msra.mxu0 %v2143
    %2871 = vmatprep.subr.mxu0 0.0
    %2872 = vmatpush1.msra.mxu0 %v2084
    %2873 = vmatprep.subr.mxu0 0.0
    %2874 = vmatpush1.msra.mxu0 %v2025
    %2875 = vmatprep.subr.mxu0 0.0
    %2876 = vmatpush1.msra.mxu0 %v1966
    %2877 = vmatprep.subr.mxu0 0.0
    %2878 = vmatpush1.msra.mxu0 %v1907
    %2879 = vmatprep.subr.mxu0 0.0
    %2880 = vmatpush1.msra.mxu0 %v1848
    %2881 = vmatprep.subr.mxu0 0.0
    %2882 = vmatpush1.msra.mxu0 %v1816
    %2883 = vmatprep.subr.mxu0 0.0
    %2884 = vmatpush2.msra.mxu0 0.0
    %2885 = vmatprep.subr.mxu0 0.0
    %2886 = vmatpush2.msra.mxu0 0.0
    %2887 = vmatprep.subr.mxu0 0.0
    %2888 = vmatpush2.msra.mxu0 0.0
    %2889 = vmatprep.subr.mxu0 0.0
    %2890 = vmatpush2.msra.mxu0 0.0
    %2891 = vmatprep.subr.mxu0 0.0
    %2892 = vmatpush2.msra.mxu0 0.0
    %2893 = vmatprep.subr.mxu0 0.0
    %2894 = vmatpush2.msra.mxu0 0.0
    %2895 = vmatprep.subr.mxu0 0.0
    %2896 = vmatpush2.msra.mxu0 0.0
    %2897 = vmatprep.subr.mxu0 0.0
    %2898 = vmatpush2.msra.mxu0 0.0
    %2899 = vmatprep.subr.mxu0 0.0
    %2900 = vmatpush2.msra.mxu0 0.0
    %2901 = vmatprep.subr.mxu0 0.0
    %2902 = vmatpush2.msra.mxu0 0.0
    %2903 = vmatprep.subr.mxu0 0.0
    %2904 = vmatpush2.msra.mxu0 0.0
    %2905 = vmatprep.subr.mxu0 0.0
    %2906 = vmatpush2.msra.mxu0 0.0
    %2907 = vmatprep.subr.mxu0 0.0
    %2908 = vmatpush2.msra.mxu0 0.0
    %2909 = vmatprep.subr.mxu0 0.0
    %2910 = vmatpush2.msra.mxu0 0.0
    %2911 = vmatprep.subr.mxu0 0.0
    %2912 = vmatpush2.msra.mxu0 0.0
    %2913 = vmatprep.subr.mxu0 0.0
    %2914 = vmatpush2.msra.mxu0 0.0
    %2915 = vmatprep.mubr.f32.mxu0 0.0
    %2916 = vmatmul.mubr.f32.gmra.mxu0 %v2307
    %v2917 = vpop.f32.mrf.mxu0
    %v2918 = vadd.f32 %v2298, %v2917
    %v2919 = vpop.f32.mrf.mxu0
    %2920 = vmatprep.mubr.f32.mxu0 0.0
    %2921 = vmatmul.mubr.f32.gmra.mxu0 %v2310
    %v2922 = vpop.f32.mrf.mxu0
    %v2923 = vadd.f32 %v2303, %v2922
    %v2924 = vpop.f32.mrf.mxu0
    %2925 = vdwg.mxu0
    %v2926 = vmax.f32 %v2379, 0.0
    %v2927 = vmax.f32 %v2381, 0.0
    %v2928 = vmax.f32 %v2456, 0.0
    %v2929 = vmax.f32 %v2458, 0.0
    %v2930 = vmax.f32 %v2533, 0.0
    %v2931 = vmax.f32 %v2535, 0.0
    %v2932 = vmax.f32 %v2610, 0.0
    %v2933 = vmax.f32 %v2612, 0.0
    %v2934 = vmax.f32 %v2687, 0.0
    %v2935 = vmax.f32 %v2689, 0.0
    %v2936 = vmax.f32 %v2764, 0.0
    %v2937 = vmax.f32 %v2766, 0.0
    %v2938 = vmax.f32 %v2841, 0.0
    %v2939 = vmax.f32 %v2843, 0.0
    %v2940 = vmax.f32 %v2918, 0.0
    %v2941 = vmax.f32 %v2385, 0.0
    %v2942 = vmax.f32 %v2387, 0.0
    %v2943 = vmax.f32 %v2462, 0.0
    %v2944 = vmax.f32 %v2464, 0.0
    %v2945 = vmax.f32 %v2539, 0.0
    %v2946 = vmax.f32 %v2541, 0.0
    %v2947 = vmax.f32 %v2616, 0.0
    %v2948 = vmax.f32 %v2618, 0.0
    %v2949 = vmax.f32 %v2693, 0.0
    %v2950 = vmax.f32 %v2695, 0.0
    %v2951 = vmax.f32 %v2770, 0.0
    %v2952 = vmax.f32 %v2772, 0.0
    %v2953 = vmax.f32 %v2847, 0.0
    %v2954 = vmax.f32 %v2849, 0.0
    %v2955 = vmax.f32 %v2923, 0.0
    %v2956 = vmul.f32 %v2926, %v1654
    %v2957 = vmul.f32 %v2927, %v1658
    %v2958 = vmul.f32 %v2928, %v1662
    %v2959 = vmul.f32 %v2929, %v1666
    %v2960 = vmul.f32 %v2930, %v1670
    %v2961 = vmul.f32 %v2931, %v1674
    %v2962 = vmul.f32 %v2932, %v1678
    %v2963 = vmul.f32 %v2933, %v1682
    %v2964 = vmul.f32 %v2934, %v1686
    %v2965 = vmul.f32 %v2935, %v1690
    %v2966 = vmul.f32 %v2936, %v1694
    %v2967 = vmul.f32 %v2937, %v1698
    %v2968 = vmul.f32 %v2938, %v1702
    %v2969 = vmul.f32 %v2939, %v1706
    %v2970 = vmul.f32 %v2940, %v1710
    %v2971 = vmul.f32 %v2941, %v1654
    %v2972 = vmul.f32 %v2942, %v1658
    %v2973 = vmul.f32 %v2943, %v1662
    %v2974 = vmul.f32 %v2944, %v1666
    %v2975 = vmul.f32 %v2945, %v1670
    %v2976 = vmul.f32 %v2946, %v1674
    %v2977 = vmul.f32 %v2947, %v1678
    %v2978 = vmul.f32 %v2948, %v1682
    %v2979 = vmul.f32 %v2949, %v1686
    %v2980 = vmul.f32 %v2950, %v1690
    %v2981 = vmul.f32 %v2951, %v1694
    %v2982 = vmul.f32 %v2952, %v1698
    %v2983 = vmul.f32 %v2953, %v1702
    %v2984 = vmul.f32 %v2954, %v1706
    %v2985 = vmul.f32 %v2955, %v1710
    %vm2986 = vcmask 64512
    %v2987 = vsel %vm2986, %v2970, 0.0
    %v2988 = vsel %vm2986, %v2985, 0.0
    %3019 = vrot.lane.b32.xlu0 %v2956, 127
    %v3020 = vpop.permute.xlu0 %3019
    %3021 = vrot.lane.b32.xlu0 %v2957, 127
    %v3022 = vpop.permute.xlu0 %3021
    %3023 = vrot.lane.b32.xlu0 %v2958, 127
    %v3024 = vpop.permute.xlu0 %3023
    %3025 = vrot.lane.b32.xlu0 %v2959, 127
    %v3026 = vpop.permute.xlu0 %3025
    %3027 = vrot.lane.b32.xlu0 %v2960, 127
    %v3028 = vpop.permute.xlu0 %3027
    %3029 = vrot.lane.b32.xlu0 %v2961, 127
    %v3030 = vpop.permute.xlu0 %3029
    %3031 = vrot.lane.b32.xlu0 %v2962, 127
    %v3032 = vpop.permute.xlu0 %3031
    %3033 = vrot.lane.b32.xlu0 %v2963, 127
    %v3034 = vpop.permute.xlu0 %3033
    %3035 = vrot.lane.b32.xlu0 %v2964, 127
    %v3036 = vpop.permute.xlu0 %3035
    %3037 = vrot.lane.b32.xlu0 %v2965, 127
    %v3038 = vpop.permute.xlu0 %3037
    %3039 = vrot.lane.b32.xlu0 %v2966, 127
    %v3040 = vpop.permute.xlu0 %3039
    %3041 = vrot.lane.b32.xlu0 %v2967, 127
    %v3042 = vpop.permute.xlu0 %3041
    %3043 = vrot.lane.b32.xlu0 %v2968, 127
    %v3044 = vpop.permute.xlu0 %3043
    %3045 = vrot.lane.b32.xlu0 %v2969, 127
    %v3046 = vpop.permute.xlu0 %3045
    %3047 = vrot.lane.b32.xlu0 %v2987, 127
    %v3048 = vpop.permute.xlu0 %3047
    %3049 = vrot.lane.b32.xlu0 %v2971, 127
    %v3050 = vpop.permute.xlu0 %3049
    %3051 = vrot.lane.b32.xlu0 %v2972, 127
    %v3052 = vpop.permute.xlu0 %3051
    %3053 = vrot.lane.b32.xlu0 %v2973, 127
    %v3054 = vpop.permute.xlu0 %3053
    %3055 = vrot.lane.b32.xlu0 %v2974, 127
    %v3056 = vpop.permute.xlu0 %3055
    %3057 = vrot.lane.b32.xlu0 %v2975, 127
    %v3058 = vpop.permute.xlu0 %3057
    %3059 = vrot.lane.b32.xlu0 %v2976, 127
    %v3060 = vpop.permute.xlu0 %3059
    %3061 = vrot.lane.b32.xlu0 %v2977, 127
    %v3062 = vpop.permute.xlu0 %3061
    %3063 = vrot.lane.b32.xlu0 %v2978, 127
    %v3064 = vpop.permute.xlu0 %3063
    %3065 = vrot.lane.b32.xlu0 %v2979, 127
    %v3066 = vpop.permute.xlu0 %3065
    %3067 = vrot.lane.b32.xlu0 %v2980, 127
    %v3068 = vpop.permute.xlu0 %3067
    %3069 = vrot.lane.b32.xlu0 %v2981, 127
    %v3070 = vpop.permute.xlu0 %3069
    %3071 = vrot.lane.b32.xlu0 %v2982, 127
    %v3072 = vpop.permute.xlu0 %3071
    %3073 = vrot.lane.b32.xlu0 %v2983, 127
    %v3074 = vpop.permute.xlu0 %3073
    %3075 = vrot.lane.b32.xlu0 %v2984, 127
    %v3076 = vpop.permute.xlu0 %3075
    %3077 = vrot.lane.b32.xlu0 %v2988, 127
    %v3078 = vpop.permute.xlu0 %3077
    %v3079 = vsel %vm389, %v3020, %v3022
    %v3080 = vsel %vm389, %v3022, %v3024
    %v3081 = vsel %vm389, %v3024, %v3026
    %v3082 = vsel %vm389, %v3026, %v3028
    %v3083 = vsel %vm389, %v3028, %v3030
    %v3084 = vsel %vm389, %v3030, %v3032
    %v3085 = vsel %vm389, %v3032, %v3034
    %v3086 = vsel %vm389, %v3034, %v3036
    %v3087 = vsel %vm389, %v3036, %v3038
    %v3088 = vsel %vm389, %v3038, %v3040
    %v3089 = vsel %vm389, %v3040, %v3042
    %v3090 = vsel %vm389, %v3042, %v3044
    %v3091 = vsel %vm389, %v3044, %v3046
    %v3092 = vsel %vm389, %v3046, %v3048
    %v3093 = vsel %vm389, %v3050, %v3052
    %v3094 = vsel %vm389, %v3052, %v3054
    %v3095 = vsel %vm389, %v3054, %v3056
    %v3096 = vsel %vm389, %v3056, %v3058
    %v3097 = vsel %vm389, %v3058, %v3060
    %v3098 = vsel %vm389, %v3060, %v3062
    %v3099 = vsel %vm389, %v3062, %v3064
    %v3100 = vsel %vm389, %v3064, %v3066
    %v3101 = vsel %vm389, %v3066, %v3068
    %v3102 = vsel %vm389, %v3068, %v3070
    %v3103 = vsel %vm389, %v3070, %v3072
    %v3104 = vsel %vm389, %v3072, %v3074
    %v3105 = vsel %vm389, %v3074, %v3076
    %v3106 = vsel %vm389, %v3076, %v3078
    %v3137 = vmax.f32 %v2956, %v3079
    %v3138 = vmax.f32 %v2957, %v3080
    %v3139 = vmax.f32 %v2958, %v3081
    %v3140 = vmax.f32 %v2959, %v3082
    %v3141 = vmax.f32 %v2960, %v3083
    %v3142 = vmax.f32 %v2961, %v3084
    %v3143 = vmax.f32 %v2962, %v3085
    %v3144 = vmax.f32 %v2963, %v3086
    %v3145 = vmax.f32 %v2964, %v3087
    %v3146 = vmax.f32 %v2965, %v3088
    %v3147 = vmax.f32 %v2966, %v3089
    %v3148 = vmax.f32 %v2967, %v3090
    %v3149 = vmax.f32 %v2968, %v3091
    %v3150 = vmax.f32 %v2969, %v3092
    %v3151 = vmax.f32 %v2970, %v3048
    %v3152 = vmax.f32 %v2971, %v3093
    %v3153 = vmax.f32 %v2972, %v3094
    %v3154 = vmax.f32 %v2973, %v3095
    %v3155 = vmax.f32 %v2974, %v3096
    %v3156 = vmax.f32 %v2975, %v3097
    %v3157 = vmax.f32 %v2976, %v3098
    %v3158 = vmax.f32 %v2977, %v3099
    %v3159 = vmax.f32 %v2978, %v3100
    %v3160 = vmax.f32 %v2979, %v3101
    %v3161 = vmax.f32 %v2980, %v3102
    %v3162 = vmax.f32 %v2981, %v3103
    %v3163 = vmax.f32 %v2982, %v3104
    %v3164 = vmax.f32 %v2983, %v3105
    %v3165 = vmax.f32 %v2984, %v3106
    %v3166 = vmax.f32 %v2985, %v3078
    %3167 = vrot.lane.b32.xlu0 %v2956, 98
    %v3168 = vpop.permute.xlu0 %3167
    %3169 = vrot.lane.b32.xlu0 %v2957, 98
    %v3170 = vpop.permute.xlu0 %3169
    %3171 = vrot.lane.b32.xlu0 %v2958, 98
    %v3172 = vpop.permute.xlu0 %3171
    %3173 = vrot.lane.b32.xlu0 %v2959, 98
    %v3174 = vpop.permute.xlu0 %3173
    %3175 = vrot.lane.b32.xlu0 %v2960, 98
    %v3176 = vpop.permute.xlu0 %3175
    %3177 = vrot.lane.b32.xlu0 %v2961, 98
    %v3178 = vpop.permute.xlu0 %3177
    %3179 = vrot.lane.b32.xlu0 %v2962, 98
    %v3180 = vpop.permute.xlu0 %3179
    %3181 = vrot.lane.b32.xlu0 %v2963, 98
    %v3182 = vpop.permute.xlu0 %3181
    %3183 = vrot.lane.b32.xlu0 %v2964, 98
    %v3184 = vpop.permute.xlu0 %3183
    %3185 = vrot.lane.b32.xlu0 %v2965, 98
    %v3186 = vpop.permute.xlu0 %3185
    %3187 = vrot.lane.b32.xlu0 %v2966, 98
    %v3188 = vpop.permute.xlu0 %3187
    %3189 = vrot.lane.b32.xlu0 %v2967, 98
    %v3190 = vpop.permute.xlu0 %3189
    %3191 = vrot.lane.b32.xlu0 %v2968, 98
    %v3192 = vpop.permute.xlu0 %3191
    %3193 = vrot.lane.b32.xlu0 %v2969, 98
    %v3194 = vpop.permute.xlu0 %3193
    %3195 = vrot.lane.b32.xlu0 %v2987, 98
    %v3196 = vpop.permute.xlu0 %3195
    %3197 = vrot.lane.b32.xlu0 %v2971, 98
    %v3198 = vpop.permute.xlu0 %3197
    %3199 = vrot.lane.b32.xlu0 %v2972, 98
    %v3200 = vpop.permute.xlu0 %3199
    %3201 = vrot.lane.b32.xlu0 %v2973, 98
    %v3202 = vpop.permute.xlu0 %3201
    %3203 = vrot.lane.b32.xlu0 %v2974, 98
    %v3204 = vpop.permute.xlu0 %3203
    %3205 = vrot.lane.b32.xlu0 %v2975, 98
    %v3206 = vpop.permute.xlu0 %3205
    %3207 = vrot.lane.b32.xlu0 %v2976, 98
    %v3208 = vpop.permute.xlu0 %3207
    %3209 = vrot.lane.b32.xlu0 %v2977, 98
    %v3210 = vpop.permute.xlu0 %3209
    %3211 = vrot.lane.b32.xlu0 %v2978, 98
    %v3212 = vpop.permute.xlu0 %3211
    %3213 = vrot.lane.b32.xlu0 %v2979, 98
    %v3214 = vpop.permute.xlu0 %3213
    %3215 = vrot.lane.b32.xlu0 %v2980, 98
    %v3216 = vpop.permute.xlu0 %3215
    %3217 = vrot.lane.b32.xlu0 %v2981, 98
    %v3218 = vpop.permute.xlu0 %3217
    %3219 = vrot.lane.b32.xlu0 %v2982, 98
    %v3220 = vpop.permute.xlu0 %3219
    %3221 = vrot.lane.b32.xlu0 %v2983, 98
    %v3222 = vpop.permute.xlu0 %3221
    %3223 = vrot.lane.b32.xlu0 %v2984, 98
    %v3224 = vpop.permute.xlu0 %3223
    %3225 = vrot.lane.b32.xlu0 %v2988, 98
    %v3226 = vpop.permute.xlu0 %3225
    %v3227 = vsel %vm539, %v3168, %v3170
    %v3228 = vsel %vm539, %v3170, %v3172
    %v3229 = vsel %vm539, %v3172, %v3174
    %v3230 = vsel %vm539, %v3174, %v3176
    %v3231 = vsel %vm539, %v3176, %v3178
    %v3232 = vsel %vm539, %v3178, %v3180
    %v3233 = vsel %vm539, %v3180, %v3182
    %v3234 = vsel %vm539, %v3182, %v3184
    %v3235 = vsel %vm539, %v3184, %v3186
    %v3236 = vsel %vm539, %v3186, %v3188
    %v3237 = vsel %vm539, %v3188, %v3190
    %v3238 = vsel %vm539, %v3190, %v3192
    %v3239 = vsel %vm539, %v3192, %v3194
    %v3240 = vsel %vm539, %v3194, %v3196
    %v3241 = vsel %vm539, %v3198, %v3200
    %v3242 = vsel %vm539, %v3200, %v3202
    %v3243 = vsel %vm539, %v3202, %v3204
    %v3244 = vsel %vm539, %v3204, %v3206
    %v3245 = vsel %vm539, %v3206, %v3208
    %v3246 = vsel %vm539, %v3208, %v3210
    %v3247 = vsel %vm539, %v3210, %v3212
    %v3248 = vsel %vm539, %v3212, %v3214
    %v3249 = vsel %vm539, %v3214, %v3216
    %v3250 = vsel %vm539, %v3216, %v3218
    %v3251 = vsel %vm539, %v3218, %v3220
    %v3252 = vsel %vm539, %v3220, %v3222
    %v3253 = vsel %vm539, %v3222, %v3224
    %v3254 = vsel %vm539, %v3224, %v3226
    %v3285 = vmax.f32 %v3137, %v3227
    %v3286 = vmax.f32 %v3138, %v3228
    %v3287 = vmax.f32 %v3139, %v3229
    %v3288 = vmax.f32 %v3140, %v3230
    %v3289 = vmax.f32 %v3141, %v3231
    %v3290 = vmax.f32 %v3142, %v3232
    %v3291 = vmax.f32 %v3143, %v3233
    %v3292 = vmax.f32 %v3144, %v3234
    %v3293 = vmax.f32 %v3145, %v3235
    %v3294 = vmax.f32 %v3146, %v3236
    %v3295 = vmax.f32 %v3147, %v3237
    %v3296 = vmax.f32 %v3148, %v3238
    %v3297 = vmax.f32 %v3149, %v3239
    %v3298 = vmax.f32 %v3150, %v3240
    %v3299 = vmax.f32 %v3151, %v3196
    %v3300 = vmax.f32 %v3152, %v3241
    %v3301 = vmax.f32 %v3153, %v3242
    %v3302 = vmax.f32 %v3154, %v3243
    %v3303 = vmax.f32 %v3155, %v3244
    %v3304 = vmax.f32 %v3156, %v3245
    %v3305 = vmax.f32 %v3157, %v3246
    %v3306 = vmax.f32 %v3158, %v3247
    %v3307 = vmax.f32 %v3159, %v3248
    %v3308 = vmax.f32 %v3160, %v3249
    %v3309 = vmax.f32 %v3161, %v3250
    %v3310 = vmax.f32 %v3162, %v3251
    %v3311 = vmax.f32 %v3163, %v3252
    %v3312 = vmax.f32 %v3164, %v3253
    %v3313 = vmax.f32 %v3165, %v3254
    %v3314 = vmax.f32 %v3166, %v3226
    %3315 = vrot.lane.b32.xlu0 %v2956, 97
    %v3316 = vpop.permute.xlu0 %3315
    %3317 = vrot.lane.b32.xlu0 %v2957, 97
    %v3318 = vpop.permute.xlu0 %3317
    %3319 = vrot.lane.b32.xlu0 %v2958, 97
    %v3320 = vpop.permute.xlu0 %3319
    %3321 = vrot.lane.b32.xlu0 %v2959, 97
    %v3322 = vpop.permute.xlu0 %3321
    %3323 = vrot.lane.b32.xlu0 %v2960, 97
    %v3324 = vpop.permute.xlu0 %3323
    %3325 = vrot.lane.b32.xlu0 %v2961, 97
    %v3326 = vpop.permute.xlu0 %3325
    %3327 = vrot.lane.b32.xlu0 %v2962, 97
    %v3328 = vpop.permute.xlu0 %3327
    %3329 = vrot.lane.b32.xlu0 %v2963, 97
    %v3330 = vpop.permute.xlu0 %3329
    %3331 = vrot.lane.b32.xlu0 %v2964, 97
    %v3332 = vpop.permute.xlu0 %3331
    %3333 = vrot.lane.b32.xlu0 %v2965, 97
    %v3334 = vpop.permute.xlu0 %3333
    %3335 = vrot.lane.b32.xlu0 %v2966, 97
    %v3336 = vpop.permute.xlu0 %3335
    %3337 = vrot.lane.b32.xlu0 %v2967, 97
    %v3338 = vpop.permute.xlu0 %3337
    %3339 = vrot.lane.b32.xlu0 %v2968, 97
    %v3340 = vpop.permute.xlu0 %3339
    %3341 = vrot.lane.b32.xlu0 %v2969, 97
    %v3342 = vpop.permute.xlu0 %3341
    %3343 = vrot.lane.b32.xlu0 %v2987, 97
    %v3344 = vpop.permute.xlu0 %3343
    %3345 = vrot.lane.b32.xlu0 %v2971, 97
    %v3346 = vpop.permute.xlu0 %3345
    %3347 = vrot.lane.b32.xlu0 %v2972, 97
    %v3348 = vpop.permute.xlu0 %3347
    %3349 = vrot.lane.b32.xlu0 %v2973, 97
    %v3350 = vpop.permute.xlu0 %3349
    %3351 = vrot.lane.b32.xlu0 %v2974, 97
    %v3352 = vpop.permute.xlu0 %3351
    %3353 = vrot.lane.b32.xlu0 %v2975, 97
    %v3354 = vpop.permute.xlu0 %3353
    %3355 = vrot.lane.b32.xlu0 %v2976, 97
    %v3356 = vpop.permute.xlu0 %3355
    %3357 = vrot.lane.b32.xlu0 %v2977, 97
    %v3358 = vpop.permute.xlu0 %3357
    %3359 = vrot.lane.b32.xlu0 %v2978, 97
    %v3360 = vpop.permute.xlu0 %3359
    %3361 = vrot.lane.b32.xlu0 %v2979, 97
    %v3362 = vpop.permute.xlu0 %3361
    %3363 = vrot.lane.b32.xlu0 %v2980, 97
    %v3364 = vpop.permute.xlu0 %3363
    %3365 = vrot.lane.b32.xlu0 %v2981, 97
    %v3366 = vpop.permute.xlu0 %3365
    %3367 = vrot.lane.b32.xlu0 %v2982, 97
    %v3368 = vpop.permute.xlu0 %3367
    %3369 = vrot.lane.b32.xlu0 %v2983, 97
    %v3370 = vpop.permute.xlu0 %3369
    %3371 = vrot.lane.b32.xlu0 %v2984, 97
    %v3372 = vpop.permute.xlu0 %3371
    %3373 = vrot.lane.b32.xlu0 %v2988, 97
    %v3374 = vpop.permute.xlu0 %3373
    %v3375 = vsel %vm614, %v3316, %v3318
    %v3376 = vsel %vm614, %v3318, %v3320
    %v3377 = vsel %vm614, %v3320, %v3322
    %v3378 = vsel %vm614, %v3322, %v3324
    %v3379 = vsel %vm614, %v3324, %v3326
    %v3380 = vsel %vm614, %v3326, %v3328
    %v3381 = vsel %vm614, %v3328, %v3330
    %v3382 = vsel %vm614, %v3330, %v3332
    %v3383 = vsel %vm614, %v3332, %v3334
    %v3384 = vsel %vm614, %v3334, %v3336
    %v3385 = vsel %vm614, %v3336, %v3338
    %v3386 = vsel %vm614, %v3338, %v3340
    %v3387 = vsel %vm614, %v3340, %v3342
    %v3388 = vsel %vm614, %v3342, %v3344
    %v3389 = vsel %vm614, %v3346, %v3348
    %v3390 = vsel %vm614, %v3348, %v3350
    %v3391 = vsel %vm614, %v3350, %v3352
    %v3392 = vsel %vm614, %v3352, %v3354
    %v3393 = vsel %vm614, %v3354, %v3356
    %v3394 = vsel %vm614, %v3356, %v3358
    %v3395 = vsel %vm614, %v3358, %v3360
    %v3396 = vsel %vm614, %v3360, %v3362
    %v3397 = vsel %vm614, %v3362, %v3364
    %v3398 = vsel %vm614, %v3364, %v3366
    %v3399 = vsel %vm614, %v3366, %v3368
    %v3400 = vsel %vm614, %v3368, %v3370
    %v3401 = vsel %vm614, %v3370, %v3372
    %v3402 = vsel %vm614, %v3372, %v3374
    %v3433 = vmax.f32 %v3285, %v3375
    %v3434 = vmax.f32 %v3286, %v3376
    %v3435 = vmax.f32 %v3287, %v3377
    %v3436 = vmax.f32 %v3288, %v3378
    %v3437 = vmax.f32 %v3289, %v3379
    %v3438 = vmax.f32 %v3290, %v3380
    %v3439 = vmax.f32 %v3291, %v3381
    %v3440 = vmax.f32 %v3292, %v3382
    %v3441 = vmax.f32 %v3293, %v3383
    %v3442 = vmax.f32 %v3294, %v3384
    %v3443 = vmax.f32 %v3295, %v3385
    %v3444 = vmax.f32 %v3296, %v3386
    %v3445 = vmax.f32 %v3297, %v3387
    %v3446 = vmax.f32 %v3298, %v3388
    %v3447 = vmax.f32 %v3299, %v3344
    %v3448 = vmax.f32 %v3300, %v3389
    %v3449 = vmax.f32 %v3301, %v3390
    %v3450 = vmax.f32 %v3302, %v3391
    %v3451 = vmax.f32 %v3303, %v3392
    %v3452 = vmax.f32 %v3304, %v3393
    %v3453 = vmax.f32 %v3305, %v3394
    %v3454 = vmax.f32 %v3306, %v3395
    %v3455 = vmax.f32 %v3307, %v3396
    %v3456 = vmax.f32 %v3308, %v3397
    %v3457 = vmax.f32 %v3309, %v3398
    %v3458 = vmax.f32 %v3310, %v3399
    %v3459 = vmax.f32 %v3311, %v3400
    %v3460 = vmax.f32 %v3312, %v3401
    %v3461 = vmax.f32 %v3313, %v3402
    %v3462 = vmax.f32 %v3314, %v3374
    %v3463 = vld [vmem:[#allocation13] sm:$0xff]
    %v3464 = vld [vmem:[#allocation13 + $0x8] sm:$0xff]
    %v3465 = vld [vmem:[#allocation13 + $0x10] sm:$0xff]
    %v3466 = vld [vmem:[#allocation13 + $0x18] sm:$0xff]
    %v3467 = vld [vmem:[#allocation13 + $0x20] sm:$0xff]
    %v3468 = vld [vmem:[#allocation13 + $0x28] sm:$0xff]
    %v3469 = vld [vmem:[#allocation13 + $0x30] sm:$0xff]
    %v3470 = vld [vmem:[#allocation13 + $0x38] sm:$0xff]
    %v3471 = vld [vmem:[#allocation13 + $0x40] sm:$0xff]
    %v3472 = vld [vmem:[#allocation13 + $0x48] sm:$0xff]
    %v3473 = vld [vmem:[#allocation13 + $0x50] sm:$0xff]
    %v3474 = vld [vmem:[#allocation13 + $0x58] sm:$0xff]
    %v3475 = vld [vmem:[#allocation13 + $0x60] sm:$0xff]
    %v3476 = vld [vmem:[#allocation13 + $0x68] sm:$0xff]
    %v3477 = vld [vmem:[#allocation13 + $0x70] sm:$0xff]
    %v3478 = vld [vmem:[#allocation13 + $0x78] sm:$0xff]
    %v3479 = vld [vmem:[#allocation13 + $0x80] sm:$0xff]
    %v3480 = vld [vmem:[#allocation13 + $0x88] sm:$0xff]
    %v3481 = vld [vmem:[#allocation13 + $0x90] sm:$0xff]
    %v3482 = vld [vmem:[#allocation13 + $0x98] sm:$0xff]
    %v3483 = vld [vmem:[#allocation13 + $0xa0] sm:$0xff]
    %v3484 = vld [vmem:[#allocation13 + $0xa8] sm:$0xff]
    %v3485 = vld [vmem:[#allocation13 + $0xb0] sm:$0xff]
    %v3486 = vld [vmem:[#allocation13 + $0xb8] sm:$0xff]
    %v3487 = vld [vmem:[#allocation13 + $0xc0] sm:$0xff]
    %v3488 = vld [vmem:[#allocation13 + $0xc8] sm:$0xff]
    %v3489 = vld [vmem:[#allocation13 + $0xd0] sm:$0xff]
    %v3490 = vld [vmem:[#allocation13 + $0xd8] sm:$0xff]
    %v3491 = vld [vmem:[#allocation13 + $0xe0] sm:$0xff]
    %v3492 = vld [vmem:[#allocation13 + $0xe8] sm:$0xff]
    %v3493 = vld [vmem:[#allocation13 + $0xf0] sm:$0xff]
    %v3494 = vld [vmem:[#allocation13 + $0xf8] sm:$0xff]
    %v3495 = vld [vmem:[#allocation13 + $0x100] sm:$0xff]
    %v3496 = vld [vmem:[#allocation13 + $0x108] sm:$0xff]
    %v3497 = vld [vmem:[#allocation13 + $0x110] sm:$0xff]
    %v3498 = vld [vmem:[#allocation13 + $0x118] sm:$0xff]
    %v3499 = vld [vmem:[#allocation13 + $0x120] sm:$0xff]
    %v3500 = vld [vmem:[#allocation13 + $0x128] sm:$0xff]
    %v3501 = vld [vmem:[#allocation13 + $0x130] sm:$0xff]
    %v3502 = vld [vmem:[#allocation13 + $0x138] sm:$0xff]
    %v3503 = vld [vmem:[#allocation13 + $0x140] sm:$0xff]
    %v3504 = vld [vmem:[#allocation13 + $0x148] sm:$0xff]
    %v3505 = vld [vmem:[#allocation13 + $0x150] sm:$0xff]
    %v3506 = vld [vmem:[#allocation13 + $0x158] sm:$0xff]
    %v3507 = vld [vmem:[#allocation13 + $0x160] sm:$0xff]
    %v3508 = vld [vmem:[#allocation13 + $0x168] sm:$0xff]
    %v3509 = vld [vmem:[#allocation13 + $0x170] sm:$0xff]
    %v3510 = vld [vmem:[#allocation13 + $0x178] sm:$0xff]
    %v3511 = vld [vmem:[#allocation13 + $0x180] sm:$0xff]
    %v3512 = vld [vmem:[#allocation13 + $0x188] sm:$0xff]
    %v3513 = vld [vmem:[#allocation13 + $0x190] sm:$0xff]
    %v3514 = vld [vmem:[#allocation13 + $0x198] sm:$0xff]
    %v3515 = vld [vmem:[#allocation13 + $0x1a0] sm:$0xff]
    %v3516 = vld [vmem:[#allocation13 + $0x1a8] sm:$0xff]
    %v3517 = vld [vmem:[#allocation13 + $0x1b0] sm:$0xff]
    %v3518 = vld [vmem:[#allocation13 + $0x1b8] sm:$0xff]
    %v3519 = vld [vmem:[#allocation13 + $0x1c0] sm:$0xff]
    %v3520 = vld [vmem:[#allocation13 + $0x1c8] sm:$0xff]
    %v3521 = vld [vmem:[#allocation13 + $0x1d0] sm:$0xff]
    %v3522 = vld [vmem:[#allocation13 + $0x1d8] sm:$0xff]
    %v3523 = vld [vmem:[#allocation13 + $0x1e0] sm:$0xff]
    %v3524 = vld [vmem:[#allocation13 + $0x1e8] sm:$0xff]
    %v3525 = vld [vmem:[#allocation13 + $0x1f0] sm:$0xff]
    %v3526 = vld [vmem:[#allocation13 + $0x1f8] sm:$0xff]
    %v3527 = vld [vmem:[#allocation13 + $0x200] sm:$0xff]
    %v3528 = vld [vmem:[#allocation13 + $0x208] sm:$0xff]
    %v3529 = vld [vmem:[#allocation13 + $0x210] sm:$0xff]
    %v3530 = vld [vmem:[#allocation13 + $0x218] sm:$0xff]
    %v3531 = vld [vmem:[#allocation13 + $0x220] sm:$0xff]
    %v3532 = vld [vmem:[#allocation13 + $0x228] sm:$0xff]
    %v3533 = vld [vmem:[#allocation13 + $0x230] sm:$0xff]
    %v3534 = vld [vmem:[#allocation13 + $0x238] sm:$0xff]
    %v3535 = vld [vmem:[#allocation13 + $0x240] sm:$0xff]
    %v3536 = vld [vmem:[#allocation13 + $0x248] sm:$0xff]
    %v3537 = vld [vmem:[#allocation13 + $0x250] sm:$0xff]
    %v3538 = vld [vmem:[#allocation13 + $0x258] sm:$0xff]
    %v3539 = vld [vmem:[#allocation13 + $0x260] sm:$0xff]
    %v3540 = vld [vmem:[#allocation13 + $0x268] sm:$0xff]
    %v3541 = vld [vmem:[#allocation13 + $0x270] sm:$0xff]
    %v3542 = vld [vmem:[#allocation13 + $0x278] sm:$0xff]
    %v3543 = vld [vmem:[#allocation13 + $0x280] sm:$0xff]
    %v3544 = vld [vmem:[#allocation13 + $0x288] sm:$0xff]
    %v3545 = vld [vmem:[#allocation13 + $0x290] sm:$0xff]
    %v3546 = vld [vmem:[#allocation13 + $0x298] sm:$0xff]
    %v3547 = vld [vmem:[#allocation13 + $0x2a0] sm:$0xff]
    %v3548 = vld [vmem:[#allocation13 + $0x2a8] sm:$0xff]
    %v3549 = vld [vmem:[#allocation13 + $0x2b0] sm:$0xff]
    %v3550 = vld [vmem:[#allocation13 + $0x2b8] sm:$0xff]
    %v3551 = vld [vmem:[#allocation13 + $0x2c0] sm:$0xff]
    %v3552 = vld [vmem:[#allocation13 + $0x2c8] sm:$0xff]
    %v3553 = vld [vmem:[#allocation13 + $0x2d0] sm:$0xff]
    %v3554 = vld [vmem:[#allocation13 + $0x2d8] sm:$0xff]
    %v3555 = vld [vmem:[#allocation13 + $0x2e0] sm:$0xff]
    %v3556 = vld [vmem:[#allocation13 + $0x2e8] sm:$0xff]
    %v3557 = vld [vmem:[#allocation13 + $0x2f0] sm:$0xff]
    %v3558 = vld [vmem:[#allocation13 + $0x2f8] sm:$0xff]
    %v3559 = vld [vmem:[#allocation13 + $0x300] sm:$0xff]
    %v3560 = vld [vmem:[#allocation13 + $0x308] sm:$0xff]
    %v3561 = vld [vmem:[#allocation13 + $0x310] sm:$0xff]
    %v3562 = vld [vmem:[#allocation13 + $0x318] sm:$0xff]
    %v3563 = vld [vmem:[#allocation13 + $0x320] sm:$0xff]
    %v3564 = vld [vmem:[#allocation13 + $0x328] sm:$0xff]
    %v3565 = vld [vmem:[#allocation13 + $0x330] sm:$0xff]
    %v3566 = vld [vmem:[#allocation13 + $0x338] sm:$0xff]
    %v3567 = vld [vmem:[#allocation13 + $0x340] sm:$0xff]
    %v3568 = vld [vmem:[#allocation13 + $0x348] sm:$0xff]
    %v3569 = vld [vmem:[#allocation13 + $0x350] sm:$0xff]
    %v3570 = vld [vmem:[#allocation13 + $0x358] sm:$0xff]
    %v3571 = vld [vmem:[#allocation13 + $0x360] sm:$0xff]
    %v3572 = vld [vmem:[#allocation13 + $0x368] sm:$0xff]
    %v3573 = vld [vmem:[#allocation13 + $0x370] sm:$0xff]
    %v3574 = vld [vmem:[#allocation13 + $0x378] sm:$0xff]
    %v3575 = vld [vmem:[#allocation13 + $0x380] sm:$0xff]
    %v3576 = vld [vmem:[#allocation13 + $0x388] sm:$0xff]
    %v3577 = vld [vmem:[#allocation13 + $0x390] sm:$0xff]
    %v3578 = vld [vmem:[#allocation13 + $0x398] sm:$0xff]
    %v3579 = vld [vmem:[#allocation13 + $0x3a0] sm:$0xff]
    %v3580 = vld [vmem:[#allocation13 + $0x3a8] sm:$0xff]
    %v3581 = vld [vmem:[#allocation13 + $0x3b0] sm:$0xff]
    %v3582 = vld [vmem:[#allocation13 + $0x3b8] sm:$0xff]
    %v3583 = vld [vmem:[#allocation13 + $0x3c0] sm:$0xff]
    %v3584 = vld [vmem:[#allocation13 + $0x3c8] sm:$0xff]
    %v3585 = vld [vmem:[#allocation13 + $0x3d0] sm:$0xff]
    %v3586 = vld [vmem:[#allocation13 + $0x3d8] sm:$0xff]
    %v3587 = vld [vmem:[#allocation13 + $0x3e0] sm:$0xff]
    %v3588 = vld [vmem:[#allocation13 + $0x3e8] sm:$0xff]
    %v3589 = vld [vmem:[#allocation13 + $0x3f0] sm:$0xff]
    %v3590 = vld [vmem:[#allocation13 + $0x3f8] sm:$0xff]
    %v3591 = vld [vmem:[#allocation13 + $0x400] sm:$0xff]
    %v3592 = vld [vmem:[#allocation13 + $0x408] sm:$0xff]
    %v3593 = vld [vmem:[#allocation13 + $0x410] sm:$0xff]
    %v3594 = vld [vmem:[#allocation13 + $0x418] sm:$0xff]
    %v3595 = vld [vmem:[#allocation13 + $0x420] sm:$0xff]
    %v3596 = vld [vmem:[#allocation13 + $0x428] sm:$0xff]
    %v3597 = vld [vmem:[#allocation13 + $0x430] sm:$0xff]
    %v3598 = vld [vmem:[#allocation13 + $0x438] sm:$0xff]
    %v3599 = vld [vmem:[#allocation13 + $0x440] sm:$0xff]
    %v3600 = vld [vmem:[#allocation13 + $0x448] sm:$0xff]
    %v3601 = vld [vmem:[#allocation13 + $0x450] sm:$0xff]
    %v3602 = vld [vmem:[#allocation13 + $0x458] sm:$0xff]
    %v3603 = vld [vmem:[#allocation13 + $0x460] sm:$0xff]
    %v3604 = vld [vmem:[#allocation13 + $0x468] sm:$0xff]
    %v3605 = vld [vmem:[#allocation13 + $0x470] sm:$0xff]
    %v3606 = vld [vmem:[#allocation13 + $0x478] sm:$0xff]
    %v3607 = vld [vmem:[#allocation13 + $0x480] sm:$0xff]
    %v3608 = vld [vmem:[#allocation13 + $0x488] sm:$0xff]
    %v3609 = vld [vmem:[#allocation13 + $0x490] sm:$0xff]
    %v3610 = vld [vmem:[#allocation13 + $0x498] sm:$0xff]
    %v3611 = vld [vmem:[#allocation13 + $0x4a0] sm:$0xff]
    %v3612 = vld [vmem:[#allocation13 + $0x4a8] sm:$0xff]
    %v3613 = vld [vmem:[#allocation13 + $0x4b0] sm:$0xff]
    %v3614 = vld [vmem:[#allocation13 + $0x4b8] sm:$0xff]
    %v3615 = vld [vmem:[#allocation13 + $0x4c0] sm:$0xff]
    %v3616 = vld [vmem:[#allocation13 + $0x4c8] sm:$0xff]
    %v3617 = vld [vmem:[#allocation13 + $0x4d0] sm:$0xff]
    %v3618 = vld [vmem:[#allocation13 + $0x4d8] sm:$0xff]
    %v3619 = vld [vmem:[#allocation13 + $0x4e0] sm:$0xff]
    %v3620 = vld [vmem:[#allocation13 + $0x4e8] sm:$0xff]
    %v3621 = vld [vmem:[#allocation13 + $0x4f0] sm:$0xff]
    %v3622 = vld [vmem:[#allocation13 + $0x4f8] sm:$0xff]
    %v3623 = vld [vmem:[#allocation13 + $0x500] sm:$0xff]
    %v3624 = vld [vmem:[#allocation13 + $0x508] sm:$0xff]
    %v3625 = vld [vmem:[#allocation13 + $0x510] sm:$0xff]
    %v3626 = vld [vmem:[#allocation13 + $0x518] sm:$0xff]
    %v3627 = vld [vmem:[#allocation13 + $0x520] sm:$0xff]
    %v3628 = vld [vmem:[#allocation13 + $0x528] sm:$0xff]
    %v3629 = vld [vmem:[#allocation13 + $0x530] sm:$0xff]
    %v3630 = vld [vmem:[#allocation13 + $0x538] sm:$0xff]
    %v3631 = vld [vmem:[#allocation13 + $0x540] sm:$0xff]
    %v3632 = vld [vmem:[#allocation13 + $0x548] sm:$0xff]
    %v3633 = vld [vmem:[#allocation13 + $0x550] sm:$0xff]
    %v3634 = vld [vmem:[#allocation13 + $0x558] sm:$0xff]
    %v3635 = vld [vmem:[#allocation13 + $0x560] sm:$0xff]
    %v3636 = vld [vmem:[#allocation13 + $0x568] sm:$0xff]
    %v3637 = vld [vmem:[#allocation13 + $0x570] sm:$0xff]
    %v3638 = vld [vmem:[#allocation13 + $0x578] sm:$0xff]
    %v3639 = vld [vmem:[#allocation13 + $0x580] sm:$0xff]
    %v3640 = vld [vmem:[#allocation13 + $0x588] sm:$0xff]
    %v3641 = vld [vmem:[#allocation13 + $0x590] sm:$0xff]
    %v3642 = vld [vmem:[#allocation13 + $0x598] sm:$0xff]
    %v3643 = vld [vmem:[#allocation13 + $0x5a0] sm:$0xff]
    %v3644 = vld [vmem:[#allocation13 + $0x5a8] sm:$0xff]
    %v3645 = vld [vmem:[#allocation13 + $0x5b0] sm:$0xff]
    %v3646 = vld [vmem:[#allocation13 + $0x5b8] sm:$0xff]
    %v3647 = vld [vmem:[#allocation13 + $0x5c0] sm:$0xff]
    %v3648 = vld [vmem:[#allocation13 + $0x5c8] sm:$0xff]
    %v3649 = vld [vmem:[#allocation13 + $0x5d0] sm:$0xff]
    %v3650 = vld [vmem:[#allocation13 + $0x5d8] sm:$0xff]
    %v3651 = vld [vmem:[#allocation13 + $0x5e0] sm:$0xff]
    %v3652 = vld [vmem:[#allocation13 + $0x5e8] sm:$0xff]
    %v3653 = vld [vmem:[#allocation13 + $0x5f0] sm:$0xff]
    %v3654 = vld [vmem:[#allocation13 + $0x5f8] sm:$0xff]
    %v3655 = vld [vmem:[#allocation13 + $0x600] sm:$0xff]
    %v3656 = vld [vmem:[#allocation13 + $0x608] sm:$0xff]
    %v3657 = vld [vmem:[#allocation13 + $0x610] sm:$0xff]
    %v3658 = vld [vmem:[#allocation13 + $0x618] sm:$0xff]
    %v3659 = vld [vmem:[#allocation13 + $0x620] sm:$0xff]
    %v3660 = vld [vmem:[#allocation13 + $0x628] sm:$0xff]
    %v3661 = vld [vmem:[#allocation13 + $0x630] sm:$0xff]
    %v3662 = vld [vmem:[#allocation13 + $0x638] sm:$0xff]
    %v3663 = vld [vmem:[#allocation13 + $0x640] sm:$0xff]
    %v3664 = vld [vmem:[#allocation13 + $0x648] sm:$0xff]
    %v3665 = vld [vmem:[#allocation13 + $0x650] sm:$0xff]
    %v3666 = vld [vmem:[#allocation13 + $0x658] sm:$0xff]
    %v3667 = vld [vmem:[#allocation13 + $0x660] sm:$0xff]
    %v3668 = vld [vmem:[#allocation13 + $0x668] sm:$0xff]
    %v3669 = vld [vmem:[#allocation13 + $0x670] sm:$0xff]
    %v3670 = vld [vmem:[#allocation13 + $0x678] sm:$0xff]
    %v3671 = vld [vmem:[#allocation13 + $0x680] sm:$0xff]
    %v3672 = vld [vmem:[#allocation13 + $0x688] sm:$0xff]
    %v3673 = vld [vmem:[#allocation13 + $0x690] sm:$0xff]
    %v3674 = vld [vmem:[#allocation13 + $0x698] sm:$0xff]
    %v3675 = vld [vmem:[#allocation13 + $0x6a0] sm:$0xff]
    %v3676 = vld [vmem:[#allocation13 + $0x6a8] sm:$0xff]
    %v3677 = vld [vmem:[#allocation13 + $0x6b0] sm:$0xff]
    %v3678 = vld [vmem:[#allocation13 + $0x6b8] sm:$0xff]
    %v3679 = vld [vmem:[#allocation13 + $0x6c0] sm:$0xff]
    %v3680 = vld [vmem:[#allocation13 + $0x6c8] sm:$0xff]
    %v3681 = vld [vmem:[#allocation13 + $0x6d0] sm:$0xff]
    %v3682 = vld [vmem:[#allocation13 + $0x6d8] sm:$0xff]
    %v3683 = vld [vmem:[#allocation13 + $0x6e0] sm:$0xff]
    %v3684 = vld [vmem:[#allocation13 + $0x6e8] sm:$0xff]
    %v3685 = vld [vmem:[#allocation13 + $0x6f0] sm:$0xff]
    %v3686 = vld [vmem:[#allocation13 + $0x6f8] sm:$0xff]
    %v3687 = vld [vmem:[#allocation13 + $0x700] sm:$0xff]
    %v3688 = vld [vmem:[#allocation13 + $0x708] sm:$0xff]
    %v3689 = vld [vmem:[#allocation13 + $0x710] sm:$0xff]
    %v3690 = vld [vmem:[#allocation13 + $0x718] sm:$0xff]
    %v3691 = vld [vmem:[#allocation13 + $0x720] sm:$0xff]
    %v3692 = vld [vmem:[#allocation13 + $0x728] sm:$0xff]
    %v3693 = vld [vmem:[#allocation13 + $0x730] sm:$0xff]
    %v3694 = vld [vmem:[#allocation13 + $0x738] sm:$0xff]
    %v3695 = vld [vmem:[#allocation13 + $0x740] sm:$0xff]
    %v3696 = vld [vmem:[#allocation13 + $0x748] sm:$0xff]
    %v3697 = vld [vmem:[#allocation13 + $0x750] sm:$0xff]
    %v3698 = vld [vmem:[#allocation13 + $0x758] sm:$0xff]
    %v3699 = vld [vmem:[#allocation13 + $0x760] sm:$0xff]
    %v3700 = vld [vmem:[#allocation13 + $0x768] sm:$0xff]
    %v3701 = vld [vmem:[#allocation13 + $0x770] sm:$0xff]
    %v3702 = vld [vmem:[#allocation13 + $0x778] sm:$0xff]
    %v3703 = vld [vmem:[#allocation13 + $0x780] sm:$0xff]
    %v3704 = vld [vmem:[#allocation13 + $0x788] sm:$0xff]
    %v3705 = vld [vmem:[#allocation13 + $0x790] sm:$0xff]
    %v3706 = vld [vmem:[#allocation13 + $0x798] sm:$0xff]
    %v3707 = vld [vmem:[#allocation13 + $0x7a0] sm:$0xff]
    %v3708 = vld [vmem:[#allocation13 + $0x7a8] sm:$0xff]
    %v3709 = vld [vmem:[#allocation13 + $0x7b0] sm:$0xff]
    %v3710 = vld [vmem:[#allocation13 + $0x7b8] sm:$0xff]
    %v3711 = vld [vmem:[#allocation13 + $0x7c0] sm:$0xff]
    %v3712 = vld [vmem:[#allocation13 + $0x7c8] sm:$0xff]
    %v3713 = vld [vmem:[#allocation13 + $0x7d0] sm:$0xff]
    %v3714 = vld [vmem:[#allocation13 + $0x7d8] sm:$0xff]
    %v3715 = vld [vmem:[#allocation13 + $0x7e0] sm:$0xff]
    %v3716 = vld [vmem:[#allocation13 + $0x7e8] sm:$0xff]
    %v3717 = vld [vmem:[#allocation13 + $0x7f0] sm:$0xff]
    %v3718 = vld [vmem:[#allocation13 + $0x7f8] sm:$0xff]
    %v3719 = vld [vmem:[#allocation13 + $0x800] sm:$0xff]
    %v3720 = vld [vmem:[#allocation13 + $0x808] sm:$0xff]
    %v3721 = vld [vmem:[#allocation13 + $0x810] sm:$0xff]
    %v3722 = vld [vmem:[#allocation13 + $0x818] sm:$0xff]
    %v3723 = vld [vmem:[#allocation13 + $0x820] sm:$0xff]
    %v3724 = vld [vmem:[#allocation13 + $0x828] sm:$0xff]
    %v3725 = vld [vmem:[#allocation13 + $0x830] sm:$0xff]
    %v3726 = vld [vmem:[#allocation13 + $0x838] sm:$0xff]
    %v3727 = vld [vmem:[#allocation13 + $0x840] sm:$0xff]
    %v3728 = vld [vmem:[#allocation13 + $0x848] sm:$0xff]
    %v3729 = vld [vmem:[#allocation13 + $0x850] sm:$0xff]
    %v3730 = vld [vmem:[#allocation13 + $0x858] sm:$0xff]
    %v3731 = vld [vmem:[#allocation13 + $0x860] sm:$0xff]
    %v3732 = vld [vmem:[#allocation13 + $0x868] sm:$0xff]
    %v3733 = vld [vmem:[#allocation13 + $0x870] sm:$0xff]
    %v3734 = vld [vmem:[#allocation13 + $0x878] sm:$0xff]
    %v3735 = vld [vmem:[#allocation13 + $0x880] sm:$0xff]
    %v3736 = vld [vmem:[#allocation13 + $0x888] sm:$0xff]
    %v3737 = vld [vmem:[#allocation13 + $0x890] sm:$0xff]
    %v3738 = vld [vmem:[#allocation13 + $0x898] sm:$0xff]
    %v3739 = vld [vmem:[#allocation13 + $0x8a0] sm:$0xff]
    %v3740 = vld [vmem:[#allocation13 + $0x8a8] sm:$0xff]
    %v3741 = vld [vmem:[#allocation13 + $0x8b0] sm:$0xff]
    %v3742 = vld [vmem:[#allocation13 + $0x8b8] sm:$0xff]
    %v3743 = vld [vmem:[#allocation13 + $0x8c0] sm:$0xff]
    %v3744 = vld [vmem:[#allocation13 + $0x8c8] sm:$0xff]
    %v3745 = vld [vmem:[#allocation13 + $0x8d0] sm:$0xff]
    %v3746 = vld [vmem:[#allocation13 + $0x8d8] sm:$0xff]
    %v3747 = vld [vmem:[#allocation13 + $0x8e0] sm:$0xff]
    %v3748 = vld [vmem:[#allocation13 + $0x8e8] sm:$0xff]
    %v3749 = vld [vmem:[#allocation13 + $0x8f0] sm:$0xff]
    %v3750 = vld [vmem:[#allocation13 + $0x8f8] sm:$0xff]
    %v3751 = vld [vmem:[#allocation13 + $0x900] sm:$0xff]
    %v3752 = vld [vmem:[#allocation13 + $0x908] sm:$0xff]
    %v3753 = vld [vmem:[#allocation13 + $0x910] sm:$0xff]
    %v3754 = vld [vmem:[#allocation13 + $0x918] sm:$0xff]
    %v3755 = vld [vmem:[#allocation13 + $0x920] sm:$0xff]
    %v3756 = vld [vmem:[#allocation13 + $0x928] sm:$0xff]
    %v3757 = vld [vmem:[#allocation13 + $0x930] sm:$0xff]
    %v3758 = vld [vmem:[#allocation13 + $0x938] sm:$0xff]
    %v3759 = vld [vmem:[#allocation13 + $0x940] sm:$0xff]
    %v3760 = vld [vmem:[#allocation13 + $0x948] sm:$0xff]
    %v3761 = vld [vmem:[#allocation13 + $0x950] sm:$0xff]
    %v3762 = vld [vmem:[#allocation13 + $0x958] sm:$0xff]
    %v3763 = vld [vmem:[#allocation13 + $0x960] sm:$0xff]
    %v3764 = vld [vmem:[#allocation13 + $0x968] sm:$0xff]
    %v3765 = vld [vmem:[#allocation13 + $0x970] sm:$0xff]
    %v3766 = vld [vmem:[#allocation13 + $0x978] sm:$0xff]
    %v3767 = vld [vmem:[#allocation13 + $0x980] sm:$0xff]
    %v3768 = vld [vmem:[#allocation13 + $0x988] sm:$0xff]
    %v3769 = vld [vmem:[#allocation13 + $0x990] sm:$0xff]
    %v3770 = vld [vmem:[#allocation13 + $0x998] sm:$0xff]
    %v3771 = vld [vmem:[#allocation13 + $0x9a0] sm:$0xff]
    %v3772 = vld [vmem:[#allocation13 + $0x9a8] sm:$0xff]
    %v3773 = vld [vmem:[#allocation13 + $0x9b0] sm:$0xff]
    %v3774 = vld [vmem:[#allocation13 + $0x9b8] sm:$0xff]
    %v3775 = vld [vmem:[#allocation13 + $0x9c0] sm:$0xff]
    %v3776 = vld [vmem:[#allocation13 + $0x9c8] sm:$0xff]
    %v3777 = vld [vmem:[#allocation13 + $0x9d0] sm:$0xff]
    %v3778 = vld [vmem:[#allocation13 + $0x9d8] sm:$0xff]
    %v3779 = vld [vmem:[#allocation13 + $0x9e0] sm:$0xff]
    %v3780 = vld [vmem:[#allocation13 + $0x9e8] sm:$0xff]
    %v3781 = vld [vmem:[#allocation13 + $0x9f0] sm:$0xff]
    %v3782 = vld [vmem:[#allocation13 + $0x9f8] sm:$0xff]
    %v3783 = vld [vmem:[#allocation13 + $0xa00] sm:$0xff]
    %v3784 = vld [vmem:[#allocation13 + $0xa08] sm:$0xff]
    %v3785 = vld [vmem:[#allocation13 + $0xa10] sm:$0xff]
    %v3786 = vld [vmem:[#allocation13 + $0xa18] sm:$0xff]
    %v3787 = vld [vmem:[#allocation13 + $0xa20] sm:$0xff]
    %v3788 = vld [vmem:[#allocation13 + $0xa28] sm:$0xff]
    %v3789 = vld [vmem:[#allocation13 + $0xa30] sm:$0xff]
    %v3790 = vld [vmem:[#allocation13 + $0xa38] sm:$0xff]
    %v3791 = vld [vmem:[#allocation13 + $0xa40] sm:$0xff]
    %v3792 = vld [vmem:[#allocation13 + $0xa48] sm:$0xff]
    %v3793 = vld [vmem:[#allocation13 + $0xa50] sm:$0xff]
    %v3794 = vld [vmem:[#allocation13 + $0xa58] sm:$0xff]
    %v3795 = vld [vmem:[#allocation13 + $0xa60] sm:$0xff]
    %v3796 = vld [vmem:[#allocation13 + $0xa68] sm:$0xff]
    %v3797 = vld [vmem:[#allocation13 + $0xa70] sm:$0xff]
    %v3798 = vld [vmem:[#allocation13 + $0xa78] sm:$0xff]
    %v3799 = vld [vmem:[#allocation13 + $0xa80] sm:$0xff]
    %v3800 = vld [vmem:[#allocation13 + $0xa88] sm:$0xff]
    %v3801 = vld [vmem:[#allocation13 + $0xa90] sm:$0xff]
    %v3802 = vld [vmem:[#allocation13 + $0xa98] sm:$0xff]
    %v3803 = vld [vmem:[#allocation13 + $0xaa0] sm:$0xff]
    %v3804 = vld [vmem:[#allocation13 + $0xaa8] sm:$0xff]
    %v3805 = vld [vmem:[#allocation13 + $0xab0] sm:$0xff]
    %v3806 = vld [vmem:[#allocation13 + $0xab8] sm:$0xff]
    %v3807 = vld [vmem:[#allocation13 + $0xac0] sm:$0xff]
    %v3808 = vld [vmem:[#allocation13 + $0xac8] sm:$0xff]
    %v3809 = vld [vmem:[#allocation13 + $0xad0] sm:$0xff]
    %v3810 = vld [vmem:[#allocation13 + $0xad8] sm:$0xff]
    %v3811 = vld [vmem:[#allocation13 + $0xae0] sm:$0xff]
    %v3812 = vld [vmem:[#allocation13 + $0xae8] sm:$0xff]
    %v3813 = vld [vmem:[#allocation13 + $0xaf0] sm:$0xff]
    %v3814 = vld [vmem:[#allocation13 + $0xaf8] sm:$0xff]
    %v3815 = vld [vmem:[#allocation13 + $0xb00] sm:$0xff]
    %v3816 = vld [vmem:[#allocation13 + $0xb08] sm:$0xff]
    %v3817 = vld [vmem:[#allocation13 + $0xb10] sm:$0xff]
    %v3818 = vld [vmem:[#allocation13 + $0xb18] sm:$0xff]
    %v3819 = vld [vmem:[#allocation13 + $0xb20] sm:$0xff]
    %v3820 = vld [vmem:[#allocation13 + $0xb28] sm:$0xff]
    %v3821 = vld [vmem:[#allocation13 + $0xb30] sm:$0xff]
    %v3822 = vld [vmem:[#allocation13 + $0xb38] sm:$0xff]
    %v3823 = vld [vmem:[#allocation13 + $0xb40] sm:$0xff]
    %v3824 = vld [vmem:[#allocation13 + $0xb48] sm:$0xff]
    %v3825 = vld [vmem:[#allocation13 + $0xb50] sm:$0xff]
    %v3826 = vld [vmem:[#allocation13 + $0xb58] sm:$0xff]
    %v3827 = vld [vmem:[#allocation13 + $0xb60] sm:$0xff]
    %v3828 = vld [vmem:[#allocation13 + $0xb68] sm:$0xff]
    %v3829 = vld [vmem:[#allocation13 + $0xb70] sm:$0xff]
    %v3830 = vld [vmem:[#allocation13 + $0xb78] sm:$0xff]
    %v3831 = vld [vmem:[#allocation13 + $0xb80] sm:$0xff]
    %v3832 = vld [vmem:[#allocation13 + $0xb88] sm:$0xff]
    %v3833 = vld [vmem:[#allocation13 + $0xb90] sm:$0xff]
    %v3834 = vld [vmem:[#allocation13 + $0xb98] sm:$0xff]
    %v3835 = vld [vmem:[#allocation13 + $0xba0] sm:$0xff]
    %v3836 = vld [vmem:[#allocation13 + $0xba8] sm:$0xff]
    %v3837 = vld [vmem:[#allocation13 + $0xbb0] sm:$0xff]
    %v3838 = vld [vmem:[#allocation13 + $0xbb8] sm:$0xff]
    %v3839 = vld [vmem:[#allocation13 + $0xbc0] sm:$0xff]
    %v3840 = vld [vmem:[#allocation13 + $0xbc8] sm:$0xff]
    %v3841 = vld [vmem:[#allocation13 + $0xbd0] sm:$0xff]
    %v3842 = vld [vmem:[#allocation13 + $0xbd8] sm:$0xff]
    %v3843 = vld [vmem:[#allocation13 + $0xbe0] sm:$0xff]
    %v3844 = vld [vmem:[#allocation13 + $0xbe8] sm:$0xff]
    %v3845 = vld [vmem:[#allocation13 + $0xbf0] sm:$0xff]
    %v3846 = vld [vmem:[#allocation13 + $0xbf8] sm:$0xff]
    %v3847 = vld [vmem:[#allocation13 + $0xc00] sm:$0xff]
    %v3848 = vld [vmem:[#allocation13 + $0xc08] sm:$0xff]
    %v3849 = vld [vmem:[#allocation13 + $0xc10] sm:$0xff]
    %v3850 = vld [vmem:[#allocation13 + $0xc18] sm:$0xff]
    %v3851 = vld [vmem:[#allocation13 + $0xc20] sm:$0xff]
    %v3852 = vld [vmem:[#allocation13 + $0xc28] sm:$0xff]
    %v3853 = vld [vmem:[#allocation13 + $0xc30] sm:$0xff]
    %v3854 = vld [vmem:[#allocation13 + $0xc38] sm:$0xff]
    %v3855 = vld [vmem:[#allocation13 + $0xc40] sm:$0xff]
    %v3856 = vld [vmem:[#allocation13 + $0xc48] sm:$0xff]
    %v3857 = vld [vmem:[#allocation13 + $0xc50] sm:$0xff]
    %v3858 = vld [vmem:[#allocation13 + $0xc58] sm:$0xff]
    %v3859 = vld [vmem:[#allocation13 + $0xc60] sm:$0xff]
    %v3860 = vld [vmem:[#allocation13 + $0xc68] sm:$0xff]
    %v3861 = vld [vmem:[#allocation13 + $0xc70] sm:$0xff]
    %v3862 = vld [vmem:[#allocation13 + $0xc78] sm:$0xff]
    %v3863 = vld [vmem:[#allocation13 + $0xc80] sm:$0xff]
    %v3864 = vld [vmem:[#allocation13 + $0xc88] sm:$0xff]
    %v3865 = vld [vmem:[#allocation13 + $0xc90] sm:$0xff]
    %v3866 = vld [vmem:[#allocation13 + $0xc98] sm:$0xff]
    %v3867 = vld [vmem:[#allocation13 + $0xca0] sm:$0xff]
    %v3868 = vld [vmem:[#allocation13 + $0xca8] sm:$0xff]
    %v3869 = vld [vmem:[#allocation13 + $0xcb0] sm:$0xff]
    %v3870 = vld [vmem:[#allocation13 + $0xcb8] sm:$0xff]
    %v3871 = vld [vmem:[#allocation13 + $0xcc0] sm:$0xff]
    %v3872 = vld [vmem:[#allocation13 + $0xcc8] sm:$0xff]
    %v3873 = vld [vmem:[#allocation13 + $0xcd0] sm:$0xff]
    %v3874 = vld [vmem:[#allocation13 + $0xcd8] sm:$0xff]
    %v3875 = vld [vmem:[#allocation13 + $0xce0] sm:$0xff]
    %v3876 = vld [vmem:[#allocation13 + $0xce8] sm:$0xff]
    %v3877 = vld [vmem:[#allocation13 + $0xcf0] sm:$0xff]
    %v3878 = vld [vmem:[#allocation13 + $0xcf8] sm:$0xff]
    %v3879 = vld [vmem:[#allocation13 + $0xd00] sm:$0xff]
    %v3880 = vld [vmem:[#allocation13 + $0xd08] sm:$0xff]
    %v3881 = vld [vmem:[#allocation13 + $0xd10] sm:$0xff]
    %v3882 = vld [vmem:[#allocation13 + $0xd18] sm:$0xff]
    %v3883 = vld [vmem:[#allocation13 + $0xd20] sm:$0xff]
    %v3884 = vld [vmem:[#allocation13 + $0xd28] sm:$0xff]
    %v3885 = vld [vmem:[#allocation13 + $0xd30] sm:$0xff]
    %v3886 = vld [vmem:[#allocation13 + $0xd38] sm:$0xff]
    %v3887 = vld [vmem:[#allocation13 + $0xd40] sm:$0xff]
    %v3888 = vld [vmem:[#allocation13 + $0xd48] sm:$0xff]
    %v3889 = vld [vmem:[#allocation13 + $0xd50] sm:$0xff]
    %v3890 = vld [vmem:[#allocation13 + $0xd58] sm:$0xff]
    %v3891 = vld [vmem:[#allocation13 + $0xd60] sm:$0xff]
    %v3892 = vld [vmem:[#allocation13 + $0xd68] sm:$0xff]
    %v3893 = vld [vmem:[#allocation13 + $0xd70] sm:$0xff]
    %v3894 = vld [vmem:[#allocation13 + $0xd78] sm:$0xff]
    %v3895 = vld [vmem:[#allocation13 + $0xd80] sm:$0xff]
    %v3896 = vld [vmem:[#allocation13 + $0xd88] sm:$0xff]
    %v3897 = vld [vmem:[#allocation13 + $0xd90] sm:$0xff]
    %v3898 = vld [vmem:[#allocation13 + $0xd98] sm:$0xff]
    %v3899 = vld [vmem:[#allocation13 + $0xda0] sm:$0xff]
    %v3900 = vld [vmem:[#allocation13 + $0xda8] sm:$0xff]
    %v3901 = vld [vmem:[#allocation13 + $0xdb0] sm:$0xff]
    %v3902 = vld [vmem:[#allocation13 + $0xdb8] sm:$0xff]
    %v3903 = vld [vmem:[#allocation13 + $0xdc0] sm:$0xff]
    %v3904 = vld [vmem:[#allocation13 + $0xdc8] sm:$0xff]
    %v3905 = vld [vmem:[#allocation13 + $0xdd0] sm:$0xff]
    %v3906 = vld [vmem:[#allocation13 + $0xdd8] sm:$0xff]
    %v3907 = vld [vmem:[#allocation13 + $0xde0] sm:$0xff]
    %v3908 = vld [vmem:[#allocation13 + $0xde8] sm:$0xff]
    %v3909 = vld [vmem:[#allocation13 + $0xdf0] sm:$0xff]
    %v3910 = vld [vmem:[#allocation13 + $0xdf8] sm:$0xff]
    %v3911 = vld [vmem:[#allocation13 + $0xe00] sm:$0xff]
    %v3912 = vld [vmem:[#allocation13 + $0xe08] sm:$0xff]
    %v3913 = vld [vmem:[#allocation13 + $0xe10] sm:$0xff]
    %v3914 = vld [vmem:[#allocation13 + $0xe18] sm:$0xff]
    %v3915 = vld [vmem:[#allocation13 + $0xe20] sm:$0xff]
    %v3916 = vld [vmem:[#allocation13 + $0xe28] sm:$0xff]
    %v3917 = vld [vmem:[#allocation13 + $0xe30] sm:$0xff]
    %v3918 = vld [vmem:[#allocation13 + $0xe38] sm:$0xff]
    %v3919 = vld [vmem:[#allocation13 + $0xe40] sm:$0xff]
    %v3920 = vld [vmem:[#allocation13 + $0xe48] sm:$0xff]
    %v3921 = vld [vmem:[#allocation13 + $0xe50] sm:$0xff]
    %v3922 = vld [vmem:[#allocation13 + $0xe58] sm:$0xff]
    %v3923 = vld [vmem:[#allocation13 + $0xe60] sm:$0xff]
    %v3924 = vld [vmem:[#allocation13 + $0xe68] sm:$0xff]
    %v3925 = vld [vmem:[#allocation13 + $0xe70] sm:$0xff]
    %v3926 = vld [vmem:[#allocation13 + $0xe78] sm:$0xff]
    %v3927 = vld [vmem:[#allocation13 + $0xe80] sm:$0xff]
    %v3928 = vld [vmem:[#allocation13 + $0xe88] sm:$0xff]
    %v3929 = vld [vmem:[#allocation13 + $0xe90] sm:$0xff]
    %v3930 = vld [vmem:[#allocation13 + $0xe98] sm:$0xff]
    %v3931 = vld [vmem:[#allocation13 + $0xea0] sm:$0xff]
    %v3932 = vld [vmem:[#allocation13 + $0xea8] sm:$0xff]
    %v3933 = vld [vmem:[#allocation13 + $0xeb0] sm:$0xff]
    %v3934 = vld [vmem:[#allocation13 + $0xeb8] sm:$0xff]
    %v3935 = vld [vmem:[#allocation13 + $0xec0] sm:$0xff]
    %v3936 = vld [vmem:[#allocation13 + $0xec8] sm:$0xff]
    %v3937 = vld [vmem:[#allocation13 + $0xed0] sm:$0xff]
    %v3938 = vld [vmem:[#allocation13 + $0xed8] sm:$0xff]
    %v3939 = vld [vmem:[#allocation13 + $0xee0] sm:$0xff]
    %v3940 = vld [vmem:[#allocation13 + $0xee8] sm:$0xff]
    %v3941 = vld [vmem:[#allocation13 + $0xef0] sm:$0xff]
    %v3942 = vld [vmem:[#allocation13 + $0xef8] sm:$0xff]
    %v3943 = vld [vmem:[#allocation13 + $0xf00] sm:$0xff]
    %v3944 = vld [vmem:[#allocation13 + $0xf08] sm:$0xff]
    %v3945 = vld [vmem:[#allocation13 + $0xf10] sm:$0xff]
    %v3946 = vld [vmem:[#allocation13 + $0xf18] sm:$0xff]
    %v3947 = vld [vmem:[#allocation13 + $0xf20] sm:$0xff]
    %v3948 = vld [vmem:[#allocation13 + $0xf28] sm:$0xff]
    %v3949 = vld [vmem:[#allocation13 + $0xf30] sm:$0xff]
    %v3950 = vld [vmem:[#allocation13 + $0xf38] sm:$0xff]
    %v3951 = vld [vmem:[#allocation13 + $0xf40] sm:$0xff]
    %v3952 = vld [vmem:[#allocation13 + $0xf48] sm:$0xff]
    %v3953 = vld [vmem:[#allocation13 + $0xf50] sm:$0xff]
    %v3954 = vld [vmem:[#allocation13 + $0xf58] sm:$0xff]
    %v3955 = vld [vmem:[#allocation13 + $0xf60] sm:$0xff]
    %v3956 = vld [vmem:[#allocation13 + $0xf68] sm:$0xff]
    %v3957 = vld [vmem:[#allocation13 + $0xf70] sm:$0xff]
    %v3958 = vld [vmem:[#allocation13 + $0xf78] sm:$0xff]
    %v3959 = vld [vmem:[#allocation13 + $0xf80] sm:$0xff]
    %v3960 = vld [vmem:[#allocation13 + $0xf88] sm:$0xff]
    %v3961 = vld [vmem:[#allocation13 + $0xf90] sm:$0xff]
    %v3962 = vld [vmem:[#allocation13 + $0xf98] sm:$0xff]
    %v3963 = vld [vmem:[#allocation13 + $0xfa0] sm:$0xff]
    %v3964 = vld [vmem:[#allocation13 + $0xfa8] sm:$0xff]
    %v3965 = vld [vmem:[#allocation13 + $0xfb0] sm:$0xff]
    %v3966 = vld [vmem:[#allocation13 + $0xfb8] sm:$0xff]
    %v3967 = vld [vmem:[#allocation13 + $0xfc0] sm:$0xff]
    %v3968 = vld [vmem:[#allocation13 + $0xfc8] sm:$0xff]
    %v3969 = vld [vmem:[#allocation13 + $0xfd0] sm:$0xff]
    %v3970 = vld [vmem:[#allocation13 + $0xfd8] sm:$0xff]
    %v3971 = vld [vmem:[#allocation13 + $0xfe0] sm:$0xff]
    %v3972 = vld [vmem:[#allocation13 + $0xfe8] sm:$0xff]
    %v3973 = vld [vmem:[#allocation13 + $0xff0] sm:$0xff]
    %v3974 = vld [vmem:[#allocation13 + $0xff8] sm:$0xff]
    %v3975 = vld [vmem:[#allocation13 + $0x1000] sm:$0xff]
    %v3976 = vld [vmem:[#allocation13 + $0x1008] sm:$0xff]
    %v3977 = vld [vmem:[#allocation13 + $0x1010] sm:$0xff]
    %v3978 = vld [vmem:[#allocation13 + $0x1018] sm:$0xff]
    %v3979 = vld [vmem:[#allocation13 + $0x1020] sm:$0xff]
    %v3980 = vld [vmem:[#allocation13 + $0x1028] sm:$0xff]
    %v3981 = vld [vmem:[#allocation13 + $0x1030] sm:$0xff]
    %v3982 = vld [vmem:[#allocation13 + $0x1038] sm:$0xff]
    %v3983 = vld [vmem:[#allocation13 + $0x1040] sm:$0xff]
    %v3984 = vld [vmem:[#allocation13 + $0x1048] sm:$0xff]
    %v3985 = vld [vmem:[#allocation13 + $0x1050] sm:$0xff]
    %v3986 = vld [vmem:[#allocation13 + $0x1058] sm:$0xff]
    %v3987 = vld [vmem:[#allocation13 + $0x1060] sm:$0xff]
    %v3988 = vld [vmem:[#allocation13 + $0x1068] sm:$0xff]
    %v3989 = vld [vmem:[#allocation13 + $0x1070] sm:$0xff]
    %v3990 = vld [vmem:[#allocation13 + $0x1078] sm:$0xff]
    %v3991 = vld [vmem:[#allocation13 + $0x1080] sm:$0xff]
    %v3992 = vld [vmem:[#allocation13 + $0x1088] sm:$0xff]
    %v3993 = vld [vmem:[#allocation13 + $0x1090] sm:$0xff]
    %v3994 = vld [vmem:[#allocation13 + $0x1098] sm:$0xff]
    %v3995 = vld [vmem:[#allocation13 + $0x10a0] sm:$0xff]
    %v3996 = vld [vmem:[#allocation13 + $0x10a8] sm:$0xff]
    %v3997 = vld [vmem:[#allocation13 + $0x10b0] sm:$0xff]
    %v3998 = vld [vmem:[#allocation13 + $0x10b8] sm:$0xff]
    %v3999 = vld [vmem:[#allocation13 + $0x10c0] sm:$0xff]
    %v4000 = vld [vmem:[#allocation13 + $0x10c8] sm:$0xff]
    %v4001 = vld [vmem:[#allocation13 + $0x10d0] sm:$0xff]
    %v4002 = vld [vmem:[#allocation13 + $0x10d8] sm:$0xff]
    %v4003 = vld [vmem:[#allocation13 + $0x10e0] sm:$0xff]
    %v4004 = vld [vmem:[#allocation13 + $0x10e8] sm:$0xff]
    %v4005 = vld [vmem:[#allocation13 + $0x10f0] sm:$0xff]
    %v4006 = vld [vmem:[#allocation13 + $0x10f8] sm:$0xff]
    %v4007 = vld [vmem:[#allocation13 + $0x1100] sm:$0xff]
    %v4008 = vld [vmem:[#allocation13 + $0x1108] sm:$0xff]
    %v4009 = vld [vmem:[#allocation13 + $0x1110] sm:$0xff]
    %v4010 = vld [vmem:[#allocation13 + $0x1118] sm:$0xff]
    %v4011 = vld [vmem:[#allocation13 + $0x1120] sm:$0xff]
    %v4012 = vld [vmem:[#allocation13 + $0x1128] sm:$0xff]
    %v4013 = vld [vmem:[#allocation13 + $0x1130] sm:$0xff]
    %v4014 = vld [vmem:[#allocation13 + $0x1138] sm:$0xff]
    %v4015 = vld [vmem:[#allocation13 + $0x1140] sm:$0xff]
    %v4016 = vld [vmem:[#allocation13 + $0x1148] sm:$0xff]
    %v4017 = vld [vmem:[#allocation13 + $0x1150] sm:$0xff]
    %v4018 = vld [vmem:[#allocation13 + $0x1158] sm:$0xff]
    %v4019 = vld [vmem:[#allocation13 + $0x1160] sm:$0xff]
    %v4020 = vld [vmem:[#allocation13 + $0x1168] sm:$0xff]
    %v4021 = vld [vmem:[#allocation13 + $0x1170] sm:$0xff]
    %v4022 = vld [vmem:[#allocation13 + $0x1178] sm:$0xff]
    %v4023 = vld [vmem:[#allocation13 + $0x1180] sm:$0xff]
    %v4024 = vld [vmem:[#allocation13 + $0x1188] sm:$0xff]
    %v4025 = vld [vmem:[#allocation13 + $0x1190] sm:$0xff]
    %v4026 = vld [vmem:[#allocation13 + $0x1198] sm:$0xff]
    %v4027 = vld [vmem:[#allocation13 + $0x11a0] sm:$0xff]
    %v4028 = vld [vmem:[#allocation13 + $0x11a8] sm:$0xff]
    %v4029 = vld [vmem:[#allocation13 + $0x11b0] sm:$0xff]
    %v4030 = vld [vmem:[#allocation13 + $0x11b8] sm:$0xff]
    %v4031 = vld [vmem:[#allocation13 + $0x11c0] sm:$0xff]
    %v4032 = vld [vmem:[#allocation13 + $0x11c8] sm:$0xff]
    %v4033 = vld [vmem:[#allocation13 + $0x11d0] sm:$0xff]
    %v4034 = vld [vmem:[#allocation13 + $0x11d8] sm:$0xff]
    %v4035 = vld [vmem:[#allocation13 + $0x11e0] sm:$0xff]
    %v4036 = vld [vmem:[#allocation13 + $0x11e8] sm:$0xff]
    %v4037 = vld [vmem:[#allocation13 + $0x11f0] sm:$0xff]
    %v4038 = vld [vmem:[#allocation13 + $0x11f8] sm:$0xff]
    %v4039 = vld [vmem:[#allocation13 + $0x1200] sm:$0xff]
    %v4040 = vld [vmem:[#allocation13 + $0x1208] sm:$0xff]
    %v4041 = vld [vmem:[#allocation13 + $0x1210] sm:$0xff]
    %v4042 = vld [vmem:[#allocation13 + $0x1218] sm:$0xff]
    %v4043 = vld [vmem:[#allocation13 + $0x1220] sm:$0xff]
    %v4044 = vld [vmem:[#allocation13 + $0x1228] sm:$0xff]
    %v4045 = vld [vmem:[#allocation13 + $0x1230] sm:$0xff]
    %v4046 = vld [vmem:[#allocation13 + $0x1238] sm:$0xff]
    %v4047 = vld [vmem:[#allocation13 + $0x1240] sm:$0xff]
    %v4048 = vld [vmem:[#allocation13 + $0x1248] sm:$0xff]
    %v4049 = vld [vmem:[#allocation13 + $0x1250] sm:$0xff]
    %v4050 = vld [vmem:[#allocation13 + $0x1258] sm:$0xff]
    %v4051 = vld [vmem:[#allocation13 + $0x1260] sm:$0xff]
    %v4052 = vld [vmem:[#allocation13 + $0x1268] sm:$0xff]
    %v4053 = vld [vmem:[#allocation13 + $0x1270] sm:$0xff]
    %v4054 = vld [vmem:[#allocation13 + $0x1278] sm:$0xff]
    %v4055 = vld [vmem:[#allocation13 + $0x1280] sm:$0xff]
    %v4056 = vld [vmem:[#allocation13 + $0x1288] sm:$0xff]
    %v4057 = vld [vmem:[#allocation13 + $0x1290] sm:$0xff]
    %v4058 = vld [vmem:[#allocation13 + $0x1298] sm:$0xff]
    %v4059 = vld [vmem:[#allocation13 + $0x12a0] sm:$0xff]
    %v4060 = vld [vmem:[#allocation13 + $0x12a8] sm:$0xff]
    %v4061 = vld [vmem:[#allocation13 + $0x12b0] sm:$0xff]
    %v4062 = vld [vmem:[#allocation13 + $0x12b8] sm:$0xff]
    %v4063 = vld [vmem:[#allocation13 + $0x12c0] sm:$0xff]
    %v4064 = vld [vmem:[#allocation13 + $0x12c8] sm:$0xff]
    %v4065 = vld [vmem:[#allocation13 + $0x12d0] sm:$0xff]
    %v4066 = vld [vmem:[#allocation13 + $0x12d8] sm:$0xff]
    %v4067 = vld [vmem:[#allocation13 + $0x12e0] sm:$0xff]
    %v4068 = vld [vmem:[#allocation13 + $0x12e8] sm:$0xff]
    %v4069 = vld [vmem:[#allocation13 + $0x12f0] sm:$0xff]
    %v4070 = vld [vmem:[#allocation13 + $0x12f8] sm:$0xff]
    %v4071 = vld [vmem:[#allocation13 + $0x1300] sm:$0xff]
    %v4072 = vld [vmem:[#allocation13 + $0x1308] sm:$0xff]
    %v4073 = vld [vmem:[#allocation13 + $0x1310] sm:$0xff]
    %v4074 = vld [vmem:[#allocation13 + $0x1318] sm:$0xff]
    %v4075 = vld [vmem:[#allocation13 + $0x1320] sm:$0xff]
    %v4076 = vld [vmem:[#allocation13 + $0x1328] sm:$0xff]
    %v4077 = vld [vmem:[#allocation13 + $0x1330] sm:$0xff]
    %v4078 = vld [vmem:[#allocation13 + $0x1338] sm:$0xff]
    %v4079 = vld [vmem:[#allocation13 + $0x1340] sm:$0xff]
    %v4080 = vld [vmem:[#allocation13 + $0x1348] sm:$0xff]
    %v4081 = vld [vmem:[#allocation13 + $0x1350] sm:$0xff]
    %v4082 = vld [vmem:[#allocation13 + $0x1358] sm:$0xff]
    %v4083 = vld [vmem:[#allocation13 + $0x1360] sm:$0xff]
    %v4084 = vld [vmem:[#allocation13 + $0x1368] sm:$0xff]
    %v4085 = vld [vmem:[#allocation13 + $0x1370] sm:$0xff]
    %v4086 = vld [vmem:[#allocation13 + $0x1378] sm:$0xff]
    %v4087 = vld [vmem:[#allocation13 + $0x1380] sm:$0xff]
    %v4088 = vld [vmem:[#allocation13 + $0x1388] sm:$0xff]
    %v4089 = vld [vmem:[#allocation13 + $0x1390] sm:$0xff]
    %v4090 = vld [vmem:[#allocation13 + $0x1398] sm:$0xff]
    %v4091 = vld [vmem:[#allocation13 + $0x13a0] sm:$0xff]
    %v4092 = vld [vmem:[#allocation13 + $0x13a8] sm:$0xff]
    %v4093 = vld [vmem:[#allocation13 + $0x13b0] sm:$0xff]
    %v4094 = vld [vmem:[#allocation13 + $0x13b8] sm:$0xff]
    %v4095 = vld [vmem:[#allocation13 + $0x13c0] sm:$0xff]
    %v4096 = vld [vmem:[#allocation13 + $0x13c8] sm:$0xff]
    %v4097 = vld [vmem:[#allocation13 + $0x13d0] sm:$0xff]
    %v4098 = vld [vmem:[#allocation13 + $0x13d8] sm:$0xff]
    %v4099 = vld [vmem:[#allocation13 + $0x13e0] sm:$0xff]
    %v4100 = vld [vmem:[#allocation13 + $0x13e8] sm:$0xff]
    %v4101 = vld [vmem:[#allocation13 + $0x13f0] sm:$0xff]
    %v4102 = vld [vmem:[#allocation13 + $0x13f8] sm:$0xff]
    %v4103 = vld [vmem:[#allocation13 + $0x1400] sm:$0xff]
    %v4104 = vld [vmem:[#allocation13 + $0x1408] sm:$0xff]
    %v4105 = vld [vmem:[#allocation13 + $0x1410] sm:$0xff]
    %v4106 = vld [vmem:[#allocation13 + $0x1418] sm:$0xff]
    %v4107 = vld [vmem:[#allocation13 + $0x1420] sm:$0xff]
    %v4108 = vld [vmem:[#allocation13 + $0x1428] sm:$0xff]
    %v4109 = vld [vmem:[#allocation13 + $0x1430] sm:$0xff]
    %v4110 = vld [vmem:[#allocation13 + $0x1438] sm:$0xff]
    %v4111 = vld [vmem:[#allocation13 + $0x1440] sm:$0xff]
    %v4112 = vld [vmem:[#allocation13 + $0x1448] sm:$0xff]
    %v4113 = vld [vmem:[#allocation13 + $0x1450] sm:$0xff]
    %v4114 = vld [vmem:[#allocation13 + $0x1458] sm:$0xff]
    %v4115 = vld [vmem:[#allocation13 + $0x1460] sm:$0xff]
    %v4116 = vld [vmem:[#allocation13 + $0x1468] sm:$0xff]
    %v4117 = vld [vmem:[#allocation13 + $0x1470] sm:$0xff]
    %v4118 = vld [vmem:[#allocation13 + $0x1478] sm:$0xff]
    %v4119 = vld [vmem:[#allocation13 + $0x1480] sm:$0xff]
    %v4120 = vld [vmem:[#allocation13 + $0x1488] sm:$0xff]
    %v4121 = vld [vmem:[#allocation13 + $0x1490] sm:$0xff]
    %v4122 = vld [vmem:[#allocation13 + $0x1498] sm:$0xff]
    %v4123 = vld [vmem:[#allocation13 + $0x14a0] sm:$0xff]
    %v4124 = vld [vmem:[#allocation13 + $0x14a8] sm:$0xff]
    %v4125 = vld [vmem:[#allocation13 + $0x14b0] sm:$0xff]
    %v4126 = vld [vmem:[#allocation13 + $0x14b8] sm:$0xff]
    %v4127 = vld [vmem:[#allocation13 + $0x14c0] sm:$0xff]
    %v4128 = vld [vmem:[#allocation13 + $0x14c8] sm:$0xff]
    %v4129 = vld [vmem:[#allocation13 + $0x14d0] sm:$0xff]
    %v4130 = vld [vmem:[#allocation13 + $0x14d8] sm:$0xff]
    %v4131 = vld [vmem:[#allocation13 + $0x14e0] sm:$0xff]
    %v4132 = vld [vmem:[#allocation13 + $0x14e8] sm:$0xff]
    %v4133 = vld [vmem:[#allocation13 + $0x14f0] sm:$0xff]
    %v4134 = vld [vmem:[#allocation13 + $0x14f8] sm:$0xff]
    %v4135 = vld [vmem:[#allocation13 + $0x1500] sm:$0xff]
    %v4136 = vld [vmem:[#allocation13 + $0x1508] sm:$0xff]
    %v4137 = vld [vmem:[#allocation13 + $0x1510] sm:$0xff]
    %v4138 = vld [vmem:[#allocation13 + $0x1518] sm:$0xff]
    %v4139 = vld [vmem:[#allocation13 + $0x1520] sm:$0xff]
    %v4140 = vld [vmem:[#allocation13 + $0x1528] sm:$0xff]
    %v4141 = vld [vmem:[#allocation13 + $0x1530] sm:$0xff]
    %v4142 = vld [vmem:[#allocation13 + $0x1538] sm:$0xff]
    %v4143 = vld [vmem:[#allocation13 + $0x1540] sm:$0xff]
    %v4144 = vld [vmem:[#allocation13 + $0x1548] sm:$0xff]
    %v4145 = vld [vmem:[#allocation13 + $0x1550] sm:$0xff]
    %v4146 = vld [vmem:[#allocation13 + $0x1558] sm:$0xff]
    %v4147 = vld [vmem:[#allocation13 + $0x1560] sm:$0xff]
    %v4148 = vld [vmem:[#allocation13 + $0x1568] sm:$0xff]
    %v4149 = vld [vmem:[#allocation13 + $0x1570] sm:$0xff]
    %v4150 = vld [vmem:[#allocation13 + $0x1578] sm:$0xff]
    %v4151 = vld [vmem:[#allocation13 + $0x1580] sm:$0xff]
    %v4152 = vld [vmem:[#allocation13 + $0x1588] sm:$0xff]
    %v4153 = vld [vmem:[#allocation13 + $0x1590] sm:$0xff]
    %v4154 = vld [vmem:[#allocation13 + $0x1598] sm:$0xff]
    %v4155 = vld [vmem:[#allocation13 + $0x15a0] sm:$0xff]
    %v4156 = vld [vmem:[#allocation13 + $0x15a8] sm:$0xff]
    %v4157 = vld [vmem:[#allocation13 + $0x15b0] sm:$0xff]
    %v4158 = vld [vmem:[#allocation13 + $0x15b8] sm:$0xff]
    %v4159 = vld [vmem:[#allocation13 + $0x15c0] sm:$0xff]
    %v4160 = vld [vmem:[#allocation13 + $0x15c8] sm:$0xff]
    %v4161 = vld [vmem:[#allocation13 + $0x15d0] sm:$0xff]
    %v4162 = vld [vmem:[#allocation13 + $0x15d8] sm:$0xff]
    %v4163 = vld [vmem:[#allocation13 + $0x15e0] sm:$0xff]
    %v4164 = vld [vmem:[#allocation13 + $0x15e8] sm:$0xff]
    %v4165 = vld [vmem:[#allocation13 + $0x15f0] sm:$0xff]
    %v4166 = vld [vmem:[#allocation13 + $0x15f8] sm:$0xff]
    %v4167 = vld [vmem:[#allocation13 + $0x1600] sm:$0xff]
    %v4168 = vld [vmem:[#allocation13 + $0x1608] sm:$0xff]
    %v4169 = vld [vmem:[#allocation13 + $0x1610] sm:$0xff]
    %v4170 = vld [vmem:[#allocation13 + $0x1618] sm:$0xff]
    %v4171 = vld [vmem:[#allocation13 + $0x1620] sm:$0xff]
    %v4172 = vld [vmem:[#allocation13 + $0x1628] sm:$0xff]
    %v4173 = vld [vmem:[#allocation13 + $0x1630] sm:$0xff]
    %v4174 = vld [vmem:[#allocation13 + $0x1638] sm:$0xff]
    %v4175 = vld [vmem:[#allocation13 + $0x1640] sm:$0xff]
    %v4176 = vld [vmem:[#allocation13 + $0x1648] sm:$0xff]
    %v4177 = vld [vmem:[#allocation13 + $0x1650] sm:$0xff]
    %v4178 = vld [vmem:[#allocation13 + $0x1658] sm:$0xff]
    %v4179 = vld [vmem:[#allocation13 + $0x1660] sm:$0xff]
    %v4180 = vld [vmem:[#allocation13 + $0x1668] sm:$0xff]
    %v4181 = vld [vmem:[#allocation13 + $0x1670] sm:$0xff]
    %v4182 = vld [vmem:[#allocation13 + $0x1678] sm:$0xff]
    %v4183 = vld [vmem:[#allocation13 + $0x1680] sm:$0xff]
    %v4184 = vld [vmem:[#allocation13 + $0x1688] sm:$0xff]
    %v4185 = vld [vmem:[#allocation13 + $0x1690] sm:$0xff]
    %v4186 = vld [vmem:[#allocation13 + $0x1698] sm:$0xff]
    %v4187 = vld [vmem:[#allocation13 + $0x16a0] sm:$0xff]
    %v4188 = vld [vmem:[#allocation13 + $0x16a8] sm:$0xff]
    %v4189 = vld [vmem:[#allocation13 + $0x16b0] sm:$0xff]
    %v4190 = vld [vmem:[#allocation13 + $0x16b8] sm:$0xff]
    %v4191 = vld [vmem:[#allocation13 + $0x16c0] sm:$0xff]
    %v4192 = vld [vmem:[#allocation13 + $0x16c8] sm:$0xff]
    %v4193 = vld [vmem:[#allocation13 + $0x16d0] sm:$0xff]
    %v4194 = vld [vmem:[#allocation13 + $0x16d8] sm:$0xff]
    %v4195 = vld [vmem:[#allocation13 + $0x16e0] sm:$0xff]
    %v4196 = vld [vmem:[#allocation13 + $0x16e8] sm:$0xff]
    %v4197 = vld [vmem:[#allocation13 + $0x16f0] sm:$0xff]
    %v4198 = vld [vmem:[#allocation13 + $0x16f8] sm:$0xff]
    %v4199 = vld [vmem:[#allocation13 + $0x1700] sm:$0xff]
    %v4200 = vld [vmem:[#allocation13 + $0x1708] sm:$0xff]
    %v4201 = vld [vmem:[#allocation13 + $0x1710] sm:$0xff]
    %v4202 = vld [vmem:[#allocation13 + $0x1718] sm:$0xff]
    %v4203 = vld [vmem:[#allocation13 + $0x1720] sm:$0xff]
    %v4204 = vld [vmem:[#allocation13 + $0x1728] sm:$0xff]
    %v4205 = vld [vmem:[#allocation13 + $0x1730] sm:$0xff]
    %v4206 = vld [vmem:[#allocation13 + $0x1738] sm:$0xff]
    %v4207 = vld [vmem:[#allocation13 + $0x1740] sm:$0xff]
    %v4208 = vld [vmem:[#allocation13 + $0x1748] sm:$0xff]
    %v4209 = vld [vmem:[#allocation13 + $0x1750] sm:$0xff]
    %v4210 = vld [vmem:[#allocation13 + $0x1758] sm:$0xff]
    %v4211 = vld [vmem:[#allocation13 + $0x1760] sm:$0xff]
    %v4212 = vld [vmem:[#allocation13 + $0x1768] sm:$0xff]
    %v4213 = vld [vmem:[#allocation13 + $0x1770] sm:$0xff]
    %v4214 = vld [vmem:[#allocation13 + $0x1778] sm:$0xff]
    %v4215 = vld [vmem:[#allocation13 + $0x1780] sm:$0xff]
    %v4216 = vld [vmem:[#allocation13 + $0x1788] sm:$0xff]
    %v4217 = vld [vmem:[#allocation13 + $0x1790] sm:$0xff]
    %v4218 = vld [vmem:[#allocation13 + $0x1798] sm:$0xff]
    %v4219 = vld [vmem:[#allocation13 + $0x17a0] sm:$0xff]
    %v4220 = vld [vmem:[#allocation13 + $0x17a8] sm:$0xff]
    %v4221 = vld [vmem:[#allocation13 + $0x17b0] sm:$0xff]
    %v4222 = vld [vmem:[#allocation13 + $0x17b8] sm:$0xff]
    %v4223 = vld [vmem:[#allocation13 + $0x17c0] sm:$0xff]
    %v4224 = vld [vmem:[#allocation13 + $0x17c8] sm:$0xff]
    %v4225 = vld [vmem:[#allocation13 + $0x17d0] sm:$0xff]
    %v4226 = vld [vmem:[#allocation13 + $0x17d8] sm:$0xff]
    %v4227 = vld [vmem:[#allocation13 + $0x17e0] sm:$0xff]
    %v4228 = vld [vmem:[#allocation13 + $0x17e8] sm:$0xff]
    %v4229 = vld [vmem:[#allocation13 + $0x17f0] sm:$0xff]
    %v4230 = vld [vmem:[#allocation13 + $0x17f8] sm:$0xff]
    %v4231 = vld [vmem:[#allocation13 + $0x1800] sm:$0xff]
    %v4232 = vld [vmem:[#allocation13 + $0x1808] sm:$0xff]
    %v4233 = vld [vmem:[#allocation13 + $0x1810] sm:$0xff]
    %v4234 = vld [vmem:[#allocation13 + $0x1818] sm:$0xff]
    %v4235 = vld [vmem:[#allocation13 + $0x1820] sm:$0xff]
    %v4236 = vld [vmem:[#allocation13 + $0x1828] sm:$0xff]
    %v4237 = vld [vmem:[#allocation13 + $0x1830] sm:$0xff]
    %v4238 = vld [vmem:[#allocation13 + $0x1838] sm:$0xff]
    %v4239 = vld [vmem:[#allocation13 + $0x1840] sm:$0xff]
    %v4240 = vld [vmem:[#allocation13 + $0x1848] sm:$0xff]
    %v4241 = vld [vmem:[#allocation13 + $0x1850] sm:$0xff]
    %v4242 = vld [vmem:[#allocation13 + $0x1858] sm:$0xff]
    %v4243 = vld [vmem:[#allocation13 + $0x1860] sm:$0xff]
    %v4244 = vld [vmem:[#allocation13 + $0x1868] sm:$0xff]
    %v4245 = vld [vmem:[#allocation13 + $0x1870] sm:$0xff]
    %v4246 = vld [vmem:[#allocation13 + $0x1878] sm:$0xff]
    %v4247 = vld [vmem:[#allocation13 + $0x1880] sm:$0xff]
    %v4248 = vld [vmem:[#allocation13 + $0x1888] sm:$0xff]
    %v4249 = vld [vmem:[#allocation13 + $0x1890] sm:$0xff]
    %v4250 = vld [vmem:[#allocation13 + $0x1898] sm:$0xff]
    %v4251 = vld [vmem:[#allocation13 + $0x18a0] sm:$0xff]
    %v4252 = vld [vmem:[#allocation13 + $0x18a8] sm:$0xff]
    %v4253 = vld [vmem:[#allocation13 + $0x18b0] sm:$0xff]
    %v4254 = vld [vmem:[#allocation13 + $0x18b8] sm:$0xff]
    %v4255 = vld [vmem:[#allocation13 + $0x18c0] sm:$0xff]
    %v4256 = vld [vmem:[#allocation13 + $0x18c8] sm:$0xff]
    %v4257 = vld [vmem:[#allocation13 + $0x18d0] sm:$0xff]
    %v4258 = vld [vmem:[#allocation13 + $0x18d8] sm:$0xff]
    %v4259 = vld [vmem:[#allocation13 + $0x18e0] sm:$0xff]
    %v4260 = vld [vmem:[#allocation13 + $0x18e8] sm:$0xff]
    %v4261 = vld [vmem:[#allocation13 + $0x18f0] sm:$0xff]
    %v4262 = vld [vmem:[#allocation13 + $0x18f8] sm:$0xff]
    %v4263 = vld [vmem:[#allocation13 + $0x1900] sm:$0xff]
    %v4264 = vld [vmem:[#allocation13 + $0x1908] sm:$0xff]
    %v4265 = vld [vmem:[#allocation13 + $0x1910] sm:$0xff]
    %v4266 = vld [vmem:[#allocation13 + $0x1918] sm:$0xff]
    %v4267 = vld [vmem:[#allocation13 + $0x1920] sm:$0xff]
    %v4268 = vld [vmem:[#allocation13 + $0x1928] sm:$0xff]
    %v4269 = vld [vmem:[#allocation13 + $0x1930] sm:$0xff]
    %v4270 = vld [vmem:[#allocation13 + $0x1938] sm:$0xff]
    %v4271 = vld [vmem:[#allocation13 + $0x1940] sm:$0xff]
    %v4272 = vld [vmem:[#allocation13 + $0x1948] sm:$0xff]
    %v4273 = vld [vmem:[#allocation13 + $0x1950] sm:$0xff]
    %v4274 = vld [vmem:[#allocation13 + $0x1958] sm:$0xff]
    %v4275 = vld [vmem:[#allocation13 + $0x1960] sm:$0xff]
    %v4276 = vld [vmem:[#allocation13 + $0x1968] sm:$0xff]
    %v4277 = vld [vmem:[#allocation13 + $0x1970] sm:$0xff]
    %v4278 = vld [vmem:[#allocation13 + $0x1978] sm:$0xff]
    %v4279 = vld [vmem:[#allocation13 + $0x1980] sm:$0xff]
    %v4280 = vld [vmem:[#allocation13 + $0x1988] sm:$0xff]
    %v4281 = vld [vmem:[#allocation13 + $0x1990] sm:$0xff]
    %v4282 = vld [vmem:[#allocation13 + $0x1998] sm:$0xff]
    %v4283 = vld [vmem:[#allocation13 + $0x19a0] sm:$0xff]
    %v4284 = vld [vmem:[#allocation13 + $0x19a8] sm:$0xff]
    %v4285 = vld [vmem:[#allocation13 + $0x19b0] sm:$0xff]
    %v4286 = vld [vmem:[#allocation13 + $0x19b8] sm:$0xff]
    %v4287 = vld [vmem:[#allocation13 + $0x19c0] sm:$0xff]
    %v4288 = vld [vmem:[#allocation13 + $0x19c8] sm:$0xff]
    %v4289 = vld [vmem:[#allocation13 + $0x19d0] sm:$0xff]
    %v4290 = vld [vmem:[#allocation13 + $0x19d8] sm:$0xff]
    %v4291 = vld [vmem:[#allocation13 + $0x19e0] sm:$0xff]
    %v4292 = vld [vmem:[#allocation13 + $0x19e8] sm:$0xff]
    %v4293 = vld [vmem:[#allocation13 + $0x19f0] sm:$0xff]
    %v4294 = vld [vmem:[#allocation13 + $0x19f8] sm:$0xff]
    %v4295 = vld [vmem:[#allocation13 + $0x1a00] sm:$0xff]
    %v4296 = vld [vmem:[#allocation13 + $0x1a08] sm:$0xff]
    %v4297 = vld [vmem:[#allocation13 + $0x1a10] sm:$0xff]
    %v4298 = vld [vmem:[#allocation13 + $0x1a18] sm:$0xff]
    %v4299 = vld [vmem:[#allocation13 + $0x1a20] sm:$0xff]
    %v4300 = vld [vmem:[#allocation13 + $0x1a28] sm:$0xff]
    %v4301 = vld [vmem:[#allocation13 + $0x1a30] sm:$0xff]
    %v4302 = vld [vmem:[#allocation13 + $0x1a38] sm:$0xff]
    %v4303 = vld [vmem:[#allocation13 + $0x1a40] sm:$0xff]
    %v4304 = vld [vmem:[#allocation13 + $0x1a48] sm:$0xff]
    %v4305 = vld [vmem:[#allocation13 + $0x1a50] sm:$0xff]
    %v4306 = vld [vmem:[#allocation13 + $0x1a58] sm:$0xff]
    %v4307 = vld [vmem:[#allocation13 + $0x1a60] sm:$0xff]
    %v4308 = vld [vmem:[#allocation13 + $0x1a68] sm:$0xff]
    %v4309 = vld [vmem:[#allocation13 + $0x1a70] sm:$0xff]
    %v4310 = vld [vmem:[#allocation13 + $0x1a78] sm:$0xff]
    %v4311 = vld [vmem:[#allocation13 + $0x1a80] sm:$0xff]
    %v4312 = vld [vmem:[#allocation13 + $0x1a88] sm:$0xff]
    %v4313 = vld [vmem:[#allocation13 + $0x1a90] sm:$0xff]
    %v4314 = vld [vmem:[#allocation13 + $0x1a98] sm:$0xff]
    %v4315 = vld [vmem:[#allocation13 + $0x1aa0] sm:$0xff]
    %v4316 = vld [vmem:[#allocation13 + $0x1aa8] sm:$0xff]
    %v4317 = vld [vmem:[#allocation13 + $0x1ab0] sm:$0xff]
    %v4318 = vld [vmem:[#allocation13 + $0x1ab8] sm:$0xff]
    %v4319 = vld [vmem:[#allocation13 + $0x1ac0] sm:$0xff]
    %v4320 = vld [vmem:[#allocation13 + $0x1ac8] sm:$0xff]
    %v4321 = vld [vmem:[#allocation13 + $0x1ad0] sm:$0xff]
    %v4322 = vld [vmem:[#allocation13 + $0x1ad8] sm:$0xff]
    %v4323 = vld [vmem:[#allocation13 + $0x1ae0] sm:$0xff]
    %v4324 = vld [vmem:[#allocation13 + $0x1ae8] sm:$0xff]
    %v4325 = vld [vmem:[#allocation13 + $0x1af0] sm:$0xff]
    %v4326 = vld [vmem:[#allocation13 + $0x1af8] sm:$0xff]
    %v4327 = vld [vmem:[#allocation13 + $0x1b00] sm:$0xff]
    %v4328 = vld [vmem:[#allocation13 + $0x1b08] sm:$0xff]
    %v4329 = vld [vmem:[#allocation13 + $0x1b10] sm:$0xff]
    %v4330 = vld [vmem:[#allocation13 + $0x1b18] sm:$0xff]
    %v4331 = vld [vmem:[#allocation13 + $0x1b20] sm:$0xff]
    %v4332 = vld [vmem:[#allocation13 + $0x1b28] sm:$0xff]
    %v4333 = vld [vmem:[#allocation13 + $0x1b30] sm:$0xff]
    %v4334 = vld [vmem:[#allocation13 + $0x1b38] sm:$0xff]
    %v4335 = vld [vmem:[#allocation13 + $0x1b40] sm:$0xff]
    %v4336 = vld [vmem:[#allocation13 + $0x1b48] sm:$0xff]
    %v4337 = vld [vmem:[#allocation13 + $0x1b50] sm:$0xff]
    %v4338 = vld [vmem:[#allocation13 + $0x1b58] sm:$0xff]
    %v4339 = vld [vmem:[#allocation13 + $0x1b60] sm:$0xff]
    %v4340 = vld [vmem:[#allocation13 + $0x1b68] sm:$0xff]
    %v4341 = vld [vmem:[#allocation13 + $0x1b70] sm:$0xff]
    %v4342 = vld [vmem:[#allocation13 + $0x1b78] sm:$0xff]
    %v4343 = vld [vmem:[#allocation13 + $0x1b80] sm:$0xff]
    %v4344 = vld [vmem:[#allocation13 + $0x1b88] sm:$0xff]
    %v4345 = vld [vmem:[#allocation13 + $0x1b90] sm:$0xff]
    %v4346 = vld [vmem:[#allocation13 + $0x1b98] sm:$0xff]
    %v4347 = vld [vmem:[#allocation13 + $0x1ba0] sm:$0xff]
    %v4348 = vld [vmem:[#allocation13 + $0x1ba8] sm:$0xff]
    %v4349 = vld [vmem:[#allocation13 + $0x1bb0] sm:$0xff]
    %v4350 = vld [vmem:[#allocation13 + $0x1bb8] sm:$0xff]
    %v4351 = vld [vmem:[#allocation13 + $0x1bc0] sm:$0xff]
    %v4352 = vld [vmem:[#allocation13 + $0x1bc8] sm:$0xff]
    %v4353 = vld [vmem:[#allocation13 + $0x1bd0] sm:$0xff]
    %v4354 = vld [vmem:[#allocation13 + $0x1bd8] sm:$0xff]
    %v4355 = vld [vmem:[#allocation13 + $0x1be0] sm:$0xff]
    %v4356 = vld [vmem:[#allocation13 + $0x1be8] sm:$0xff]
    %v4357 = vld [vmem:[#allocation13 + $0x1bf0] sm:$0xff]
    %v4358 = vld [vmem:[#allocation13 + $0x1bf8] sm:$0xff]
    %v4359 = vld [vmem:[#allocation13 + $0x1c00] sm:$0xff]
    %v4360 = vld [vmem:[#allocation13 + $0x1c08] sm:$0xff]
    %v4361 = vld [vmem:[#allocation13 + $0x1c10] sm:$0xff]
    %v4362 = vld [vmem:[#allocation13 + $0x1c18] sm:$0xff]
    %v4364 = vsel %vm2986, %v3447, 0
    %v4367 = vsel %vm2986, %v3462, 0
    %4369 = vmatprep.subr.mxu0 %v3524
    %4370 = vmatpush1.msra.mxu0 %v3523
    %4371 = vmatprep.subr.mxu0 %v3520
    %4372 = vmatpush1.msra.mxu0 %v3519
    %4373 = vmatprep.subr.mxu0 %v3516
    %4374 = vmatpush1.msra.mxu0 %v3515
    %4375 = vmatprep.subr.mxu0 %v3512
    %4376 = vmatpush1.msra.mxu0 %v3511
    %4377 = vmatprep.subr.mxu0 %v3508
    %4378 = vmatpush1.msra.mxu0 %v3507
    %4379 = vmatprep.subr.mxu0 %v3504
    %4380 = vmatpush1.msra.mxu0 %v3503
    %4381 = vmatprep.subr.mxu0 %v3500
    %4382 = vmatpush1.msra.mxu0 %v3499
    %4383 = vmatprep.subr.mxu0 %v3496
    %4384 = vmatpush1.msra.mxu0 %v3495
    %4385 = vmatprep.subr.mxu0 %v3492
    %4386 = vmatpush1.msra.mxu0 %v3491
    %4387 = vmatprep.subr.mxu0 %v3488
    %4388 = vmatpush1.msra.mxu0 %v3487
    %4389 = vmatprep.subr.mxu0 %v3484
    %4390 = vmatpush1.msra.mxu0 %v3483
    %4391 = vmatprep.subr.mxu0 %v3480
    %4392 = vmatpush1.msra.mxu0 %v3479
    %4393 = vmatprep.subr.mxu0 %v3476
    %4394 = vmatpush1.msra.mxu0 %v3475
    %4395 = vmatprep.subr.mxu0 %v3472
    %4396 = vmatpush1.msra.mxu0 %v3471
    %4397 = vmatprep.subr.mxu0 %v3468
    %4398 = vmatpush1.msra.mxu0 %v3467
    %4399 = vmatprep.subr.mxu0 %v3464
    %4400 = vmatpush1.msra.mxu0 %v3463
    %4401 = vmatprep.subr.mxu0 %v3588
    %4402 = vmatpush2.msra.mxu0 %v3587
    %4403 = vmatprep.subr.mxu0 %v3584
    %4404 = vmatpush2.msra.mxu0 %v3583
    %4405 = vmatprep.subr.mxu0 %v3580
    %4406 = vmatpush2.msra.mxu0 %v3579
    %4407 = vmatprep.subr.mxu0 %v3576
    %4408 = vmatpush2.msra.mxu0 %v3575
    %4409 = vmatprep.subr.mxu0 %v3572
    %4410 = vmatpush2.msra.mxu0 %v3571
    %4411 = vmatprep.subr.mxu0 %v3568
    %4412 = vmatpush2.msra.mxu0 %v3567
    %4413 = vmatprep.subr.mxu0 %v3564
    %4414 = vmatpush2.msra.mxu0 %v3563
    %4415 = vmatprep.subr.mxu0 %v3560
    %4416 = vmatpush2.msra.mxu0 %v3559
    %4417 = vmatprep.subr.mxu0 %v3556
    %4418 = vmatpush2.msra.mxu0 %v3555
    %4419 = vmatprep.subr.mxu0 %v3552
    %4420 = vmatpush2.msra.mxu0 %v3551
    %4421 = vmatprep.subr.mxu0 %v3548
    %4422 = vmatpush2.msra.mxu0 %v3547
    %4423 = vmatprep.subr.mxu0 %v3544
    %4424 = vmatpush2.msra.mxu0 %v3543
    %4425 = vmatprep.subr.mxu0 %v3540
    %4426 = vmatpush2.msra.mxu0 %v3539
    %4427 = vmatprep.subr.mxu0 %v3536
    %4428 = vmatpush2.msra.mxu0 %v3535
    %4429 = vmatprep.subr.mxu0 %v3532
    %4430 = vmatpush2.msra.mxu0 %v3531
    %4431 = vmatprep.subr.mxu0 %v3528
    %4432 = vmatpush2.msra.mxu0 %v3527
    %4433 = vmatprep.mubr.f32.mxu0 %v3434
    %4434 = vmatmul.mubr.f32.gmra.mxu0 %v3433
    %v4435 = vpop.f32.mrf.mxu0
    %v4436 = vadd.f32 0.0, %v4435
    %v4437 = vpop.f32.mrf.mxu0
    %v4438 = vadd.f32 0.0, %v4437
    %4439 = vmatprep.mubr.f32.mxu0 %v3449
    %4440 = vmatmul.mubr.f32.gmra.mxu0 %v3448
    %v4441 = vpop.f32.mrf.mxu0
    %v4442 = vadd.f32 0.0, %v4441
    %v4443 = vpop.f32.mrf.mxu0
    %v4444 = vadd.f32 0.0, %v4443
    %4445 = vdwg.mxu0
    %4446 = vmatprep.subr.mxu0 %v3652
    %4447 = vmatpush1.msra.mxu0 %v3651
    %4448 = vmatprep.subr.mxu0 %v3648
    %4449 = vmatpush1.msra.mxu0 %v3647
    %4450 = vmatprep.subr.mxu0 %v3644
    %4451 = vmatpush1.msra.mxu0 %v3643
    %4452 = vmatprep.subr.mxu0 %v3640
    %4453 = vmatpush1.msra.mxu0 %v3639
    %4454 = vmatprep.subr.mxu0 %v3636
    %4455 = vmatpush1.msra.mxu0 %v3635
    %4456 = vmatprep.subr.mxu0 %v3632
    %4457 = vmatpush1.msra.mxu0 %v3631
    %4458 = vmatprep.subr.mxu0 %v3628
    %4459 = vmatpush1.msra.mxu0 %v3627
    %4460 = vmatprep.subr.mxu0 %v3624
    %4461 = vmatpush1.msra.mxu0 %v3623
    %4462 = vmatprep.subr.mxu0 %v3620
    %4463 = vmatpush1.msra.mxu0 %v3619
    %4464 = vmatprep.subr.mxu0 %v3616
    %4465 = vmatpush1.msra.mxu0 %v3615
    %4466 = vmatprep.subr.mxu0 %v3612
    %4467 = vmatpush1.msra.mxu0 %v3611
    %4468 = vmatprep.subr.mxu0 %v3608
    %4469 = vmatpush1.msra.mxu0 %v3607
    %4470 = vmatprep.subr.mxu0 %v3604
    %4471 = vmatpush1.msra.mxu0 %v3603
    %4472 = vmatprep.subr.mxu0 %v3600
    %4473 = vmatpush1.msra.mxu0 %v3599
    %4474 = vmatprep.subr.mxu0 %v3596
    %4475 = vmatpush1.msra.mxu0 %v3595
    %4476 = vmatprep.subr.mxu0 %v3592
    %4477 = vmatpush1.msra.mxu0 %v3591
    %4478 = vmatprep.subr.mxu0 %v3716
    %4479 = vmatpush2.msra.mxu0 %v3715
    %4480 = vmatprep.subr.mxu0 %v3712
    %4481 = vmatpush2.msra.mxu0 %v3711
    %4482 = vmatprep.subr.mxu0 %v3708
    %4483 = vmatpush2.msra.mxu0 %v3707
    %4484 = vmatprep.subr.mxu0 %v3704
    %4485 = vmatpush2.msra.mxu0 %v3703
    %4486 = vmatprep.subr.mxu0 %v3700
    %4487 = vmatpush2.msra.mxu0 %v3699
    %4488 = vmatprep.subr.mxu0 %v3696
    %4489 = vmatpush2.msra.mxu0 %v3695
    %4490 = vmatprep.subr.mxu0 %v3692
    %4491 = vmatpush2.msra.mxu0 %v3691
    %4492 = vmatprep.subr.mxu0 %v3688
    %4493 = vmatpush2.msra.mxu0 %v3687
    %4494 = vmatprep.subr.mxu0 %v3684
    %4495 = vmatpush2.msra.mxu0 %v3683
    %4496 = vmatprep.subr.mxu0 %v3680
    %4497 = vmatpush2.msra.mxu0 %v3679
    %4498 = vmatprep.subr.mxu0 %v3676
    %4499 = vmatpush2.msra.mxu0 %v3675
    %4500 = vmatprep.subr.mxu0 %v3672
    %4501 = vmatpush2.msra.mxu0 %v3671
    %4502 = vmatprep.subr.mxu0 %v3668
    %4503 = vmatpush2.msra.mxu0 %v3667
    %4504 = vmatprep.subr.mxu0 %v3664
    %4505 = vmatpush2.msra.mxu0 %v3663
    %4506 = vmatprep.subr.mxu0 %v3660
    %4507 = vmatpush2.msra.mxu0 %v3659
    %4508 = vmatprep.subr.mxu0 %v3656
    %4509 = vmatpush2.msra.mxu0 %v3655
    %4510 = vmatprep.mubr.f32.mxu0 %v3436
    %4511 = vmatmul.mubr.f32.gmra.mxu0 %v3435
    %v4512 = vpop.f32.mrf.mxu0
    %v4513 = vadd.f32 %v4436, %v4512
    %v4514 = vpop.f32.mrf.mxu0
    %v4515 = vadd.f32 %v4438, %v4514
    %4516 = vmatprep.mubr.f32.mxu0 %v3451
    %4517 = vmatmul.mubr.f32.gmra.mxu0 %v3450
    %v4518 = vpop.f32.mrf.mxu0
    %v4519 = vadd.f32 %v4442, %v4518
    %v4520 = vpop.f32.mrf.mxu0
    %v4521 = vadd.f32 %v4444, %v4520
    %4522 = vdwg.mxu0
    %4523 = vmatprep.subr.mxu0 %v3780
    %4524 = vmatpush1.msra.mxu0 %v3779
    %4525 = vmatprep.subr.mxu0 %v3776
    %4526 = vmatpush1.msra.mxu0 %v3775
    %4527 = vmatprep.subr.mxu0 %v3772
    %4528 = vmatpush1.msra.mxu0 %v3771
    %4529 = vmatprep.subr.mxu0 %v3768
    %4530 = vmatpush1.msra.mxu0 %v3767
    %4531 = vmatprep.subr.mxu0 %v3764
    %4532 = vmatpush1.msra.mxu0 %v3763
    %4533 = vmatprep.subr.mxu0 %v3760
    %4534 = vmatpush1.msra.mxu0 %v3759
    %4535 = vmatprep.subr.mxu0 %v3756
    %4536 = vmatpush1.msra.mxu0 %v3755
    %4537 = vmatprep.subr.mxu0 %v3752
    %4538 = vmatpush1.msra.mxu0 %v3751
    %4539 = vmatprep.subr.mxu0 %v3748
    %4540 = vmatpush1.msra.mxu0 %v3747
    %4541 = vmatprep.subr.mxu0 %v3744
    %4542 = vmatpush1.msra.mxu0 %v3743
    %4543 = vmatprep.subr.mxu0 %v3740
    %4544 = vmatpush1.msra.mxu0 %v3739
    %4545 = vmatprep.subr.mxu0 %v3736
    %4546 = vmatpush1.msra.mxu0 %v3735
    %4547 = vmatprep.subr.mxu0 %v3732
    %4548 = vmatpush1.msra.mxu0 %v3731
    %4549 = vmatprep.subr.mxu0 %v3728
    %4550 = vmatpush1.msra.mxu0 %v3727
    %4551 = vmatprep.subr.mxu0 %v3724
    %4552 = vmatpush1.msra.mxu0 %v3723
    %4553 = vmatprep.subr.mxu0 %v3720
    %4554 = vmatpush1.msra.mxu0 %v3719
    %4555 = vmatprep.subr.mxu0 %v3844
    %4556 = vmatpush2.msra.mxu0 %v3843
    %4557 = vmatprep.subr.mxu0 %v3840
    %4558 = vmatpush2.msra.mxu0 %v3839
    %4559 = vmatprep.subr.mxu0 %v3836
    %4560 = vmatpush2.msra.mxu0 %v3835
    %4561 = vmatprep.subr.mxu0 %v3832
    %4562 = vmatpush2.msra.mxu0 %v3831
    %4563 = vmatprep.subr.mxu0 %v3828
    %4564 = vmatpush2.msra.mxu0 %v3827
    %4565 = vmatprep.subr.mxu0 %v3824
    %4566 = vmatpush2.msra.mxu0 %v3823
    %4567 = vmatprep.subr.mxu0 %v3820
    %4568 = vmatpush2.msra.mxu0 %v3819
    %4569 = vmatprep.subr.mxu0 %v3816
    %4570 = vmatpush2.msra.mxu0 %v3815
    %4571 = vmatprep.subr.mxu0 %v3812
    %4572 = vmatpush2.msra.mxu0 %v3811
    %4573 = vmatprep.subr.mxu0 %v3808
    %4574 = vmatpush2.msra.mxu0 %v3807
    %4575 = vmatprep.subr.mxu0 %v3804
    %4576 = vmatpush2.msra.mxu0 %v3803
    %4577 = vmatprep.subr.mxu0 %v3800
    %4578 = vmatpush2.msra.mxu0 %v3799
    %4579 = vmatprep.subr.mxu0 %v3796
    %4580 = vmatpush2.msra.mxu0 %v3795
    %4581 = vmatprep.subr.mxu0 %v3792
    %4582 = vmatpush2.msra.mxu0 %v3791
    %4583 = vmatprep.subr.mxu0 %v3788
    %4584 = vmatpush2.msra.mxu0 %v3787
    %4585 = vmatprep.subr.mxu0 %v3784
    %4586 = vmatpush2.msra.mxu0 %v3783
    %4587 = vmatprep.mubr.f32.mxu0 %v3438
    %4588 = vmatmul.mubr.f32.gmra.mxu0 %v3437
    %v4589 = vpop.f32.mrf.mxu0
    %v4590 = vadd.f32 %v4513, %v4589
    %v4591 = vpop.f32.mrf.mxu0
    %v4592 = vadd.f32 %v4515, %v4591
    %4593 = vmatprep.mubr.f32.mxu0 %v3453
    %4594 = vmatmul.mubr.f32.gmra.mxu0 %v3452
    %v4595 = vpop.f32.mrf.mxu0
    %v4596 = vadd.f32 %v4519, %v4595
    %v4597 = vpop.f32.mrf.mxu0
    %v4598 = vadd.f32 %v4521, %v4597
    %4599 = vdwg.mxu0
    %4600 = vmatprep.subr.mxu0 %v3908
    %4601 = vmatpush1.msra.mxu0 %v3907
    %4602 = vmatprep.subr.mxu0 %v3904
    %4603 = vmatpush1.msra.mxu0 %v3903
    %4604 = vmatprep.subr.mxu0 %v3900
    %4605 = vmatpush1.msra.mxu0 %v3899
    %4606 = vmatprep.subr.mxu0 %v3896
    %4607 = vmatpush1.msra.mxu0 %v3895
    %4608 = vmatprep.subr.mxu0 %v3892
    %4609 = vmatpush1.msra.mxu0 %v3891
    %4610 = vmatprep.subr.mxu0 %v3888
    %4611 = vmatpush1.msra.mxu0 %v3887
    %4612 = vmatprep.subr.mxu0 %v3884
    %4613 = vmatpush1.msra.mxu0 %v3883
    %4614 = vmatprep.subr.mxu0 %v3880
    %4615 = vmatpush1.msra.mxu0 %v3879
    %4616 = vmatprep.subr.mxu0 %v3876
    %4617 = vmatpush1.msra.mxu0 %v3875
    %4618 = vmatprep.subr.mxu0 %v3872
    %4619 = vmatpush1.msra.mxu0 %v3871
    %4620 = vmatprep.subr.mxu0 %v3868
    %4621 = vmatpush1.msra.mxu0 %v3867
    %4622 = vmatprep.subr.mxu0 %v3864
    %4623 = vmatpush1.msra.mxu0 %v3863
    %4624 = vmatprep.subr.mxu0 %v3860
    %4625 = vmatpush1.msra.mxu0 %v3859
    %4626 = vmatprep.subr.mxu0 %v3856
    %4627 = vmatpush1.msra.mxu0 %v3855
    %4628 = vmatprep.subr.mxu0 %v3852
    %4629 = vmatpush1.msra.mxu0 %v3851
    %4630 = vmatprep.subr.mxu0 %v3848
    %4631 = vmatpush1.msra.mxu0 %v3847
    %4632 = vmatprep.subr.mxu0 %v3972
    %4633 = vmatpush2.msra.mxu0 %v3971
    %4634 = vmatprep.subr.mxu0 %v3968
    %4635 = vmatpush2.msra.mxu0 %v3967
    %4636 = vmatprep.subr.mxu0 %v3964
    %4637 = vmatpush2.msra.mxu0 %v3963
    %4638 = vmatprep.subr.mxu0 %v3960
    %4639 = vmatpush2.msra.mxu0 %v3959
    %4640 = vmatprep.subr.mxu0 %v3956
    %4641 = vmatpush2.msra.mxu0 %v3955
    %4642 = vmatprep.subr.mxu0 %v3952
    %4643 = vmatpush2.msra.mxu0 %v3951
    %4644 = vmatprep.subr.mxu0 %v3948
    %4645 = vmatpush2.msra.mxu0 %v3947
    %4646 = vmatprep.subr.mxu0 %v3944
    %4647 = vmatpush2.msra.mxu0 %v3943
    %4648 = vmatprep.subr.mxu0 %v3940
    %4649 = vmatpush2.msra.mxu0 %v3939
    %4650 = vmatprep.subr.mxu0 %v3936
    %4651 = vmatpush2.msra.mxu0 %v3935
    %4652 = vmatprep.subr.mxu0 %v3932
    %4653 = vmatpush2.msra.mxu0 %v3931
    %4654 = vmatprep.subr.mxu0 %v3928
    %4655 = vmatpush2.msra.mxu0 %v3927
    %4656 = vmatprep.subr.mxu0 %v3924
    %4657 = vmatpush2.msra.mxu0 %v3923
    %4658 = vmatprep.subr.mxu0 %v3920
    %4659 = vmatpush2.msra.mxu0 %v3919
    %4660 = vmatprep.subr.mxu0 %v3916
    %4661 = vmatpush2.msra.mxu0 %v3915
    %4662 = vmatprep.subr.mxu0 %v3912
    %4663 = vmatpush2.msra.mxu0 %v3911
    %4664 = vmatprep.mubr.f32.mxu0 %v3440
    %4665 = vmatmul.mubr.f32.gmra.mxu0 %v3439
    %v4666 = vpop.f32.mrf.mxu0
    %v4667 = vadd.f32 %v4590, %v4666
    %v4668 = vpop.f32.mrf.mxu0
    %v4669 = vadd.f32 %v4592, %v4668
    %4670 = vmatprep.mubr.f32.mxu0 %v3455
    %4671 = vmatmul.mubr.f32.gmra.mxu0 %v3454
    %v4672 = vpop.f32.mrf.mxu0
    %v4673 = vadd.f32 %v4596, %v4672
    %v4674 = vpop.f32.mrf.mxu0
    %v4675 = vadd.f32 %v4598, %v4674
    %4676 = vdwg.mxu0
    %4677 = vmatprep.subr.mxu0 %v4036
    %4678 = vmatpush1.msra.mxu0 %v4035
    %4679 = vmatprep.subr.mxu0 %v4032
    %4680 = vmatpush1.msra.mxu0 %v4031
    %4681 = vmatprep.subr.mxu0 %v4028
    %4682 = vmatpush1.msra.mxu0 %v4027
    %4683 = vmatprep.subr.mxu0 %v4024
    %4684 = vmatpush1.msra.mxu0 %v4023
    %4685 = vmatprep.subr.mxu0 %v4020
    %4686 = vmatpush1.msra.mxu0 %v4019
    %4687 = vmatprep.subr.mxu0 %v4016
    %4688 = vmatpush1.msra.mxu0 %v4015
    %4689 = vmatprep.subr.mxu0 %v4012
    %4690 = vmatpush1.msra.mxu0 %v4011
    %4691 = vmatprep.subr.mxu0 %v4008
    %4692 = vmatpush1.msra.mxu0 %v4007
    %4693 = vmatprep.subr.mxu0 %v4004
    %4694 = vmatpush1.msra.mxu0 %v4003
    %4695 = vmatprep.subr.mxu0 %v4000
    %4696 = vmatpush1.msra.mxu0 %v3999
    %4697 = vmatprep.subr.mxu0 %v3996
    %4698 = vmatpush1.msra.mxu0 %v3995
    %4699 = vmatprep.subr.mxu0 %v3992
    %4700 = vmatpush1.msra.mxu0 %v3991
    %4701 = vmatprep.subr.mxu0 %v3988
    %4702 = vmatpush1.msra.mxu0 %v3987
    %4703 = vmatprep.subr.mxu0 %v3984
    %4704 = vmatpush1.msra.mxu0 %v3983
    %4705 = vmatprep.subr.mxu0 %v3980
    %4706 = vmatpush1.msra.mxu0 %v3979
    %4707 = vmatprep.subr.mxu0 %v3976
    %4708 = vmatpush1.msra.mxu0 %v3975
    %4709 = vmatprep.subr.mxu0 %v4100
    %4710 = vmatpush2.msra.mxu0 %v4099
    %4711 = vmatprep.subr.mxu0 %v4096
    %4712 = vmatpush2.msra.mxu0 %v4095
    %4713 = vmatprep.subr.mxu0 %v4092
    %4714 = vmatpush2.msra.mxu0 %v4091
    %4715 = vmatprep.subr.mxu0 %v4088
    %4716 = vmatpush2.msra.mxu0 %v4087
    %4717 = vmatprep.subr.mxu0 %v4084
    %4718 = vmatpush2.msra.mxu0 %v4083
    %4719 = vmatprep.subr.mxu0 %v4080
    %4720 = vmatpush2.msra.mxu0 %v4079
    %4721 = vmatprep.subr.mxu0 %v4076
    %4722 = vmatpush2.msra.mxu0 %v4075
    %4723 = vmatprep.subr.mxu0 %v4072
    %4724 = vmatpush2.msra.mxu0 %v4071
    %4725 = vmatprep.subr.mxu0 %v4068
    %4726 = vmatpush2.msra.mxu0 %v4067
    %4727 = vmatprep.subr.mxu0 %v4064
    %4728 = vmatpush2.msra.mxu0 %v4063
    %4729 = vmatprep.subr.mxu0 %v4060
    %4730 = vmatpush2.msra.mxu0 %v4059
    %4731 = vmatprep.subr.mxu0 %v4056
    %4732 = vmatpush2.msra.mxu0 %v4055
    %4733 = vmatprep.subr.mxu0 %v4052
    %4734 = vmatpush2.msra.mxu0 %v4051
    %4735 = vmatprep.subr.mxu0 %v4048
    %4736 = vmatpush2.msra.mxu0 %v4047
    %4737 = vmatprep.subr.mxu0 %v4044
    %4738 = vmatpush2.msra.mxu0 %v4043
    %4739 = vmatprep.subr.mxu0 %v4040
    %4740 = vmatpush2.msra.mxu0 %v4039
    %4741 = vmatprep.mubr.f32.mxu0 %v3442
    %4742 = vmatmul.mubr.f32.gmra.mxu0 %v3441
    %v4743 = vpop.f32.mrf.mxu0
    %v4744 = vadd.f32 %v4667, %v4743
    %v4745 = vpop.f32.mrf.mxu0
    %v4746 = vadd.f32 %v4669, %v4745
    %4747 = vmatprep.mubr.f32.mxu0 %v3457
    %4748 = vmatmul.mubr.f32.gmra.mxu0 %v3456
    %v4749 = vpop.f32.mrf.mxu0
    %v4750 = vadd.f32 %v4673, %v4749
    %v4751 = vpop.f32.mrf.mxu0
    %v4752 = vadd.f32 %v4675, %v4751
    %4753 = vdwg.mxu0
    %4754 = vmatprep.subr.mxu0 %v4164
    %4755 = vmatpush1.msra.mxu0 %v4163
    %4756 = vmatprep.subr.mxu0 %v4160
    %4757 = vmatpush1.msra.mxu0 %v4159
    %4758 = vmatprep.subr.mxu0 %v4156
    %4759 = vmatpush1.msra.mxu0 %v4155
    %4760 = vmatprep.subr.mxu0 %v4152
    %4761 = vmatpush1.msra.mxu0 %v4151
    %4762 = vmatprep.subr.mxu0 %v4148
    %4763 = vmatpush1.msra.mxu0 %v4147
    %4764 = vmatprep.subr.mxu0 %v4144
    %4765 = vmatpush1.msra.mxu0 %v4143
    %4766 = vmatprep.subr.mxu0 %v4140
    %4767 = vmatpush1.msra.mxu0 %v4139
    %4768 = vmatprep.subr.mxu0 %v4136
    %4769 = vmatpush1.msra.mxu0 %v4135
    %4770 = vmatprep.subr.mxu0 %v4132
    %4771 = vmatpush1.msra.mxu0 %v4131
    %4772 = vmatprep.subr.mxu0 %v4128
    %4773 = vmatpush1.msra.mxu0 %v4127
    %4774 = vmatprep.subr.mxu0 %v4124
    %4775 = vmatpush1.msra.mxu0 %v4123
    %4776 = vmatprep.subr.mxu0 %v4120
    %4777 = vmatpush1.msra.mxu0 %v4119
    %4778 = vmatprep.subr.mxu0 %v4116
    %4779 = vmatpush1.msra.mxu0 %v4115
    %4780 = vmatprep.subr.mxu0 %v4112
    %4781 = vmatpush1.msra.mxu0 %v4111
    %4782 = vmatprep.subr.mxu0 %v4108
    %4783 = vmatpush1.msra.mxu0 %v4107
    %4784 = vmatprep.subr.mxu0 %v4104
    %4785 = vmatpush1.msra.mxu0 %v4103
    %4786 = vmatprep.subr.mxu0 %v4228
    %4787 = vmatpush2.msra.mxu0 %v4227
    %4788 = vmatprep.subr.mxu0 %v4224
    %4789 = vmatpush2.msra.mxu0 %v4223
    %4790 = vmatprep.subr.mxu0 %v4220
    %4791 = vmatpush2.msra.mxu0 %v4219
    %4792 = vmatprep.subr.mxu0 %v4216
    %4793 = vmatpush2.msra.mxu0 %v4215
    %4794 = vmatprep.subr.mxu0 %v4212
    %4795 = vmatpush2.msra.mxu0 %v4211
    %4796 = vmatprep.subr.mxu0 %v4208
    %4797 = vmatpush2.msra.mxu0 %v4207
    %4798 = vmatprep.subr.mxu0 %v4204
    %4799 = vmatpush2.msra.mxu0 %v4203
    %4800 = vmatprep.subr.mxu0 %v4200
    %4801 = vmatpush2.msra.mxu0 %v4199
    %4802 = vmatprep.subr.mxu0 %v4196
    %4803 = vmatpush2.msra.mxu0 %v4195
    %4804 = vmatprep.subr.mxu0 %v4192
    %4805 = vmatpush2.msra.mxu0 %v4191
    %4806 = vmatprep.subr.mxu0 %v4188
    %4807 = vmatpush2.msra.mxu0 %v4187
    %4808 = vmatprep.subr.mxu0 %v4184
    %4809 = vmatpush2.msra.mxu0 %v4183
    %4810 = vmatprep.subr.mxu0 %v4180
    %4811 = vmatpush2.msra.mxu0 %v4179
    %4812 = vmatprep.subr.mxu0 %v4176
    %4813 = vmatpush2.msra.mxu0 %v4175
    %4814 = vmatprep.subr.mxu0 %v4172
    %4815 = vmatpush2.msra.mxu0 %v4171
    %4816 = vmatprep.subr.mxu0 %v4168
    %4817 = vmatpush2.msra.mxu0 %v4167
    %4818 = vmatprep.mubr.f32.mxu0 %v3444
    %4819 = vmatmul.mubr.f32.gmra.mxu0 %v3443
    %v4820 = vpop.f32.mrf.mxu0
    %v4821 = vadd.f32 %v4744, %v4820
    %v4822 = vpop.f32.mrf.mxu0
    %v4823 = vadd.f32 %v4746, %v4822
    %4824 = vmatprep.mubr.f32.mxu0 %v3459
    %4825 = vmatmul.mubr.f32.gmra.mxu0 %v3458
    %v4826 = vpop.f32.mrf.mxu0
    %v4827 = vadd.f32 %v4750, %v4826
    %v4828 = vpop.f32.mrf.mxu0
    %v4829 = vadd.f32 %v4752, %v4828
    %4830 = vdwg.mxu0
    %4831 = vmatprep.subr.mxu0 %v4292
    %4832 = vmatpush1.msra.mxu0 %v4291
    %4833 = vmatprep.subr.mxu0 %v4288
    %4834 = vmatpush1.msra.mxu0 %v4287
    %4835 = vmatprep.subr.mxu0 %v4284
    %4836 = vmatpush1.msra.mxu0 %v4283
    %4837 = vmatprep.subr.mxu0 %v4280
    %4838 = vmatpush1.msra.mxu0 %v4279
    %4839 = vmatprep.subr.mxu0 %v4276
    %4840 = vmatpush1.msra.mxu0 %v4275
    %4841 = vmatprep.subr.mxu0 %v4272
    %4842 = vmatpush1.msra.mxu0 %v4271
    %4843 = vmatprep.subr.mxu0 %v4268
    %4844 = vmatpush1.msra.mxu0 %v4267
    %4845 = vmatprep.subr.mxu0 %v4264
    %4846 = vmatpush1.msra.mxu0 %v4263
    %4847 = vmatprep.subr.mxu0 %v4260
    %4848 = vmatpush1.msra.mxu0 %v4259
    %4849 = vmatprep.subr.mxu0 %v4256
    %4850 = vmatpush1.msra.mxu0 %v4255
    %4851 = vmatprep.subr.mxu0 %v4252
    %4852 = vmatpush1.msra.mxu0 %v4251
    %4853 = vmatprep.subr.mxu0 %v4248
    %4854 = vmatpush1.msra.mxu0 %v4247
    %4855 = vmatprep.subr.mxu0 %v4244
    %4856 = vmatpush1.msra.mxu0 %v4243
    %4857 = vmatprep.subr.mxu0 %v4240
    %4858 = vmatpush1.msra.mxu0 %v4239
    %4859 = vmatprep.subr.mxu0 %v4236
    %4860 = vmatpush1.msra.mxu0 %v4235
    %4861 = vmatprep.subr.mxu0 %v4232
    %4862 = vmatpush1.msra.mxu0 %v4231
    %4863 = vmatprep.subr.mxu0 %v4356
    %4864 = vmatpush2.msra.mxu0 %v4355
    %4865 = vmatprep.subr.mxu0 %v4352
    %4866 = vmatpush2.msra.mxu0 %v4351
    %4867 = vmatprep.subr.mxu0 %v4348
    %4868 = vmatpush2.msra.mxu0 %v4347
    %4869 = vmatprep.subr.mxu0 %v4344
    %4870 = vmatpush2.msra.mxu0 %v4343
    %4871 = vmatprep.subr.mxu0 %v4340
    %4872 = vmatpush2.msra.mxu0 %v4339
    %4873 = vmatprep.subr.mxu0 %v4336
    %4874 = vmatpush2.msra.mxu0 %v4335
    %4875 = vmatprep.subr.mxu0 %v4332
    %4876 = vmatpush2.msra.mxu0 %v4331
    %4877 = vmatprep.subr.mxu0 %v4328
    %4878 = vmatpush2.msra.mxu0 %v4327
    %4879 = vmatprep.subr.mxu0 %v4324
    %4880 = vmatpush2.msra.mxu0 %v4323
    %4881 = vmatprep.subr.mxu0 %v4320
    %4882 = vmatpush2.msra.mxu0 %v4319
    %4883 = vmatprep.subr.mxu0 %v4316
    %4884 = vmatpush2.msra.mxu0 %v4315
    %4885 = vmatprep.subr.mxu0 %v4312
    %4886 = vmatpush2.msra.mxu0 %v4311
    %4887 = vmatprep.subr.mxu0 %v4308
    %4888 = vmatpush2.msra.mxu0 %v4307
    %4889 = vmatprep.subr.mxu0 %v4304
    %4890 = vmatpush2.msra.mxu0 %v4303
    %4891 = vmatprep.subr.mxu0 %v4300
    %4892 = vmatpush2.msra.mxu0 %v4299
    %4893 = vmatprep.subr.mxu0 %v4296
    %4894 = vmatpush2.msra.mxu0 %v4295
    %4895 = vmatprep.mubr.f32.mxu0 %v3446
    %4896 = vmatmul.mubr.f32.gmra.mxu0 %v3445
    %v4897 = vpop.f32.mrf.mxu0
    %v4898 = vadd.f32 %v4821, %v4897
    %v4899 = vpop.f32.mrf.mxu0
    %v4900 = vadd.f32 %v4823, %v4899
    %4901 = vmatprep.mubr.f32.mxu0 %v3461
    %4902 = vmatmul.mubr.f32.gmra.mxu0 %v3460
    %v4903 = vpop.f32.mrf.mxu0
    %v4904 = vadd.f32 %v4827, %v4903
    %v4905 = vpop.f32.mrf.mxu0
    %v4906 = vadd.f32 %v4829, %v4905
    %4907 = vdwg.mxu0
    %4908 = vmatprep.subr.mxu0 0.0
    %4909 = vmatpush1.msra.mxu0 0.0
    %4910 = vmatprep.subr.mxu0 0.0
    %4911 = vmatpush1.msra.mxu0 0.0
    %4912 = vmatprep.subr.mxu0 0.0
    %4913 = vmatpush1.msra.mxu0 0.0
    %4914 = vmatprep.subr.mxu0 0.0
    %4915 = vmatpush1.msra.mxu0 0.0
    %4916 = vmatprep.subr.mxu0 0.0
    %4917 = vmatpush1.msra.mxu0 0.0
    %4918 = vmatprep.subr.mxu0 0.0
    %4919 = vmatpush1.msra.mxu0 0.0
    %4920 = vmatprep.subr.mxu0 0.0
    %4921 = vmatpush1.msra.mxu0 0.0
    %4922 = vmatprep.subr.mxu0 0.0
    %4923 = vmatpush1.msra.mxu0 0.0
    %4924 = vmatprep.subr.mxu0 0.0
    %4925 = vmatpush1.msra.mxu0 0.0
    %4926 = vmatprep.subr.mxu0 0.0
    %4927 = vmatpush1.msra.mxu0 0.0
    %4928 = vmatprep.subr.mxu0 0.0
    %4929 = vmatpush1.msra.mxu0 0.0
    %4930 = vmatprep.subr.mxu0 0.0
    %4931 = vmatpush1.msra.mxu0 0.0
    %4932 = vmatprep.subr.mxu0 0.0
    %4933 = vmatpush1.msra.mxu0 0.0
    %4934 = vmatprep.subr.mxu0 0.0
    %4935 = vmatpush1.msra.mxu0 0.0
    %4936 = vmatprep.subr.mxu0 0.0
    %4937 = vmatpush1.msra.mxu0 0.0
    %4938 = vmatprep.subr.mxu0 %v4360
    %4939 = vmatpush1.msra.mxu0 %v4359
    %4940 = vmatprep.subr.mxu0 0.0
    %4941 = vmatpush2.msra.mxu0 0.0
    %4942 = vmatprep.subr.mxu0 0.0
    %4943 = vmatpush2.msra.mxu0 0.0
    %4944 = vmatprep.subr.mxu0 0.0
    %4945 = vmatpush2.msra.mxu0 0.0
    %4946 = vmatprep.subr.mxu0 0.0
    %4947 = vmatpush2.msra.mxu0 0.0
    %4948 = vmatprep.subr.mxu0 0.0
    %4949 = vmatpush2.msra.mxu0 0.0
    %4950 = vmatprep.subr.mxu0 0.0
    %4951 = vmatpush2.msra.mxu0 0.0
    %4952 = vmatprep.subr.mxu0 0.0
    %4953 = vmatpush2.msra.mxu0 0.0
    %4954 = vmatprep.subr.mxu0 0.0
    %4955 = vmatpush2.msra.mxu0 0.0
    %4956 = vmatprep.subr.mxu0 0.0
    %4957 = vmatpush2.msra.mxu0 0.0
    %4958 = vmatprep.subr.mxu0 0.0
    %4959 = vmatpush2.msra.mxu0 0.0
    %4960 = vmatprep.subr.mxu0 0.0
    %4961 = vmatpush2.msra.mxu0 0.0
    %4962 = vmatprep.subr.mxu0 0.0
    %4963 = vmatpush2.msra.mxu0 0.0
    %4964 = vmatprep.subr.mxu0 0.0
    %4965 = vmatpush2.msra.mxu0 0.0
    %4966 = vmatprep.subr.mxu0 0.0
    %4967 = vmatpush2.msra.mxu0 0.0
    %4968 = vmatprep.subr.mxu0 0.0
    %4969 = vmatpush2.msra.mxu0 0.0
    %4970 = vmatprep.subr.mxu0 0.0
    %4971 = vmatpush2.msra.mxu0 0.0
    %4972 = vmatprep.mubr.f32.mxu0 0.0
    %4973 = vmatmul.mubr.f32.gmra.mxu0 %v4364
    %v4974 = vpop.f32.mrf.mxu0
    %v4975 = vadd.f32 %v4898, %v4974
    %v4976 = vpop.f32.mrf.mxu0
    %v4977 = vadd.f32 %v4900, %v4976
    %4978 = vmatprep.mubr.f32.mxu0 0.0
    %4979 = vmatmul.mubr.f32.gmra.mxu0 %v4367
    %v4980 = vpop.f32.mrf.mxu0
    %v4981 = vadd.f32 %v4904, %v4980
    %v4982 = vpop.f32.mrf.mxu0
    %v4983 = vadd.f32 %v4906, %v4982
    %4984 = vdwg.mxu0
    %4985 = vmatprep.subr.mxu0 %v3526
    %4986 = vmatpush1.msra.mxu0 %v3525
    %4987 = vmatprep.subr.mxu0 %v3522
    %4988 = vmatpush1.msra.mxu0 %v3521
    %4989 = vmatprep.subr.mxu0 %v3518
    %4990 = vmatpush1.msra.mxu0 %v3517
    %4991 = vmatprep.subr.mxu0 %v3514
    %4992 = vmatpush1.msra.mxu0 %v3513
    %4993 = vmatprep.subr.mxu0 %v3510
    %4994 = vmatpush1.msra.mxu0 %v3509
    %4995 = vmatprep.subr.mxu0 %v3506
    %4996 = vmatpush1.msra.mxu0 %v3505
    %4997 = vmatprep.subr.mxu0 %v3502
    %4998 = vmatpush1.msra.mxu0 %v3501
    %4999 = vmatprep.subr.mxu0 %v3498
    %5000 = vmatpush1.msra.mxu0 %v3497
    %5001 = vmatprep.subr.mxu0 %v3494
    %5002 = vmatpush1.msra.mxu0 %v3493
    %5003 = vmatprep.subr.mxu0 %v3490
    %5004 = vmatpush1.msra.mxu0 %v3489
    %5005 = vmatprep.subr.mxu0 %v3486
    %5006 = vmatpush1.msra.mxu0 %v3485
    %5007 = vmatprep.subr.mxu0 %v3482
    %5008 = vmatpush1.msra.mxu0 %v3481
    %5009 = vmatprep.subr.mxu0 %v3478
    %5010 = vmatpush1.msra.mxu0 %v3477
    %5011 = vmatprep.subr.mxu0 %v3474
    %5012 = vmatpush1.msra.mxu0 %v3473
    %5013 = vmatprep.subr.mxu0 %v3470
    %5014 = vmatpush1.msra.mxu0 %v3469
    %5015 = vmatprep.subr.mxu0 %v3466
    %5016 = vmatpush1.msra.mxu0 %v3465
    %5017 = vmatprep.subr.mxu0 %v3590
    %5018 = vmatpush2.msra.mxu0 %v3589
    %5019 = vmatprep.subr.mxu0 %v3586
    %5020 = vmatpush2.msra.mxu0 %v3585
    %5021 = vmatprep.subr.mxu0 %v3582
    %5022 = vmatpush2.msra.mxu0 %v3581
    %5023 = vmatprep.subr.mxu0 %v3578
    %5024 = vmatpush2.msra.mxu0 %v3577
    %5025 = vmatprep.subr.mxu0 %v3574
    %5026 = vmatpush2.msra.mxu0 %v3573
    %5027 = vmatprep.subr.mxu0 %v3570
    %5028 = vmatpush2.msra.mxu0 %v3569
    %5029 = vmatprep.subr.mxu0 %v3566
    %5030 = vmatpush2.msra.mxu0 %v3565
    %5031 = vmatprep.subr.mxu0 %v3562
    %5032 = vmatpush2.msra.mxu0 %v3561
    %5033 = vmatprep.subr.mxu0 %v3558
    %5034 = vmatpush2.msra.mxu0 %v3557
    %5035 = vmatprep.subr.mxu0 %v3554
    %5036 = vmatpush2.msra.mxu0 %v3553
    %5037 = vmatprep.subr.mxu0 %v3550
    %5038 = vmatpush2.msra.mxu0 %v3549
    %5039 = vmatprep.subr.mxu0 %v3546
    %5040 = vmatpush2.msra.mxu0 %v3545
    %5041 = vmatprep.subr.mxu0 %v3542
    %5042 = vmatpush2.msra.mxu0 %v3541
    %5043 = vmatprep.subr.mxu0 %v3538
    %5044 = vmatpush2.msra.mxu0 %v3537
    %5045 = vmatprep.subr.mxu0 %v3534
    %5046 = vmatpush2.msra.mxu0 %v3533
    %5047 = vmatprep.subr.mxu0 %v3530
    %5048 = vmatpush2.msra.mxu0 %v3529
    %5049 = vmatprep.mubr.f32.mxu0 %v3434
    %5050 = vmatmul.mubr.f32.gmra.mxu0 %v3433
    %v5051 = vpop.f32.mrf.mxu0
    %v5052 = vadd.f32 0.0, %v5051
    %v5053 = vpop.f32.mrf.mxu0
    %v5054 = vadd.f32 0.0, %v5053
    %5055 = vmatprep.mubr.f32.mxu0 %v3449
    %5056 = vmatmul.mubr.f32.gmra.mxu0 %v3448
    %v5057 = vpop.f32.mrf.mxu0
    %v5058 = vadd.f32 0.0, %v5057
    %v5059 = vpop.f32.mrf.mxu0
    %v5060 = vadd.f32 0.0, %v5059
    %5061 = vdwg.mxu0
    %5062 = vmatprep.subr.mxu0 %v3654
    %5063 = vmatpush1.msra.mxu0 %v3653
    %5064 = vmatprep.subr.mxu0 %v3650
    %5065 = vmatpush1.msra.mxu0 %v3649
    %5066 = vmatprep.subr.mxu0 %v3646
    %5067 = vmatpush1.msra.mxu0 %v3645
    %5068 = vmatprep.subr.mxu0 %v3642
    %5069 = vmatpush1.msra.mxu0 %v3641
    %5070 = vmatprep.subr.mxu0 %v3638
    %5071 = vmatpush1.msra.mxu0 %v3637
    %5072 = vmatprep.subr.mxu0 %v3634
    %5073 = vmatpush1.msra.mxu0 %v3633
    %5074 = vmatprep.subr.mxu0 %v3630
    %5075 = vmatpush1.msra.mxu0 %v3629
    %5076 = vmatprep.subr.mxu0 %v3626
    %5077 = vmatpush1.msra.mxu0 %v3625
    %5078 = vmatprep.subr.mxu0 %v3622
    %5079 = vmatpush1.msra.mxu0 %v3621
    %5080 = vmatprep.subr.mxu0 %v3618
    %5081 = vmatpush1.msra.mxu0 %v3617
    %5082 = vmatprep.subr.mxu0 %v3614
    %5083 = vmatpush1.msra.mxu0 %v3613
    %5084 = vmatprep.subr.mxu0 %v3610
    %5085 = vmatpush1.msra.mxu0 %v3609
    %5086 = vmatprep.subr.mxu0 %v3606
    %5087 = vmatpush1.msra.mxu0 %v3605
    %5088 = vmatprep.subr.mxu0 %v3602
    %5089 = vmatpush1.msra.mxu0 %v3601
    %5090 = vmatprep.subr.mxu0 %v3598
    %5091 = vmatpush1.msra.mxu0 %v3597
    %5092 = vmatprep.subr.mxu0 %v3594
    %5093 = vmatpush1.msra.mxu0 %v3593
    %5094 = vmatprep.subr.mxu0 %v3718
    %5095 = vmatpush2.msra.mxu0 %v3717
    %5096 = vmatprep.subr.mxu0 %v3714
    %5097 = vmatpush2.msra.mxu0 %v3713
    %5098 = vmatprep.subr.mxu0 %v3710
    %5099 = vmatpush2.msra.mxu0 %v3709
    %5100 = vmatprep.subr.mxu0 %v3706
    %5101 = vmatpush2.msra.mxu0 %v3705
    %5102 = vmatprep.subr.mxu0 %v3702
    %5103 = vmatpush2.msra.mxu0 %v3701
    %5104 = vmatprep.subr.mxu0 %v3698
    %5105 = vmatpush2.msra.mxu0 %v3697
    %5106 = vmatprep.subr.mxu0 %v3694
    %5107 = vmatpush2.msra.mxu0 %v3693
    %5108 = vmatprep.subr.mxu0 %v3690
    %5109 = vmatpush2.msra.mxu0 %v3689
    %5110 = vmatprep.subr.mxu0 %v3686
    %5111 = vmatpush2.msra.mxu0 %v3685
    %5112 = vmatprep.subr.mxu0 %v3682
    %5113 = vmatpush2.msra.mxu0 %v3681
    %5114 = vmatprep.subr.mxu0 %v3678
    %5115 = vmatpush2.msra.mxu0 %v3677
    %5116 = vmatprep.subr.mxu0 %v3674
    %5117 = vmatpush2.msra.mxu0 %v3673
    %5118 = vmatprep.subr.mxu0 %v3670
    %5119 = vmatpush2.msra.mxu0 %v3669
    %5120 = vmatprep.subr.mxu0 %v3666
    %5121 = vmatpush2.msra.mxu0 %v3665
    %5122 = vmatprep.subr.mxu0 %v3662
    %5123 = vmatpush2.msra.mxu0 %v3661
    %5124 = vmatprep.subr.mxu0 %v3658
    %5125 = vmatpush2.msra.mxu0 %v3657
    %5126 = vmatprep.mubr.f32.mxu0 %v3436
    %5127 = vmatmul.mubr.f32.gmra.mxu0 %v3435
    %v5128 = vpop.f32.mrf.mxu0
    %v5129 = vadd.f32 %v5052, %v5128
    %v5130 = vpop.f32.mrf.mxu0
    %v5131 = vadd.f32 %v5054, %v5130
    %5132 = vmatprep.mubr.f32.mxu0 %v3451
    %5133 = vmatmul.mubr.f32.gmra.mxu0 %v3450
    %v5134 = vpop.f32.mrf.mxu0
    %v5135 = vadd.f32 %v5058, %v5134
    %v5136 = vpop.f32.mrf.mxu0
    %v5137 = vadd.f32 %v5060, %v5136
    %5138 = vdwg.mxu0
    %5139 = vmatprep.subr.mxu0 %v3782
    %5140 = vmatpush1.msra.mxu0 %v3781
    %5141 = vmatprep.subr.mxu0 %v3778
    %5142 = vmatpush1.msra.mxu0 %v3777
    %5143 = vmatprep.subr.mxu0 %v3774
    %5144 = vmatpush1.msra.mxu0 %v3773
    %5145 = vmatprep.subr.mxu0 %v3770
    %5146 = vmatpush1.msra.mxu0 %v3769
    %5147 = vmatprep.subr.mxu0 %v3766
    %5148 = vmatpush1.msra.mxu0 %v3765
    %5149 = vmatprep.subr.mxu0 %v3762
    %5150 = vmatpush1.msra.mxu0 %v3761
    %5151 = vmatprep.subr.mxu0 %v3758
    %5152 = vmatpush1.msra.mxu0 %v3757
    %5153 = vmatprep.subr.mxu0 %v3754
    %5154 = vmatpush1.msra.mxu0 %v3753
    %5155 = vmatprep.subr.mxu0 %v3750
    %5156 = vmatpush1.msra.mxu0 %v3749
    %5157 = vmatprep.subr.mxu0 %v3746
    %5158 = vmatpush1.msra.mxu0 %v3745
    %5159 = vmatprep.subr.mxu0 %v3742
    %5160 = vmatpush1.msra.mxu0 %v3741
    %5161 = vmatprep.subr.mxu0 %v3738
    %5162 = vmatpush1.msra.mxu0 %v3737
    %5163 = vmatprep.subr.mxu0 %v3734
    %5164 = vmatpush1.msra.mxu0 %v3733
    %5165 = vmatprep.subr.mxu0 %v3730
    %5166 = vmatpush1.msra.mxu0 %v3729
    %5167 = vmatprep.subr.mxu0 %v3726
    %5168 = vmatpush1.msra.mxu0 %v3725
    %5169 = vmatprep.subr.mxu0 %v3722
    %5170 = vmatpush1.msra.mxu0 %v3721
    %5171 = vmatprep.subr.mxu0 %v3846
    %5172 = vmatpush2.msra.mxu0 %v3845
    %5173 = vmatprep.subr.mxu0 %v3842
    %5174 = vmatpush2.msra.mxu0 %v3841
    %5175 = vmatprep.subr.mxu0 %v3838
    %5176 = vmatpush2.msra.mxu0 %v3837
    %5177 = vmatprep.subr.mxu0 %v3834
    %5178 = vmatpush2.msra.mxu0 %v3833
    %5179 = vmatprep.subr.mxu0 %v3830
    %5180 = vmatpush2.msra.mxu0 %v3829
    %5181 = vmatprep.subr.mxu0 %v3826
    %5182 = vmatpush2.msra.mxu0 %v3825
    %5183 = vmatprep.subr.mxu0 %v3822
    %5184 = vmatpush2.msra.mxu0 %v3821
    %5185 = vmatprep.subr.mxu0 %v3818
    %5186 = vmatpush2.msra.mxu0 %v3817
    %5187 = vmatprep.subr.mxu0 %v3814
    %5188 = vmatpush2.msra.mxu0 %v3813
    %5189 = vmatprep.subr.mxu0 %v3810
    %5190 = vmatpush2.msra.mxu0 %v3809
    %5191 = vmatprep.subr.mxu0 %v3806
    %5192 = vmatpush2.msra.mxu0 %v3805
    %5193 = vmatprep.subr.mxu0 %v3802
    %5194 = vmatpush2.msra.mxu0 %v3801
    %5195 = vmatprep.subr.mxu0 %v3798
    %5196 = vmatpush2.msra.mxu0 %v3797
    %5197 = vmatprep.subr.mxu0 %v3794
    %5198 = vmatpush2.msra.mxu0 %v3793
    %5199 = vmatprep.subr.mxu0 %v3790
    %5200 = vmatpush2.msra.mxu0 %v3789
    %5201 = vmatprep.subr.mxu0 %v3786
    %5202 = vmatpush2.msra.mxu0 %v3785
    %5203 = vmatprep.mubr.f32.mxu0 %v3438
    %5204 = vmatmul.mubr.f32.gmra.mxu0 %v3437
    %v5205 = vpop.f32.mrf.mxu0
    %v5206 = vadd.f32 %v5129, %v5205
    %v5207 = vpop.f32.mrf.mxu0
    %v5208 = vadd.f32 %v5131, %v5207
    %5209 = vmatprep.mubr.f32.mxu0 %v3453
    %5210 = vmatmul.mubr.f32.gmra.mxu0 %v3452
    %v5211 = vpop.f32.mrf.mxu0
    %v5212 = vadd.f32 %v5135, %v5211
    %v5213 = vpop.f32.mrf.mxu0
    %v5214 = vadd.f32 %v5137, %v5213
    %5215 = vdwg.mxu0
    %5216 = vmatprep.subr.mxu0 %v3910
    %5217 = vmatpush1.msra.mxu0 %v3909
    %5218 = vmatprep.subr.mxu0 %v3906
    %5219 = vmatpush1.msra.mxu0 %v3905
    %5220 = vmatprep.subr.mxu0 %v3902
    %5221 = vmatpush1.msra.mxu0 %v3901
    %5222 = vmatprep.subr.mxu0 %v3898
    %5223 = vmatpush1.msra.mxu0 %v3897
    %5224 = vmatprep.subr.mxu0 %v3894
    %5225 = vmatpush1.msra.mxu0 %v3893
    %5226 = vmatprep.subr.mxu0 %v3890
    %5227 = vmatpush1.msra.mxu0 %v3889
    %5228 = vmatprep.subr.mxu0 %v3886
    %5229 = vmatpush1.msra.mxu0 %v3885
    %5230 = vmatprep.subr.mxu0 %v3882
    %5231 = vmatpush1.msra.mxu0 %v3881
    %5232 = vmatprep.subr.mxu0 %v3878
    %5233 = vmatpush1.msra.mxu0 %v3877
    %5234 = vmatprep.subr.mxu0 %v3874
    %5235 = vmatpush1.msra.mxu0 %v3873
    %5236 = vmatprep.subr.mxu0 %v3870
    %5237 = vmatpush1.msra.mxu0 %v3869
    %5238 = vmatprep.subr.mxu0 %v3866
    %5239 = vmatpush1.msra.mxu0 %v3865
    %5240 = vmatprep.subr.mxu0 %v3862
    %5241 = vmatpush1.msra.mxu0 %v3861
    %5242 = vmatprep.subr.mxu0 %v3858
    %5243 = vmatpush1.msra.mxu0 %v3857
    %5244 = vmatprep.subr.mxu0 %v3854
    %5245 = vmatpush1.msra.mxu0 %v3853
    %5246 = vmatprep.subr.mxu0 %v3850
    %5247 = vmatpush1.msra.mxu0 %v3849
    %5248 = vmatprep.subr.mxu0 %v3974
    %5249 = vmatpush2.msra.mxu0 %v3973
    %5250 = vmatprep.subr.mxu0 %v3970
    %5251 = vmatpush2.msra.mxu0 %v3969
    %5252 = vmatprep.subr.mxu0 %v3966
    %5253 = vmatpush2.msra.mxu0 %v3965
    %5254 = vmatprep.subr.mxu0 %v3962
    %5255 = vmatpush2.msra.mxu0 %v3961
    %5256 = vmatprep.subr.mxu0 %v3958
    %5257 = vmatpush2.msra.mxu0 %v3957
    %5258 = vmatprep.subr.mxu0 %v3954
    %5259 = vmatpush2.msra.mxu0 %v3953
    %5260 = vmatprep.subr.mxu0 %v3950
    %5261 = vmatpush2.msra.mxu0 %v3949
    %5262 = vmatprep.subr.mxu0 %v3946
    %5263 = vmatpush2.msra.mxu0 %v3945
    %5264 = vmatprep.subr.mxu0 %v3942
    %5265 = vmatpush2.msra.mxu0 %v3941
    %5266 = vmatprep.subr.mxu0 %v3938
    %5267 = vmatpush2.msra.mxu0 %v3937
    %5268 = vmatprep.subr.mxu0 %v3934
    %5269 = vmatpush2.msra.mxu0 %v3933
    %5270 = vmatprep.subr.mxu0 %v3930
    %5271 = vmatpush2.msra.mxu0 %v3929
    %5272 = vmatprep.subr.mxu0 %v3926
    %5273 = vmatpush2.msra.mxu0 %v3925
    %5274 = vmatprep.subr.mxu0 %v3922
    %5275 = vmatpush2.msra.mxu0 %v3921
    %5276 = vmatprep.subr.mxu0 %v3918
    %5277 = vmatpush2.msra.mxu0 %v3917
    %5278 = vmatprep.subr.mxu0 %v3914
    %5279 = vmatpush2.msra.mxu0 %v3913
    %5280 = vmatprep.mubr.f32.mxu0 %v3440
    %5281 = vmatmul.mubr.f32.gmra.mxu0 %v3439
    %v5282 = vpop.f32.mrf.mxu0
    %v5283 = vadd.f32 %v5206, %v5282
    %v5284 = vpop.f32.mrf.mxu0
    %v5285 = vadd.f32 %v5208, %v5284
    %5286 = vmatprep.mubr.f32.mxu0 %v3455
    %5287 = vmatmul.mubr.f32.gmra.mxu0 %v3454
    %v5288 = vpop.f32.mrf.mxu0
    %v5289 = vadd.f32 %v5212, %v5288
    %v5290 = vpop.f32.mrf.mxu0
    %v5291 = vadd.f32 %v5214, %v5290
    %5292 = vdwg.mxu0
    %5293 = vmatprep.subr.mxu0 %v4038
    %5294 = vmatpush1.msra.mxu0 %v4037
    %5295 = vmatprep.subr.mxu0 %v4034
    %5296 = vmatpush1.msra.mxu0 %v4033
    %5297 = vmatprep.subr.mxu0 %v4030
    %5298 = vmatpush1.msra.mxu0 %v4029
    %5299 = vmatprep.subr.mxu0 %v4026
    %5300 = vmatpush1.msra.mxu0 %v4025
    %5301 = vmatprep.subr.mxu0 %v4022
    %5302 = vmatpush1.msra.mxu0 %v4021
    %5303 = vmatprep.subr.mxu0 %v4018
    %5304 = vmatpush1.msra.mxu0 %v4017
    %5305 = vmatprep.subr.mxu0 %v4014
    %5306 = vmatpush1.msra.mxu0 %v4013
    %5307 = vmatprep.subr.mxu0 %v4010
    %5308 = vmatpush1.msra.mxu0 %v4009
    %5309 = vmatprep.subr.mxu0 %v4006
    %5310 = vmatpush1.msra.mxu0 %v4005
    %5311 = vmatprep.subr.mxu0 %v4002
    %5312 = vmatpush1.msra.mxu0 %v4001
    %5313 = vmatprep.subr.mxu0 %v3998
    %5314 = vmatpush1.msra.mxu0 %v3997
    %5315 = vmatprep.subr.mxu0 %v3994
    %5316 = vmatpush1.msra.mxu0 %v3993
    %5317 = vmatprep.subr.mxu0 %v3990
    %5318 = vmatpush1.msra.mxu0 %v3989
    %5319 = vmatprep.subr.mxu0 %v3986
    %5320 = vmatpush1.msra.mxu0 %v3985
    %5321 = vmatprep.subr.mxu0 %v3982
    %5322 = vmatpush1.msra.mxu0 %v3981
    %5323 = vmatprep.subr.mxu0 %v3978
    %5324 = vmatpush1.msra.mxu0 %v3977
    %5325 = vmatprep.subr.mxu0 %v4102
    %5326 = vmatpush2.msra.mxu0 %v4101
    %5327 = vmatprep.subr.mxu0 %v4098
    %5328 = vmatpush2.msra.mxu0 %v4097
    %5329 = vmatprep.subr.mxu0 %v4094
    %5330 = vmatpush2.msra.mxu0 %v4093
    %5331 = vmatprep.subr.mxu0 %v4090
    %5332 = vmatpush2.msra.mxu0 %v4089
    %5333 = vmatprep.subr.mxu0 %v4086
    %5334 = vmatpush2.msra.mxu0 %v4085
    %5335 = vmatprep.subr.mxu0 %v4082
    %5336 = vmatpush2.msra.mxu0 %v4081
    %5337 = vmatprep.subr.mxu0 %v4078
    %5338 = vmatpush2.msra.mxu0 %v4077
    %5339 = vmatprep.subr.mxu0 %v4074
    %5340 = vmatpush2.msra.mxu0 %v4073
    %5341 = vmatprep.subr.mxu0 %v4070
    %5342 = vmatpush2.msra.mxu0 %v4069
    %5343 = vmatprep.subr.mxu0 %v4066
    %5344 = vmatpush2.msra.mxu0 %v4065
    %5345 = vmatprep.subr.mxu0 %v4062
    %5346 = vmatpush2.msra.mxu0 %v4061
    %5347 = vmatprep.subr.mxu0 %v4058
    %5348 = vmatpush2.msra.mxu0 %v4057
    %5349 = vmatprep.subr.mxu0 %v4054
    %5350 = vmatpush2.msra.mxu0 %v4053
    %5351 = vmatprep.subr.mxu0 %v4050
    %5352 = vmatpush2.msra.mxu0 %v4049
    %5353 = vmatprep.subr.mxu0 %v4046
    %5354 = vmatpush2.msra.mxu0 %v4045
    %5355 = vmatprep.subr.mxu0 %v4042
    %5356 = vmatpush2.msra.mxu0 %v4041
    %5357 = vmatprep.mubr.f32.mxu0 %v3442
    %5358 = vmatmul.mubr.f32.gmra.mxu0 %v3441
    %v5359 = vpop.f32.mrf.mxu0
    %v5360 = vadd.f32 %v5283, %v5359
    %v5361 = vpop.f32.mrf.mxu0
    %v5362 = vadd.f32 %v5285, %v5361
    %5363 = vmatprep.mubr.f32.mxu0 %v3457
    %5364 = vmatmul.mubr.f32.gmra.mxu0 %v3456
    %v5365 = vpop.f32.mrf.mxu0
    %v5366 = vadd.f32 %v5289, %v5365
    %v5367 = vpop.f32.mrf.mxu0
    %v5368 = vadd.f32 %v5291, %v5367
    %5369 = vdwg.mxu0
    %5370 = vmatprep.subr.mxu0 %v4166
    %5371 = vmatpush1.msra.mxu0 %v4165
    %5372 = vmatprep.subr.mxu0 %v4162
    %5373 = vmatpush1.msra.mxu0 %v4161
    %5374 = vmatprep.subr.mxu0 %v4158
    %5375 = vmatpush1.msra.mxu0 %v4157
    %5376 = vmatprep.subr.mxu0 %v4154
    %5377 = vmatpush1.msra.mxu0 %v4153
    %5378 = vmatprep.subr.mxu0 %v4150
    %5379 = vmatpush1.msra.mxu0 %v4149
    %5380 = vmatprep.subr.mxu0 %v4146
    %5381 = vmatpush1.msra.mxu0 %v4145
    %5382 = vmatprep.subr.mxu0 %v4142
    %5383 = vmatpush1.msra.mxu0 %v4141
    %5384 = vmatprep.subr.mxu0 %v4138
    %5385 = vmatpush1.msra.mxu0 %v4137
    %5386 = vmatprep.subr.mxu0 %v4134
    %5387 = vmatpush1.msra.mxu0 %v4133
    %5388 = vmatprep.subr.mxu0 %v4130
    %5389 = vmatpush1.msra.mxu0 %v4129
    %5390 = vmatprep.subr.mxu0 %v4126
    %5391 = vmatpush1.msra.mxu0 %v4125
    %5392 = vmatprep.subr.mxu0 %v4122
    %5393 = vmatpush1.msra.mxu0 %v4121
    %5394 = vmatprep.subr.mxu0 %v4118
    %5395 = vmatpush1.msra.mxu0 %v4117
    %5396 = vmatprep.subr.mxu0 %v4114
    %5397 = vmatpush1.msra.mxu0 %v4113
    %5398 = vmatprep.subr.mxu0 %v4110
    %5399 = vmatpush1.msra.mxu0 %v4109
    %5400 = vmatprep.subr.mxu0 %v4106
    %5401 = vmatpush1.msra.mxu0 %v4105
    %5402 = vmatprep.subr.mxu0 %v4230
    %5403 = vmatpush2.msra.mxu0 %v4229
    %5404 = vmatprep.subr.mxu0 %v4226
    %5405 = vmatpush2.msra.mxu0 %v4225
    %5406 = vmatprep.subr.mxu0 %v4222
    %5407 = vmatpush2.msra.mxu0 %v4221
    %5408 = vmatprep.subr.mxu0 %v4218
    %5409 = vmatpush2.msra.mxu0 %v4217
    %5410 = vmatprep.subr.mxu0 %v4214
    %5411 = vmatpush2.msra.mxu0 %v4213
    %5412 = vmatprep.subr.mxu0 %v4210
    %5413 = vmatpush2.msra.mxu0 %v4209
    %5414 = vmatprep.subr.mxu0 %v4206
    %5415 = vmatpush2.msra.mxu0 %v4205
    %5416 = vmatprep.subr.mxu0 %v4202
    %5417 = vmatpush2.msra.mxu0 %v4201
    %5418 = vmatprep.subr.mxu0 %v4198
    %5419 = vmatpush2.msra.mxu0 %v4197
    %5420 = vmatprep.subr.mxu0 %v4194
    %5421 = vmatpush2.msra.mxu0 %v4193
    %5422 = vmatprep.subr.mxu0 %v4190
    %5423 = vmatpush2.msra.mxu0 %v4189
    %5424 = vmatprep.subr.mxu0 %v4186
    %5425 = vmatpush2.msra.mxu0 %v4185
    %5426 = vmatprep.subr.mxu0 %v4182
    %5427 = vmatpush2.msra.mxu0 %v4181
    %5428 = vmatprep.subr.mxu0 %v4178
    %5429 = vmatpush2.msra.mxu0 %v4177
    %5430 = vmatprep.subr.mxu0 %v4174
    %5431 = vmatpush2.msra.mxu0 %v4173
    %5432 = vmatprep.subr.mxu0 %v4170
    %5433 = vmatpush2.msra.mxu0 %v4169
    %5434 = vmatprep.mubr.f32.mxu0 %v3444
    %5435 = vmatmul.mubr.f32.gmra.mxu0 %v3443
    %v5436 = vpop.f32.mrf.mxu0
    %v5437 = vadd.f32 %v5360, %v5436
    %v5438 = vpop.f32.mrf.mxu0
    %v5439 = vadd.f32 %v5362, %v5438
    %5440 = vmatprep.mubr.f32.mxu0 %v3459
    %5441 = vmatmul.mubr.f32.gmra.mxu0 %v3458
    %v5442 = vpop.f32.mrf.mxu0
    %v5443 = vadd.f32 %v5366, %v5442
    %v5444 = vpop.f32.mrf.mxu0
    %v5445 = vadd.f32 %v5368, %v5444
    %5446 = vdwg.mxu0
    %5447 = vmatprep.subr.mxu0 %v4294
    %5448 = vmatpush1.msra.mxu0 %v4293
    %5449 = vmatprep.subr.mxu0 %v4290
    %5450 = vmatpush1.msra.mxu0 %v4289
    %5451 = vmatprep.subr.mxu0 %v4286
    %5452 = vmatpush1.msra.mxu0 %v4285
    %5453 = vmatprep.subr.mxu0 %v4282
    %5454 = vmatpush1.msra.mxu0 %v4281
    %5455 = vmatprep.subr.mxu0 %v4278
    %5456 = vmatpush1.msra.mxu0 %v4277
    %5457 = vmatprep.subr.mxu0 %v4274
    %5458 = vmatpush1.msra.mxu0 %v4273
    %5459 = vmatprep.subr.mxu0 %v4270
    %5460 = vmatpush1.msra.mxu0 %v4269
    %5461 = vmatprep.subr.mxu0 %v4266
    %5462 = vmatpush1.msra.mxu0 %v4265
    %5463 = vmatprep.subr.mxu0 %v4262
    %5464 = vmatpush1.msra.mxu0 %v4261
    %5465 = vmatprep.subr.mxu0 %v4258
    %5466 = vmatpush1.msra.mxu0 %v4257
    %5467 = vmatprep.subr.mxu0 %v4254
    %5468 = vmatpush1.msra.mxu0 %v4253
    %5469 = vmatprep.subr.mxu0 %v4250
    %5470 = vmatpush1.msra.mxu0 %v4249
    %5471 = vmatprep.subr.mxu0 %v4246
    %5472 = vmatpush1.msra.mxu0 %v4245
    %5473 = vmatprep.subr.mxu0 %v4242
    %5474 = vmatpush1.msra.mxu0 %v4241
    %5475 = vmatprep.subr.mxu0 %v4238
    %5476 = vmatpush1.msra.mxu0 %v4237
    %5477 = vmatprep.subr.mxu0 %v4234
    %5478 = vmatpush1.msra.mxu0 %v4233
    %5479 = vmatprep.subr.mxu0 %v4358
    %5480 = vmatpush2.msra.mxu0 %v4357
    %5481 = vmatprep.subr.mxu0 %v4354
    %5482 = vmatpush2.msra.mxu0 %v4353
    %5483 = vmatprep.subr.mxu0 %v4350
    %5484 = vmatpush2.msra.mxu0 %v4349
    %5485 = vmatprep.subr.mxu0 %v4346
    %5486 = vmatpush2.msra.mxu0 %v4345
    %5487 = vmatprep.subr.mxu0 %v4342
    %5488 = vmatpush2.msra.mxu0 %v4341
    %5489 = vmatprep.subr.mxu0 %v4338
    %5490 = vmatpush2.msra.mxu0 %v4337
    %5491 = vmatprep.subr.mxu0 %v4334
    %5492 = vmatpush2.msra.mxu0 %v4333
    %5493 = vmatprep.subr.mxu0 %v4330
    %5494 = vmatpush2.msra.mxu0 %v4329
    %5495 = vmatprep.subr.mxu0 %v4326
    %5496 = vmatpush2.msra.mxu0 %v4325
    %5497 = vmatprep.subr.mxu0 %v4322
    %5498 = vmatpush2.msra.mxu0 %v4321
    %5499 = vmatprep.subr.mxu0 %v4318
    %5500 = vmatpush2.msra.mxu0 %v4317
    %5501 = vmatprep.subr.mxu0 %v4314
    %5502 = vmatpush2.msra.mxu0 %v4313
    %5503 = vmatprep.subr.mxu0 %v4310
    %5504 = vmatpush2.msra.mxu0 %v4309
    %5505 = vmatprep.subr.mxu0 %v4306
    %5506 = vmatpush2.msra.mxu0 %v4305
    %5507 = vmatprep.subr.mxu0 %v4302
    %5508 = vmatpush2.msra.mxu0 %v4301
    %5509 = vmatprep.subr.mxu0 %v4298
    %5510 = vmatpush2.msra.mxu0 %v4297
    %5511 = vmatprep.mubr.f32.mxu0 %v3446
    %5512 = vmatmul.mubr.f32.gmra.mxu0 %v3445
    %v5513 = vpop.f32.mrf.mxu0
    %v5514 = vadd.f32 %v5437, %v5513
    %v5515 = vpop.f32.mrf.mxu0
    %v5516 = vadd.f32 %v5439, %v5515
    %5517 = vmatprep.mubr.f32.mxu0 %v3461
    %5518 = vmatmul.mubr.f32.gmra.mxu0 %v3460
    %v5519 = vpop.f32.mrf.mxu0
    %v5520 = vadd.f32 %v5443, %v5519
    %v5521 = vpop.f32.mrf.mxu0
    %v5522 = vadd.f32 %v5445, %v5521
    %5523 = vdwg.mxu0
    %5524 = vmatprep.subr.mxu0 0.0
    %5525 = vmatpush1.msra.mxu0 0.0
    %5526 = vmatprep.subr.mxu0 0.0
    %5527 = vmatpush1.msra.mxu0 0.0
    %5528 = vmatprep.subr.mxu0 0.0
    %5529 = vmatpush1.msra.mxu0 0.0
    %5530 = vmatprep.subr.mxu0 0.0
    %5531 = vmatpush1.msra.mxu0 0.0
    %5532 = vmatprep.subr.mxu0 0.0
    %5533 = vmatpush1.msra.mxu0 0.0
    %5534 = vmatprep.subr.mxu0 0.0
    %5535 = vmatpush1.msra.mxu0 0.0
    %5536 = vmatprep.subr.mxu0 0.0
    %5537 = vmatpush1.msra.mxu0 0.0
    %5538 = vmatprep.subr.mxu0 0.0
    %5539 = vmatpush1.msra.mxu0 0.0
    %5540 = vmatprep.subr.mxu0 0.0
    %5541 = vmatpush1.msra.mxu0 0.0
    %5542 = vmatprep.subr.mxu0 0.0
    %5543 = vmatpush1.msra.mxu0 0.0
    %5544 = vmatprep.subr.mxu0 0.0
    %5545 = vmatpush1.msra.mxu0 0.0
    %5546 = vmatprep.subr.mxu0 0.0
    %5547 = vmatpush1.msra.mxu0 0.0
    %5548 = vmatprep.subr.mxu0 0.0
    %5549 = vmatpush1.msra.mxu0 0.0
    %5550 = vmatprep.subr.mxu0 0.0
    %5551 = vmatpush1.msra.mxu0 0.0
    %5552 = vmatprep.subr.mxu0 0.0
    %5553 = vmatpush1.msra.mxu0 0.0
    %5554 = vmatprep.subr.mxu0 %v4362
    %5555 = vmatpush1.msra.mxu0 %v4361
    %5556 = vmatprep.subr.mxu0 0.0
    %5557 = vmatpush2.msra.mxu0 0.0
    %5558 = vmatprep.subr.mxu0 0.0
    %5559 = vmatpush2.msra.mxu0 0.0
    %5560 = vmatprep.subr.mxu0 0.0
    %5561 = vmatpush2.msra.mxu0 0.0
    %5562 = vmatprep.subr.mxu0 0.0
    %5563 = vmatpush2.msra.mxu0 0.0
    %5564 = vmatprep.subr.mxu0 0.0
    %5565 = vmatpush2.msra.mxu0 0.0
    %5566 = vmatprep.subr.mxu0 0.0
    %5567 = vmatpush2.msra.mxu0 0.0
    %5568 = vmatprep.subr.mxu0 0.0
    %5569 = vmatpush2.msra.mxu0 0.0
    %5570 = vmatprep.subr.mxu0 0.0
    %5571 = vmatpush2.msra.mxu0 0.0
    %5572 = vmatprep.subr.mxu0 0.0
    %5573 = vmatpush2.msra.mxu0 0.0
    %5574 = vmatprep.subr.mxu0 0.0
    %5575 = vmatpush2.msra.mxu0 0.0
    %5576 = vmatprep.subr.mxu0 0.0
    %5577 = vmatpush2.msra.mxu0 0.0
    %5578 = vmatprep.subr.mxu0 0.0
    %5579 = vmatpush2.msra.mxu0 0.0
    %5580 = vmatprep.subr.mxu0 0.0
    %5581 = vmatpush2.msra.mxu0 0.0
    %5582 = vmatprep.subr.mxu0 0.0
    %5583 = vmatpush2.msra.mxu0 0.0
    %5584 = vmatprep.subr.mxu0 0.0
    %5585 = vmatpush2.msra.mxu0 0.0
    %5586 = vmatprep.subr.mxu0 0.0
    %5587 = vmatpush2.msra.mxu0 0.0
    %5588 = vmatprep.mubr.f32.mxu0 0.0
    %5589 = vmatmul.mubr.f32.gmra.mxu0 %v4364
    %v5590 = vpop.f32.mrf.mxu0
    %v5591 = vadd.f32 %v5514, %v5590
    %v5592 = vpop.f32.mrf.mxu0
    %v5593 = vadd.f32 %v5516, %v5592
    %5594 = vmatprep.mubr.f32.mxu0 0.0
    %5595 = vmatmul.mubr.f32.gmra.mxu0 %v4367
    %v5596 = vpop.f32.mrf.mxu0
    %v5597 = vadd.f32 %v5520, %v5596
    %v5598 = vpop.f32.mrf.mxu0
    %v5599 = vadd.f32 %v5522, %v5598
    %5600 = vdwg.mxu0
    %5609 = vrot.lane.b32.xlu0 %v4975, 17
    %v5610 = vpop.permute.xlu0 %5609
    %5611 = vrot.lane.b32.xlu0 %v4977, 17
    %v5612 = vpop.permute.xlu0 %5611
    %5613 = vrot.lane.b32.xlu0 %v5591, 17
    %v5614 = vpop.permute.xlu0 %5613
    %5615 = vrot.lane.b32.xlu0 %v5593, 17
    %v5616 = vpop.permute.xlu0 %5615
    %5617 = vrot.lane.b32.xlu0 %v4981, 17
    %v5618 = vpop.permute.xlu0 %5617
    %5619 = vrot.lane.b32.xlu0 %v4983, 17
    %v5620 = vpop.permute.xlu0 %5619
    %5621 = vrot.lane.b32.xlu0 %v5597, 17
    %v5622 = vpop.permute.xlu0 %5621
    %5623 = vrot.lane.b32.xlu0 %v5599, 17
    %v5624 = vpop.permute.xlu0 %5623
    %vm5625 = vcmask 138240
    %v5626 = vsel %vm5625, %v5610, %v5612
    %v5627 = vsel %vm5625, %v5612, %v5614
    %v5628 = vsel %vm5625, %v5614, %v5616
    %v5629 = vsel %vm5625, %v5618, %v5620
    %v5630 = vsel %vm5625, %v5620, %v5622
    %v5631 = vsel %vm5625, %v5622, %v5624
    %v5642 = vsel %vm5625, 0.0, %v5610
    %v5643 = vsel %vm5625, 0.0, %v5618
    %v5644 = vsel %vm5625, %v5616, 0.0
    %v5645 = vsel %vm5625, %v5624, 0.0
    %5650 = vrot.lane.b32.xlu0 %v5642, 127
    %v5651 = vpop.permute.xlu0 %5650
    %5652 = vrot.lane.b32.xlu0 %v5626, 127
    %v5653 = vpop.permute.xlu0 %5652
    %5654 = vrot.lane.b32.xlu0 %v5627, 127
    %v5655 = vpop.permute.xlu0 %5654
    %5656 = vrot.lane.b32.xlu0 %v5628, 127
    %v5657 = vpop.permute.xlu0 %5656
    %5658 = vrot.lane.b32.xlu0 %v5644, 127
    %v5659 = vpop.permute.xlu0 %5658
    %5660 = vrot.lane.b32.xlu0 %v5643, 127
    %v5661 = vpop.permute.xlu0 %5660
    %5662 = vrot.lane.b32.xlu0 %v5629, 127
    %v5663 = vpop.permute.xlu0 %5662
    %5664 = vrot.lane.b32.xlu0 %v5630, 127
    %v5665 = vpop.permute.xlu0 %5664
    %5666 = vrot.lane.b32.xlu0 %v5631, 127
    %v5667 = vpop.permute.xlu0 %5666
    %5668 = vrot.lane.b32.xlu0 %v5645, 127
    %v5669 = vpop.permute.xlu0 %5668
    %v5670 = vsel %vm389, %v5651, %v5653
    %v5671 = vsel %vm389, %v5653, %v5655
    %v5672 = vsel %vm389, %v5655, %v5657
    %v5673 = vsel %vm389, %v5657, %v5659
    %v5674 = vsel %vm389, %v5661, %v5663
    %v5675 = vsel %vm389, %v5663, %v5665
    %v5676 = vsel %vm389, %v5665, %v5667
    %v5677 = vsel %vm389, %v5667, %v5669
    %5686 = vrot.lane.b32.xlu0 %v5642, 126
    %v5687 = vpop.permute.xlu0 %5686
    %5688 = vrot.lane.b32.xlu0 %v5626, 126
    %v5689 = vpop.permute.xlu0 %5688
    %5690 = vrot.lane.b32.xlu0 %v5627, 126
    %v5691 = vpop.permute.xlu0 %5690
    %5692 = vrot.lane.b32.xlu0 %v5628, 126
    %v5693 = vpop.permute.xlu0 %5692
    %5694 = vrot.lane.b32.xlu0 %v5644, 126
    %v5695 = vpop.permute.xlu0 %5694
    %5696 = vrot.lane.b32.xlu0 %v5643, 126
    %v5697 = vpop.permute.xlu0 %5696
    %5698 = vrot.lane.b32.xlu0 %v5629, 126
    %v5699 = vpop.permute.xlu0 %5698
    %5700 = vrot.lane.b32.xlu0 %v5630, 126
    %v5701 = vpop.permute.xlu0 %5700
    %5702 = vrot.lane.b32.xlu0 %v5631, 126
    %v5703 = vpop.permute.xlu0 %5702
    %5704 = vrot.lane.b32.xlu0 %v5645, 126
    %v5705 = vpop.permute.xlu0 %5704
    %v5706 = vsel %vm464, %v5687, %v5689
    %v5707 = vsel %vm464, %v5689, %v5691
    %v5708 = vsel %vm464, %v5691, %v5693
    %v5709 = vsel %vm464, %v5693, %v5695
    %v5710 = vsel %vm464, %v5697, %v5699
    %v5711 = vsel %vm464, %v5699, %v5701
    %v5712 = vsel %vm464, %v5701, %v5703
    %v5713 = vsel %vm464, %v5703, %v5705
    %5722 = vrot.lane.b32.xlu0 %v5642, 112
    %v5723 = vpop.permute.xlu0 %5722
    %5724 = vrot.lane.b32.xlu0 %v5626, 112
    %v5725 = vpop.permute.xlu0 %5724
    %5726 = vrot.lane.b32.xlu0 %v5627, 112
    %v5727 = vpop.permute.xlu0 %5726
    %5728 = vrot.lane.b32.xlu0 %v5628, 112
    %v5729 = vpop.permute.xlu0 %5728
    %5730 = vrot.lane.b32.xlu0 %v5644, 112
    %v5731 = vpop.permute.xlu0 %5730
    %5732 = vrot.lane.b32.xlu0 %v5643, 112
    %v5733 = vpop.permute.xlu0 %5732
    %5734 = vrot.lane.b32.xlu0 %v5629, 112
    %v5735 = vpop.permute.xlu0 %5734
    %5736 = vrot.lane.b32.xlu0 %v5630, 112
    %v5737 = vpop.permute.xlu0 %5736
    %5738 = vrot.lane.b32.xlu0 %v5631, 112
    %v5739 = vpop.permute.xlu0 %5738
    %5740 = vrot.lane.b32.xlu0 %v5645, 112
    %v5741 = vpop.permute.xlu0 %5740
    %vm5742 = vcmask 916480
    %v5743 = vsel %vm5742, %v5723, %v5725
    %v5744 = vsel %vm5742, %v5725, %v5727
    %v5745 = vsel %vm5742, %v5727, %v5729
    %v5746 = vsel %vm5742, %v5729, %v5731
    %v5747 = vsel %vm5742, %v5733, %v5735
    %v5748 = vsel %vm5742, %v5735, %v5737
    %v5749 = vsel %vm5742, %v5737, %v5739
    %v5750 = vsel %vm5742, %v5739, %v5741
    %5759 = vrot.lane.b32.xlu0 %v5642, 111
    %v5760 = vpop.permute.xlu0 %5759
    %5761 = vrot.lane.b32.xlu0 %v5626, 111
    %v5762 = vpop.permute.xlu0 %5761
    %5763 = vrot.lane.b32.xlu0 %v5627, 111
    %v5764 = vpop.permute.xlu0 %5763
    %5765 = vrot.lane.b32.xlu0 %v5628, 111
    %v5766 = vpop.permute.xlu0 %5765
    %5767 = vrot.lane.b32.xlu0 %v5644, 111
    %v5768 = vpop.permute.xlu0 %5767
    %5769 = vrot.lane.b32.xlu0 %v5643, 111
    %v5770 = vpop.permute.xlu0 %5769
    %5771 = vrot.lane.b32.xlu0 %v5629, 111
    %v5772 = vpop.permute.xlu0 %5771
    %5773 = vrot.lane.b32.xlu0 %v5630, 111
    %v5774 = vpop.permute.xlu0 %5773
    %5775 = vrot.lane.b32.xlu0 %v5631, 111
    %v5776 = vpop.permute.xlu0 %5775
    %5777 = vrot.lane.b32.xlu0 %v5645, 111
    %v5778 = vpop.permute.xlu0 %5777
    %vm5779 = vcmask 908288
    %v5780 = vsel %vm5779, %v5760, %v5762
    %v5781 = vsel %vm5779, %v5762, %v5764
    %v5782 = vsel %vm5779, %v5764, %v5766
    %v5783 = vsel %vm5779, %v5766, %v5768
    %v5784 = vsel %vm5779, %v5770, %v5772
    %v5785 = vsel %vm5779, %v5772, %v5774
    %v5786 = vsel %vm5779, %v5774, %v5776
    %v5787 = vsel %vm5779, %v5776, %v5778
    %5796 = vrot.lane.b32.xlu0 %v5642, 110
    %v5797 = vpop.permute.xlu0 %5796
    %5798 = vrot.lane.b32.xlu0 %v5626, 110
    %v5799 = vpop.permute.xlu0 %5798
    %5800 = vrot.lane.b32.xlu0 %v5627, 110
    %v5801 = vpop.permute.xlu0 %5800
    %5802 = vrot.lane.b32.xlu0 %v5628, 110
    %v5803 = vpop.permute.xlu0 %5802
    %5804 = vrot.lane.b32.xlu0 %v5644, 110
    %v5805 = vpop.permute.xlu0 %5804
    %5806 = vrot.lane.b32.xlu0 %v5643, 110
    %v5807 = vpop.permute.xlu0 %5806
    %5808 = vrot.lane.b32.xlu0 %v5629, 110
    %v5809 = vpop.permute.xlu0 %5808
    %5810 = vrot.lane.b32.xlu0 %v5630, 110
    %v5811 = vpop.permute.xlu0 %5810
    %5812 = vrot.lane.b32.xlu0 %v5631, 110
    %v5813 = vpop.permute.xlu0 %5812
    %5814 = vrot.lane.b32.xlu0 %v5645, 110
    %v5815 = vpop.permute.xlu0 %5814
    %vm5816 = vcmask 900096
    %v5817 = vsel %vm5816, %v5797, %v5799
    %v5818 = vsel %vm5816, %v5799, %v5801
    %v5819 = vsel %vm5816, %v5801, %v5803
    %v5820 = vsel %vm5816, %v5803, %v5805
    %v5821 = vsel %vm5816, %v5807, %v5809
    %v5822 = vsel %vm5816, %v5809, %v5811
    %v5823 = vsel %vm5816, %v5811, %v5813
    %v5824 = vsel %vm5816, %v5813, %v5815
    %5833 = vrot.lane.b32.xlu0 %v5642, 96
    %v5834 = vpop.permute.xlu0 %5833
    %5835 = vrot.lane.b32.xlu0 %v5626, 96
    %v5836 = vpop.permute.xlu0 %5835
    %5837 = vrot.lane.b32.xlu0 %v5627, 96
    %v5838 = vpop.permute.xlu0 %5837
    %5839 = vrot.lane.b32.xlu0 %v5628, 96
    %v5840 = vpop.permute.xlu0 %5839
    %5841 = vrot.lane.b32.xlu0 %v5644, 96
    %v5842 = vpop.permute.xlu0 %5841
    %5843 = vrot.lane.b32.xlu0 %v5643, 96
    %v5844 = vpop.permute.xlu0 %5843
    %5845 = vrot.lane.b32.xlu0 %v5629, 96
    %v5846 = vpop.permute.xlu0 %5845
    %5847 = vrot.lane.b32.xlu0 %v5630, 96
    %v5848 = vpop.permute.xlu0 %5847
    %5849 = vrot.lane.b32.xlu0 %v5631, 96
    %v5850 = vpop.permute.xlu0 %5849
    %5851 = vrot.lane.b32.xlu0 %v5645, 96
    %v5852 = vpop.permute.xlu0 %5851
    %v5853 = vsel %vm689, %v5834, %v5836
    %v5854 = vsel %vm689, %v5836, %v5838
    %v5855 = vsel %vm689, %v5838, %v5840
    %v5856 = vsel %vm689, %v5840, %v5842
    %v5857 = vsel %vm689, %v5844, %v5846
    %v5858 = vsel %vm689, %v5846, %v5848
    %v5859 = vsel %vm689, %v5848, %v5850
    %v5860 = vsel %vm689, %v5850, %v5852
    %5869 = vrot.lane.b32.xlu0 %v5642, 95
    %v5870 = vpop.permute.xlu0 %5869
    %5871 = vrot.lane.b32.xlu0 %v5626, 95
    %v5872 = vpop.permute.xlu0 %5871
    %5873 = vrot.lane.b32.xlu0 %v5627, 95
    %v5874 = vpop.permute.xlu0 %5873
    %5875 = vrot.lane.b32.xlu0 %v5628, 95
    %v5876 = vpop.permute.xlu0 %5875
    %5877 = vrot.lane.b32.xlu0 %v5644, 95
    %v5878 = vpop.permute.xlu0 %5877
    %5879 = vrot.lane.b32.xlu0 %v5643, 95
    %v5880 = vpop.permute.xlu0 %5879
    %5881 = vrot.lane.b32.xlu0 %v5629, 95
    %v5882 = vpop.permute.xlu0 %5881
    %5883 = vrot.lane.b32.xlu0 %v5630, 95
    %v5884 = vpop.permute.xlu0 %5883
    %5885 = vrot.lane.b32.xlu0 %v5631, 95
    %v5886 = vpop.permute.xlu0 %5885
    %5887 = vrot.lane.b32.xlu0 %v5645, 95
    %v5888 = vpop.permute.xlu0 %5887
    %vm5889 = vcmask 777216
    %v5890 = vsel %vm5889, %v5870, %v5872
    %v5891 = vsel %vm5889, %v5872, %v5874
    %v5892 = vsel %vm5889, %v5874, %v5876
    %v5893 = vsel %vm5889, %v5876, %v5878
    %v5894 = vsel %vm5889, %v5880, %v5882
    %v5895 = vsel %vm5889, %v5882, %v5884
    %v5896 = vsel %vm5889, %v5884, %v5886
    %v5897 = vsel %vm5889, %v5886, %v5888
    %5906 = vrot.lane.b32.xlu0 %v5642, 94
    %v5907 = vpop.permute.xlu0 %5906
    %5908 = vrot.lane.b32.xlu0 %v5626, 94
    %v5909 = vpop.permute.xlu0 %5908
    %5910 = vrot.lane.b32.xlu0 %v5627, 94
    %v5911 = vpop.permute.xlu0 %5910
    %5912 = vrot.lane.b32.xlu0 %v5628, 94
    %v5913 = vpop.permute.xlu0 %5912
    %5914 = vrot.lane.b32.xlu0 %v5644, 94
    %v5915 = vpop.permute.xlu0 %5914
    %5916 = vrot.lane.b32.xlu0 %v5643, 94
    %v5917 = vpop.permute.xlu0 %5916
    %5918 = vrot.lane.b32.xlu0 %v5629, 94
    %v5919 = vpop.permute.xlu0 %5918
    %5920 = vrot.lane.b32.xlu0 %v5630, 94
    %v5921 = vpop.permute.xlu0 %5920
    %5922 = vrot.lane.b32.xlu0 %v5631, 94
    %v5923 = vpop.permute.xlu0 %5922
    %5924 = vrot.lane.b32.xlu0 %v5645, 94
    %v5925 = vpop.permute.xlu0 %5924
    %vm5926 = vcmask 769024
    %v5927 = vsel %vm5926, %v5907, %v5909
    %v5928 = vsel %vm5926, %v5909, %v5911
    %v5929 = vsel %vm5926, %v5911, %v5913
    %v5930 = vsel %vm5926, %v5913, %v5915
    %v5931 = vsel %vm5926, %v5917, %v5919
    %v5932 = vsel %vm5926, %v5919, %v5921
    %v5933 = vsel %vm5926, %v5921, %v5923
    %v5934 = vsel %vm5926, %v5923, %v5925
    %v5943 = vld [vmem:[#allocation7] sm:$0xff]
    %v5944 = vld [vmem:[#allocation7 + $0x8] sm:$0xff]
    %v5945 = vld [vmem:[#allocation7 + $0x10] sm:$0xff]
    %v5946 = vld [vmem:[#allocation7 + $0x18] sm:$0xff]
    %v5947 = vld [vmem:[%s6] sm:$0xff]
    %v5948 = vld [vmem:[%s6 + $0x8] sm:$0xff]
    %5950 = vset.pattern.permute.xlu0 0
    %5951 = vperm.xlu0 %5950, %v5947
    %v5952 = vpop.permute.xlu0 %5951
    %5955 = vset.pattern.permute.xlu0 0
    %5956 = vperm.xlu0 %5955, %v5948
    %v5957 = vpop.permute.xlu0 %5956
    %vm5959 = vcmask 130048
    %v5961 = vsel %vm5959, %v5944, 0
    %v5964 = vsel %vm5959, %v5946, 0
    %5966 = vmatprep.subr.mxu0 %v5895
    %5967 = vmatpush1.msra.mxu0 %v5894
    %5968 = vmatprep.subr.mxu0 %v5891
    %5969 = vmatpush1.msra.mxu0 %v5890
    %5970 = vmatprep.subr.mxu0 %v5858
    %5971 = vmatpush1.msra.mxu0 %v5857
    %5972 = vmatprep.subr.mxu0 %v5854
    %5973 = vmatpush1.msra.mxu0 %v5853
    %5974 = vmatprep.subr.mxu0 %v5822
    %5975 = vmatpush1.msra.mxu0 %v5821
    %5976 = vmatprep.subr.mxu0 %v5818
    %5977 = vmatpush1.msra.mxu0 %v5817
    %5978 = vmatprep.subr.mxu0 %v5785
    %5979 = vmatpush1.msra.mxu0 %v5784
    %5980 = vmatprep.subr.mxu0 %v5781
    %5981 = vmatpush1.msra.mxu0 %v5780
    %5982 = vmatprep.subr.mxu0 %v5748
    %5983 = vmatpush1.msra.mxu0 %v5747
    %5984 = vmatprep.subr.mxu0 %v5744
    %5985 = vmatpush1.msra.mxu0 %v5743
    %5986 = vmatprep.subr.mxu0 %v5711
    %5987 = vmatpush1.msra.mxu0 %v5710
    %5988 = vmatprep.subr.mxu0 %v5707
    %5989 = vmatpush1.msra.mxu0 %v5706
    %5990 = vmatprep.subr.mxu0 %v5675
    %5991 = vmatpush1.msra.mxu0 %v5674
    %5992 = vmatprep.subr.mxu0 %v5671
    %5993 = vmatpush1.msra.mxu0 %v5670
    %5994 = vmatprep.subr.mxu0 %v5629
    %5995 = vmatpush1.msra.mxu0 %v5643
    %5996 = vmatprep.subr.mxu0 %v5626
    %5997 = vmatpush1.msra.mxu0 %v5642
    %5998 = vmatprep.subr.mxu0 0.0
    %5999 = vmatpush2.msra.mxu0 0.0
    %6000 = vmatprep.subr.mxu0 0.0
    %6001 = vmatpush2.msra.mxu0 0.0
    %6002 = vmatprep.subr.mxu0 0.0
    %6003 = vmatpush2.msra.mxu0 0.0
    %6004 = vmatprep.subr.mxu0 0.0
    %6005 = vmatpush2.msra.mxu0 0.0
    %6006 = vmatprep.subr.mxu0 0.0
    %6007 = vmatpush2.msra.mxu0 0.0
    %6008 = vmatprep.subr.mxu0 0.0
    %6009 = vmatpush2.msra.mxu0 0.0
    %6010 = vmatprep.subr.mxu0 0.0
    %6011 = vmatpush2.msra.mxu0 0.0
    %6012 = vmatprep.subr.mxu0 0.0
    %6013 = vmatpush2.msra.mxu0 0.0
    %6014 = vmatprep.subr.mxu0 0.0
    %6015 = vmatpush2.msra.mxu0 0.0
    %6016 = vmatprep.subr.mxu0 0.0
    %6017 = vmatpush2.msra.mxu0 0.0
    %6018 = vmatprep.subr.mxu0 0.0
    %6019 = vmatpush2.msra.mxu0 0.0
    %6020 = vmatprep.subr.mxu0 0.0
    %6021 = vmatpush2.msra.mxu0 0.0
    %6022 = vmatprep.subr.mxu0 0.0
    %6023 = vmatpush2.msra.mxu0 0.0
    %6024 = vmatprep.subr.mxu0 0.0
    %6025 = vmatpush2.msra.mxu0 0.0
    %6026 = vmatprep.subr.mxu0 %v5932
    %6027 = vmatpush2.msra.mxu0 %v5931
    %6028 = vmatprep.subr.mxu0 %v5928
    %6029 = vmatpush2.msra.mxu0 %v5927
    %6030 = vmatprep.mubr.f32.mxu0 %v5961
    %6031 = vmatmul.mubr.f32.gmra.mxu0 %v5943
    %v6032 = vpop.f32.mrf.mxu0
    %v6033 = vadd.f32 %v5952, %v6032
    %v6034 = vpop.f32.mrf.mxu0
    %v6035 = vadd.f32 %v5952, %v6034
    %6036 = vmatprep.mubr.f32.mxu0 %v5964
    %6037 = vmatmul.mubr.f32.gmra.mxu0 %v5945
    %v6038 = vpop.f32.mrf.mxu0
    %v6039 = vadd.f32 %v5957, %v6038
    %v6040 = vpop.f32.mrf.mxu0
    %v6041 = vadd.f32 %v5957, %v6040
    %6042 = vdwg.mxu0
    %6043 = vmatprep.subr.mxu0 %v5897
    %6044 = vmatpush1.msra.mxu0 %v5896
    %6045 = vmatprep.subr.mxu0 %v5893
    %6046 = vmatpush1.msra.mxu0 %v5892
    %6047 = vmatprep.subr.mxu0 %v5860
    %6048 = vmatpush1.msra.mxu0 %v5859
    %6049 = vmatprep.subr.mxu0 %v5856
    %6050 = vmatpush1.msra.mxu0 %v5855
    %6051 = vmatprep.subr.mxu0 %v5824
    %6052 = vmatpush1.msra.mxu0 %v5823
    %6053 = vmatprep.subr.mxu0 %v5820
    %6054 = vmatpush1.msra.mxu0 %v5819
    %6055 = vmatprep.subr.mxu0 %v5787
    %6056 = vmatpush1.msra.mxu0 %v5786
    %6057 = vmatprep.subr.mxu0 %v5783
    %6058 = vmatpush1.msra.mxu0 %v5782
    %6059 = vmatprep.subr.mxu0 %v5750
    %6060 = vmatpush1.msra.mxu0 %v5749
    %6061 = vmatprep.subr.mxu0 %v5746
    %6062 = vmatpush1.msra.mxu0 %v5745
    %6063 = vmatprep.subr.mxu0 %v5713
    %6064 = vmatpush1.msra.mxu0 %v5712
    %6065 = vmatprep.subr.mxu0 %v5709
    %6066 = vmatpush1.msra.mxu0 %v5708
    %6067 = vmatprep.subr.mxu0 %v5677
    %6068 = vmatpush1.msra.mxu0 %v5676
    %6069 = vmatprep.subr.mxu0 %v5673
    %6070 = vmatpush1.msra.mxu0 %v5672
    %6071 = vmatprep.subr.mxu0 %v5631
    %6072 = vmatpush1.msra.mxu0 %v5630
    %6073 = vmatprep.subr.mxu0 %v5628
    %6074 = vmatpush1.msra.mxu0 %v5627
    %6075 = vmatprep.subr.mxu0 0.0
    %6076 = vmatpush2.msra.mxu0 0.0
    %6077 = vmatprep.subr.mxu0 0.0
    %6078 = vmatpush2.msra.mxu0 0.0
    %6079 = vmatprep.subr.mxu0 0.0
    %6080 = vmatpush2.msra.mxu0 0.0
    %6081 = vmatprep.subr.mxu0 0.0
    %6082 = vmatpush2.msra.mxu0 0.0
    %6083 = vmatprep.subr.mxu0 0.0
    %6084 = vmatpush2.msra.mxu0 0.0
    %6085 = vmatprep.subr.mxu0 0.0
    %6086 = vmatpush2.msra.mxu0 0.0
    %6087 = vmatprep.subr.mxu0 0.0
    %6088 = vmatpush2.msra.mxu0 0.0
    %6089 = vmatprep.subr.mxu0 0.0
    %6090 = vmatpush2.msra.mxu0 0.0
    %6091 = vmatprep.subr.mxu0 0.0
    %6092 = vmatpush2.msra.mxu0 0.0
    %6093 = vmatprep.subr.mxu0 0.0
    %6094 = vmatpush2.msra.mxu0 0.0
    %6095 = vmatprep.subr.mxu0 0.0
    %6096 = vmatpush2.msra.mxu0 0.0
    %6097 = vmatprep.subr.mxu0 0.0
    %6098 = vmatpush2.msra.mxu0 0.0
    %6099 = vmatprep.subr.mxu0 0.0
    %6100 = vmatpush2.msra.mxu0 0.0
    %6101 = vmatprep.subr.mxu0 0.0
    %6102 = vmatpush2.msra.mxu0 0.0
    %6103 = vmatprep.subr.mxu0 %v5934
    %6104 = vmatpush2.msra.mxu0 %v5933
    %6105 = vmatprep.subr.mxu0 %v5930
    %6106 = vmatpush2.msra.mxu0 %v5929
    %6107 = vmatprep.mubr.f32.mxu0 %v5961
    %6108 = vmatmul.mubr.f32.gmra.mxu0 %v5943
    %v6109 = vpop.f32.mrf.mxu0
    %v6110 = vadd.f32 %v5952, %v6109
    %v6111 = vpop.f32.mrf.mxu0
    %v6112 = vadd.f32 %v5952, %v6111
    %6113 = vmatprep.mubr.f32.mxu0 %v5964
    %6114 = vmatmul.mubr.f32.gmra.mxu0 %v5945
    %v6115 = vpop.f32.mrf.mxu0
    %v6116 = vadd.f32 %v5957, %v6115
    %v6117 = vpop.f32.mrf.mxu0
    %v6118 = vadd.f32 %v5957, %v6117
    %6119 = vdwg.mxu0
    %v6120 = vmax.f32 %v6033, 0.0
    %v6121 = vmax.f32 %v6035, 0.0
    %v6122 = vmax.f32 %v6110, 0.0
    %v6123 = vmax.f32 %v6112, 0.0
    %v6124 = vmax.f32 %v6039, 0.0
    %v6125 = vmax.f32 %v6041, 0.0
    %v6126 = vmax.f32 %v6116, 0.0
    %v6127 = vmax.f32 %v6118, 0.0
    %v6129 = vlaneseq
    %v6130 = vshrl.u32 %v6129, 7
    %v6131 = vsub.s32 0, %v6130
    %v6132 = vrot.slane %v214, %v6131
    %v6133 = vlaneseq
    %v6134 = vshrl.u32 %v6133, 7
    %v6135 = vsub.s32 1, %v6134
    %v6136 = vrot.slane %v214, %v6135
    %v6137 = vlaneseq
    %v6138 = vshrl.u32 %v6137, 7
    %v6139 = vsub.s32 2, %v6138
    %v6140 = vrot.slane %v214, %v6139
    %v6141 = vlaneseq
    %v6142 = vshrl.u32 %v6141, 7
    %v6143 = vsub.s32 3, %v6142
    %v6144 = vrot.slane %v214, %v6143
    %v6149 = vmul.f32 %v6120, %v6132
    %v6150 = vmul.f32 %v6121, %v6136
    %v6151 = vmul.f32 %v6122, %v6140
    %v6152 = vmul.f32 %v6123, %v6144
    %v6153 = vmul.f32 %v6124, %v6132
    %v6154 = vmul.f32 %v6125, %v6136
    %v6155 = vmul.f32 %v6126, %v6140
    %v6156 = vmul.f32 %v6127, %v6144
    %6165 = vrot.lane.b32.xlu0 %v6149, 17
    %v6166 = vpop.permute.xlu0 %6165
    %6167 = vrot.lane.b32.xlu0 %v6150, 17
    %v6168 = vpop.permute.xlu0 %6167
    %6169 = vrot.lane.b32.xlu0 %v6151, 17
    %v6170 = vpop.permute.xlu0 %6169
    %6171 = vrot.lane.b32.xlu0 %v6152, 17
    %v6172 = vpop.permute.xlu0 %6171
    %6173 = vrot.lane.b32.xlu0 %v6153, 17
    %v6174 = vpop.permute.xlu0 %6173
    %6175 = vrot.lane.b32.xlu0 %v6154, 17
    %v6176 = vpop.permute.xlu0 %6175
    %6177 = vrot.lane.b32.xlu0 %v6155, 17
    %v6178 = vpop.permute.xlu0 %6177
    %6179 = vrot.lane.b32.xlu0 %v6156, 17
    %v6180 = vpop.permute.xlu0 %6179
    %v6181 = vsel %vm5625, %v6166, %v6168
    %v6182 = vsel %vm5625, %v6168, %v6170
    %v6183 = vsel %vm5625, %v6170, %v6172
    %v6184 = vsel %vm5625, %v6174, %v6176
    %v6185 = vsel %vm5625, %v6176, %v6178
    %v6186 = vsel %vm5625, %v6178, %v6180
    %v6197 = vsel %vm5625, 0.0, %v6166
    %v6198 = vsel %vm5625, 0.0, %v6174
    %v6199 = vsel %vm5625, %v6172, 0.0
    %v6200 = vsel %vm5625, %v6180, 0.0
    %6205 = vrot.lane.b32.xlu0 %v6197, 127
    %v6206 = vpop.permute.xlu0 %6205
    %6207 = vrot.lane.b32.xlu0 %v6181, 127
    %v6208 = vpop.permute.xlu0 %6207
    %6209 = vrot.lane.b32.xlu0 %v6182, 127
    %v6210 = vpop.permute.xlu0 %6209
    %6211 = vrot.lane.b32.xlu0 %v6183, 127
    %v6212 = vpop.permute.xlu0 %6211
    %6213 = vrot.lane.b32.xlu0 %v6199, 127
    %v6214 = vpop.permute.xlu0 %6213
    %6215 = vrot.lane.b32.xlu0 %v6198, 127
    %v6216 = vpop.permute.xlu0 %6215
    %6217 = vrot.lane.b32.xlu0 %v6184, 127
    %v6218 = vpop.permute.xlu0 %6217
    %6219 = vrot.lane.b32.xlu0 %v6185, 127
    %v6220 = vpop.permute.xlu0 %6219
    %6221 = vrot.lane.b32.xlu0 %v6186, 127
    %v6222 = vpop.permute.xlu0 %6221
    %6223 = vrot.lane.b32.xlu0 %v6200, 127
    %v6224 = vpop.permute.xlu0 %6223
    %v6225 = vsel %vm389, %v6206, %v6208
    %v6226 = vsel %vm389, %v6208, %v6210
    %v6227 = vsel %vm389, %v6210, %v6212
    %v6228 = vsel %vm389, %v6212, %v6214
    %v6229 = vsel %vm389, %v6216, %v6218
    %v6230 = vsel %vm389, %v6218, %v6220
    %v6231 = vsel %vm389, %v6220, %v6222
    %v6232 = vsel %vm389, %v6222, %v6224
    %6241 = vrot.lane.b32.xlu0 %v6197, 126
    %v6242 = vpop.permute.xlu0 %6241
    %6243 = vrot.lane.b32.xlu0 %v6181, 126
    %v6244 = vpop.permute.xlu0 %6243
    %6245 = vrot.lane.b32.xlu0 %v6182, 126
    %v6246 = vpop.permute.xlu0 %6245
    %6247 = vrot.lane.b32.xlu0 %v6183, 126
    %v6248 = vpop.permute.xlu0 %6247
    %6249 = vrot.lane.b32.xlu0 %v6199, 126
    %v6250 = vpop.permute.xlu0 %6249
    %6251 = vrot.lane.b32.xlu0 %v6198, 126
    %v6252 = vpop.permute.xlu0 %6251
    %6253 = vrot.lane.b32.xlu0 %v6184, 126
    %v6254 = vpop.permute.xlu0 %6253
    %6255 = vrot.lane.b32.xlu0 %v6185, 126
    %v6256 = vpop.permute.xlu0 %6255
    %6257 = vrot.lane.b32.xlu0 %v6186, 126
    %v6258 = vpop.permute.xlu0 %6257
    %6259 = vrot.lane.b32.xlu0 %v6200, 126
    %v6260 = vpop.permute.xlu0 %6259
    %v6261 = vsel %vm464, %v6242, %v6244
    %v6262 = vsel %vm464, %v6244, %v6246
    %v6263 = vsel %vm464, %v6246, %v6248
    %v6264 = vsel %vm464, %v6248, %v6250
    %v6265 = vsel %vm464, %v6252, %v6254
    %v6266 = vsel %vm464, %v6254, %v6256
    %v6267 = vsel %vm464, %v6256, %v6258
    %v6268 = vsel %vm464, %v6258, %v6260
    %6277 = vrot.lane.b32.xlu0 %v6197, 112
    %v6278 = vpop.permute.xlu0 %6277
    %6279 = vrot.lane.b32.xlu0 %v6181, 112
    %v6280 = vpop.permute.xlu0 %6279
    %6281 = vrot.lane.b32.xlu0 %v6182, 112
    %v6282 = vpop.permute.xlu0 %6281
    %6283 = vrot.lane.b32.xlu0 %v6183, 112
    %v6284 = vpop.permute.xlu0 %6283
    %6285 = vrot.lane.b32.xlu0 %v6199, 112
    %v6286 = vpop.permute.xlu0 %6285
    %6287 = vrot.lane.b32.xlu0 %v6198, 112
    %v6288 = vpop.permute.xlu0 %6287
    %6289 = vrot.lane.b32.xlu0 %v6184, 112
    %v6290 = vpop.permute.xlu0 %6289
    %6291 = vrot.lane.b32.xlu0 %v6185, 112
    %v6292 = vpop.permute.xlu0 %6291
    %6293 = vrot.lane.b32.xlu0 %v6186, 112
    %v6294 = vpop.permute.xlu0 %6293
    %6295 = vrot.lane.b32.xlu0 %v6200, 112
    %v6296 = vpop.permute.xlu0 %6295
    %v6297 = vsel %vm5742, %v6278, %v6280
    %v6298 = vsel %vm5742, %v6280, %v6282
    %v6299 = vsel %vm5742, %v6282, %v6284
    %v6300 = vsel %vm5742, %v6284, %v6286
    %v6301 = vsel %vm5742, %v6288, %v6290
    %v6302 = vsel %vm5742, %v6290, %v6292
    %v6303 = vsel %vm5742, %v6292, %v6294
    %v6304 = vsel %vm5742, %v6294, %v6296
    %6313 = vrot.lane.b32.xlu0 %v6197, 111
    %v6314 = vpop.permute.xlu0 %6313
    %6315 = vrot.lane.b32.xlu0 %v6181, 111
    %v6316 = vpop.permute.xlu0 %6315
    %6317 = vrot.lane.b32.xlu0 %v6182, 111
    %v6318 = vpop.permute.xlu0 %6317
    %6319 = vrot.lane.b32.xlu0 %v6183, 111
    %v6320 = vpop.permute.xlu0 %6319
    %6321 = vrot.lane.b32.xlu0 %v6199, 111
    %v6322 = vpop.permute.xlu0 %6321
    %6323 = vrot.lane.b32.xlu0 %v6198, 111
    %v6324 = vpop.permute.xlu0 %6323
    %6325 = vrot.lane.b32.xlu0 %v6184, 111
    %v6326 = vpop.permute.xlu0 %6325
    %6327 = vrot.lane.b32.xlu0 %v6185, 111
    %v6328 = vpop.permute.xlu0 %6327
    %6329 = vrot.lane.b32.xlu0 %v6186, 111
    %v6330 = vpop.permute.xlu0 %6329
    %6331 = vrot.lane.b32.xlu0 %v6200, 111
    %v6332 = vpop.permute.xlu0 %6331
    %v6333 = vsel %vm5779, %v6314, %v6316
    %v6334 = vsel %vm5779, %v6316, %v6318
    %v6335 = vsel %vm5779, %v6318, %v6320
    %v6336 = vsel %vm5779, %v6320, %v6322
    %v6337 = vsel %vm5779, %v6324, %v6326
    %v6338 = vsel %vm5779, %v6326, %v6328
    %v6339 = vsel %vm5779, %v6328, %v6330
    %v6340 = vsel %vm5779, %v6330, %v6332
    %6349 = vrot.lane.b32.xlu0 %v6197, 110
    %v6350 = vpop.permute.xlu0 %6349
    %6351 = vrot.lane.b32.xlu0 %v6181, 110
    %v6352 = vpop.permute.xlu0 %6351
    %6353 = vrot.lane.b32.xlu0 %v6182, 110
    %v6354 = vpop.permute.xlu0 %6353
    %6355 = vrot.lane.b32.xlu0 %v6183, 110
    %v6356 = vpop.permute.xlu0 %6355
    %6357 = vrot.lane.b32.xlu0 %v6199, 110
    %v6358 = vpop.permute.xlu0 %6357
    %6359 = vrot.lane.b32.xlu0 %v6198, 110
    %v6360 = vpop.permute.xlu0 %6359
    %6361 = vrot.lane.b32.xlu0 %v6184, 110
    %v6362 = vpop.permute.xlu0 %6361
    %6363 = vrot.lane.b32.xlu0 %v6185, 110
    %v6364 = vpop.permute.xlu0 %6363
    %6365 = vrot.lane.b32.xlu0 %v6186, 110
    %v6366 = vpop.permute.xlu0 %6365
    %6367 = vrot.lane.b32.xlu0 %v6200, 110
    %v6368 = vpop.permute.xlu0 %6367
    %v6369 = vsel %vm5816, %v6350, %v6352
    %v6370 = vsel %vm5816, %v6352, %v6354
    %v6371 = vsel %vm5816, %v6354, %v6356
    %v6372 = vsel %vm5816, %v6356, %v6358
    %v6373 = vsel %vm5816, %v6360, %v6362
    %v6374 = vsel %vm5816, %v6362, %v6364
    %v6375 = vsel %vm5816, %v6364, %v6366
    %v6376 = vsel %vm5816, %v6366, %v6368
    %6385 = vrot.lane.b32.xlu0 %v6197, 96
    %v6386 = vpop.permute.xlu0 %6385
    %6387 = vrot.lane.b32.xlu0 %v6181, 96
    %v6388 = vpop.permute.xlu0 %6387
    %6389 = vrot.lane.b32.xlu0 %v6182, 96
    %v6390 = vpop.permute.xlu0 %6389
    %6391 = vrot.lane.b32.xlu0 %v6183, 96
    %v6392 = vpop.permute.xlu0 %6391
    %6393 = vrot.lane.b32.xlu0 %v6199, 96
    %v6394 = vpop.permute.xlu0 %6393
    %6395 = vrot.lane.b32.xlu0 %v6198, 96
    %v6396 = vpop.permute.xlu0 %6395
    %6397 = vrot.lane.b32.xlu0 %v6184, 96
    %v6398 = vpop.permute.xlu0 %6397
    %6399 = vrot.lane.b32.xlu0 %v6185, 96
    %v6400 = vpop.permute.xlu0 %6399
    %6401 = vrot.lane.b32.xlu0 %v6186, 96
    %v6402 = vpop.permute.xlu0 %6401
    %6403 = vrot.lane.b32.xlu0 %v6200, 96
    %v6404 = vpop.permute.xlu0 %6403
    %v6405 = vsel %vm689, %v6386, %v6388
    %v6406 = vsel %vm689, %v6388, %v6390
    %v6407 = vsel %vm689, %v6390, %v6392
    %v6408 = vsel %vm689, %v6392, %v6394
    %v6409 = vsel %vm689, %v6396, %v6398
    %v6410 = vsel %vm689, %v6398, %v6400
    %v6411 = vsel %vm689, %v6400, %v6402
    %v6412 = vsel %vm689, %v6402, %v6404
    %6421 = vrot.lane.b32.xlu0 %v6197, 95
    %v6422 = vpop.permute.xlu0 %6421
    %6423 = vrot.lane.b32.xlu0 %v6181, 95
    %v6424 = vpop.permute.xlu0 %6423
    %6425 = vrot.lane.b32.xlu0 %v6182, 95
    %v6426 = vpop.permute.xlu0 %6425
    %6427 = vrot.lane.b32.xlu0 %v6183, 95
    %v6428 = vpop.permute.xlu0 %6427
    %6429 = vrot.lane.b32.xlu0 %v6199, 95
    %v6430 = vpop.permute.xlu0 %6429
    %6431 = vrot.lane.b32.xlu0 %v6198, 95
    %v6432 = vpop.permute.xlu0 %6431
    %6433 = vrot.lane.b32.xlu0 %v6184, 95
    %v6434 = vpop.permute.xlu0 %6433
    %6435 = vrot.lane.b32.xlu0 %v6185, 95
    %v6436 = vpop.permute.xlu0 %6435
    %6437 = vrot.lane.b32.xlu0 %v6186, 95
    %v6438 = vpop.permute.xlu0 %6437
    %6439 = vrot.lane.b32.xlu0 %v6200, 95
    %v6440 = vpop.permute.xlu0 %6439
    %v6441 = vsel %vm5889, %v6422, %v6424
    %v6442 = vsel %vm5889, %v6424, %v6426
    %v6443 = vsel %vm5889, %v6426, %v6428
    %v6444 = vsel %vm5889, %v6428, %v6430
    %v6445 = vsel %vm5889, %v6432, %v6434
    %v6446 = vsel %vm5889, %v6434, %v6436
    %v6447 = vsel %vm5889, %v6436, %v6438
    %v6448 = vsel %vm5889, %v6438, %v6440
    %6457 = vrot.lane.b32.xlu0 %v6197, 94
    %v6458 = vpop.permute.xlu0 %6457
    %6459 = vrot.lane.b32.xlu0 %v6181, 94
    %v6460 = vpop.permute.xlu0 %6459
    %6461 = vrot.lane.b32.xlu0 %v6182, 94
    %v6462 = vpop.permute.xlu0 %6461
    %6463 = vrot.lane.b32.xlu0 %v6183, 94
    %v6464 = vpop.permute.xlu0 %6463
    %6465 = vrot.lane.b32.xlu0 %v6199, 94
    %v6466 = vpop.permute.xlu0 %6465
    %6467 = vrot.lane.b32.xlu0 %v6198, 94
    %v6468 = vpop.permute.xlu0 %6467
    %6469 = vrot.lane.b32.xlu0 %v6184, 94
    %v6470 = vpop.permute.xlu0 %6469
    %6471 = vrot.lane.b32.xlu0 %v6185, 94
    %v6472 = vpop.permute.xlu0 %6471
    %6473 = vrot.lane.b32.xlu0 %v6186, 94
    %v6474 = vpop.permute.xlu0 %6473
    %6475 = vrot.lane.b32.xlu0 %v6200, 94
    %v6476 = vpop.permute.xlu0 %6475
    %v6477 = vsel %vm5926, %v6458, %v6460
    %v6478 = vsel %vm5926, %v6460, %v6462
    %v6479 = vsel %vm5926, %v6462, %v6464
    %v6480 = vsel %vm5926, %v6464, %v6466
    %v6481 = vsel %vm5926, %v6468, %v6470
    %v6482 = vsel %vm5926, %v6470, %v6472
    %v6483 = vsel %vm5926, %v6472, %v6474
    %v6484 = vsel %vm5926, %v6474, %v6476
    %v6493 = vld [vmem:[#allocation8] sm:$0xff]
    %v6494 = vld [vmem:[#allocation8 + $0x8] sm:$0xff]
    %v6495 = vld [vmem:[%s8] sm:$0xff]
    %6497 = vset.pattern.permute.xlu0 0
    %6498 = vperm.xlu0 %6497, %v6495
    %v6499 = vpop.permute.xlu0 %6498
    %v6502 = vsel %vm5959, %v6494, 0
    %6504 = vmatprep.subr.mxu0 %v6446
    %6505 = vmatpush1.msra.mxu0 %v6445
    %6506 = vmatprep.subr.mxu0 %v6442
    %6507 = vmatpush1.msra.mxu0 %v6441
    %6508 = vmatprep.subr.mxu0 %v6410
    %6509 = vmatpush1.msra.mxu0 %v6409
    %6510 = vmatprep.subr.mxu0 %v6406
    %6511 = vmatpush1.msra.mxu0 %v6405
    %6512 = vmatprep.subr.mxu0 %v6374
    %6513 = vmatpush1.msra.mxu0 %v6373
    %6514 = vmatprep.subr.mxu0 %v6370
    %6515 = vmatpush1.msra.mxu0 %v6369
    %6516 = vmatprep.subr.mxu0 %v6338
    %6517 = vmatpush1.msra.mxu0 %v6337
    %6518 = vmatprep.subr.mxu0 %v6334
    %6519 = vmatpush1.msra.mxu0 %v6333
    %6520 = vmatprep.subr.mxu0 %v6302
    %6521 = vmatpush1.msra.mxu0 %v6301
    %6522 = vmatprep.subr.mxu0 %v6298
    %6523 = vmatpush1.msra.mxu0 %v6297
    %6524 = vmatprep.subr.mxu0 %v6266
    %6525 = vmatpush1.msra.mxu0 %v6265
    %6526 = vmatprep.subr.mxu0 %v6262
    %6527 = vmatpush1.msra.mxu0 %v6261
    %6528 = vmatprep.subr.mxu0 %v6230
    %6529 = vmatpush1.msra.mxu0 %v6229
    %6530 = vmatprep.subr.mxu0 %v6226
    %6531 = vmatpush1.msra.mxu0 %v6225
    %6532 = vmatprep.subr.mxu0 %v6184
    %6533 = vmatpush1.msra.mxu0 %v6198
    %6534 = vmatprep.subr.mxu0 %v6181
    %6535 = vmatpush1.msra.mxu0 %v6197
    %6536 = vmatprep.subr.mxu0 0.0
    %6537 = vmatpush2.msra.mxu0 0.0
    %6538 = vmatprep.subr.mxu0 0.0
    %6539 = vmatpush2.msra.mxu0 0.0
    %6540 = vmatprep.subr.mxu0 0.0
    %6541 = vmatpush2.msra.mxu0 0.0
    %6542 = vmatprep.subr.mxu0 0.0
    %6543 = vmatpush2.msra.mxu0 0.0
    %6544 = vmatprep.subr.mxu0 0.0
    %6545 = vmatpush2.msra.mxu0 0.0
    %6546 = vmatprep.subr.mxu0 0.0
    %6547 = vmatpush2.msra.mxu0 0.0
    %6548 = vmatprep.subr.mxu0 0.0
    %6549 = vmatpush2.msra.mxu0 0.0
    %6550 = vmatprep.subr.mxu0 0.0
    %6551 = vmatpush2.msra.mxu0 0.0
    %6552 = vmatprep.subr.mxu0 0.0
    %6553 = vmatpush2.msra.mxu0 0.0
    %6554 = vmatprep.subr.mxu0 0.0
    %6555 = vmatpush2.msra.mxu0 0.0
    %6556 = vmatprep.subr.mxu0 0.0
    %6557 = vmatpush2.msra.mxu0 0.0
    %6558 = vmatprep.subr.mxu0 0.0
    %6559 = vmatpush2.msra.mxu0 0.0
    %6560 = vmatprep.subr.mxu0 0.0
    %6561 = vmatpush2.msra.mxu0 0.0
    %6562 = vmatprep.subr.mxu0 0.0
    %6563 = vmatpush2.msra.mxu0 0.0
    %6564 = vmatprep.subr.mxu0 %v6482
    %6565 = vmatpush2.msra.mxu0 %v6481
    %6566 = vmatprep.subr.mxu0 %v6478
    %6567 = vmatpush2.msra.mxu0 %v6477
    %6568 = vmatprep.mubr.f32.mxu0 %v6502
    %6569 = vmatmul.mubr.f32.gmra.mxu0 %v6493
    %v6570 = vpop.f32.mrf.mxu0
    %v6571 = vadd.f32 %v6499, %v6570
    %v6572 = vpop.f32.mrf.mxu0
    %v6573 = vadd.f32 %v6499, %v6572
    %6574 = vdwg.mxu0
    %6575 = vmatprep.subr.mxu0 %v6448
    %6576 = vmatpush1.msra.mxu0 %v6447
    %6577 = vmatprep.subr.mxu0 %v6444
    %6578 = vmatpush1.msra.mxu0 %v6443
    %6579 = vmatprep.subr.mxu0 %v6412
    %6580 = vmatpush1.msra.mxu0 %v6411
    %6581 = vmatprep.subr.mxu0 %v6408
    %6582 = vmatpush1.msra.mxu0 %v6407
    %6583 = vmatprep.subr.mxu0 %v6376
    %6584 = vmatpush1.msra.mxu0 %v6375
    %6585 = vmatprep.subr.mxu0 %v6372
    %6586 = vmatpush1.msra.mxu0 %v6371
    %6587 = vmatprep.subr.mxu0 %v6340
    %6588 = vmatpush1.msra.mxu0 %v6339
    %6589 = vmatprep.subr.mxu0 %v6336
    %6590 = vmatpush1.msra.mxu0 %v6335
    %6591 = vmatprep.subr.mxu0 %v6304
    %6592 = vmatpush1.msra.mxu0 %v6303
    %6593 = vmatprep.subr.mxu0 %v6300
    %6594 = vmatpush1.msra.mxu0 %v6299
    %6595 = vmatprep.subr.mxu0 %v6268
    %6596 = vmatpush1.msra.mxu0 %v6267
    %6597 = vmatprep.subr.mxu0 %v6264
    %6598 = vmatpush1.msra.mxu0 %v6263
    %6599 = vmatprep.subr.mxu0 %v6232
    %6600 = vmatpush1.msra.mxu0 %v6231
    %6601 = vmatprep.subr.mxu0 %v6228
    %6602 = vmatpush1.msra.mxu0 %v6227
    %6603 = vmatprep.subr.mxu0 %v6186
    %6604 = vmatpush1.msra.mxu0 %v6185
    %6605 = vmatprep.subr.mxu0 %v6183
    %6606 = vmatpush1.msra.mxu0 %v6182
    %6607 = vmatprep.subr.mxu0 0.0
    %6608 = vmatpush2.msra.mxu0 0.0
    %6609 = vmatprep.subr.mxu0 0.0
    %6610 = vmatpush2.msra.mxu0 0.0
    %6611 = vmatprep.subr.mxu0 0.0
    %6612 = vmatpush2.msra.mxu0 0.0
    %6613 = vmatprep.subr.mxu0 0.0
    %6614 = vmatpush2.msra.mxu0 0.0
    %6615 = vmatprep.subr.mxu0 0.0
    %6616 = vmatpush2.msra.mxu0 0.0
    %6617 = vmatprep.subr.mxu0 0.0
    %6618 = vmatpush2.msra.mxu0 0.0
    %6619 = vmatprep.subr.mxu0 0.0
    %6620 = vmatpush2.msra.mxu0 0.0
    %6621 = vmatprep.subr.mxu0 0.0
    %6622 = vmatpush2.msra.mxu0 0.0
    %6623 = vmatprep.subr.mxu0 0.0
    %6624 = vmatpush2.msra.mxu0 0.0
    %6625 = vmatprep.subr.mxu0 0.0
    %6626 = vmatpush2.msra.mxu0 0.0
    %6627 = vmatprep.subr.mxu0 0.0
    %6628 = vmatpush2.msra.mxu0 0.0
    %6629 = vmatprep.subr.mxu0 0.0
    %6630 = vmatpush2.msra.mxu0 0.0
    %6631 = vmatprep.subr.mxu0 0.0
    %6632 = vmatpush2.msra.mxu0 0.0
    %6633 = vmatprep.subr.mxu0 0.0
    %6634 = vmatpush2.msra.mxu0 0.0
    %6635 = vmatprep.subr.mxu0 %v6484
    %6636 = vmatpush2.msra.mxu0 %v6483
    %6637 = vmatprep.subr.mxu0 %v6480
    %6638 = vmatpush2.msra.mxu0 %v6479
    %6639 = vmatprep.mubr.f32.mxu0 %v6502
    %6640 = vmatmul.mubr.f32.gmra.mxu0 %v6493
    %v6641 = vpop.f32.mrf.mxu0
    %v6642 = vadd.f32 %v6499, %v6641
    %v6643 = vpop.f32.mrf.mxu0
    %v6644 = vadd.f32 %v6499, %v6643
    %6645 = vdwg.mxu0
    %v6646 = vmax.f32 %v6571, 0.0
    %v6647 = vmax.f32 %v6573, 0.0
    %v6648 = vmax.f32 %v6642, 0.0
    %v6649 = vmax.f32 %v6644, 0.0
    %v6650 = vmul.f32 %v6646, %v6132
    %v6651 = vmul.f32 %v6647, %v6136
    %v6652 = vmul.f32 %v6648, %v6140
    %v6653 = vmul.f32 %v6649, %v6144
    %6659 = vrot.lane.b32.xlu0 %v6650, 127
    %v6660 = vpop.permute.xlu0 %6659
    %6661 = vrot.lane.b32.xlu0 %v6651, 127
    %v6662 = vpop.permute.xlu0 %6661
    %6663 = vrot.lane.b32.xlu0 %v6652, 127
    %v6664 = vpop.permute.xlu0 %6663
    %6665 = vrot.lane.b32.xlu0 %v6653, 127
    %v6666 = vpop.permute.xlu0 %6665
    %6667 = vrot.lane.b32.xlu0 0.0, 127
    %v6668 = vpop.permute.xlu0 %6667
    %v6669 = vsel %vm389, %v6660, %v6662
    %v6670 = vsel %vm389, %v6662, %v6664
    %v6671 = vsel %vm389, %v6664, %v6666
    %v6672 = vsel %vm389, %v6666, %v6668
    %v6677 = vmax.f32 %v6650, %v6669
    %v6678 = vmax.f32 %v6651, %v6670
    %v6679 = vmax.f32 %v6652, %v6671
    %v6680 = vmax.f32 %v6653, %v6672
    %6681 = vrot.lane.b32.xlu0 %v6650, 112
    %v6682 = vpop.permute.xlu0 %6681
    %6683 = vrot.lane.b32.xlu0 %v6651, 112
    %v6684 = vpop.permute.xlu0 %6683
    %6685 = vrot.lane.b32.xlu0 %v6652, 112
    %v6686 = vpop.permute.xlu0 %6685
    %6687 = vrot.lane.b32.xlu0 %v6653, 112
    %v6688 = vpop.permute.xlu0 %6687
    %6689 = vrot.lane.b32.xlu0 0.0, 112
    %v6690 = vpop.permute.xlu0 %6689
    %v6691 = vsel %vm5742, %v6682, %v6684
    %v6692 = vsel %vm5742, %v6684, %v6686
    %v6693 = vsel %vm5742, %v6686, %v6688
    %v6694 = vsel %vm5742, %v6688, %v6690
    %v6699 = vmax.f32 %v6677, %v6691
    %v6700 = vmax.f32 %v6678, %v6692
    %v6701 = vmax.f32 %v6679, %v6693
    %v6702 = vmax.f32 %v6680, %v6694
    %6703 = vrot.lane.b32.xlu0 %v6650, 111
    %v6704 = vpop.permute.xlu0 %6703
    %6705 = vrot.lane.b32.xlu0 %v6651, 111
    %v6706 = vpop.permute.xlu0 %6705
    %6707 = vrot.lane.b32.xlu0 %v6652, 111
    %v6708 = vpop.permute.xlu0 %6707
    %6709 = vrot.lane.b32.xlu0 %v6653, 111
    %v6710 = vpop.permute.xlu0 %6709
    %6711 = vrot.lane.b32.xlu0 0.0, 111
    %v6712 = vpop.permute.xlu0 %6711
    %v6713 = vsel %vm5779, %v6704, %v6706
    %v6714 = vsel %vm5779, %v6706, %v6708
    %v6715 = vsel %vm5779, %v6708, %v6710
    %v6716 = vsel %vm5779, %v6710, %v6712
    %v6721 = vmax.f32 %v6699, %v6713
    %v6722 = vmax.f32 %v6700, %v6714
    %v6723 = vmax.f32 %v6701, %v6715
    %v6724 = vmax.f32 %v6702, %v6716
    %v6725 = vld [vmem:[%s12] sm:$0xff]
    %v6726 = vld [vmem:[%s12 + $0x8] sm:$0xff]
    %v6727 = vld [vmem:[%s12 + $0x10] sm:$0xff]
    %v6728 = vld [vmem:[%s12 + $0x18] sm:$0xff]
    %v6729 = vld [vmem:[%s12 + $0x20] sm:$0xff]
    %v6730 = vld [vmem:[%s12 + $0x28] sm:$0xff]
    %v6731 = vld [vmem:[%s12 + $0x30] sm:$0xff]
    %v6732 = vld [vmem:[%s12 + $0x38] sm:$0xff]
    %v6733 = vld [vmem:[%s12 + $0x40] sm:$0xff]
    %v6734 = vld [vmem:[%s12 + $0x48] sm:$0xff]
    %v6735 = vld [vmem:[%s12 + $0x50] sm:$0xff]
    %v6736 = vld [vmem:[%s12 + $0x58] sm:$0xff]
    %v6737 = vld [vmem:[%s12 + $0x60] sm:$0xff]
    %v6738 = vld [vmem:[%s12 + $0x68] sm:$0xff]
    %v6739 = vld [vmem:[%s12 + $0x70] sm:$0xff]
    %v6740 = vld [vmem:[%s12 + $0x78] sm:$0xff]
    %v6741 = vld [vmem:[%s12 + $0x80] sm:$0xff]
    %v6742 = vld [vmem:[%s12 + $0x88] sm:$0xff]
    %v6743 = vld [vmem:[%s12 + $0x90] sm:$0xff]
    %v6744 = vld [vmem:[%s12 + $0x98] sm:$0xff]
    %v6745 = vld [vmem:[%s12 + $0xa0] sm:$0xff]
    %v6746 = vld [vmem:[%s12 + $0xa8] sm:$0xff]
    %v6747 = vld [vmem:[%s12 + $0xb0] sm:$0xff]
    %v6748 = vld [vmem:[%s12 + $0xb8] sm:$0xff]
    %v6749 = vld [vmem:[%s12 + $0xc0] sm:$0xff]
    %v6750 = vld [vmem:[%s12 + $0xc8] sm:$0xff]
    %v6751 = vld [vmem:[%s12 + $0xd0] sm:$0xff]
    %v6752 = vld [vmem:[%s12 + $0xd8] sm:$0xff]
    %v6753 = vld [vmem:[%s12 + $0xe0] sm:$0xff]
    %v6754 = vld [vmem:[%s12 + $0xe8] sm:$0xff]
    %v6755 = vld [vmem:[%s12 + $0xf0] sm:$0xff]
    %v6756 = vld [vmem:[%s12 + $0xf8] sm:$0xff]
    %v6757 = vld [vmem:[%s12 + $0x100] sm:$0xff]
    %v6758 = vld [vmem:[%s12 + $0x108] sm:$0xff]
    %v6759 = vld [vmem:[%s12 + $0x110] sm:$0xff]
    %v6760 = vld [vmem:[%s12 + $0x118] sm:$0xff]
    %v6761 = vld [vmem:[%s12 + $0x120] sm:$0xff]
    %v6762 = vld [vmem:[%s12 + $0x128] sm:$0xff]
    %v6763 = vld [vmem:[%s12 + $0x130] sm:$0xff]
    %v6764 = vld [vmem:[%s12 + $0x138] sm:$0xff]
    %v6765 = vld [vmem:[%s12 + $0x140] sm:$0xff]
    %v6766 = vld [vmem:[%s12 + $0x148] sm:$0xff]
    %v6767 = vld [vmem:[%s12 + $0x150] sm:$0xff]
    %v6768 = vld [vmem:[%s12 + $0x158] sm:$0xff]
    %v6769 = vld [vmem:[%s12 + $0x160] sm:$0xff]
    %v6770 = vld [vmem:[%s12 + $0x168] sm:$0xff]
    %v6771 = vld [vmem:[%s12 + $0x170] sm:$0xff]
    %v6772 = vld [vmem:[%s12 + $0x178] sm:$0xff]
    %v6773 = vld [vmem:[%s12 + $0x180] sm:$0xff]
    %v6774 = vld [vmem:[%s12 + $0x188] sm:$0xff]
    %v6775 = vld [vmem:[%s12 + $0x190] sm:$0xff]
    %v6776 = vld [vmem:[%s12 + $0x198] sm:$0xff]
    %v6777 = vld [vmem:[%s12 + $0x1a0] sm:$0xff]
    %v6778 = vld [vmem:[%s12 + $0x1a8] sm:$0xff]
    %v6779 = vld [vmem:[%s12 + $0x1b0] sm:$0xff]
    %v6780 = vld [vmem:[%s12 + $0x1b8] sm:$0xff]
    %v6781 = vld [vmem:[%s12 + $0x1c0] sm:$0xff]
    %v6782 = vld [vmem:[%s12 + $0x1c8] sm:$0xff]
    %v6783 = vld [vmem:[%s12 + $0x1d0] sm:$0xff]
    %v6784 = vld [vmem:[%s12 + $0x1d8] sm:$0xff]
    %v6785 = vld [vmem:[%s12 + $0x1e0] sm:$0xff]
    %v6786 = vld [vmem:[%s12 + $0x1e8] sm:$0xff]
    %v6787 = vld [vmem:[%s12 + $0x1f0] sm:$0xff]
    %v6788 = vld [vmem:[%s12 + $0x1f8] sm:$0xff]
    %v6789 = vld [vmem:[%s12 + $0x200] sm:$0xff]
    %v6790 = vld [vmem:[%s12 + $0x208] sm:$0xff]
    %v6791 = vld [vmem:[%s12 + $0x210] sm:$0xff]
    %v6792 = vld [vmem:[%s12 + $0x218] sm:$0xff]
    %v6793 = vld [vmem:[%s12 + $0x220] sm:$0xff]
    %v6794 = vld [vmem:[%s12 + $0x228] sm:$0xff]
    %v6795 = vld [vmem:[%s12 + $0x230] sm:$0xff]
    %v6796 = vld [vmem:[%s12 + $0x238] sm:$0xff]
    %v6797 = vld [vmem:[%s12 + $0x240] sm:$0xff]
    %v6798 = vld [vmem:[%s12 + $0x248] sm:$0xff]
    %v6799 = vld [vmem:[%s12 + $0x250] sm:$0xff]
    %v6800 = vld [vmem:[%s12 + $0x258] sm:$0xff]
    %v6801 = vld [vmem:[%s12 + $0x260] sm:$0xff]
    %v6802 = vld [vmem:[%s12 + $0x268] sm:$0xff]
    %v6803 = vld [vmem:[%s12 + $0x270] sm:$0xff]
    %v6804 = vld [vmem:[%s12 + $0x278] sm:$0xff]
    %v6805 = vld [vmem:[%s12 + $0x280] sm:$0xff]
    %v6806 = vld [vmem:[%s12 + $0x288] sm:$0xff]
    %v6807 = vld [vmem:[%s12 + $0x290] sm:$0xff]
    %v6808 = vld [vmem:[%s12 + $0x298] sm:$0xff]
    %v6809 = vld [vmem:[%s12 + $0x2a0] sm:$0xff]
    %v6810 = vld [vmem:[%s12 + $0x2a8] sm:$0xff]
    %v6811 = vld [vmem:[%s12 + $0x2b0] sm:$0xff]
    %v6812 = vld [vmem:[%s12 + $0x2b8] sm:$0xff]
    %v6813 = vld [vmem:[%s12 + $0x2c0] sm:$0xff]
    %v6814 = vld [vmem:[%s12 + $0x2c8] sm:$0xff]
    %v6815 = vld [vmem:[%s12 + $0x2d0] sm:$0xff]
    %v6816 = vld [vmem:[%s12 + $0x2d8] sm:$0xff]
    %v6817 = vld [vmem:[%s12 + $0x2e0] sm:$0xff]
    %v6818 = vld [vmem:[%s12 + $0x2e8] sm:$0xff]
    %v6819 = vld [vmem:[%s12 + $0x2f0] sm:$0xff]
    %v6820 = vld [vmem:[%s12 + $0x2f8] sm:$0xff]
    %v6821 = vld [vmem:[%s12 + $0x300] sm:$0xff]
    %v6822 = vld [vmem:[%s12 + $0x308] sm:$0xff]
    %v6823 = vld [vmem:[%s12 + $0x310] sm:$0xff]
    %v6824 = vld [vmem:[%s12 + $0x318] sm:$0xff]
    %v6825 = vld [vmem:[%s12 + $0x320] sm:$0xff]
    %v6826 = vld [vmem:[%s12 + $0x328] sm:$0xff]
    %v6827 = vld [vmem:[%s12 + $0x330] sm:$0xff]
    %v6828 = vld [vmem:[%s12 + $0x338] sm:$0xff]
    %v6829 = vld [vmem:[%s12 + $0x340] sm:$0xff]
    %v6830 = vld [vmem:[%s12 + $0x348] sm:$0xff]
    %v6831 = vld [vmem:[%s12 + $0x350] sm:$0xff]
    %v6832 = vld [vmem:[%s12 + $0x358] sm:$0xff]
    %v6833 = vld [vmem:[%s12 + $0x360] sm:$0xff]
    %v6834 = vld [vmem:[%s12 + $0x368] sm:$0xff]
    %v6835 = vld [vmem:[%s12 + $0x370] sm:$0xff]
    %v6836 = vld [vmem:[%s12 + $0x378] sm:$0xff]
    %v6837 = vld [vmem:[%s12 + $0x380] sm:$0xff]
    %v6838 = vld [vmem:[%s12 + $0x388] sm:$0xff]
    %v6839 = vld [vmem:[%s12 + $0x390] sm:$0xff]
    %v6840 = vld [vmem:[%s12 + $0x398] sm:$0xff]
    %v6841 = vld [vmem:[%s12 + $0x3a0] sm:$0xff]
    %v6842 = vld [vmem:[%s12 + $0x3a8] sm:$0xff]
    %v6843 = vld [vmem:[%s12 + $0x3b0] sm:$0xff]
    %v6844 = vld [vmem:[%s12 + $0x3b8] sm:$0xff]
    %v6845 = vld [vmem:[%s12 + $0x3c0] sm:$0xff]
    %v6846 = vld [vmem:[%s12 + $0x3c8] sm:$0xff]
    %v6847 = vld [vmem:[%s12 + $0x3d0] sm:$0xff]
    %v6848 = vld [vmem:[%s12 + $0x3d8] sm:$0xff]
    %v6849 = vld [vmem:[%s12 + $0x3e0] sm:$0xff]
    %v6850 = vld [vmem:[%s12 + $0x3e8] sm:$0xff]
    %v6851 = vld [vmem:[%s12 + $0x3f0] sm:$0xff]
    %v6852 = vld [vmem:[%s12 + $0x3f8] sm:$0xff]
    %6853 = vmatprep.subr.mxu0 %v6756
    %6854 = vmatpush1.msra.mxu0 %v6755
    %6855 = vmatprep.subr.mxu0 %v6754
    %6856 = vmatpush1.msra.mxu0 %v6753
    %6857 = vmatprep.subr.mxu0 %v6752
    %6858 = vmatpush1.msra.mxu0 %v6751
    %6859 = vmatprep.subr.mxu0 %v6750
    %6860 = vmatpush1.msra.mxu0 %v6749
    %6861 = vmatprep.subr.mxu0 %v6748
    %6862 = vmatpush1.msra.mxu0 %v6747
    %6863 = vmatprep.subr.mxu0 %v6746
    %6864 = vmatpush1.msra.mxu0 %v6745
    %6865 = vmatprep.subr.mxu0 %v6744
    %6866 = vmatpush1.msra.mxu0 %v6743
    %6867 = vmatprep.subr.mxu0 %v6742
    %6868 = vmatpush1.msra.mxu0 %v6741
    %6869 = vmatprep.subr.mxu0 %v6740
    %6870 = vmatpush1.msra.mxu0 %v6739
    %6871 = vmatprep.subr.mxu0 %v6738
    %6872 = vmatpush1.msra.mxu0 %v6737
    %6873 = vmatprep.subr.mxu0 %v6736
    %6874 = vmatpush1.msra.mxu0 %v6735
    %6875 = vmatprep.subr.mxu0 %v6734
    %6876 = vmatpush1.msra.mxu0 %v6733
    %6877 = vmatprep.subr.mxu0 %v6732
    %6878 = vmatpush1.msra.mxu0 %v6731
    %6879 = vmatprep.subr.mxu0 %v6730
    %6880 = vmatpush1.msra.mxu0 %v6729
    %6881 = vmatprep.subr.mxu0 %v6728
    %6882 = vmatpush1.msra.mxu0 %v6727
    %6883 = vmatprep.subr.mxu0 %v6726
    %6884 = vmatpush1.msra.mxu0 %v6725
    %6885 = vmatprep.subr.mxu0 %v6788
    %6886 = vmatpush2.msra.mxu0 %v6787
    %6887 = vmatprep.subr.mxu0 %v6786
    %6888 = vmatpush2.msra.mxu0 %v6785
    %6889 = vmatprep.subr.mxu0 %v6784
    %6890 = vmatpush2.msra.mxu0 %v6783
    %6891 = vmatprep.subr.mxu0 %v6782
    %6892 = vmatpush2.msra.mxu0 %v6781
    %6893 = vmatprep.subr.mxu0 %v6780
    %6894 = vmatpush2.msra.mxu0 %v6779
    %6895 = vmatprep.subr.mxu0 %v6778
    %6896 = vmatpush2.msra.mxu0 %v6777
    %6897 = vmatprep.subr.mxu0 %v6776
    %6898 = vmatpush2.msra.mxu0 %v6775
    %6899 = vmatprep.subr.mxu0 %v6774
    %6900 = vmatpush2.msra.mxu0 %v6773
    %6901 = vmatprep.subr.mxu0 %v6772
    %6902 = vmatpush2.msra.mxu0 %v6771
    %6903 = vmatprep.subr.mxu0 %v6770
    %6904 = vmatpush2.msra.mxu0 %v6769
    %6905 = vmatprep.subr.mxu0 %v6768
    %6906 = vmatpush2.msra.mxu0 %v6767
    %6907 = vmatprep.subr.mxu0 %v6766
    %6908 = vmatpush2.msra.mxu0 %v6765
    %6909 = vmatprep.subr.mxu0 %v6764
    %6910 = vmatpush2.msra.mxu0 %v6763
    %6911 = vmatprep.subr.mxu0 %v6762
    %6912 = vmatpush2.msra.mxu0 %v6761
    %6913 = vmatprep.subr.mxu0 %v6760
    %6914 = vmatpush2.msra.mxu0 %v6759
    %6915 = vmatprep.subr.mxu0 %v6758
    %6916 = vmatpush2.msra.mxu0 %v6757
    %6917 = vmatprep.mubr.f32.mxu0 %v6722
    %6918 = vmatmul.mubr.f32.gmra.mxu0 %v6721
    %v6919 = vpop.f32.mrf.mxu0
    %v6920 = vadd.f32 0.0, %v6919
    %v6921 = vpop.f32.mrf.mxu0
    %v6922 = vadd.f32 0.0, %v6921
    %6923 = vdwg.mxu0
    %6924 = vmatprep.subr.mxu0 %v6820
    %6925 = vmatpush1.msra.mxu0 %v6819
    %6926 = vmatprep.subr.mxu0 %v6818
    %6927 = vmatpush1.msra.mxu0 %v6817
    %6928 = vmatprep.subr.mxu0 %v6816
    %6929 = vmatpush1.msra.mxu0 %v6815
    %6930 = vmatprep.subr.mxu0 %v6814
    %6931 = vmatpush1.msra.mxu0 %v6813
    %6932 = vmatprep.subr.mxu0 %v6812
    %6933 = vmatpush1.msra.mxu0 %v6811
    %6934 = vmatprep.subr.mxu0 %v6810
    %6935 = vmatpush1.msra.mxu0 %v6809
    %6936 = vmatprep.subr.mxu0 %v6808
    %6937 = vmatpush1.msra.mxu0 %v6807
    %6938 = vmatprep.subr.mxu0 %v6806
    %6939 = vmatpush1.msra.mxu0 %v6805
    %6940 = vmatprep.subr.mxu0 %v6804
    %6941 = vmatpush1.msra.mxu0 %v6803
    %6942 = vmatprep.subr.mxu0 %v6802
    %6943 = vmatpush1.msra.mxu0 %v6801
    %6944 = vmatprep.subr.mxu0 %v6800
    %6945 = vmatpush1.msra.mxu0 %v6799
    %6946 = vmatprep.subr.mxu0 %v6798
    %6947 = vmatpush1.msra.mxu0 %v6797
    %6948 = vmatprep.subr.mxu0 %v6796
    %6949 = vmatpush1.msra.mxu0 %v6795
    %6950 = vmatprep.subr.mxu0 %v6794
    %6951 = vmatpush1.msra.mxu0 %v6793
    %6952 = vmatprep.subr.mxu0 %v6792
    %6953 = vmatpush1.msra.mxu0 %v6791
    %6954 = vmatprep.subr.mxu0 %v6790
    %6955 = vmatpush1.msra.mxu0 %v6789
    %6956 = vmatprep.subr.mxu0 %v6852
    %6957 = vmatpush2.msra.mxu0 %v6851
    %6958 = vmatprep.subr.mxu0 %v6850
    %6959 = vmatpush2.msra.mxu0 %v6849
    %6960 = vmatprep.subr.mxu0 %v6848
    %6961 = vmatpush2.msra.mxu0 %v6847
    %6962 = vmatprep.subr.mxu0 %v6846
    %6963 = vmatpush2.msra.mxu0 %v6845
    %6964 = vmatprep.subr.mxu0 %v6844
    %6965 = vmatpush2.msra.mxu0 %v6843
    %6966 = vmatprep.subr.mxu0 %v6842
    %6967 = vmatpush2.msra.mxu0 %v6841
    %6968 = vmatprep.subr.mxu0 %v6840
    %6969 = vmatpush2.msra.mxu0 %v6839
    %6970 = vmatprep.subr.mxu0 %v6838
    %6971 = vmatpush2.msra.mxu0 %v6837
    %6972 = vmatprep.subr.mxu0 %v6836
    %6973 = vmatpush2.msra.mxu0 %v6835
    %6974 = vmatprep.subr.mxu0 %v6834
    %6975 = vmatpush2.msra.mxu0 %v6833
    %6976 = vmatprep.subr.mxu0 %v6832
    %6977 = vmatpush2.msra.mxu0 %v6831
    %6978 = vmatprep.subr.mxu0 %v6830
    %6979 = vmatpush2.msra.mxu0 %v6829
    %6980 = vmatprep.subr.mxu0 %v6828
    %6981 = vmatpush2.msra.mxu0 %v6827
    %6982 = vmatprep.subr.mxu0 %v6826
    %6983 = vmatpush2.msra.mxu0 %v6825
    %6984 = vmatprep.subr.mxu0 %v6824
    %6985 = vmatpush2.msra.mxu0 %v6823
    %6986 = vmatprep.subr.mxu0 %v6822
    %6987 = vmatpush2.msra.mxu0 %v6821
    %6988 = vmatprep.mubr.f32.mxu0 %v6724
    %6989 = vmatmul.mubr.f32.gmra.mxu0 %v6723
    %v6990 = vpop.f32.mrf.mxu0
    %v6991 = vadd.f32 %v6920, %v6990
    %v6992 = vpop.f32.mrf.mxu0
    %v6993 = vadd.f32 %v6922, %v6992
    %6994 = vdwg.mxu0
    %v6996 = vrot.slane %v6991, 1
    %6997 = vrot.lane.b32.xlu0 %v6996, 81
    %v6998 = vpop.permute.xlu0 %6997
    %v7000 = vrot.slane %v6991, 2
    %7001 = vrot.lane.b32.xlu0 %v7000, 34
    %v7002 = vpop.permute.xlu0 %7001
    %v7004 = vrot.slane %v6991, 3
    %7005 = vrot.lane.b32.xlu0 %v7004, 115
    %v7006 = vpop.permute.xlu0 %7005
    %v7008 = vrot.slane %v6991, 4
    %7009 = vrot.lane.b32.xlu0 %v7008, 68
    %v7010 = vpop.permute.xlu0 %7009
    %v7012 = vrot.slane %v6991, 5
    %7013 = vrot.lane.b32.xlu0 %v7012, 21
    %v7014 = vpop.permute.xlu0 %7013
    %v7016 = vrot.slane %v6991, 6
    %7017 = vrot.lane.b32.xlu0 %v7016, 102
    %v7018 = vpop.permute.xlu0 %7017
    %v7020 = vrot.slane %v6991, 7
    %7021 = vrot.lane.b32.xlu0 %v7020, 55
    %v7022 = vpop.permute.xlu0 %7021
    %vm7024 = vcmask 662528
    %v7025 = vsel %vm7024, %v6991, %v6998
    %vm7026 = vcmask 277504
    %v7027 = vsel %vm7026, %v6998, %v7002
    %vm7028 = vcmask 941056
    %v7029 = vsel %vm7028, %v7027, %v7006
    %v7030 = vsel %vm764, %v7006, %v7010
    %vm7031 = vcmask 171008
    %v7032 = vsel %vm7031, %v7010, %v7014
    %vm7033 = vcmask 834560
    %v7034 = vsel %vm7033, %v7032, %v7018
    %vm7035 = vcmask 449536
    %v7036 = vsel %vm7035, %v7018, %v7022
    %7038 = vrot.lane.b32.xlu0 %v6991, 47
    %v7039 = vpop.permute.xlu0 %7038
    %7040 = vrot.lane.b32.xlu0 %v6993, 47
    %v7041 = vpop.permute.xlu0 %7040
    %vm7042 = vcmask 384000
    %v7043 = vsel %vm7042, %v7039, %v7041
    %v7045 = vrot.slane %v6993, 1
    %v7048 = vrot.slane %v6993, 2
    %7049 = vrot.lane.b32.xlu0 %v7000, 81
    %v7050 = vpop.permute.xlu0 %7049
    %7051 = vrot.lane.b32.xlu0 %v7048, 81
    %v7052 = vpop.permute.xlu0 %7051
    %v7053 = vsel %vm7024, %v7050, %v7052
    %v7055 = vrot.slane %v6993, 3
    %7056 = vrot.lane.b32.xlu0 %v7004, 34
    %v7057 = vpop.permute.xlu0 %7056
    %7058 = vrot.lane.b32.xlu0 %v7055, 34
    %v7059 = vpop.permute.xlu0 %7058
    %v7060 = vsel %vm7026, %v7057, %v7059
    %v7063 = vrot.slane %v6993, 4
    %7064 = vrot.lane.b32.xlu0 %v7008, 115
    %v7065 = vpop.permute.xlu0 %7064
    %7066 = vrot.lane.b32.xlu0 %v7063, 115
    %v7067 = vpop.permute.xlu0 %7066
    %v7068 = vsel %vm7028, %v7065, %v7067
    %v7071 = vrot.slane %v6993, 5
    %7072 = vrot.lane.b32.xlu0 %v7012, 68
    %v7073 = vpop.permute.xlu0 %7072
    %7074 = vrot.lane.b32.xlu0 %v7071, 68
    %v7075 = vpop.permute.xlu0 %7074
    %v7076 = vsel %vm764, %v7073, %v7075
    %v7078 = vrot.slane %v6993, 6
    %7079 = vrot.lane.b32.xlu0 %v7016, 21
    %v7080 = vpop.permute.xlu0 %7079
    %7081 = vrot.lane.b32.xlu0 %v7078, 21
    %v7082 = vpop.permute.xlu0 %7081
    %v7083 = vsel %vm7031, %v7080, %v7082
    %v7086 = vrot.slane %v6993, 7
    %7087 = vrot.lane.b32.xlu0 %v7020, 102
    %v7088 = vpop.permute.xlu0 %7087
    %7089 = vrot.lane.b32.xlu0 %v7086, 102
    %v7090 = vpop.permute.xlu0 %7089
    %v7091 = vsel %vm7033, %v7088, %v7090
    %v7093 = vsel %vm7024, %v7043, %v6996
    %v7094 = vsel %vm7026, %v7045, %v7053
    %v7095 = vsel %vm7028, %v7094, %v7057
    %v7096 = vsel %vm764, %v7060, %v7068
    %v7097 = vsel %vm7031, %v7067, %v7076
    %v7098 = vsel %vm7033, %v7097, %v7080
    %v7099 = vsel %vm7035, %v7083, %v7091
    %v7105 = vrot.slane %v7093, 7
    %v7106 = vrot.slane %v7095, 7
    %v7107 = vrot.slane %v7096, 7
    %v7108 = vrot.slane %v7098, 7
    %v7109 = vrot.slane %v7099, 7
    %v7110 = vrot.slane %v7090, 7
    %v7117 = vsel %vm914, %v7025, %v7105
    %v7118 = vsel %vm914, %v7029, %v7106
    %v7119 = vsel %vm914, %v7030, %v7107
    %v7120 = vsel %vm914, %v7034, %v7108
    %v7121 = vsel %vm914, %v7036, %v7109
    %v7122 = vsel %vm914, %v7022, %v7110
    %v7123 = vld [vmem:[#allocation14] sm:$0xff]
    %v7124 = vld [vmem:[#allocation14 + $0x8] sm:$0xff]
    %v7125 = vld [vmem:[#allocation14 + $0x10] sm:$0xff]
    %v7126 = vld [vmem:[#allocation14 + $0x18] sm:$0xff]
    %v7127 = vld [vmem:[#allocation14 + $0x20] sm:$0xff]
    %v7128 = vld [vmem:[#allocation14 + $0x28] sm:$0xff]
    %v7129 = vld [vmem:[#allocation14 + $0x30] sm:$0xff]
    %v7130 = vld [vmem:[#allocation14 + $0x38] sm:$0xff]
    %v7131 = vld [vmem:[#allocation14 + $0x40] sm:$0xff]
    %v7132 = vld [vmem:[#allocation14 + $0x48] sm:$0xff]
    %v7133 = vld [vmem:[#allocation14 + $0x50] sm:$0xff]
    %v7134 = vld [vmem:[#allocation14 + $0x58] sm:$0xff]
    %v7135 = vld [vmem:[#allocation14 + $0x60] sm:$0xff]
    %v7136 = vld [vmem:[#allocation14 + $0x68] sm:$0xff]
    %v7137 = vld [vmem:[#allocation14 + $0x70] sm:$0xff]
    %v7138 = vld [vmem:[#allocation14 + $0x78] sm:$0xff]
    %v7139 = vld [vmem:[#allocation14 + $0x80] sm:$0xff]
    %v7140 = vld [vmem:[#allocation14 + $0x88] sm:$0xff]
    %v7141 = vld [vmem:[#allocation14 + $0x90] sm:$0xff]
    %v7142 = vld [vmem:[#allocation14 + $0x98] sm:$0xff]
    %v7143 = vld [vmem:[#allocation14 + $0xa0] sm:$0xff]
    %v7144 = vld [vmem:[#allocation14 + $0xa8] sm:$0xff]
    %v7145 = vld [vmem:[#allocation14 + $0xb0] sm:$0xff]
    %v7146 = vld [vmem:[#allocation14 + $0xb8] sm:$0xff]
    %v7147 = vld [vmem:[#allocation14 + $0xc0] sm:$0xff]
    %v7148 = vld [vmem:[#allocation14 + $0xc8] sm:$0xff]
    %v7149 = vld [vmem:[#allocation14 + $0xd0] sm:$0xff]
    %v7150 = vld [vmem:[#allocation14 + $0xd8] sm:$0xff]
    %v7151 = vld [vmem:[#allocation14 + $0xe0] sm:$0xff]
    %v7152 = vld [vmem:[#allocation14 + $0xe8] sm:$0xff]
    %v7153 = vld [vmem:[#allocation14 + $0xf0] sm:$0xff]
    %v7154 = vld [vmem:[#allocation14 + $0xf8] sm:$0xff]
    %v7155 = vld [vmem:[#allocation14 + $0x100] sm:$0xff]
    %v7156 = vld [vmem:[#allocation14 + $0x108] sm:$0xff]
    %v7157 = vld [vmem:[#allocation14 + $0x110] sm:$0xff]
    %v7158 = vld [vmem:[#allocation14 + $0x118] sm:$0xff]
    %v7159 = vld [vmem:[#allocation14 + $0x120] sm:$0xff]
    %v7160 = vld [vmem:[#allocation14 + $0x128] sm:$0xff]
    %v7161 = vld [vmem:[#allocation14 + $0x130] sm:$0xff]
    %v7162 = vld [vmem:[#allocation14 + $0x138] sm:$0xff]
    %v7163 = vld [vmem:[#allocation14 + $0x140] sm:$0xff]
    %v7164 = vld [vmem:[#allocation14 + $0x148] sm:$0xff]
    %v7165 = vld [vmem:[#allocation14 + $0x150] sm:$0xff]
    %v7166 = vld [vmem:[#allocation14 + $0x158] sm:$0xff]
    %v7167 = vld [vmem:[#allocation14 + $0x160] sm:$0xff]
    %v7168 = vld [vmem:[#allocation14 + $0x168] sm:$0xff]
    %v7169 = vld [vmem:[#allocation14 + $0x170] sm:$0xff]
    %v7170 = vld [vmem:[#allocation14 + $0x178] sm:$0xff]
    %v7171 = vld [vmem:[#allocation14 + $0x180] sm:$0xff]
    %v7172 = vld [vmem:[#allocation14 + $0x188] sm:$0xff]
    %v7173 = vld [vmem:[#allocation14 + $0x190] sm:$0xff]
    %v7174 = vld [vmem:[#allocation14 + $0x198] sm:$0xff]
    %v7175 = vld [vmem:[#allocation14 + $0x1a0] sm:$0xff]
    %v7176 = vld [vmem:[#allocation14 + $0x1a8] sm:$0xff]
    %v7177 = vld [vmem:[#allocation14 + $0x1b0] sm:$0xff]
    %v7178 = vld [vmem:[#allocation14 + $0x1b8] sm:$0xff]
    %v7179 = vld [vmem:[#allocation14 + $0x1c0] sm:$0xff]
    %v7180 = vld [vmem:[#allocation14 + $0x1c8] sm:$0xff]
    %v7181 = vld [vmem:[#allocation14 + $0x1d0] sm:$0xff]
    %v7182 = vld [vmem:[#allocation14 + $0x1d8] sm:$0xff]
    %v7183 = vld [vmem:[#allocation14 + $0x1e0] sm:$0xff]
    %v7184 = vld [vmem:[#allocation14 + $0x1e8] sm:$0xff]
    %v7185 = vld [vmem:[#allocation14 + $0x1f0] sm:$0xff]
    %v7186 = vld [vmem:[#allocation14 + $0x1f8] sm:$0xff]
    %v7187 = vld [vmem:[#allocation14 + $0x200] sm:$0xff]
    %v7188 = vld [vmem:[#allocation14 + $0x208] sm:$0xff]
    %v7189 = vld [vmem:[#allocation14 + $0x210] sm:$0xff]
    %v7190 = vld [vmem:[#allocation14 + $0x218] sm:$0xff]
    %v7191 = vld [vmem:[#allocation14 + $0x220] sm:$0xff]
    %v7192 = vld [vmem:[#allocation14 + $0x228] sm:$0xff]
    %v7193 = vld [vmem:[#allocation14 + $0x230] sm:$0xff]
    %v7194 = vld [vmem:[#allocation14 + $0x238] sm:$0xff]
    %v7195 = vld [vmem:[#allocation14 + $0x240] sm:$0xff]
    %v7196 = vld [vmem:[#allocation14 + $0x248] sm:$0xff]
    %v7197 = vld [vmem:[#allocation14 + $0x250] sm:$0xff]
    %v7198 = vld [vmem:[#allocation14 + $0x258] sm:$0xff]
    %v7199 = vld [vmem:[#allocation14 + $0x260] sm:$0xff]
    %v7200 = vld [vmem:[#allocation14 + $0x268] sm:$0xff]
    %v7201 = vld [vmem:[#allocation14 + $0x270] sm:$0xff]
    %v7202 = vld [vmem:[#allocation14 + $0x278] sm:$0xff]
    %v7203 = vld [vmem:[#allocation14 + $0x280] sm:$0xff]
    %v7204 = vld [vmem:[#allocation14 + $0x288] sm:$0xff]
    %v7205 = vld [vmem:[#allocation14 + $0x290] sm:$0xff]
    %v7206 = vld [vmem:[#allocation14 + $0x298] sm:$0xff]
    %v7207 = vld [vmem:[#allocation14 + $0x2a0] sm:$0xff]
    %v7208 = vld [vmem:[#allocation14 + $0x2a8] sm:$0xff]
    %v7209 = vld [vmem:[#allocation14 + $0x2b0] sm:$0xff]
    %v7210 = vld [vmem:[#allocation14 + $0x2b8] sm:$0xff]
    %v7211 = vld [vmem:[#allocation14 + $0x2c0] sm:$0xff]
    %v7212 = vld [vmem:[#allocation14 + $0x2c8] sm:$0xff]
    %v7213 = vld [vmem:[#allocation14 + $0x2d0] sm:$0xff]
    %v7214 = vld [vmem:[#allocation14 + $0x2d8] sm:$0xff]
    %v7215 = vld [vmem:[#allocation14 + $0x2e0] sm:$0xff]
    %v7216 = vld [vmem:[#allocation14 + $0x2e8] sm:$0xff]
    %v7217 = vld [vmem:[#allocation14 + $0x2f0] sm:$0xff]
    %v7218 = vld [vmem:[#allocation14 + $0x2f8] sm:$0xff]
    %v7219 = vld [vmem:[#allocation14 + $0x300] sm:$0xff]
    %v7220 = vld [vmem:[#allocation14 + $0x308] sm:$0xff]
    %v7221 = vld [vmem:[#allocation14 + $0x310] sm:$0xff]
    %v7222 = vld [vmem:[#allocation14 + $0x318] sm:$0xff]
    %v7223 = vld [vmem:[#allocation14 + $0x320] sm:$0xff]
    %v7224 = vld [vmem:[#allocation14 + $0x328] sm:$0xff]
    %v7225 = vld [vmem:[#allocation14 + $0x330] sm:$0xff]
    %v7226 = vld [vmem:[#allocation14 + $0x338] sm:$0xff]
    %v7227 = vld [vmem:[#allocation14 + $0x340] sm:$0xff]
    %v7228 = vld [vmem:[#allocation14 + $0x348] sm:$0xff]
    %v7229 = vld [vmem:[#allocation14 + $0x350] sm:$0xff]
    %v7230 = vld [vmem:[#allocation14 + $0x358] sm:$0xff]
    %v7231 = vld [vmem:[#allocation14 + $0x360] sm:$0xff]
    %v7232 = vld [vmem:[#allocation14 + $0x368] sm:$0xff]
    %v7233 = vld [vmem:[#allocation14 + $0x370] sm:$0xff]
    %v7234 = vld [vmem:[#allocation14 + $0x378] sm:$0xff]
    %v7235 = vld [vmem:[#allocation14 + $0x380] sm:$0xff]
    %v7236 = vld [vmem:[#allocation14 + $0x388] sm:$0xff]
    %v7237 = vld [vmem:[#allocation14 + $0x390] sm:$0xff]
    %v7238 = vld [vmem:[#allocation14 + $0x398] sm:$0xff]
    %v7239 = vld [vmem:[#allocation14 + $0x3a0] sm:$0xff]
    %v7240 = vld [vmem:[#allocation14 + $0x3a8] sm:$0xff]
    %v7241 = vld [vmem:[#allocation14 + $0x3b0] sm:$0xff]
    %v7242 = vld [vmem:[#allocation14 + $0x3b8] sm:$0xff]
    %v7243 = vld [vmem:[#allocation14 + $0x3c0] sm:$0xff]
    %v7244 = vld [vmem:[#allocation14 + $0x3c8] sm:$0xff]
    %v7245 = vld [vmem:[#allocation14 + $0x3d0] sm:$0xff]
    %v7246 = vld [vmem:[#allocation14 + $0x3d8] sm:$0xff]
    %v7247 = vld [vmem:[#allocation14 + $0x3e0] sm:$0xff]
    %v7248 = vld [vmem:[#allocation14 + $0x3e8] sm:$0xff]
    %v7249 = vld [vmem:[#allocation14 + $0x3f0] sm:$0xff]
    %v7250 = vld [vmem:[#allocation14 + $0x3f8] sm:$0xff]
    %v7251 = vld [vmem:[#allocation14 + $0x400] sm:$0xff]
    %v7252 = vld [vmem:[#allocation14 + $0x408] sm:$0xff]
    %v7253 = vld [vmem:[#allocation14 + $0x410] sm:$0xff]
    %v7254 = vld [vmem:[#allocation14 + $0x418] sm:$0xff]
    %v7255 = vld [vmem:[#allocation14 + $0x420] sm:$0xff]
    %v7256 = vld [vmem:[#allocation14 + $0x428] sm:$0xff]
    %v7257 = vld [vmem:[#allocation14 + $0x430] sm:$0xff]
    %v7258 = vld [vmem:[#allocation14 + $0x438] sm:$0xff]
    %v7259 = vld [vmem:[#allocation14 + $0x440] sm:$0xff]
    %v7260 = vld [vmem:[#allocation14 + $0x448] sm:$0xff]
    %v7261 = vld [vmem:[#allocation14 + $0x450] sm:$0xff]
    %v7262 = vld [vmem:[#allocation14 + $0x458] sm:$0xff]
    %v7263 = vld [vmem:[#allocation14 + $0x460] sm:$0xff]
    %v7264 = vld [vmem:[#allocation14 + $0x468] sm:$0xff]
    %v7265 = vld [vmem:[#allocation14 + $0x470] sm:$0xff]
    %v7266 = vld [vmem:[#allocation14 + $0x478] sm:$0xff]
    %v7267 = vld [vmem:[#allocation14 + $0x480] sm:$0xff]
    %v7268 = vld [vmem:[#allocation14 + $0x488] sm:$0xff]
    %v7269 = vld [vmem:[#allocation14 + $0x490] sm:$0xff]
    %v7270 = vld [vmem:[#allocation14 + $0x498] sm:$0xff]
    %v7271 = vld [vmem:[#allocation14 + $0x4a0] sm:$0xff]
    %v7272 = vld [vmem:[#allocation14 + $0x4a8] sm:$0xff]
    %v7273 = vld [vmem:[#allocation14 + $0x4b0] sm:$0xff]
    %v7274 = vld [vmem:[#allocation14 + $0x4b8] sm:$0xff]
    %v7275 = vld [vmem:[#allocation14 + $0x4c0] sm:$0xff]
    %v7276 = vld [vmem:[#allocation14 + $0x4c8] sm:$0xff]
    %v7277 = vld [vmem:[#allocation14 + $0x4d0] sm:$0xff]
    %v7278 = vld [vmem:[#allocation14 + $0x4d8] sm:$0xff]
    %v7279 = vld [vmem:[#allocation14 + $0x4e0] sm:$0xff]
    %v7280 = vld [vmem:[#allocation14 + $0x4e8] sm:$0xff]
    %v7281 = vld [vmem:[#allocation14 + $0x4f0] sm:$0xff]
    %v7282 = vld [vmem:[#allocation14 + $0x4f8] sm:$0xff]
    %v7283 = vld [vmem:[#allocation14 + $0x500] sm:$0xff]
    %v7284 = vld [vmem:[#allocation14 + $0x508] sm:$0xff]
    %v7285 = vld [vmem:[#allocation16] sm:$0x3]
    %v7287 = vlaneseq
    %v7288 = vshrl.u32 %v7287, 7
    %v7289 = vsub.s32 0, %v7288
    %v7290 = vrot.slane %v7285, %v7289
    %v7291 = vlaneseq
    %v7292 = vshrl.u32 %v7291, 7
    %v7293 = vsub.s32 1, %v7292
    %v7294 = vrot.slane %v7285, %v7293
    %v7298 = vsel %vm2986, %v7122, 0
    %7300 = vmatprep.subr.mxu0 %v7154
    %7301 = vmatpush1.msra.mxu0 %v7153
    %7302 = vmatprep.subr.mxu0 %v7152
    %7303 = vmatpush1.msra.mxu0 %v7151
    %7304 = vmatprep.subr.mxu0 %v7150
    %7305 = vmatpush1.msra.mxu0 %v7149
    %7306 = vmatprep.subr.mxu0 %v7148
    %7307 = vmatpush1.msra.mxu0 %v7147
    %7308 = vmatprep.subr.mxu0 %v7146
    %7309 = vmatpush1.msra.mxu0 %v7145
    %7310 = vmatprep.subr.mxu0 %v7144
    %7311 = vmatpush1.msra.mxu0 %v7143
    %7312 = vmatprep.subr.mxu0 %v7142
    %7313 = vmatpush1.msra.mxu0 %v7141
    %7314 = vmatprep.subr.mxu0 %v7140
    %7315 = vmatpush1.msra.mxu0 %v7139
    %7316 = vmatprep.subr.mxu0 %v7138
    %7317 = vmatpush1.msra.mxu0 %v7137
    %7318 = vmatprep.subr.mxu0 %v7136
    %7319 = vmatpush1.msra.mxu0 %v7135
    %7320 = vmatprep.subr.mxu0 %v7134
    %7321 = vmatpush1.msra.mxu0 %v7133
    %7322 = vmatprep.subr.mxu0 %v7132
    %7323 = vmatpush1.msra.mxu0 %v7131
    %7324 = vmatprep.subr.mxu0 %v7130
    %7325 = vmatpush1.msra.mxu0 %v7129
    %7326 = vmatprep.subr.mxu0 %v7128
    %7327 = vmatpush1.msra.mxu0 %v7127
    %7328 = vmatprep.subr.mxu0 %v7126
    %7329 = vmatpush1.msra.mxu0 %v7125
    %7330 = vmatprep.subr.mxu0 %v7124
    %7331 = vmatpush1.msra.mxu0 %v7123
    %7332 = vmatprep.subr.mxu0 %v7186
    %7333 = vmatpush2.msra.mxu0 %v7185
    %7334 = vmatprep.subr.mxu0 %v7184
    %7335 = vmatpush2.msra.mxu0 %v7183
    %7336 = vmatprep.subr.mxu0 %v7182
    %7337 = vmatpush2.msra.mxu0 %v7181
    %7338 = vmatprep.subr.mxu0 %v7180
    %7339 = vmatpush2.msra.mxu0 %v7179
    %7340 = vmatprep.subr.mxu0 %v7178
    %7341 = vmatpush2.msra.mxu0 %v7177
    %7342 = vmatprep.subr.mxu0 %v7176
    %7343 = vmatpush2.msra.mxu0 %v7175
    %7344 = vmatprep.subr.mxu0 %v7174
    %7345 = vmatpush2.msra.mxu0 %v7173
    %7346 = vmatprep.subr.mxu0 %v7172
    %7347 = vmatpush2.msra.mxu0 %v7171
    %7348 = vmatprep.subr.mxu0 %v7170
    %7349 = vmatpush2.msra.mxu0 %v7169
    %7350 = vmatprep.subr.mxu0 %v7168
    %7351 = vmatpush2.msra.mxu0 %v7167
    %7352 = vmatprep.subr.mxu0 %v7166
    %7353 = vmatpush2.msra.mxu0 %v7165
    %7354 = vmatprep.subr.mxu0 %v7164
    %7355 = vmatpush2.msra.mxu0 %v7163
    %7356 = vmatprep.subr.mxu0 %v7162
    %7357 = vmatpush2.msra.mxu0 %v7161
    %7358 = vmatprep.subr.mxu0 %v7160
    %7359 = vmatpush2.msra.mxu0 %v7159
    %7360 = vmatprep.subr.mxu0 %v7158
    %7361 = vmatpush2.msra.mxu0 %v7157
    %7362 = vmatprep.subr.mxu0 %v7156
    %7363 = vmatpush2.msra.mxu0 %v7155
    %7364 = vmatprep.mubr.f32.mxu0 %v7118
    %7365 = vmatmul.mubr.f32.gmra.mxu0 %v7117
    %v7366 = vpop.f32.mrf.mxu0
    %v7367 = vadd.f32 %v7290, %v7366
    %v7368 = vpop.f32.mrf.mxu0
    %v7369 = vadd.f32 %v7294, %v7368
    %7370 = vdwg.mxu0
    %7371 = vmatprep.subr.mxu0 %v7218
    %7372 = vmatpush1.msra.mxu0 %v7217
    %7373 = vmatprep.subr.mxu0 %v7216
    %7374 = vmatpush1.msra.mxu0 %v7215
    %7375 = vmatprep.subr.mxu0 %v7214
    %7376 = vmatpush1.msra.mxu0 %v7213
    %7377 = vmatprep.subr.mxu0 %v7212
    %7378 = vmatpush1.msra.mxu0 %v7211
    %7379 = vmatprep.subr.mxu0 %v7210
    %7380 = vmatpush1.msra.mxu0 %v7209
    %7381 = vmatprep.subr.mxu0 %v7208
    %7382 = vmatpush1.msra.mxu0 %v7207
    %7383 = vmatprep.subr.mxu0 %v7206
    %7384 = vmatpush1.msra.mxu0 %v7205
    %7385 = vmatprep.subr.mxu0 %v7204
    %7386 = vmatpush1.msra.mxu0 %v7203
    %7387 = vmatprep.subr.mxu0 %v7202
    %7388 = vmatpush1.msra.mxu0 %v7201
    %7389 = vmatprep.subr.mxu0 %v7200
    %7390 = vmatpush1.msra.mxu0 %v7199
    %7391 = vmatprep.subr.mxu0 %v7198
    %7392 = vmatpush1.msra.mxu0 %v7197
    %7393 = vmatprep.subr.mxu0 %v7196
    %7394 = vmatpush1.msra.mxu0 %v7195
    %7395 = vmatprep.subr.mxu0 %v7194
    %7396 = vmatpush1.msra.mxu0 %v7193
    %7397 = vmatprep.subr.mxu0 %v7192
    %7398 = vmatpush1.msra.mxu0 %v7191
    %7399 = vmatprep.subr.mxu0 %v7190
    %7400 = vmatpush1.msra.mxu0 %v7189
    %7401 = vmatprep.subr.mxu0 %v7188
    %7402 = vmatpush1.msra.mxu0 %v7187
    %7403 = vmatprep.subr.mxu0 %v7250
    %7404 = vmatpush2.msra.mxu0 %v7249
    %7405 = vmatprep.subr.mxu0 %v7248
    %7406 = vmatpush2.msra.mxu0 %v7247
    %7407 = vmatprep.subr.mxu0 %v7246
    %7408 = vmatpush2.msra.mxu0 %v7245
    %7409 = vmatprep.subr.mxu0 %v7244
    %7410 = vmatpush2.msra.mxu0 %v7243
    %7411 = vmatprep.subr.mxu0 %v7242
    %7412 = vmatpush2.msra.mxu0 %v7241
    %7413 = vmatprep.subr.mxu0 %v7240
    %7414 = vmatpush2.msra.mxu0 %v7239
    %7415 = vmatprep.subr.mxu0 %v7238
    %7416 = vmatpush2.msra.mxu0 %v7237
    %7417 = vmatprep.subr.mxu0 %v7236
    %7418 = vmatpush2.msra.mxu0 %v7235
    %7419 = vmatprep.subr.mxu0 %v7234
    %7420 = vmatpush2.msra.mxu0 %v7233
    %7421 = vmatprep.subr.mxu0 %v7232
    %7422 = vmatpush2.msra.mxu0 %v7231
    %7423 = vmatprep.subr.mxu0 %v7230
    %7424 = vmatpush2.msra.mxu0 %v7229
    %7425 = vmatprep.subr.mxu0 %v7228
    %7426 = vmatpush2.msra.mxu0 %v7227
    %7427 = vmatprep.subr.mxu0 %v7226
    %7428 = vmatpush2.msra.mxu0 %v7225
    %7429 = vmatprep.subr.mxu0 %v7224
    %7430 = vmatpush2.msra.mxu0 %v7223
    %7431 = vmatprep.subr.mxu0 %v7222
    %7432 = vmatpush2.msra.mxu0 %v7221
    %7433 = vmatprep.subr.mxu0 %v7220
    %7434 = vmatpush2.msra.mxu0 %v7219
    %7435 = vmatprep.mubr.f32.mxu0 %v7120
    %7436 = vmatmul.mubr.f32.gmra.mxu0 %v7119
    %v7437 = vpop.f32.mrf.mxu0
    %v7438 = vadd.f32 %v7367, %v7437
    %v7439 = vpop.f32.mrf.mxu0
    %v7440 = vadd.f32 %v7369, %v7439
    %7441 = vdwg.mxu0
    %7442 = vmatprep.subr.mxu0 %v7282
    %7443 = vmatpush1.msra.mxu0 %v7281
    %7444 = vmatprep.subr.mxu0 %v7280
    %7445 = vmatpush1.msra.mxu0 %v7279
    %7446 = vmatprep.subr.mxu0 %v7278
    %7447 = vmatpush1.msra.mxu0 %v7277
    %7448 = vmatprep.subr.mxu0 %v7276
    %7449 = vmatpush1.msra.mxu0 %v7275
    %7450 = vmatprep.subr.mxu0 %v7274
    %7451 = vmatpush1.msra.mxu0 %v7273
    %7452 = vmatprep.subr.mxu0 %v7272
    %7453 = vmatpush1.msra.mxu0 %v7271
    %7454 = vmatprep.subr.mxu0 %v7270
    %7455 = vmatpush1.msra.mxu0 %v7269
    %7456 = vmatprep.subr.mxu0 %v7268
    %7457 = vmatpush1.msra.mxu0 %v7267
    %7458 = vmatprep.subr.mxu0 %v7266
    %7459 = vmatpush1.msra.mxu0 %v7265
    %7460 = vmatprep.subr.mxu0 %v7264
    %7461 = vmatpush1.msra.mxu0 %v7263
    %7462 = vmatprep.subr.mxu0 %v7262
    %7463 = vmatpush1.msra.mxu0 %v7261
    %7464 = vmatprep.subr.mxu0 %v7260
    %7465 = vmatpush1.msra.mxu0 %v7259
    %7466 = vmatprep.subr.mxu0 %v7258
    %7467 = vmatpush1.msra.mxu0 %v7257
    %7468 = vmatprep.subr.mxu0 %v7256
    %7469 = vmatpush1.msra.mxu0 %v7255
    %7470 = vmatprep.subr.mxu0 %v7254
    %7471 = vmatpush1.msra.mxu0 %v7253
    %7472 = vmatprep.subr.mxu0 %v7252
    %7473 = vmatpush1.msra.mxu0 %v7251
    %7474 = vmatprep.subr.mxu0 0.0
    %7475 = vmatpush2.msra.mxu0 0.0
    %7476 = vmatprep.subr.mxu0 0.0
    %7477 = vmatpush2.msra.mxu0 0.0
    %7478 = vmatprep.subr.mxu0 0.0
    %7479 = vmatpush2.msra.mxu0 0.0
    %7480 = vmatprep.subr.mxu0 0.0
    %7481 = vmatpush2.msra.mxu0 0.0
    %7482 = vmatprep.subr.mxu0 0.0
    %7483 = vmatpush2.msra.mxu0 0.0
    %7484 = vmatprep.subr.mxu0 0.0
    %7485 = vmatpush2.msra.mxu0 0.0
    %7486 = vmatprep.subr.mxu0 0.0
    %7487 = vmatpush2.msra.mxu0 0.0
    %7488 = vmatprep.subr.mxu0 0.0
    %7489 = vmatpush2.msra.mxu0 0.0
    %7490 = vmatprep.subr.mxu0 0.0
    %7491 = vmatpush2.msra.mxu0 0.0
    %7492 = vmatprep.subr.mxu0 0.0
    %7493 = vmatpush2.msra.mxu0 0.0
    %7494 = vmatprep.subr.mxu0 0.0
    %7495 = vmatpush2.msra.mxu0 0.0
    %7496 = vmatprep.subr.mxu0 0.0
    %7497 = vmatpush2.msra.mxu0 0.0
    %7498 = vmatprep.subr.mxu0 0.0
    %7499 = vmatpush2.msra.mxu0 0.0
    %7500 = vmatprep.subr.mxu0 0.0
    %7501 = vmatpush2.msra.mxu0 0.0
    %7502 = vmatprep.subr.mxu0 0.0
    %7503 = vmatpush2.msra.mxu0 0.0
    %7504 = vmatprep.subr.mxu0 %v7284
    %7505 = vmatpush2.msra.mxu0 %v7283
    %7506 = vmatprep.mubr.f32.mxu0 %v7298
    %7507 = vmatmul.mubr.f32.gmra.mxu0 %v7121
    %v7508 = vpop.f32.mrf.mxu0
    %v7509 = vadd.f32 %v7438, %v7508
    %v7510 = vpop.f32.mrf.mxu0
    %v7511 = vadd.f32 %v7440, %v7510
    %7512 = vdwg.mxu0
    %v7513 = vmax.f32 %v7509, 0.0
    %v7514 = vmax.f32 %v7511, 0.0
    %v7515 = vld [vmem:[#allocation17] sm:$0xff]
    %v7516 = vld [vmem:[#allocation17 + $0x8] sm:$0xff]
    %v7517 = vld [vmem:[#allocation17 + $0x10] sm:$0xff]
    %v7518 = vld [vmem:[#allocation17 + $0x18] sm:$0xff]
    %v7519 = vld [vmem:[#allocation17 + $0x20] sm:$0xff]
    %v7520 = vld [vmem:[#allocation17 + $0x28] sm:$0xff]
    %v7521 = vld [vmem:[#allocation17 + $0x30] sm:$0xff]
    %v7522 = vld [vmem:[#allocation17 + $0x38] sm:$0xff]
    %v7523 = vld [vmem:[#allocation17 + $0x40] sm:$0xff]
    %v7524 = vld [vmem:[#allocation17 + $0x48] sm:$0xff]
    %v7525 = vld [vmem:[#allocation17 + $0x50] sm:$0xff]
    %v7526 = vld [vmem:[#allocation17 + $0x58] sm:$0xff]
    %v7527 = vld [vmem:[#allocation17 + $0x60] sm:$0xff]
    %v7528 = vld [vmem:[#allocation17 + $0x68] sm:$0xff]
    %v7529 = vld [vmem:[#allocation17 + $0x70] sm:$0xff]
    %v7530 = vld [vmem:[#allocation17 + $0x78] sm:$0xff]
    %v7531 = vld [vmem:[#allocation17 + $0x80] sm:$0xff]
    %v7532 = vld [vmem:[#allocation17 + $0x88] sm:$0xff]
    %v7533 = vld [vmem:[#allocation17 + $0x90] sm:$0xff]
    %v7534 = vld [vmem:[#allocation17 + $0x98] sm:$0xff]
    %v7535 = vld [vmem:[#allocation17 + $0xa0] sm:$0xff]
    %v7536 = vld [vmem:[#allocation17 + $0xa8] sm:$0xff]
    %v7537 = vld [vmem:[#allocation17 + $0xb0] sm:$0xff]
    %v7538 = vld [vmem:[#allocation17 + $0xb8] sm:$0xff]
    %v7539 = vld [vmem:[#allocation17 + $0xc0] sm:$0xff]
    %v7540 = vld [vmem:[#allocation17 + $0xc8] sm:$0xff]
    %v7541 = vld [vmem:[#allocation17 + $0xd0] sm:$0xff]
    %v7542 = vld [vmem:[#allocation17 + $0xd8] sm:$0xff]
    %v7543 = vld [vmem:[#allocation17 + $0xe0] sm:$0xff]
    %v7544 = vld [vmem:[#allocation17 + $0xe8] sm:$0xff]
    %v7545 = vld [vmem:[#allocation17 + $0xf0] sm:$0xff]
    %v7546 = vld [vmem:[#allocation17 + $0xf8] sm:$0xff]
    %v7547 = vld [vmem:[#allocation17 + $0x100] sm:$0xff]
    %v7548 = vld [vmem:[#allocation17 + $0x108] sm:$0xff]
    %v7549 = vld [vmem:[#allocation17 + $0x110] sm:$0xff]
    %v7550 = vld [vmem:[#allocation17 + $0x118] sm:$0xff]
    %v7551 = vld [vmem:[#allocation17 + $0x120] sm:$0xff]
    %v7552 = vld [vmem:[#allocation17 + $0x128] sm:$0xff]
    %v7553 = vld [vmem:[#allocation17 + $0x130] sm:$0xff]
    %v7554 = vld [vmem:[#allocation17 + $0x138] sm:$0xff]
    %v7555 = vld [vmem:[#allocation17 + $0x140] sm:$0xff]
    %v7556 = vld [vmem:[#allocation17 + $0x148] sm:$0xff]
    %v7557 = vld [vmem:[#allocation17 + $0x150] sm:$0xff]
    %v7558 = vld [vmem:[#allocation17 + $0x158] sm:$0xff]
    %v7559 = vld [vmem:[#allocation17 + $0x160] sm:$0xff]
    %v7560 = vld [vmem:[#allocation17 + $0x168] sm:$0xff]
    %v7561 = vld [vmem:[#allocation17 + $0x170] sm:$0xff]
    %v7562 = vld [vmem:[#allocation17 + $0x178] sm:$0xff]
    %v7563 = vld [vmem:[#allocation17 + $0x180] sm:$0xff]
    %v7564 = vld [vmem:[#allocation17 + $0x188] sm:$0xff]
    %v7565 = vld [vmem:[#allocation17 + $0x190] sm:$0xff]
    %v7566 = vld [vmem:[#allocation17 + $0x198] sm:$0xff]
    %v7567 = vld [vmem:[#allocation17 + $0x1a0] sm:$0xff]
    %v7568 = vld [vmem:[#allocation17 + $0x1a8] sm:$0xff]
    %v7569 = vld [vmem:[#allocation17 + $0x1b0] sm:$0xff]
    %v7570 = vld [vmem:[#allocation17 + $0x1b8] sm:$0xff]
    %v7571 = vld [vmem:[#allocation17 + $0x1c0] sm:$0xff]
    %v7572 = vld [vmem:[#allocation17 + $0x1c8] sm:$0xff]
    %v7573 = vld [vmem:[#allocation17 + $0x1d0] sm:$0xff]
    %v7574 = vld [vmem:[#allocation17 + $0x1d8] sm:$0xff]
    %v7575 = vld [vmem:[#allocation17 + $0x1e0] sm:$0xff]
    %v7576 = vld [vmem:[#allocation17 + $0x1e8] sm:$0xff]
    %v7577 = vld [vmem:[#allocation17 + $0x1f0] sm:$0xff]
    %v7578 = vld [vmem:[#allocation17 + $0x1f8] sm:$0xff]
    %v7579 = vld [vmem:[#allocation19] sm:$0x3]
    %v7581 = vlaneseq
    %v7582 = vshrl.u32 %v7581, 7
    %v7583 = vsub.s32 0, %v7582
    %v7584 = vrot.slane %v7579, %v7583
    %v7585 = vlaneseq
    %v7586 = vshrl.u32 %v7585, 7
    %v7587 = vsub.s32 1, %v7586
    %v7588 = vrot.slane %v7579, %v7587
    %7591 = vmatprep.subr.mxu0 %v7546
    %7592 = vmatpush1.msra.mxu0 %v7545
    %7593 = vmatprep.subr.mxu0 %v7544
    %7594 = vmatpush1.msra.mxu0 %v7543
    %7595 = vmatprep.subr.mxu0 %v7542
    %7596 = vmatpush1.msra.mxu0 %v7541
    %7597 = vmatprep.subr.mxu0 %v7540
    %7598 = vmatpush1.msra.mxu0 %v7539
    %7599 = vmatprep.subr.mxu0 %v7538
    %7600 = vmatpush1.msra.mxu0 %v7537
    %7601 = vmatprep.subr.mxu0 %v7536
    %7602 = vmatpush1.msra.mxu0 %v7535
    %7603 = vmatprep.subr.mxu0 %v7534
    %7604 = vmatpush1.msra.mxu0 %v7533
    %7605 = vmatprep.subr.mxu0 %v7532
    %7606 = vmatpush1.msra.mxu0 %v7531
    %7607 = vmatprep.subr.mxu0 %v7530
    %7608 = vmatpush1.msra.mxu0 %v7529
    %7609 = vmatprep.subr.mxu0 %v7528
    %7610 = vmatpush1.msra.mxu0 %v7527
    %7611 = vmatprep.subr.mxu0 %v7526
    %7612 = vmatpush1.msra.mxu0 %v7525
    %7613 = vmatprep.subr.mxu0 %v7524
    %7614 = vmatpush1.msra.mxu0 %v7523
    %7615 = vmatprep.subr.mxu0 %v7522
    %7616 = vmatpush1.msra.mxu0 %v7521
    %7617 = vmatprep.subr.mxu0 %v7520
    %7618 = vmatpush1.msra.mxu0 %v7519
    %7619 = vmatprep.subr.mxu0 %v7518
    %7620 = vmatpush1.msra.mxu0 %v7517
    %7621 = vmatprep.subr.mxu0 %v7516
    %7622 = vmatpush1.msra.mxu0 %v7515
    %7623 = vmatprep.subr.mxu0 %v7578
    %7624 = vmatpush2.msra.mxu0 %v7577
    %7625 = vmatprep.subr.mxu0 %v7576
    %7626 = vmatpush2.msra.mxu0 %v7575
    %7627 = vmatprep.subr.mxu0 %v7574
    %7628 = vmatpush2.msra.mxu0 %v7573
    %7629 = vmatprep.subr.mxu0 %v7572
    %7630 = vmatpush2.msra.mxu0 %v7571
    %7631 = vmatprep.subr.mxu0 %v7570
    %7632 = vmatpush2.msra.mxu0 %v7569
    %7633 = vmatprep.subr.mxu0 %v7568
    %7634 = vmatpush2.msra.mxu0 %v7567
    %7635 = vmatprep.subr.mxu0 %v7566
    %7636 = vmatpush2.msra.mxu0 %v7565
    %7637 = vmatprep.subr.mxu0 %v7564
    %7638 = vmatpush2.msra.mxu0 %v7563
    %7639 = vmatprep.subr.mxu0 %v7562
    %7640 = vmatpush2.msra.mxu0 %v7561
    %7641 = vmatprep.subr.mxu0 %v7560
    %7642 = vmatpush2.msra.mxu0 %v7559
    %7643 = vmatprep.subr.mxu0 %v7558
    %7644 = vmatpush2.msra.mxu0 %v7557
    %7645 = vmatprep.subr.mxu0 %v7556
    %7646 = vmatpush2.msra.mxu0 %v7555
    %7647 = vmatprep.subr.mxu0 %v7554
    %7648 = vmatpush2.msra.mxu0 %v7553
    %7649 = vmatprep.subr.mxu0 %v7552
    %7650 = vmatpush2.msra.mxu0 %v7551
    %7651 = vmatprep.subr.mxu0 %v7550
    %7652 = vmatpush2.msra.mxu0 %v7549
    %7653 = vmatprep.subr.mxu0 %v7548
    %7654 = vmatpush2.msra.mxu0 %v7547
    %7655 = vmatprep.mubr.f32.mxu0 %v7514
    %7656 = vmatmul.mubr.f32.gmra.mxu0 %v7513
    %v7657 = vpop.f32.mrf.mxu0
    %v7658 = vadd.f32 %v7584, %v7657
    %v7659 = vpop.f32.mrf.mxu0
    %v7660 = vadd.f32 %v7588, %v7659
    %7661 = vdwg.mxu0
    %v7662 = vmax.f32 %v7658, 0.0
    %v7663 = vmax.f32 %v7660, 0.0
    %v7664 = vld [vmem:[%s17] sm:$0xff]
    %v7665 = vld [vmem:[%s17 + $0x8] sm:$0xff]
    %v7666 = vld [vmem:[%s17 + $0x10] sm:$0xff]
    %v7667 = vld [vmem:[%s17 + $0x18] sm:$0xff]
    %v7668 = vld [vmem:[%s17 + $0x20] sm:$0xff]
    %v7669 = vld [vmem:[%s17 + $0x28] sm:$0xff]
    %v7670 = vld [vmem:[%s17 + $0x30] sm:$0xff]
    %v7671 = vld [vmem:[%s17 + $0x38] sm:$0xff]
    %v7672 = vld [vmem:[%s17 + $0x40] sm:$0xff]
    %v7673 = vld [vmem:[%s17 + $0x48] sm:$0xff]
    %v7674 = vld [vmem:[%s17 + $0x50] sm:$0xff]
    %v7675 = vld [vmem:[%s17 + $0x58] sm:$0xff]
    %v7676 = vld [vmem:[%s17 + $0x60] sm:$0xff]
    %v7677 = vld [vmem:[%s17 + $0x68] sm:$0xff]
    %v7678 = vld [vmem:[%s17 + $0x70] sm:$0xff]
    %v7679 = vld [vmem:[%s17 + $0x78] sm:$0xff]
    %v7680 = vld [vmem:[%s17 + $0x80] sm:$0xff]
    %v7681 = vld [vmem:[%s17 + $0x88] sm:$0xff]
    %v7682 = vld [vmem:[%s17 + $0x90] sm:$0xff]
    %v7683 = vld [vmem:[%s17 + $0x98] sm:$0xff]
    %v7684 = vld [vmem:[%s17 + $0xa0] sm:$0xff]
    %v7685 = vld [vmem:[%s17 + $0xa8] sm:$0xff]
    %v7686 = vld [vmem:[%s17 + $0xb0] sm:$0xff]
    %v7687 = vld [vmem:[%s17 + $0xb8] sm:$0xff]
    %v7688 = vld [vmem:[%s17 + $0xc0] sm:$0xff]
    %v7689 = vld [vmem:[%s17 + $0xc8] sm:$0xff]
    %v7690 = vld [vmem:[%s17 + $0xd0] sm:$0xff]
    %v7691 = vld [vmem:[%s17 + $0xd8] sm:$0xff]
    %v7692 = vld [vmem:[%s17 + $0xe0] sm:$0xff]
    %v7693 = vld [vmem:[%s17 + $0xe8] sm:$0xff]
    %v7694 = vld [vmem:[%s17 + $0xf0] sm:$0xff]
    %v7695 = vld [vmem:[%s17 + $0xf8] sm:$0xff]
    %v7696 = vld [vmem:[#allocation20] sm:$0x1]
    %v7698 = vlaneseq
    %v7699 = vshrl.u32 %v7698, 7
    %v7700 = vsub.s32 0, %v7699
    %v7701 = vrot.slane %v7696, %v7700
    %7703 = vmatprep.subr.mxu0 0.0
    %7704 = vmatpush1.msra.mxu0 %v7679
    %7705 = vmatprep.subr.mxu0 0.0
    %7706 = vmatpush1.msra.mxu0 %v7678
    %7707 = vmatprep.subr.mxu0 0.0
    %7708 = vmatpush1.msra.mxu0 %v7677
    %7709 = vmatprep.subr.mxu0 0.0
    %7710 = vmatpush1.msra.mxu0 %v7676
    %7711 = vmatprep.subr.mxu0 0.0
    %7712 = vmatpush1.msra.mxu0 %v7675
    %7713 = vmatprep.subr.mxu0 0.0
    %7714 = vmatpush1.msra.mxu0 %v7674
    %7715 = vmatprep.subr.mxu0 0.0
    %7716 = vmatpush1.msra.mxu0 %v7673
    %7717 = vmatprep.subr.mxu0 0.0
    %7718 = vmatpush1.msra.mxu0 %v7672
    %7719 = vmatprep.subr.mxu0 0.0
    %7720 = vmatpush1.msra.mxu0 %v7671
    %7721 = vmatprep.subr.mxu0 0.0
    %7722 = vmatpush1.msra.mxu0 %v7670
    %7723 = vmatprep.subr.mxu0 0.0
    %7724 = vmatpush1.msra.mxu0 %v7669
    %7725 = vmatprep.subr.mxu0 0.0
    %7726 = vmatpush1.msra.mxu0 %v7668
    %7727 = vmatprep.subr.mxu0 0.0
    %7728 = vmatpush1.msra.mxu0 %v7667
    %7729 = vmatprep.subr.mxu0 0.0
    %7730 = vmatpush1.msra.mxu0 %v7666
    %7731 = vmatprep.subr.mxu0 0.0
    %7732 = vmatpush1.msra.mxu0 %v7665
    %7733 = vmatprep.subr.mxu0 0.0
    %7734 = vmatpush1.msra.mxu0 %v7664
    %7735 = vmatprep.subr.mxu0 0.0
    %7736 = vmatpush2.msra.mxu0 %v7695
    %7737 = vmatprep.subr.mxu0 0.0
    %7738 = vmatpush2.msra.mxu0 %v7694
    %7739 = vmatprep.subr.mxu0 0.0
    %7740 = vmatpush2.msra.mxu0 %v7693
    %7741 = vmatprep.subr.mxu0 0.0
    %7742 = vmatpush2.msra.mxu0 %v7692
    %7743 = vmatprep.subr.mxu0 0.0
    %7744 = vmatpush2.msra.mxu0 %v7691
    %7745 = vmatprep.subr.mxu0 0.0
    %7746 = vmatpush2.msra.mxu0 %v7690
    %7747 = vmatprep.subr.mxu0 0.0
    %7748 = vmatpush2.msra.mxu0 %v7689
    %7749 = vmatprep.subr.mxu0 0.0
    %7750 = vmatpush2.msra.mxu0 %v7688
    %7751 = vmatprep.subr.mxu0 0.0
    %7752 = vmatpush2.msra.mxu0 %v7687
    %7753 = vmatprep.subr.mxu0 0.0
    %7754 = vmatpush2.msra.mxu0 %v7686
    %7755 = vmatprep.subr.mxu0 0.0
    %7756 = vmatpush2.msra.mxu0 %v7685
    %7757 = vmatprep.subr.mxu0 0.0
    %7758 = vmatpush2.msra.mxu0 %v7684
    %7759 = vmatprep.subr.mxu0 0.0
    %7760 = vmatpush2.msra.mxu0 %v7683
    %7761 = vmatprep.subr.mxu0 0.0
    %7762 = vmatpush2.msra.mxu0 %v7682
    %7763 = vmatprep.subr.mxu0 0.0
    %7764 = vmatpush2.msra.mxu0 %v7681
    %7765 = vmatprep.subr.mxu0 0.0
    %7766 = vmatpush2.msra.mxu0 %v7680
    %7767 = vmatprep.mubr.f32.mxu0 %v7663
    %7768 = vmatmul.mubr.f32.gmra.mxu0 %v7662
    %v7769 = vpop.f32.mrf.mxu0
    %v7770 = vadd.f32 %v7701, %v7769
    %v7771 = vpop.f32.mrf.mxu0
    %7772 = vdwg.mxu0
    %vm7773 = vcmask 74752
    %7774 = vst.msk [vmem:[#allocation22] sm:$0x3] %vm7773, %v7770
    // Predicated region
    $region126: #{yannet_forward.1} parent=1 // pred_check
      _
    $region127: #{yannet_forward.1} parent=1 // pred_check_branch
      %7776 = sbr.rel (0) target = $region129
    $region128: #{yannet_forward.1} parent=1 // pred_region
      %s7778 = ssub.s32 32, 32
      %7779 = vsyncadd [#allocation4], %s7778
      %s7781 = sshll.u32 [#allocation22], 4
      %s7782 = int_to_ptr.vmem [resolvable:$true] %s7781
      %7784 = dma.vmem_to_hbm [thread:$0]  %s7782, 32, %s19, [#allocation4]
    $region129: #{yannet_forward.1} parent=1 // pred_fallthru
      _
    // Predicated region
    $region130: #{yannet_forward.1} parent=1 // pred_check
      _
    $region131: #{yannet_forward.1} parent=1 // pred_check_branch
      %7786 = sbr.rel (0) target = $region133
    $region132: #{yannet_forward.1} parent=1 // pred_region
      %7787 = dma.done [#allocation4], 32
    $region133: #{yannet_forward.1} parent=1 // pred_fallthru
      _
    %7788 = vsyncpa [#allocation3], 1
    %7789 = vsyncpa [#allocation6], 1
    %7790 = vsyncpa [#allocation9], 1
    %7791 = vsyncpa [#allocation12], 1
    %7792 = vsyncpa [#allocation15], 1
    %7793 = vsyncpa [#allocation18], 1
    %7794 = vsyncpa [#allocation21], 1
    %7795 = vsyncpa [#allocation4], 1

</llo_original>
